<compile_context>
chip_gen: v6e
topology: v6e:2x2x1
jax: 0.10.0
libtpu: 0.0.40
codegen_flags: <defaults>
</compile_context>

<pallas_src>
import functools
import numpy as np

import jax
import jax.numpy as jnp
from jax.experimental import pallas as pl
from jax.experimental.pallas import tpu as pltpu

# ----------------------------- config (scaled-down DeiT-Base) ----------------
IMG = 32             # deit_base: 224
PATCH = 16           # deit_base: 16
IN_CH = 3
EMBED = 128          # deit_base: 768
DEPTH = 2            # deit_base: 12
HEADS = 4            # deit_base: 12
HEAD_DIM = EMBED // HEADS
MLP_HIDDEN = EMBED * 4
NUM_CLASSES = 1000   # fixed by the module (timm head)
NUM_CLASSES_PAD = 1024  # lane-aligned padded class dim (pads are exactly zero)
FC_OUT = 512         # fixed by the module (nn.Linear(1000, 512))
LN_EPS = 1e-6

HP = IMG // PATCH
NP = HP * HP                 # patches per image (4)
T = NP + 1                   # real tokens incl. cls (5)
TP = ((T + 7) // 8) * 8      # sublane-padded tokens (8)


# ----------------------------- in-kernel helpers ------------------------------
def _ln_f32(x, g, b):
    """LayerNorm over the last dim, f32, gamma/beta shaped (1, D)."""
    mean = jnp.mean(x, axis=-1, keepdims=True)
    var = jnp.mean(jnp.square(x - mean), axis=-1, keepdims=True)
    return (x - mean) * jax.lax.rsqrt(var + LN_EPS) * g + b


def _gelu_f32(x):
    """Exact (erf) GELU, matching torch.nn.GELU used by timm ViT blocks."""
    return 0.5 * x * (1.0 + jax.lax.erf(x * np.float32(1.0 / np.sqrt(2.0))))


# ----------------------------- Pallas kernels --------------------------------
def _patch_kernel(p_ref, w_ref, b_ref, o_ref):
    """Patch embedding: (B*Np, C*P*P) @ (C*P*P, D) + b, bf16 MXU, f32 accum."""
    acc = jnp.dot(p_ref[...].astype(jnp.bfloat16), w_ref[...],
                  preferred_element_type=jnp.float32)
    o_ref[...] = (acc + b_ref[...]).astype(o_ref.dtype)


def patch_embed(patches, w, b):
    M, K = patches.shape
    return pl.pallas_call(
        _patch_kernel,
        out_shape=jax.ShapeDtypeStruct((M, EMBED), jnp.float32),
        grid=(1,),
        in_specs=[
            pl.BlockSpec((M, K), lambda i: (0, 0)),
            pl.BlockSpec((K, EMBED), lambda i: (0, 0)),
            pl.BlockSpec((1, EMBED), lambda i: (0, 0)),
        ],
        out_specs=pl.BlockSpec((M, EMBED), lambda i: (0, 0)),
        compiler_params=pltpu.CompilerParams(dimension_semantics=("arbitrary",)),
    )(patches, w, b)


def _block_kernel(x_ref, ln1_g, ln1_b, qkv_w, qkv_b, proj_w, proj_b,
                  ln2_g, ln2_b, fc1_w, fc1_b, fc2_w, fc2_b, o_ref,
                  *, scale, t_real):
    """One full pre-LN transformer block for one batch element, fully fused."""
    x = x_ref[0].astype(jnp.float32)                       # (TP, D)

    # --- MHSA ---
    h = _ln_f32(x, ln1_g[...], ln1_b[...])
    qkv = jnp.dot(h.astype(jnp.bfloat16), qkv_w[...],
                  preferred_element_type=jnp.float32) + qkv_b[...]   # (TP, 3D)
    q = qkv[:, 0:EMBED]
    k = qkv[:, EMBED:2 * EMBED]
    v = qkv[:, 2 * EMBED:3 * EMBED]

    # mask out padded key tokens (cols >= t_real) so real rows are exact
    kmask = jax.lax.broadcasted_iota(jnp.int32, (TP, TP), 1) < t_real

    pw = proj_w[...]                                       # (D, D) bf16, resident
    proj_acc = jnp.zeros((TP, EMBED), jnp.float32)
    for hh in range(HEADS):                                # static unroll (4 heads)
        lo = hh * HEAD_DIM
        qh = q[:, lo:lo + HEAD_DIM].astype(jnp.bfloat16)
        kh = k[:, lo:lo + HEAD_DIM].astype(jnp.bfloat16)
        vh = v[:, lo:lo + HEAD_DIM].astype(jnp.bfloat16)
        s = jax.lax.dot_general(qh, kh, (((1,), (1,)), ((), ())),
                                preferred_element_type=jnp.float32) * scale
        s = jnp.where(kmask, s, jnp.float32(-1e30))
        m = jnp.max(s, axis=-1, keepdims=True)
        p = jnp.exp(s - m)
        p = p / jnp.sum(p, axis=-1, keepdims=True)
        oh = jnp.dot(p.astype(jnp.bfloat16), vh,
                     preferred_element_type=jnp.float32)   # (TP, Dh)
        # fold the concat-over-heads + output projection into a per-head matmul
        proj_acc = proj_acc + jnp.dot(oh.astype(jnp.bfloat16),
                                      pw[lo:lo + HEAD_DIM, :],
                                      preferred_element_type=jnp.float32)
    x = x + proj_acc + proj_b[...]

    # --- MLP ---
    h2 = _ln_f32(x, ln2_g[...], ln2_b[...])
    h2 = jnp.dot(h2.astype(jnp.bfloat16), fc1_w[...],
                 preferred_element_type=jnp.float32) + fc1_b[...]
    h2 = _gelu_f32(h2)
    h2 = jnp.dot(h2.astype(jnp.bfloat16), fc2_w[...],
                 preferred_element_type=jnp.float32) + fc2_b[...]

    o_ref[0] = (x + h2).astype(o_ref.dtype)


def transformer_block(seq, blk):
    B = seq.shape[0]
    kernel = functools.partial(_block_kernel,
                               scale=float(HEAD_DIM) ** -0.5, t_real=T)
    w_spec = lambda shape: pl.BlockSpec(shape, lambda b: (0, 0))
    return pl.pallas_call(
        kernel,
        out_shape=jax.ShapeDtypeStruct((B, TP, EMBED), jnp.float32),
        grid=(B,),
        in_specs=[
            pl.BlockSpec((1, TP, EMBED), lambda b: (b, 0, 0)),   # x
            w_spec((1, EMBED)),                                  # ln1_g
            w_spec((1, EMBED)),                                  # ln1_b
            w_spec((EMBED, 3 * EMBED)),                          # qkv_w
            w_spec((1, 3 * EMBED)),                              # qkv_b
            w_spec((EMBED, EMBED)),                              # proj_w
            w_spec((1, EMBED)),                                  # proj_b
            w_spec((1, EMBED)),                                  # ln2_g
            w_spec((1, EMBED)),                                  # ln2_b
            w_spec((EMBED, MLP_HIDDEN)),                         # fc1_w
            w_spec((1, MLP_HIDDEN)),                             # fc1_b
            w_spec((MLP_HIDDEN, EMBED)),                         # fc2_w
            w_spec((1, EMBED)),                                  # fc2_b
        ],
        out_specs=pl.BlockSpec((1, TP, EMBED), lambda b: (b, 0, 0)),
        compiler_params=pltpu.CompilerParams(dimension_semantics=("parallel",)),
    )(seq, blk["ln1_g"], blk["ln1_b"], blk["qkv_w"], blk["qkv_b"],
      blk["proj_w"], blk["proj_b"], blk["ln2_g"], blk["ln2_b"],
      blk["fc1_w"], blk["fc1_b"], blk["fc2_w"], blk["fc2_b"])


def _head_kernel(x_ref, g_ref, b_ref, hw_ref, hb_ref, fw_ref, fb_ref, o_ref):
    """Fused final LN -> 1024-padded class head -> fc(1024->512)."""
    x = _ln_f32(x_ref[...].astype(jnp.float32), g_ref[...], b_ref[...])
    logits = jnp.dot(x.astype(jnp.bfloat16), hw_ref[...],
                     preferred_element_type=jnp.float32) + hb_ref[...]
    out = jnp.dot(logits.astype(jnp.bfloat16), fw_ref[...],
                  preferred_element_type=jnp.float32) + fb_ref[...]
    o_ref[...] = out.astype(o_ref.dtype)


def head_fc(cls_pad, norm_g, norm_b, head_w, head_b, fc_w, fc_b):
    R = cls_pad.shape[0]
    return pl.pallas_call(
        _head_kernel,
        out_shape=jax.ShapeDtypeStruct((R, FC_OUT), jnp.float32),
        grid=(1,),
        in_specs=[
            pl.BlockSpec((R, EMBED), lambda i: (0, 0)),
            pl.BlockSpec((1, EMBED), lambda i: (0, 0)),
            pl.BlockSpec((1, EMBED), lambda i: (0, 0)),
            pl.BlockSpec((EMBED, NUM_CLASSES_PAD), lambda i: (0, 0)),
            pl.BlockSpec((1, NUM_CLASSES_PAD), lambda i: (0, 0)),
            pl.BlockSpec((NUM_CLASSES_PAD, FC_OUT), lambda i: (0, 0)),
            pl.BlockSpec((1, FC_OUT), lambda i: (0, 0)),
        ],
        out_specs=pl.BlockSpec((R, FC_OUT), lambda i: (0, 0)),
        compiler_params=pltpu.CompilerParams(dimension_semantics=("arbitrary",)),
    )(cls_pad, norm_g, norm_b, head_w, head_b, fc_w, fc_b)


# ----------------------------- parameters ------------------------------------
def init_params(key):
    # TODO(synk): pretrained DeiT-Base weights (torch.hub load) are replaced by
    # deterministic random init at a scaled-down configuration.
    def nrm(k, shape, std=0.02):
        return jax.random.normal(k, shape, jnp.float32) * std

    keys = iter(jax.random.split(key, 16 + 8 * DEPTH))
    head_w = nrm(next(keys), (EMBED, NUM_CLASSES))
    fc_w = nrm(next(keys), (NUM_CLASSES, FC_OUT))
    pad_c = NUM_CLASSES_PAD - NUM_CLASSES

    params = {
        "patch_w": nrm(next(keys), (IN_CH * PATCH * PATCH, EMBED)).astype(jnp.bfloat16),
        "patch_b": jnp.zeros((1, EMBED), jnp.float32),
        "cls_token": nrm(next(keys), (1, 1, EMBED)),
        "pos_embed": nrm(next(keys), (1, T, EMBED)),
        "norm_g": jnp.ones((1, EMBED), jnp.float32),
        "norm_b": jnp.zeros((1, EMBED), jnp.float32),
        # class dim zero-padded 1000 -> 1024: padded logits are exactly 0 and
        # padded fc_w rows are 0, so the result equals the unpadded model.
        "head_w": jnp.pad(head_w, ((0, 0), (0, pad_c))).astype(jnp.bfloat16),
        "head_b": jnp.zeros((1, NUM_CLASSES_PAD), jnp.float32),
        "fc_w": jnp.pad(fc_w, ((0, pad_c), (0, 0))).astype(jnp.bfloat16),
        "fc_b": jnp.zeros((1, FC_OUT), jnp.float32),
        "blocks": [],
    }
    for _ in range(DEPTH):
        params["blocks"].append({
            "ln1_g": jnp.ones((1, EMBED), jnp.float32),
            "ln1_b": jnp.zeros((1, EMBED), jnp.float32),
            "qkv_w": nrm(next(keys), (EMBED, 3 * EMBED)).astype(jnp.bfloat16),
            "qkv_b": jnp.zeros((1, 3 * EMBED), jnp.float32),
            "proj_w": nrm(next(keys), (EMBED, EMBED)).astype(jnp.bfloat16),
            "proj_b": jnp.zeros((1, EMBED), jnp.float32),
            "ln2_g": jnp.ones((1, EMBED), jnp.float32),
            "ln2_b": jnp.zeros((1, EMBED), jnp.float32),
            "fc1_w": nrm(next(keys), (EMBED, MLP_HIDDEN)).astype(jnp.bfloat16),
            "fc1_b": jnp.zeros((1, MLP_HIDDEN), jnp.float32),
            "fc2_w": nrm(next(keys), (MLP_HIDDEN, EMBED)).astype(jnp.bfloat16),
            "fc2_b": jnp.zeros((1, EMBED), jnp.float32),
        })
    return params


# ----------------------------- forward ----------------------------------------
def deit_forward(params, x):
    """x: NCHW float32 image batch -> (B, 512)."""
    B = x.shape[0]

    # Patch embedding: conv(k=16, s=16) == unfold (c, kh, kw order) + matmul.
    patches = x.reshape(B, IN_CH, HP, PATCH, HP, PATCH)
    patches = patches.transpose(0, 2, 4, 1, 3, 5)            # (B, Hp, Wp, C, P, P)
    patches = patches.reshape(B * NP, IN_CH * PATCH * PATCH)
    tok = patch_embed(patches, params["patch_w"], params["patch_b"])   # (B*Np, D)
    tok = tok.reshape(B, NP, EMBED)

    # cls token + positional embedding, then pad tokens 5 -> 8 (sublane hygiene).
    cls = jnp.broadcast_to(params["cls_token"], (B, 1, EMBED))
    seq = jnp.concatenate([cls, tok], axis=1) + params["pos_embed"]    # (B, T, D)
    seq = jnp.pad(seq, ((0, 0), (0, TP - T), (0, 0)))                  # (B, TP, D)

    # Fused transformer blocks (one pallas_call each, grid over batch).
    for blk in params["blocks"]:
        seq = transformer_block(seq, blk)

    # Final LN is per-row; only the cls row is consumed downstream.
    cls_rows = seq[:, 0, :]                                            # (B, D)
    RP = max(8, ((B + 7) // 8) * 8)
    cls_pad = jnp.pad(cls_rows, ((0, RP - B), (0, 0)))                 # (RP, D)
    out = head_fc(cls_pad, params["norm_g"], params["norm_b"],
                  params["head_w"], params["head_b"],
                  params["fc_w"], params["fc_b"])                      # (RP, 512)
    return out[:B]


if __name__ == "__main__":
    key = jax.random.PRNGKey(0)
    pkey, xkey = jax.random.split(key)
    params = init_params(pkey)
    x = jax.random.normal(xkey, (2, IN_CH, IMG, IMG), jnp.float32)

    out = jax.jit(deit_forward)(params, x)
    out = jax.block_until_ready(out)
    assert out.shape == (2, FC_OUT), out.shape
    assert bool(jnp.all(jnp.isfinite(out)))
    print("KERNEL_OK")
</pallas_src>

<mosaic_0001>
module attributes {stable_mosaic.version = 11 : i64} {
  func.func @_patch_kernel(%arg0: i32, %arg1: memref<8x768xf32, #tpu.memory_space<vmem>>, %arg2: memref<768x128xbf16, #tpu.memory_space<vmem>>, %arg3: memref<1x128xf32, #tpu.memory_space<vmem>>, %arg4: memref<8x128xf32, #tpu.memory_space<vmem>>) attributes {dimension_semantics = [#tpu.dimension_semantics<arbitrary>], iteration_bounds = array<i64: 1>, scalar_prefetch = 0 : i64, scratch_operands = 0 : i64, tpu.core_type = #tpu.core_type<tc>, window_params = [{pipeline_mode = #tpu.pipeline_mode<synchronous>, transform_indices = @transform_0, window_bounds = array<i64: 8, 768>}, {pipeline_mode = #tpu.pipeline_mode<synchronous>, transform_indices = @transform_1, window_bounds = array<i64: 768, 128>}, {pipeline_mode = #tpu.pipeline_mode<synchronous>, transform_indices = @transform_2, window_bounds = array<i64: 1, 128>}, {pipeline_mode = #tpu.pipeline_mode<synchronous>, transform_indices = @transform_3, window_bounds = array<i64: 8, 128>}]} {
    %c0 = arith.constant 0 : index
    %c0_0 = arith.constant 0 : index
    %0 = vector.load %arg1[%c0, %c0_0] : memref<8x768xf32, #tpu.memory_space<vmem>>, vector<8x768xf32>
    %1 = arith.truncf %0 : vector<8x768xf32> to vector<8x768xbf16>
    %c0_1 = arith.constant 0 : index
    %c0_2 = arith.constant 0 : index
    %2 = vector.load %arg2[%c0_1, %c0_2] : memref<768x128xbf16, #tpu.memory_space<vmem>>, vector<768x128xbf16>
    %cst = arith.constant dense<0.000000e+00> : vector<8x128xf32>
    %3 = tpu.matmul %1, %2, %cst {dimension_numbers = #tpu.dot_dimension_numbers<[1], [0], [0], [1], [0, 0, 1, 1], [], []>} : vector<8x768xbf16>, vector<768x128xbf16>, vector<8x128xf32> -> vector<8x128xf32>
    %c0_3 = arith.constant 0 : index
    %c0_4 = arith.constant 0 : index
    %4 = vector.load %arg3[%c0_3, %c0_4] : memref<1x128xf32, #tpu.memory_space<vmem>>, vector<1x128xf32>
    %5 = vector.broadcast %4 : vector<1x128xf32> to vector<8x128xf32>
    %6 = arith.addf %3, %5 : vector<8x128xf32>
    %c0_5 = arith.constant 0 : index
    %c0_6 = arith.constant 0 : index
    %7 = vector.load %arg4[%c0_5, %c0_6] : memref<8x128xf32, #tpu.memory_space<vmem>>, vector<8x128xf32>
    tpu.vector_store %arg4[%c0_5, %c0_6], %6 {strides = array<i32>} : memref<8x128xf32, #tpu.memory_space<vmem>>, vector<8x128xf32>,
    return
  }
  func.func @transform_0(%arg0: i32) -> (i32, i32) {
    %c0_i32 = arith.constant 0 : i32
    %c0_i32_0 = arith.constant 0 : i32
    %c0_i32_1 = arith.constant 0 : i32
    return %c0_i32, %c0_i32_0 : i32, i32
  }
  func.func @transform_1(%arg0: i32) -> (i32, i32) {
    %c0_i32 = arith.constant 0 : i32
    %c0_i32_0 = arith.constant 0 : i32
    %c0_i32_1 = arith.constant 0 : i32
    return %c0_i32, %c0_i32_0 : i32, i32
  }
  func.func @transform_2(%arg0: i32) -> (i32, i32) {
    %c0_i32 = arith.constant 0 : i32
    %c0_i32_0 = arith.constant 0 : i32
    %c0_i32_1 = arith.constant 0 : i32
    return %c0_i32, %c0_i32_0 : i32, i32
  }
  func.func @transform_3(%arg0: i32) -> (i32, i32) {
    %c0_i32 = arith.constant 0 : i32
    %c0_i32_0 = arith.constant 0 : i32
    %c0_i32_1 = arith.constant 0 : i32
    return %c0_i32, %c0_i32_0 : i32, i32
  }
}

module attributes {stable_mosaic.version = 11 : i64} {
  func.func @_block_kernel(%arg0: i32, %arg1: memref<1x8x128xf32, #tpu.memory_space<vmem>>, %arg2: memref<1x128xf32, #tpu.memory_space<vmem>>, %arg3: memref<1x128xf32, #tpu.memory_space<vmem>>, %arg4: memref<128x384xbf16, #tpu.memory_space<vmem>>, %arg5: memref<1x384xf32, #tpu.memory_space<vmem>>, %arg6: memref<128x128xbf16, #tpu.memory_space<vmem>>, %arg7: memref<1x128xf32, #tpu.memory_space<vmem>>, %arg8: memref<1x128xf32, #tpu.memory_space<vmem>>, %arg9: memref<1x128xf32, #tpu.memory_space<vmem>>, %arg10: memref<128x512xbf16, #tpu.memory_space<vmem>>, %arg11: memref<1x512xf32, #tpu.memory_space<vmem>>, %arg12: memref<512x128xbf16, #tpu.memory_space<vmem>>, %arg13: memref<1x128xf32, #tpu.memory_space<vmem>>, %arg14: memref<1x8x128xf32, #tpu.memory_space<vmem>>) attributes {dimension_semantics = [#tpu.dimension_semantics<parallel>], iteration_bounds = array<i64: 2>, scalar_prefetch = 0 : i64, scratch_operands = 0 : i64, tpu.core_type = #tpu.core_type<tc>, window_params = [{transform_indices = @transform_0, window_bounds = array<i64: 1, 8, 128>}, {pipeline_mode = #tpu.pipeline_mode<synchronous>, transform_indices = @transform_1, window_bounds = array<i64: 1, 128>}, {pipeline_mode = #tpu.pipeline_mode<synchronous>, transform_indices = @transform_2, window_bounds = array<i64: 1, 128>}, {pipeline_mode = #tpu.pipeline_mode<synchronous>, transform_indices = @transform_3, window_bounds = array<i64: 128, 384>}, {pipeline_mode = #tpu.pipeline_mode<synchronous>, transform_indices = @transform_4, window_bounds = array<i64: 1, 384>}, {pipeline_mode = #tpu.pipeline_mode<synchronous>, transform_indices = @transform_5, window_bounds = array<i64: 128, 128>}, {pipeline_mode = #tpu.pipeline_mode<synchronous>, transform_indices = @transform_6, window_bounds = array<i64: 1, 128>}, {pipeline_mode = #tpu.pipeline_mode<synchronous>, transform_indices = @transform_7, window_bounds = array<i64: 1, 128>}, {pipeline_mode = #tpu.pipeline_mode<synchronous>, transform_indices = @transform_8, window_bounds = array<i64: 1, 128>}, {pipeline_mode = #tpu.pipeline_mode<synchronous>, transform_indices = @transform_9, window_bounds = array<i64: 128, 512>}, {pipeline_mode = #tpu.pipeline_mode<synchronous>, transform_indices = @transform_10, window_bounds = array<i64: 1, 512>}, {pipeline_mode = #tpu.pipeline_mode<synchronous>, transform_indices = @transform_11, window_bounds = array<i64: 512, 128>}, {pipeline_mode = #tpu.pipeline_mode<synchronous>, transform_indices = @transform_12, window_bounds = array<i64: 1, 128>}, {transform_indices = @transform_13, window_bounds = array<i64: 1, 8, 128>}]} {
    %c0 = arith.constant 0 : index
    %c0_0 = arith.constant 0 : index
    %c0_1 = arith.constant 0 : index
    %0 = vector.load %arg1[%c0, %c0_0, %c0_1] : memref<1x8x128xf32, #tpu.memory_space<vmem>>, vector<1x8x128xf32>
    %1 = vector.shape_cast %0 : vector<1x8x128xf32> to vector<8x128xf32>
    %c0_2 = arith.constant 0 : index
    %c0_3 = arith.constant 0 : index
    %2 = vector.load %arg2[%c0_2, %c0_3] : memref<1x128xf32, #tpu.memory_space<vmem>>, vector<1x128xf32>
    %c0_4 = arith.constant 0 : index
    %c0_5 = arith.constant 0 : index
    %3 = vector.load %arg3[%c0_4, %c0_5] : memref<1x128xf32, #tpu.memory_space<vmem>>, vector<1x128xf32>
    %cst = arith.constant dense<0.000000e+00> : vector<8xf32>
    %4 = vector.multi_reduction <add>, %1, %cst [1] : vector<8x128xf32> to vector<8xf32>
    %5 = vector.shape_cast %4 : vector<8xf32> to vector<8x1xf32>
    %cst_6 = arith.constant 1.280000e+02 : f32
    %6 = vector.broadcast %cst_6 : f32 to vector<8x1xf32>
    %7 = arith.divf %5, %6 : vector<8x1xf32>
    %8 = vector.broadcast %7 : vector<8x1xf32> to vector<8x128xf32>
    %9 = arith.subf %1, %8 : vector<8x128xf32>
    %10 = arith.mulf %9, %9 : vector<8x128xf32>
    %cst_7 = arith.constant dense<0.000000e+00> : vector<8xf32>
    %11 = vector.multi_reduction <add>, %10, %cst_7 [1] : vector<8x128xf32> to vector<8xf32>
    %12 = vector.shape_cast %11 : vector<8xf32> to vector<8x1xf32>
    %cst_8 = arith.constant 1.280000e+02 : f32
    %13 = vector.broadcast %cst_8 : f32 to vector<8x1xf32>
    %14 = arith.divf %12, %13 : vector<8x1xf32>
    %15 = vector.broadcast %7 : vector<8x1xf32> to vector<8x128xf32>
    %16 = arith.subf %1, %15 : vector<8x128xf32>
    %cst_9 = arith.constant 9.99999997E-7 : f32
    %17 = vector.broadcast %cst_9 : f32 to vector<8x1xf32>
    %18 = arith.addf %14, %17 : vector<8x1xf32>
    %19 = math.rsqrt %18 : vector<8x1xf32>
    %20 = vector.broadcast %19 : vector<8x1xf32> to vector<8x128xf32>
    %21 = arith.mulf %16, %20 : vector<8x128xf32>
    %22 = vector.broadcast %2 : vector<1x128xf32> to vector<8x128xf32>
    %23 = arith.mulf %21, %22 : vector<8x128xf32>
    %24 = vector.broadcast %3 : vector<1x128xf32> to vector<8x128xf32>
    %25 = arith.addf %23, %24 : vector<8x128xf32>
    %26 = arith.truncf %25 : vector<8x128xf32> to vector<8x128xbf16>
    %c0_10 = arith.constant 0 : index
    %c0_11 = arith.constant 0 : index
    %27 = vector.load %arg4[%c0_10, %c0_11] : memref<128x384xbf16, #tpu.memory_space<vmem>>, vector<128x384xbf16>
    %cst_12 = arith.constant dense<0.000000e+00> : vector<8x384xf32>
    %28 = tpu.matmul %26, %27, %cst_12 {dimension_numbers = #tpu.dot_dimension_numbers<[1], [0], [0], [1], [0, 0, 1, 1], [], []>} : vector<8x128xbf16>, vector<128x384xbf16>, vector<8x384xf32> -> vector<8x384xf32>
    %c0_13 = arith.constant 0 : index
    %c0_14 = arith.constant 0 : index
    %29 = vector.load %arg5[%c0_13, %c0_14] : memref<1x384xf32, #tpu.memory_space<vmem>>, vector<1x384xf32>
    %30 = vector.broadcast %29 : vector<1x384xf32> to vector<8x384xf32>
    %31 = arith.addf %28, %30 : vector<8x384xf32>
    %32 = vector.extract_strided_slice %31 {offsets = [0, 0], sizes = [8, 128], strides = [1, 1]} : vector<8x384xf32> to vector<8x128xf32>
    %33 = vector.extract_strided_slice %31 {offsets = [0, 128], sizes = [8, 128], strides = [1, 1]} : vector<8x384xf32> to vector<8x128xf32>
    %34 = vector.extract_strided_slice %31 {offsets = [0, 256], sizes = [8, 128], strides = [1, 1]} : vector<8x384xf32> to vector<8x128xf32>
    %35 = tpu.iota {dimensions = array<i32: 1>} : vector<8x8xi32>
    %c5_i32 = arith.constant 5 : i32
    %36 = vector.broadcast %c5_i32 : i32 to vector<8x8xi32>
    %37 = arith.cmpi slt, %35, %36 : vector<8x8xi32>
    %c0_15 = arith.constant 0 : index
    %c0_16 = arith.constant 0 : index
    %38 = vector.load %arg6[%c0_15, %c0_16] : memref<128x128xbf16, #tpu.memory_space<vmem>>, vector<128x128xbf16>
    %cst_17 = arith.constant 0.000000e+00 : f32
    %39 = vector.broadcast %cst_17 : f32 to vector<8x128xf32>
    %40 = vector.extract_strided_slice %32 {offsets = [0, 0], sizes = [8, 32], strides = [1, 1]} : vector<8x128xf32> to vector<8x32xf32>
    %41 = arith.truncf %40 : vector<8x32xf32> to vector<8x32xbf16>
    %42 = vector.extract_strided_slice %33 {offsets = [0, 0], sizes = [8, 32], strides = [1, 1]} : vector<8x128xf32> to vector<8x32xf32>
    %43 = arith.truncf %42 : vector<8x32xf32> to vector<8x32xbf16>
    %44 = vector.extract_strided_slice %34 {offsets = [0, 0], sizes = [8, 32], strides = [1, 1]} : vector<8x128xf32> to vector<8x32xf32>
    %45 = arith.truncf %44 : vector<8x32xf32> to vector<8x32xbf16>
    %cst_18 = arith.constant dense<0.000000e+00> : vector<8x8xf32>
    %46 = tpu.matmul %41, %43, %cst_18 {dimension_numbers = #tpu.dot_dimension_numbers<[1], [1], [0], [0], [0, 0, 1, 0], [], []>} : vector<8x32xbf16>, vector<8x32xbf16>, vector<8x8xf32> -> vector<8x8xf32>
    %cst_19 = arith.constant 0.176776692 : f32
    %47 = vector.broadcast %cst_19 : f32 to vector<8x8xf32>
    %48 = arith.mulf %46, %47 : vector<8x8xf32>
    %cst_20 = arith.constant -1.000000e+30 : f32
    %49 = vector.broadcast %cst_20 : f32 to vector<8x8xf32>
    %50 = arith.select %37, %48, %49 : vector<8x8xi1>, vector<8x8xf32>
    %cst_21 = arith.constant dense<0xFF800000> : vector<8xf32>
    %51 = vector.multi_reduction <maximumf>, %50, %cst_21 [1] : vector<8x8xf32> to vector<8xf32>
    %52 = vector.shape_cast %51 : vector<8xf32> to vector<8x1xf32>
    %53 = vector.broadcast %52 : vector<8x1xf32> to vector<8x8xf32>
    %54 = arith.subf %50, %53 : vector<8x8xf32>
    %55 = math.exp %54 : vector<8x8xf32>
    %cst_22 = arith.constant dense<0.000000e+00> : vector<8xf32>
    %56 = vector.multi_reduction <add>, %55, %cst_22 [1] : vector<8x8xf32> to vector<8xf32>
    %57 = vector.shape_cast %56 : vector<8xf32> to vector<8x1xf32>
    %58 = vector.broadcast %57 : vector<8x1xf32> to vector<8x8xf32>
    %59 = arith.divf %55, %58 : vector<8x8xf32>
    %60 = arith.truncf %59 : vector<8x8xf32> to vector<8x8xbf16>
    %cst_23 = arith.constant dense<0.000000e+00> : vector<8x32xf32>
    %61 = tpu.matmul %60, %45, %cst_23 {dimension_numbers = #tpu.dot_dimension_numbers<[1], [0], [0], [1], [0, 0, 1, 1], [], []>} : vector<8x8xbf16>, vector<8x32xbf16>, vector<8x32xf32> -> vector<8x32xf32>
    %62 = arith.truncf %61 : vector<8x32xf32> to vector<8x32xbf16>
    %63 = vector.extract_strided_slice %38 {offsets = [0, 0], sizes = [32, 128], strides = [1, 1]} : vector<128x128xbf16> to vector<32x128xbf16>
    %cst_24 = arith.constant dense<0.000000e+00> : vector<8x128xf32>
    %64 = tpu.matmul %62, %63, %cst_24 {dimension_numbers = #tpu.dot_dimension_numbers<[1], [0], [0], [1], [0, 0, 1, 1], [], []>} : vector<8x32xbf16>, vector<32x128xbf16>, vector<8x128xf32> -> vector<8x128xf32>
    %65 = arith.addf %39, %64 : vector<8x128xf32>
    %66 = vector.extract_strided_slice %32 {offsets = [0, 32], sizes = [8, 32], strides = [1, 1]} : vector<8x128xf32> to vector<8x32xf32>
    %67 = arith.truncf %66 : vector<8x32xf32> to vector<8x32xbf16>
    %68 = vector.extract_strided_slice %33 {offsets = [0, 32], sizes = [8, 32], strides = [1, 1]} : vector<8x128xf32> to vector<8x32xf32>
    %69 = arith.truncf %68 : vector<8x32xf32> to vector<8x32xbf16>
    %70 = vector.extract_strided_slice %34 {offsets = [0, 32], sizes = [8, 32], strides = [1, 1]} : vector<8x128xf32> to vector<8x32xf32>
    %71 = arith.truncf %70 : vector<8x32xf32> to vector<8x32xbf16>
    %cst_25 = arith.constant dense<0.000000e+00> : vector<8x8xf32>
    %72 = tpu.matmul %67, %69, %cst_25 {dimension_numbers = #tpu.dot_dimension_numbers<[1], [1], [0], [0], [0, 0, 1, 0], [], []>} : vector<8x32xbf16>, vector<8x32xbf16>, vector<8x8xf32> -> vector<8x8xf32>
    %cst_26 = arith.constant 0.176776692 : f32
    %73 = vector.broadcast %cst_26 : f32 to vector<8x8xf32>
    %74 = arith.mulf %72, %73 : vector<8x8xf32>
    %cst_27 = arith.constant -1.000000e+30 : f32
    %75 = vector.broadcast %cst_27 : f32 to vector<8x8xf32>
    %76 = arith.select %37, %74, %75 : vector<8x8xi1>, vector<8x8xf32>
    %cst_28 = arith.constant dense<0xFF800000> : vector<8xf32>
    %77 = vector.multi_reduction <maximumf>, %76, %cst_28 [1] : vector<8x8xf32> to vector<8xf32>
    %78 = vector.shape_cast %77 : vector<8xf32> to vector<8x1xf32>
    %79 = vector.broadcast %78 : vector<8x1xf32> to vector<8x8xf32>
    %80 = arith.subf %76, %79 : vector<8x8xf32>
    %81 = math.exp %80 : vector<8x8xf32>
    %cst_29 = arith.constant dense<0.000000e+00> : vector<8xf32>
    %82 = vector.multi_reduction <add>, %81, %cst_29 [1] : vector<8x8xf32> to vector<8xf32>
    %83 = vector.shape_cast %82 : vector<8xf32> to vector<8x1xf32>
    %84 = vector.broadcast %83 : vector<8x1xf32> to vector<8x8xf32>
    %85 = arith.divf %81, %84 : vector<8x8xf32>
    %86 = arith.truncf %85 : vector<8x8xf32> to vector<8x8xbf16>
    %cst_30 = arith.constant dense<0.000000e+00> : vector<8x32xf32>
    %87 = tpu.matmul %86, %71, %cst_30 {dimension_numbers = #tpu.dot_dimension_numbers<[1], [0], [0], [1], [0, 0, 1, 1], [], []>} : vector<8x8xbf16>, vector<8x32xbf16>, vector<8x32xf32> -> vector<8x32xf32>
    %88 = arith.truncf %87 : vector<8x32xf32> to vector<8x32xbf16>
    %89 = vector.extract_strided_slice %38 {offsets = [32, 0], sizes = [32, 128], strides = [1, 1]} : vector<128x128xbf16> to vector<32x128xbf16>
    %cst_31 = arith.constant dense<0.000000e+00> : vector<8x128xf32>
    %90 = tpu.matmul %88, %89, %cst_31 {dimension_numbers = #tpu.dot_dimension_numbers<[1], [0], [0], [1], [0, 0, 1, 1], [], []>} : vector<8x32xbf16>, vector<32x128xbf16>, vector<8x128xf32> -> vector<8x128xf32>
    %91 = arith.addf %65, %90 : vector<8x128xf32>
    %92 = vector.extract_strided_slice %32 {offsets = [0, 64], sizes = [8, 32], strides = [1, 1]} : vector<8x128xf32> to vector<8x32xf32>
    %93 = arith.truncf %92 : vector<8x32xf32> to vector<8x32xbf16>
    %94 = vector.extract_strided_slice %33 {offsets = [0, 64], sizes = [8, 32], strides = [1, 1]} : vector<8x128xf32> to vector<8x32xf32>
    %95 = arith.truncf %94 : vector<8x32xf32> to vector<8x32xbf16>
    %96 = vector.extract_strided_slice %34 {offsets = [0, 64], sizes = [8, 32], strides = [1, 1]} : vector<8x128xf32> to vector<8x32xf32>
    %97 = arith.truncf %96 : vector<8x32xf32> to vector<8x32xbf16>
    %cst_32 = arith.constant dense<0.000000e+00> : vector<8x8xf32>
    %98 = tpu.matmul %93, %95, %cst_32 {dimension_numbers = #tpu.dot_dimension_numbers<[1], [1], [0], [0], [0, 0, 1, 0], [], []>} : vector<8x32xbf16>, vector<8x32xbf16>, vector<8x8xf32> -> vector<8x8xf32>
    %cst_33 = arith.constant 0.176776692 : f32
    %99 = vector.broadcast %cst_33 : f32 to vector<8x8xf32>
    %100 = arith.mulf %98, %99 : vector<8x8xf32>
    %cst_34 = arith.constant -1.000000e+30 : f32
    %101 = vector.broadcast %cst_34 : f32 to vector<8x8xf32>
    %102 = arith.select %37, %100, %101 : vector<8x8xi1>, vector<8x8xf32>
    %cst_35 = arith.constant dense<0xFF800000> : vector<8xf32>
    %103 = vector.multi_reduction <maximumf>, %102, %cst_35 [1] : vector<8x8xf32> to vector<8xf32>
    %104 = vector.shape_cast %103 : vector<8xf32> to vector<8x1xf32>
    %105 = vector.broadcast %104 : vector<8x1xf32> to vector<8x8xf32>
    %106 = arith.subf %102, %105 : vector<8x8xf32>
    %107 = math.exp %106 : vector<8x8xf32>
    %cst_36 = arith.constant dense<0.000000e+00> : vector<8xf32>
    %108 = vector.multi_reduction <add>, %107, %cst_36 [1] : vector<8x8xf32> to vector<8xf32>
    %109 = vector.shape_cast %108 : vector<8xf32> to vector<8x1xf32>
    %110 = vector.broadcast %109 : vector<8x1xf32> to vector<8x8xf32>
    %111 = arith.divf %107, %110 : vector<8x8xf32>
    %112 = arith.truncf %111 : vector<8x8xf32> to vector<8x8xbf16>
    %cst_37 = arith.constant dense<0.000000e+00> : vector<8x32xf32>
    %113 = tpu.matmul %112, %97, %cst_37 {dimension_numbers = #tpu.dot_dimension_numbers<[1], [0], [0], [1], [0, 0, 1, 1], [], []>} : vector<8x8xbf16>, vector<8x32xbf16>, vector<8x32xf32> -> vector<8x32xf32>
    %114 = arith.truncf %113 : vector<8x32xf32> to vector<8x32xbf16>
    %115 = vector.extract_strided_slice %38 {offsets = [64, 0], sizes = [32, 128], strides = [1, 1]} : vector<128x128xbf16> to vector<32x128xbf16>
    %cst_38 = arith.constant dense<0.000000e+00> : vector<8x128xf32>
    %116 = tpu.matmul %114, %115, %cst_38 {dimension_numbers = #tpu.dot_dimension_numbers<[1], [0], [0], [1], [0, 0, 1, 1], [], []>} : vector<8x32xbf16>, vector<32x128xbf16>, vector<8x128xf32> -> vector<8x128xf32>
    %117 = arith.addf %91, %116 : vector<8x128xf32>
    %118 = vector.extract_strided_slice %32 {offsets = [0, 96], sizes = [8, 32], strides = [1, 1]} : vector<8x128xf32> to vector<8x32xf32>
    %119 = arith.truncf %118 : vector<8x32xf32> to vector<8x32xbf16>
    %120 = vector.extract_strided_slice %33 {offsets = [0, 96], sizes = [8, 32], strides = [1, 1]} : vector<8x128xf32> to vector<8x32xf32>
    %121 = arith.truncf %120 : vector<8x32xf32> to vector<8x32xbf16>
    %122 = vector.extract_strided_slice %34 {offsets = [0, 96], sizes = [8, 32], strides = [1, 1]} : vector<8x128xf32> to vector<8x32xf32>
    %123 = arith.truncf %122 : vector<8x32xf32> to vector<8x32xbf16>
    %cst_39 = arith.constant dense<0.000000e+00> : vector<8x8xf32>
    %124 = tpu.matmul %119, %121, %cst_39 {dimension_numbers = #tpu.dot_dimension_numbers<[1], [1], [0], [0], [0, 0, 1, 0], [], []>} : vector<8x32xbf16>, vector<8x32xbf16>, vector<8x8xf32> -> vector<8x8xf32>
    %cst_40 = arith.constant 0.176776692 : f32
    %125 = vector.broadcast %cst_40 : f32 to vector<8x8xf32>
    %126 = arith.mulf %124, %125 : vector<8x8xf32>
    %cst_41 = arith.constant -1.000000e+30 : f32
    %127 = vector.broadcast %cst_41 : f32 to vector<8x8xf32>
    %128 = arith.select %37, %126, %127 : vector<8x8xi1>, vector<8x8xf32>
    %cst_42 = arith.constant dense<0xFF800000> : vector<8xf32>
    %129 = vector.multi_reduction <maximumf>, %128, %cst_42 [1] : vector<8x8xf32> to vector<8xf32>
    %130 = vector.shape_cast %129 : vector<8xf32> to vector<8x1xf32>
    %131 = vector.broadcast %130 : vector<8x1xf32> to vector<8x8xf32>
    %132 = arith.subf %128, %131 : vector<8x8xf32>
    %133 = math.exp %132 : vector<8x8xf32>
    %cst_43 = arith.constant dense<0.000000e+00> : vector<8xf32>
    %134 = vector.multi_reduction <add>, %133, %cst_43 [1] : vector<8x8xf32> to vector<8xf32>
    %135 = vector.shape_cast %134 : vector<8xf32> to vector<8x1xf32>
    %136 = vector.broadcast %135 : vector<8x1xf32> to vector<8x8xf32>
    %137 = arith.divf %133, %136 : vector<8x8xf32>
    %138 = arith.truncf %137 : vector<8x8xf32> to vector<8x8xbf16>
    %cst_44 = arith.constant dense<0.000000e+00> : vector<8x32xf32>
    %139 = tpu.matmul %138, %123, %cst_44 {dimension_numbers = #tpu.dot_dimension_numbers<[1], [0], [0], [1], [0, 0, 1, 1], [], []>} : vector<8x8xbf16>, vector<8x32xbf16>, vector<8x32xf32> -> vector<8x32xf32>
    %140 = arith.truncf %139 : vector<8x32xf32> to vector<8x32xbf16>
    %141 = vector.extract_strided_slice %38 {offsets = [96, 0], sizes = [32, 128], strides = [1, 1]} : vector<128x128xbf16> to vector<32x128xbf16>
    %cst_45 = arith.constant dense<0.000000e+00> : vector<8x128xf32>
    %142 = tpu.matmul %140, %141, %cst_45 {dimension_numbers = #tpu.dot_dimension_numbers<[1], [0], [0], [1], [0, 0, 1, 1], [], []>} : vector<8x32xbf16>, vector<32x128xbf16>, vector<8x128xf32> -> vector<8x128xf32>
    %143 = arith.addf %117, %142 : vector<8x128xf32>
    %144 = arith.addf %1, %143 : vector<8x128xf32>
    %c0_46 = arith.constant 0 : index
    %c0_47 = arith.constant 0 : index
    %145 = vector.load %arg7[%c0_46, %c0_47] : memref<1x128xf32, #tpu.memory_space<vmem>>, vector<1x128xf32>
    %146 = vector.broadcast %145 : vector<1x128xf32> to vector<8x128xf32>
    %147 = arith.addf %144, %146 : vector<8x128xf32>
    %c0_48 = arith.constant 0 : index
    %c0_49 = arith.constant 0 : index
    %148 = vector.load %arg8[%c0_48, %c0_49] : memref<1x128xf32, #tpu.memory_space<vmem>>, vector<1x128xf32>
    %c0_50 = arith.constant 0 : index
    %c0_51 = arith.constant 0 : index
    %149 = vector.load %arg9[%c0_50, %c0_51] : memref<1x128xf32, #tpu.memory_space<vmem>>, vector<1x128xf32>
    %cst_52 = arith.constant dense<0.000000e+00> : vector<8xf32>
    %150 = vector.multi_reduction <add>, %147, %cst_52 [1] : vector<8x128xf32> to vector<8xf32>
    %151 = vector.shape_cast %150 : vector<8xf32> to vector<8x1xf32>
    %cst_53 = arith.constant 1.280000e+02 : f32
    %152 = vector.broadcast %cst_53 : f32 to vector<8x1xf32>
    %153 = arith.divf %151, %152 : vector<8x1xf32>
    %154 = vector.broadcast %153 : vector<8x1xf32> to vector<8x128xf32>
    %155 = arith.subf %147, %154 : vector<8x128xf32>
    %156 = arith.mulf %155, %155 : vector<8x128xf32>
    %cst_54 = arith.constant dense<0.000000e+00> : vector<8xf32>
    %157 = vector.multi_reduction <add>, %156, %cst_54 [1] : vector<8x128xf32> to vector<8xf32>
    %158 = vector.shape_cast %157 : vector<8xf32> to vector<8x1xf32>
    %cst_55 = arith.constant 1.280000e+02 : f32
    %159 = vector.broadcast %cst_55 : f32 to vector<8x1xf32>
    %160 = arith.divf %158, %159 : vector<8x1xf32>
    %161 = vector.broadcast %153 : vector<8x1xf32> to vector<8x128xf32>
    %162 = arith.subf %147, %161 : vector<8x128xf32>
    %cst_56 = arith.constant 9.99999997E-7 : f32
    %163 = vector.broadcast %cst_56 : f32 to vector<8x1xf32>
    %164 = arith.addf %160, %163 : vector<8x1xf32>
    %165 = math.rsqrt %164 : vector<8x1xf32>
    %166 = vector.broadcast %165 : vector<8x1xf32> to vector<8x128xf32>
    %167 = arith.mulf %162, %166 : vector<8x128xf32>
    %168 = vector.broadcast %148 : vector<1x128xf32> to vector<8x128xf32>
    %169 = arith.mulf %167, %168 : vector<8x128xf32>
    %170 = vector.broadcast %149 : vector<1x128xf32> to vector<8x128xf32>
    %171 = arith.addf %169, %170 : vector<8x128xf32>
    %172 = arith.truncf %171 : vector<8x128xf32> to vector<8x128xbf16>
    %c0_57 = arith.constant 0 : index
    %c0_58 = arith.constant 0 : index
    %173 = vector.load %arg10[%c0_57, %c0_58] : memref<128x512xbf16, #tpu.memory_space<vmem>>, vector<128x512xbf16>
    %cst_59 = arith.constant dense<0.000000e+00> : vector<8x512xf32>
    %174 = tpu.matmul %172, %173, %cst_59 {dimension_numbers = #tpu.dot_dimension_numbers<[1], [0], [0], [1], [0, 0, 1, 1], [], []>} : vector<8x128xbf16>, vector<128x512xbf16>, vector<8x512xf32> -> vector<8x512xf32>
    %c0_60 = arith.constant 0 : index
    %c0_61 = arith.constant 0 : index
    %175 = vector.load %arg11[%c0_60, %c0_61] : memref<1x512xf32, #tpu.memory_space<vmem>>, vector<1x512xf32>
    %176 = vector.broadcast %175 : vector<1x512xf32> to vector<8x512xf32>
    %177 = arith.addf %174, %176 : vector<8x512xf32>
    %cst_62 = arith.constant 5.000000e-01 : f32
    %178 = vector.broadcast %cst_62 : f32 to vector<8x512xf32>
    %179 = arith.mulf %178, %177 : vector<8x512xf32>
    %cst_63 = arith.constant 0.707106769 : f32
    %180 = vector.broadcast %cst_63 : f32 to vector<8x512xf32>
    %181 = arith.mulf %177, %180 : vector<8x512xf32>
    %182 = math.erf %181 : vector<8x512xf32>
    %cst_64 = arith.constant 1.000000e+00 : f32
    %183 = vector.broadcast %cst_64 : f32 to vector<8x512xf32>
    %184 = arith.addf %183, %182 : vector<8x512xf32>
    %185 = arith.mulf %179, %184 : vector<8x512xf32>
    %186 = arith.truncf %185 : vector<8x512xf32> to vector<8x512xbf16>
    %c0_65 = arith.constant 0 : index
    %c0_66 = arith.constant 0 : index
    %187 = vector.load %arg12[%c0_65, %c0_66] : memref<512x128xbf16, #tpu.memory_space<vmem>>, vector<512x128xbf16>
    %cst_67 = arith.constant dense<0.000000e+00> : vector<8x128xf32>
    %188 = tpu.matmul %186, %187, %cst_67 {dimension_numbers = #tpu.dot_dimension_numbers<[1], [0], [0], [1], [0, 0, 1, 1], [], []>} : vector<8x512xbf16>, vector<512x128xbf16>, vector<8x128xf32> -> vector<8x128xf32>
    %c0_68 = arith.constant 0 : index
    %c0_69 = arith.constant 0 : index
    %189 = vector.load %arg13[%c0_68, %c0_69] : memref<1x128xf32, #tpu.memory_space<vmem>>, vector<1x128xf32>
    %190 = vector.broadcast %189 : vector<1x128xf32> to vector<8x128xf32>
    %191 = arith.addf %188, %190 : vector<8x128xf32>
    %192 = arith.addf %147, %191 : vector<8x128xf32>
    %c0_70 = arith.constant 0 : index
    %c0_71 = arith.constant 0 : index
    %c0_72 = arith.constant 0 : index
    %193 = vector.load %arg14[%c0_70, %c0_71, %c0_72] : memref<1x8x128xf32, #tpu.memory_space<vmem>>, vector<1x8x128xf32>
    %194 = vector.shape_cast %193 : vector<1x8x128xf32> to vector<8x128xf32>
    %195 = vector.shape_cast %192 : vector<8x128xf32> to vector<1x8x128xf32>
    tpu.vector_store %arg14[%c0_70, %c0_71, %c0_72], %195 {strides = array<i32>} : memref<1x8x128xf32, #tpu.memory_space<vmem>>, vector<1x8x128xf32>,
    return
  }
  func.func @transform_0(%arg0: i32) -> (i32, i32, i32) {
    %c0_i32 = arith.constant 0 : i32
    %c0_i32_0 = arith.constant 0 : i32
    %c0_i32_1 = arith.constant 0 : i32
    return %arg0, %c0_i32, %c0_i32_0 : i32, i32, i32
  }
  func.func @transform_1(%arg0: i32) -> (i32, i32) {
    %c0_i32 = arith.constant 0 : i32
    %c0_i32_0 = arith.constant 0 : i32
    %c0_i32_1 = arith.constant 0 : i32
    return %c0_i32, %c0_i32_0 : i32, i32
  }
  func.func @transform_2(%arg0: i32) -> (i32, i32) {
    %c0_i32 = arith.constant 0 : i32
    %c0_i32_0 = arith.constant 0 : i32
    %c0_i32_1 = arith.constant 0 : i32
    return %c0_i32, %c0_i32_0 : i32, i32
  }
  func.func @transform_3(%arg0: i32) -> (i32, i32) {
    %c0_i32 = arith.constant 0 : i32
    %c0_i32_0 = arith.constant 0 : i32
    %c0_i32_1 = arith.constant 0 : i32
    return %c0_i32, %c0_i32_0 : i32, i32
  }
  func.func @transform_4(%arg0: i32) -> (i32, i32) {
    %c0_i32 = arith.constant 0 : i32
    %c0_i32_0 = arith.constant 0 : i32
    %c0_i32_1 = arith.constant 0 : i32
    return %c0_i32, %c0_i32_0 : i32, i32
  }
  func.func @transform_5(%arg0: i32) -> (i32, i32) {
    %c0_i32 = arith.constant 0 : i32
    %c0_i32_0 = arith.constant 0 : i32
    %c0_i32_1 = arith.constant 0 : i32
    return %c0_i32, %c0_i32_0 : i32, i32
  }
  func.func @transform_6(%arg0: i32) -> (i32, i32) {
    %c0_i32 = arith.constant 0 : i32
    %c0_i32_0 = arith.constant 0 : i32
    %c0_i32_1 = arith.constant 0 : i32
    return %c0_i32, %c0_i32_0 : i32, i32
  }
  func.func @transform_7(%arg0: i32) -> (i32, i32) {
    %c0_i32 = arith.constant 0 : i32
    %c0_i32_0 = arith.constant 0 : i32
    %c0_i32_1 = arith.constant 0 : i32
    return %c0_i32, %c0_i32_0 : i32, i32
  }
  func.func @transform_8(%arg0: i32) -> (i32, i32) {
    %c0_i32 = arith.constant 0 : i32
    %c0_i32_0 = arith.constant 0 : i32
    %c0_i32_1 = arith.constant 0 : i32
    return %c0_i32, %c0_i32_0 : i32, i32
  }
  func.func @transform_9(%arg0: i32) -> (i32, i32) {
    %c0_i32 = arith.constant 0 : i32
    %c0_i32_0 = arith.constant 0 : i32
    %c0_i32_1 = arith.constant 0 : i32
    return %c0_i32, %c0_i32_0 : i32, i32
  }
  func.func @transform_10(%arg0: i32) -> (i32, i32) {
    %c0_i32 = arith.constant 0 : i32
    %c0_i32_0 = arith.constant 0 : i32
    %c0_i32_1 = arith.constant 0 : i32
    return %c0_i32, %c0_i32_0 : i32, i32
  }
  func.func @transform_11(%arg0: i32) -> (i32, i32) {
    %c0_i32 = arith.constant 0 : i32
    %c0_i32_0 = arith.constant 0 : i32
    %c0_i32_1 = arith.constant 0 : i32
    return %c0_i32, %c0_i32_0 : i32, i32
  }
  func.func @transform_12(%arg0: i32) -> (i32, i32) {
    %c0_i32 = arith.constant 0 : i32
    %c0_i32_0 = arith.constant 0 : i32
    %c0_i32_1 = arith.constant 0 : i32
    return %c0_i32, %c0_i32_0 : i32, i32
  }
  func.func @transform_13(%arg0: i32) -> (i32, i32, i32) {
    %c0_i32 = arith.constant 0 : i32
    %c0_i32_0 = arith.constant 0 : i32
    %c0_i32_1 = arith.constant 0 : i32
    return %arg0, %c0_i32, %c0_i32_0 : i32, i32, i32
  }
}

module attributes {stable_mosaic.version = 11 : i64} {
  func.func @_block_kernel(%arg0: i32, %arg1: memref<1x8x128xf32, #tpu.memory_space<vmem>>, %arg2: memref<1x128xf32, #tpu.memory_space<vmem>>, %arg3: memref<1x128xf32, #tpu.memory_space<vmem>>, %arg4: memref<128x384xbf16, #tpu.memory_space<vmem>>, %arg5: memref<1x384xf32, #tpu.memory_space<vmem>>, %arg6: memref<128x128xbf16, #tpu.memory_space<vmem>>, %arg7: memref<1x128xf32, #tpu.memory_space<vmem>>, %arg8: memref<1x128xf32, #tpu.memory_space<vmem>>, %arg9: memref<1x128xf32, #tpu.memory_space<vmem>>, %arg10: memref<128x512xbf16, #tpu.memory_space<vmem>>, %arg11: memref<1x512xf32, #tpu.memory_space<vmem>>, %arg12: memref<512x128xbf16, #tpu.memory_space<vmem>>, %arg13: memref<1x128xf32, #tpu.memory_space<vmem>>, %arg14: memref<1x8x128xf32, #tpu.memory_space<vmem>>) attributes {dimension_semantics = [#tpu.dimension_semantics<parallel>], iteration_bounds = array<i64: 2>, scalar_prefetch = 0 : i64, scratch_operands = 0 : i64, tpu.core_type = #tpu.core_type<tc>, window_params = [{transform_indices = @transform_0, window_bounds = array<i64: 1, 8, 128>}, {pipeline_mode = #tpu.pipeline_mode<synchronous>, transform_indices = @transform_1, window_bounds = array<i64: 1, 128>}, {pipeline_mode = #tpu.pipeline_mode<synchronous>, transform_indices = @transform_2, window_bounds = array<i64: 1, 128>}, {pipeline_mode = #tpu.pipeline_mode<synchronous>, transform_indices = @transform_3, window_bounds = array<i64: 128, 384>}, {pipeline_mode = #tpu.pipeline_mode<synchronous>, transform_indices = @transform_4, window_bounds = array<i64: 1, 384>}, {pipeline_mode = #tpu.pipeline_mode<synchronous>, transform_indices = @transform_5, window_bounds = array<i64: 128, 128>}, {pipeline_mode = #tpu.pipeline_mode<synchronous>, transform_indices = @transform_6, window_bounds = array<i64: 1, 128>}, {pipeline_mode = #tpu.pipeline_mode<synchronous>, transform_indices = @transform_7, window_bounds = array<i64: 1, 128>}, {pipeline_mode = #tpu.pipeline_mode<synchronous>, transform_indices = @transform_8, window_bounds = array<i64: 1, 128>}, {pipeline_mode = #tpu.pipeline_mode<synchronous>, transform_indices = @transform_9, window_bounds = array<i64: 128, 512>}, {pipeline_mode = #tpu.pipeline_mode<synchronous>, transform_indices = @transform_10, window_bounds = array<i64: 1, 512>}, {pipeline_mode = #tpu.pipeline_mode<synchronous>, transform_indices = @transform_11, window_bounds = array<i64: 512, 128>}, {pipeline_mode = #tpu.pipeline_mode<synchronous>, transform_indices = @transform_12, window_bounds = array<i64: 1, 128>}, {transform_indices = @transform_13, window_bounds = array<i64: 1, 8, 128>}]} {
    %c0 = arith.constant 0 : index
    %c0_0 = arith.constant 0 : index
    %c0_1 = arith.constant 0 : index
    %0 = vector.load %arg1[%c0, %c0_0, %c0_1] : memref<1x8x128xf32, #tpu.memory_space<vmem>>, vector<1x8x128xf32>
    %1 = vector.shape_cast %0 : vector<1x8x128xf32> to vector<8x128xf32>
    %c0_2 = arith.constant 0 : index
    %c0_3 = arith.constant 0 : index
    %2 = vector.load %arg2[%c0_2, %c0_3] : memref<1x128xf32, #tpu.memory_space<vmem>>, vector<1x128xf32>
    %c0_4 = arith.constant 0 : index
    %c0_5 = arith.constant 0 : index
    %3 = vector.load %arg3[%c0_4, %c0_5] : memref<1x128xf32, #tpu.memory_space<vmem>>, vector<1x128xf32>
    %cst = arith.constant dense<0.000000e+00> : vector<8xf32>
    %4 = vector.multi_reduction <add>, %1, %cst [1] : vector<8x128xf32> to vector<8xf32>
    %5 = vector.shape_cast %4 : vector<8xf32> to vector<8x1xf32>
    %cst_6 = arith.constant 1.280000e+02 : f32
    %6 = vector.broadcast %cst_6 : f32 to vector<8x1xf32>
    %7 = arith.divf %5, %6 : vector<8x1xf32>
    %8 = vector.broadcast %7 : vector<8x1xf32> to vector<8x128xf32>
    %9 = arith.subf %1, %8 : vector<8x128xf32>
    %10 = arith.mulf %9, %9 : vector<8x128xf32>
    %cst_7 = arith.constant dense<0.000000e+00> : vector<8xf32>
    %11 = vector.multi_reduction <add>, %10, %cst_7 [1] : vector<8x128xf32> to vector<8xf32>
    %12 = vector.shape_cast %11 : vector<8xf32> to vector<8x1xf32>
    %cst_8 = arith.constant 1.280000e+02 : f32
    %13 = vector.broadcast %cst_8 : f32 to vector<8x1xf32>
    %14 = arith.divf %12, %13 : vector<8x1xf32>
    %15 = vector.broadcast %7 : vector<8x1xf32> to vector<8x128xf32>
    %16 = arith.subf %1, %15 : vector<8x128xf32>
    %cst_9 = arith.constant 9.99999997E-7 : f32
    %17 = vector.broadcast %cst_9 : f32 to vector<8x1xf32>
    %18 = arith.addf %14, %17 : vector<8x1xf32>
    %19 = math.rsqrt %18 : vector<8x1xf32>
    %20 = vector.broadcast %19 : vector<8x1xf32> to vector<8x128xf32>
    %21 = arith.mulf %16, %20 : vector<8x128xf32>
    %22 = vector.broadcast %2 : vector<1x128xf32> to vector<8x128xf32>
    %23 = arith.mulf %21, %22 : vector<8x128xf32>
    %24 = vector.broadcast %3 : vector<1x128xf32> to vector<8x128xf32>
    %25 = arith.addf %23, %24 : vector<8x128xf32>
    %26 = arith.truncf %25 : vector<8x128xf32> to vector<8x128xbf16>
    %c0_10 = arith.constant 0 : index
    %c0_11 = arith.constant 0 : index
    %27 = vector.load %arg4[%c0_10, %c0_11] : memref<128x384xbf16, #tpu.memory_space<vmem>>, vector<128x384xbf16>
    %cst_12 = arith.constant dense<0.000000e+00> : vector<8x384xf32>
    %28 = tpu.matmul %26, %27, %cst_12 {dimension_numbers = #tpu.dot_dimension_numbers<[1], [0], [0], [1], [0, 0, 1, 1], [], []>} : vector<8x128xbf16>, vector<128x384xbf16>, vector<8x384xf32> -> vector<8x384xf32>
    %c0_13 = arith.constant 0 : index
    %c0_14 = arith.constant 0 : index
    %29 = vector.load %arg5[%c0_13, %c0_14] : memref<1x384xf32, #tpu.memory_space<vmem>>, vector<1x384xf32>
    %30 = vector.broadcast %29 : vector<1x384xf32> to vector<8x384xf32>
    %31 = arith.addf %28, %30 : vector<8x384xf32>
    %32 = vector.extract_strided_slice %31 {offsets = [0, 0], sizes = [8, 128], strides = [1, 1]} : vector<8x384xf32> to vector<8x128xf32>
    %33 = vector.extract_strided_slice %31 {offsets = [0, 128], sizes = [8, 128], strides = [1, 1]} : vector<8x384xf32> to vector<8x128xf32>
    %34 = vector.extract_strided_slice %31 {offsets = [0, 256], sizes = [8, 128], strides = [1, 1]} : vector<8x384xf32> to vector<8x128xf32>
    %35 = tpu.iota {dimensions = array<i32: 1>} : vector<8x8xi32>
    %c5_i32 = arith.constant 5 : i32
    %36 = vector.broadcast %c5_i32 : i32 to vector<8x8xi32>
    %37 = arith.cmpi slt, %35, %36 : vector<8x8xi32>
    %c0_15 = arith.constant 0 : index
    %c0_16 = arith.constant 0 : index
    %38 = vector.load %arg6[%c0_15, %c0_16] : memref<128x128xbf16, #tpu.memory_space<vmem>>, vector<128x128xbf16>
    %cst_17 = arith.constant 0.000000e+00 : f32
    %39 = vector.broadcast %cst_17 : f32 to vector<8x128xf32>
    %40 = vector.extract_strided_slice %32 {offsets = [0, 0], sizes = [8, 32], strides = [1, 1]} : vector<8x128xf32> to vector<8x32xf32>
    %41 = arith.truncf %40 : vector<8x32xf32> to vector<8x32xbf16>
    %42 = vector.extract_strided_slice %33 {offsets = [0, 0], sizes = [8, 32], strides = [1, 1]} : vector<8x128xf32> to vector<8x32xf32>
    %43 = arith.truncf %42 : vector<8x32xf32> to vector<8x32xbf16>
    %44 = vector.extract_strided_slice %34 {offsets = [0, 0], sizes = [8, 32], strides = [1, 1]} : vector<8x128xf32> to vector<8x32xf32>
    %45 = arith.truncf %44 : vector<8x32xf32> to vector<8x32xbf16>
    %cst_18 = arith.constant dense<0.000000e+00> : vector<8x8xf32>
    %46 = tpu.matmul %41, %43, %cst_18 {dimension_numbers = #tpu.dot_dimension_numbers<[1], [1], [0], [0], [0, 0, 1, 0], [], []>} : vector<8x32xbf16>, vector<8x32xbf16>, vector<8x8xf32> -> vector<8x8xf32>
    %cst_19 = arith.constant 0.176776692 : f32
    %47 = vector.broadcast %cst_19 : f32 to vector<8x8xf32>
    %48 = arith.mulf %46, %47 : vector<8x8xf32>
    %cst_20 = arith.constant -1.000000e+30 : f32
    %49 = vector.broadcast %cst_20 : f32 to vector<8x8xf32>
    %50 = arith.select %37, %48, %49 : vector<8x8xi1>, vector<8x8xf32>
    %cst_21 = arith.constant dense<0xFF800000> : vector<8xf32>
    %51 = vector.multi_reduction <maximumf>, %50, %cst_21 [1] : vector<8x8xf32> to vector<8xf32>
    %52 = vector.shape_cast %51 : vector<8xf32> to vector<8x1xf32>
    %53 = vector.broadcast %52 : vector<8x1xf32> to vector<8x8xf32>
    %54 = arith.subf %50, %53 : vector<8x8xf32>
    %55 = math.exp %54 : vector<8x8xf32>
    %cst_22 = arith.constant dense<0.000000e+00> : vector<8xf32>
    %56 = vector.multi_reduction <add>, %55, %cst_22 [1] : vector<8x8xf32> to vector<8xf32>
    %57 = vector.shape_cast %56 : vector<8xf32> to vector<8x1xf32>
    %58 = vector.broadcast %57 : vector<8x1xf32> to vector<8x8xf32>
    %59 = arith.divf %55, %58 : vector<8x8xf32>
    %60 = arith.truncf %59 : vector<8x8xf32> to vector<8x8xbf16>
    %cst_23 = arith.constant dense<0.000000e+00> : vector<8x32xf32>
    %61 = tpu.matmul %60, %45, %cst_23 {dimension_numbers = #tpu.dot_dimension_numbers<[1], [0], [0], [1], [0, 0, 1, 1], [], []>} : vector<8x8xbf16>, vector<8x32xbf16>, vector<8x32xf32> -> vector<8x32xf32>
    %62 = arith.truncf %61 : vector<8x32xf32> to vector<8x32xbf16>
    %63 = vector.extract_strided_slice %38 {offsets = [0, 0], sizes = [32, 128], strides = [1, 1]} : vector<128x128xbf16> to vector<32x128xbf16>
    %cst_24 = arith.constant dense<0.000000e+00> : vector<8x128xf32>
    %64 = tpu.matmul %62, %63, %cst_24 {dimension_numbers = #tpu.dot_dimension_numbers<[1], [0], [0], [1], [0, 0, 1, 1], [], []>} : vector<8x32xbf16>, vector<32x128xbf16>, vector<8x128xf32> -> vector<8x128xf32>
    %65 = arith.addf %39, %64 : vector<8x128xf32>
    %66 = vector.extract_strided_slice %32 {offsets = [0, 32], sizes = [8, 32], strides = [1, 1]} : vector<8x128xf32> to vector<8x32xf32>
    %67 = arith.truncf %66 : vector<8x32xf32> to vector<8x32xbf16>
    %68 = vector.extract_strided_slice %33 {offsets = [0, 32], sizes = [8, 32], strides = [1, 1]} : vector<8x128xf32> to vector<8x32xf32>
    %69 = arith.truncf %68 : vector<8x32xf32> to vector<8x32xbf16>
    %70 = vector.extract_strided_slice %34 {offsets = [0, 32], sizes = [8, 32], strides = [1, 1]} : vector<8x128xf32> to vector<8x32xf32>
    %71 = arith.truncf %70 : vector<8x32xf32> to vector<8x32xbf16>
    %cst_25 = arith.constant dense<0.000000e+00> : vector<8x8xf32>
    %72 = tpu.matmul %67, %69, %cst_25 {dimension_numbers = #tpu.dot_dimension_numbers<[1], [1], [0], [0], [0, 0, 1, 0], [], []>} : vector<8x32xbf16>, vector<8x32xbf16>, vector<8x8xf32> -> vector<8x8xf32>
    %cst_26 = arith.constant 0.176776692 : f32
    %73 = vector.broadcast %cst_26 : f32 to vector<8x8xf32>
    %74 = arith.mulf %72, %73 : vector<8x8xf32>
    %cst_27 = arith.constant -1.000000e+30 : f32
    %75 = vector.broadcast %cst_27 : f32 to vector<8x8xf32>
    %76 = arith.select %37, %74, %75 : vector<8x8xi1>, vector<8x8xf32>
    %cst_28 = arith.constant dense<0xFF800000> : vector<8xf32>
    %77 = vector.multi_reduction <maximumf>, %76, %cst_28 [1] : vector<8x8xf32> to vector<8xf32>
    %78 = vector.shape_cast %77 : vector<8xf32> to vector<8x1xf32>
    %79 = vector.broadcast %78 : vector<8x1xf32> to vector<8x8xf32>
    %80 = arith.subf %76, %79 : vector<8x8xf32>
    %81 = math.exp %80 : vector<8x8xf32>
    %cst_29 = arith.constant dense<0.000000e+00> : vector<8xf32>
    %82 = vector.multi_reduction <add>, %81, %cst_29 [1] : vector<8x8xf32> to vector<8xf32>
    %83 = vector.shape_cast %82 : vector<8xf32> to vector<8x1xf32>
    %84 = vector.broadcast %83 : vector<8x1xf32> to vector<8x8xf32>
    %85 = arith.divf %81, %84 : vector<8x8xf32>
    %86 = arith.truncf %85 : vector<8x8xf32> to vector<8x8xbf16>
    %cst_30 = arith.constant dense<0.000000e+00> : vector<8x32xf32>
    %87 = tpu.matmul %86, %71, %cst_30 {dimension_numbers = #tpu.dot_dimension_numbers<[1], [0], [0], [1], [0, 0, 1, 1], [], []>} : vector<8x8xbf16>, vector<8x32xbf16>, vector<8x32xf32> -> vector<8x32xf32>
    %88 = arith.truncf %87 : vector<8x32xf32> to vector<8x32xbf16>
    %89 = vector.extract_strided_slice %38 {offsets = [32, 0], sizes = [32, 128], strides = [1, 1]} : vector<128x128xbf16> to vector<32x128xbf16>
    %cst_31 = arith.constant dense<0.000000e+00> : vector<8x128xf32>
    %90 = tpu.matmul %88, %89, %cst_31 {dimension_numbers = #tpu.dot_dimension_numbers<[1], [0], [0], [1], [0, 0, 1, 1], [], []>} : vector<8x32xbf16>, vector<32x128xbf16>, vector<8x128xf32> -> vector<8x128xf32>
    %91 = arith.addf %65, %90 : vector<8x128xf32>
    %92 = vector.extract_strided_slice %32 {offsets = [0, 64], sizes = [8, 32], strides = [1, 1]} : vector<8x128xf32> to vector<8x32xf32>
    %93 = arith.truncf %92 : vector<8x32xf32> to vector<8x32xbf16>
    %94 = vector.extract_strided_slice %33 {offsets = [0, 64], sizes = [8, 32], strides = [1, 1]} : vector<8x128xf32> to vector<8x32xf32>
    %95 = arith.truncf %94 : vector<8x32xf32> to vector<8x32xbf16>
    %96 = vector.extract_strided_slice %34 {offsets = [0, 64], sizes = [8, 32], strides = [1, 1]} : vector<8x128xf32> to vector<8x32xf32>
    %97 = arith.truncf %96 : vector<8x32xf32> to vector<8x32xbf16>
    %cst_32 = arith.constant dense<0.000000e+00> : vector<8x8xf32>
    %98 = tpu.matmul %93, %95, %cst_32 {dimension_numbers = #tpu.dot_dimension_numbers<[1], [1], [0], [0], [0, 0, 1, 0], [], []>} : vector<8x32xbf16>, vector<8x32xbf16>, vector<8x8xf32> -> vector<8x8xf32>
    %cst_33 = arith.constant 0.176776692 : f32
    %99 = vector.broadcast %cst_33 : f32 to vector<8x8xf32>
    %100 = arith.mulf %98, %99 : vector<8x8xf32>
    %cst_34 = arith.constant -1.000000e+30 : f32
    %101 = vector.broadcast %cst_34 : f32 to vector<8x8xf32>
    %102 = arith.select %37, %100, %101 : vector<8x8xi1>, vector<8x8xf32>
    %cst_35 = arith.constant dense<0xFF800000> : vector<8xf32>
    %103 = vector.multi_reduction <maximumf>, %102, %cst_35 [1] : vector<8x8xf32> to vector<8xf32>
    %104 = vector.shape_cast %103 : vector<8xf32> to vector<8x1xf32>
    %105 = vector.broadcast %104 : vector<8x1xf32> to vector<8x8xf32>
    %106 = arith.subf %102, %105 : vector<8x8xf32>
    %107 = math.exp %106 : vector<8x8xf32>
    %cst_36 = arith.constant dense<0.000000e+00> : vector<8xf32>
    %108 = vector.multi_reduction <add>, %107, %cst_36 [1] : vector<8x8xf32> to vector<8xf32>
    %109 = vector.shape_cast %108 : vector<8xf32> to vector<8x1xf32>
    %110 = vector.broadcast %109 : vector<8x1xf32> to vector<8x8xf32>
    %111 = arith.divf %107, %110 : vector<8x8xf32>
    %112 = arith.truncf %111 : vector<8x8xf32> to vector<8x8xbf16>
    %cst_37 = arith.constant dense<0.000000e+00> : vector<8x32xf32>
    %113 = tpu.matmul %112, %97, %cst_37 {dimension_numbers = #tpu.dot_dimension_numbers<[1], [0], [0], [1], [0, 0, 1, 1], [], []>} : vector<8x8xbf16>, vector<8x32xbf16>, vector<8x32xf32> -> vector<8x32xf32>
    %114 = arith.truncf %113 : vector<8x32xf32> to vector<8x32xbf16>
    %115 = vector.extract_strided_slice %38 {offsets = [64, 0], sizes = [32, 128], strides = [1, 1]} : vector<128x128xbf16> to vector<32x128xbf16>
    %cst_38 = arith.constant dense<0.000000e+00> : vector<8x128xf32>
    %116 = tpu.matmul %114, %115, %cst_38 {dimension_numbers = #tpu.dot_dimension_numbers<[1], [0], [0], [1], [0, 0, 1, 1], [], []>} : vector<8x32xbf16>, vector<32x128xbf16>, vector<8x128xf32> -> vector<8x128xf32>
    %117 = arith.addf %91, %116 : vector<8x128xf32>
    %118 = vector.extract_strided_slice %32 {offsets = [0, 96], sizes = [8, 32], strides = [1, 1]} : vector<8x128xf32> to vector<8x32xf32>
    %119 = arith.truncf %118 : vector<8x32xf32> to vector<8x32xbf16>
    %120 = vector.extract_strided_slice %33 {offsets = [0, 96], sizes = [8, 32], strides = [1, 1]} : vector<8x128xf32> to vector<8x32xf32>
    %121 = arith.truncf %120 : vector<8x32xf32> to vector<8x32xbf16>
    %122 = vector.extract_strided_slice %34 {offsets = [0, 96], sizes = [8, 32], strides = [1, 1]} : vector<8x128xf32> to vector<8x32xf32>
    %123 = arith.truncf %122 : vector<8x32xf32> to vector<8x32xbf16>
    %cst_39 = arith.constant dense<0.000000e+00> : vector<8x8xf32>
    %124 = tpu.matmul %119, %121, %cst_39 {dimension_numbers = #tpu.dot_dimension_numbers<[1], [1], [0], [0], [0, 0, 1, 0], [], []>} : vector<8x32xbf16>, vector<8x32xbf16>, vector<8x8xf32> -> vector<8x8xf32>
    %cst_40 = arith.constant 0.176776692 : f32
    %125 = vector.broadcast %cst_40 : f32 to vector<8x8xf32>
    %126 = arith.mulf %124, %125 : vector<8x8xf32>
    %cst_41 = arith.constant -1.000000e+30 : f32
    %127 = vector.broadcast %cst_41 : f32 to vector<8x8xf32>
    %128 = arith.select %37, %126, %127 : vector<8x8xi1>, vector<8x8xf32>
    %cst_42 = arith.constant dense<0xFF800000> : vector<8xf32>
    %129 = vector.multi_reduction <maximumf>, %128, %cst_42 [1] : vector<8x8xf32> to vector<8xf32>
    %130 = vector.shape_cast %129 : vector<8xf32> to vector<8x1xf32>
    %131 = vector.broadcast %130 : vector<8x1xf32> to vector<8x8xf32>
    %132 = arith.subf %128, %131 : vector<8x8xf32>
    %133 = math.exp %132 : vector<8x8xf32>
    %cst_43 = arith.constant dense<0.000000e+00> : vector<8xf32>
    %134 = vector.multi_reduction <add>, %133, %cst_43 [1] : vector<8x8xf32> to vector<8xf32>
    %135 = vector.shape_cast %134 : vector<8xf32> to vector<8x1xf32>
    %136 = vector.broadcast %135 : vector<8x1xf32> to vector<8x8xf32>
    %137 = arith.divf %133, %136 : vector<8x8xf32>
    %138 = arith.truncf %137 : vector<8x8xf32> to vector<8x8xbf16>
    %cst_44 = arith.constant dense<0.000000e+00> : vector<8x32xf32>
    %139 = tpu.matmul %138, %123, %cst_44 {dimension_numbers = #tpu.dot_dimension_numbers<[1], [0], [0], [1], [0, 0, 1, 1], [], []>} : vector<8x8xbf16>, vector<8x32xbf16>, vector<8x32xf32> -> vector<8x32xf32>
    %140 = arith.truncf %139 : vector<8x32xf32> to vector<8x32xbf16>
    %141 = vector.extract_strided_slice %38 {offsets = [96, 0], sizes = [32, 128], strides = [1, 1]} : vector<128x128xbf16> to vector<32x128xbf16>
    %cst_45 = arith.constant dense<0.000000e+00> : vector<8x128xf32>
    %142 = tpu.matmul %140, %141, %cst_45 {dimension_numbers = #tpu.dot_dimension_numbers<[1], [0], [0], [1], [0, 0, 1, 1], [], []>} : vector<8x32xbf16>, vector<32x128xbf16>, vector<8x128xf32> -> vector<8x128xf32>
    %143 = arith.addf %117, %142 : vector<8x128xf32>
    %144 = arith.addf %1, %143 : vector<8x128xf32>
    %c0_46 = arith.constant 0 : index
    %c0_47 = arith.constant 0 : index
    %145 = vector.load %arg7[%c0_46, %c0_47] : memref<1x128xf32, #tpu.memory_space<vmem>>, vector<1x128xf32>
    %146 = vector.broadcast %145 : vector<1x128xf32> to vector<8x128xf32>
    %147 = arith.addf %144, %146 : vector<8x128xf32>
    %c0_48 = arith.constant 0 : index
    %c0_49 = arith.constant 0 : index
    %148 = vector.load %arg8[%c0_48, %c0_49] : memref<1x128xf32, #tpu.memory_space<vmem>>, vector<1x128xf32>
    %c0_50 = arith.constant 0 : index
    %c0_51 = arith.constant 0 : index
    %149 = vector.load %arg9[%c0_50, %c0_51] : memref<1x128xf32, #tpu.memory_space<vmem>>, vector<1x128xf32>
    %cst_52 = arith.constant dense<0.000000e+00> : vector<8xf32>
    %150 = vector.multi_reduction <add>, %147, %cst_52 [1] : vector<8x128xf32> to vector<8xf32>
    %151 = vector.shape_cast %150 : vector<8xf32> to vector<8x1xf32>
    %cst_53 = arith.constant 1.280000e+02 : f32
    %152 = vector.broadcast %cst_53 : f32 to vector<8x1xf32>
    %153 = arith.divf %151, %152 : vector<8x1xf32>
    %154 = vector.broadcast %153 : vector<8x1xf32> to vector<8x128xf32>
    %155 = arith.subf %147, %154 : vector<8x128xf32>
    %156 = arith.mulf %155, %155 : vector<8x128xf32>
    %cst_54 = arith.constant dense<0.000000e+00> : vector<8xf32>
    %157 = vector.multi_reduction <add>, %156, %cst_54 [1] : vector<8x128xf32> to vector<8xf32>
    %158 = vector.shape_cast %157 : vector<8xf32> to vector<8x1xf32>
    %cst_55 = arith.constant 1.280000e+02 : f32
    %159 = vector.broadcast %cst_55 : f32 to vector<8x1xf32>
    %160 = arith.divf %158, %159 : vector<8x1xf32>
    %161 = vector.broadcast %153 : vector<8x1xf32> to vector<8x128xf32>
    %162 = arith.subf %147, %161 : vector<8x128xf32>
    %cst_56 = arith.constant 9.99999997E-7 : f32
    %163 = vector.broadcast %cst_56 : f32 to vector<8x1xf32>
    %164 = arith.addf %160, %163 : vector<8x1xf32>
    %165 = math.rsqrt %164 : vector<8x1xf32>
    %166 = vector.broadcast %165 : vector<8x1xf32> to vector<8x128xf32>
    %167 = arith.mulf %162, %166 : vector<8x128xf32>
    %168 = vector.broadcast %148 : vector<1x128xf32> to vector<8x128xf32>
    %169 = arith.mulf %167, %168 : vector<8x128xf32>
    %170 = vector.broadcast %149 : vector<1x128xf32> to vector<8x128xf32>
    %171 = arith.addf %169, %170 : vector<8x128xf32>
    %172 = arith.truncf %171 : vector<8x128xf32> to vector<8x128xbf16>
    %c0_57 = arith.constant 0 : index
    %c0_58 = arith.constant 0 : index
    %173 = vector.load %arg10[%c0_57, %c0_58] : memref<128x512xbf16, #tpu.memory_space<vmem>>, vector<128x512xbf16>
    %cst_59 = arith.constant dense<0.000000e+00> : vector<8x512xf32>
    %174 = tpu.matmul %172, %173, %cst_59 {dimension_numbers = #tpu.dot_dimension_numbers<[1], [0], [0], [1], [0, 0, 1, 1], [], []>} : vector<8x128xbf16>, vector<128x512xbf16>, vector<8x512xf32> -> vector<8x512xf32>
    %c0_60 = arith.constant 0 : index
    %c0_61 = arith.constant 0 : index
    %175 = vector.load %arg11[%c0_60, %c0_61] : memref<1x512xf32, #tpu.memory_space<vmem>>, vector<1x512xf32>
    %176 = vector.broadcast %175 : vector<1x512xf32> to vector<8x512xf32>
    %177 = arith.addf %174, %176 : vector<8x512xf32>
    %cst_62 = arith.constant 5.000000e-01 : f32
    %178 = vector.broadcast %cst_62 : f32 to vector<8x512xf32>
    %179 = arith.mulf %178, %177 : vector<8x512xf32>
    %cst_63 = arith.constant 0.707106769 : f32
    %180 = vector.broadcast %cst_63 : f32 to vector<8x512xf32>
    %181 = arith.mulf %177, %180 : vector<8x512xf32>
    %182 = math.erf %181 : vector<8x512xf32>
    %cst_64 = arith.constant 1.000000e+00 : f32
    %183 = vector.broadcast %cst_64 : f32 to vector<8x512xf32>
    %184 = arith.addf %183, %182 : vector<8x512xf32>
    %185 = arith.mulf %179, %184 : vector<8x512xf32>
    %186 = arith.truncf %185 : vector<8x512xf32> to vector<8x512xbf16>
    %c0_65 = arith.constant 0 : index
    %c0_66 = arith.constant 0 : index
    %187 = vector.load %arg12[%c0_65, %c0_66] : memref<512x128xbf16, #tpu.memory_space<vmem>>, vector<512x128xbf16>
    %cst_67 = arith.constant dense<0.000000e+00> : vector<8x128xf32>
    %188 = tpu.matmul %186, %187, %cst_67 {dimension_numbers = #tpu.dot_dimension_numbers<[1], [0], [0], [1], [0, 0, 1, 1], [], []>} : vector<8x512xbf16>, vector<512x128xbf16>, vector<8x128xf32> -> vector<8x128xf32>
    %c0_68 = arith.constant 0 : index
    %c0_69 = arith.constant 0 : index
    %189 = vector.load %arg13[%c0_68, %c0_69] : memref<1x128xf32, #tpu.memory_space<vmem>>, vector<1x128xf32>
    %190 = vector.broadcast %189 : vector<1x128xf32> to vector<8x128xf32>
    %191 = arith.addf %188, %190 : vector<8x128xf32>
    %192 = arith.addf %147, %191 : vector<8x128xf32>
    %c0_70 = arith.constant 0 : index
    %c0_71 = arith.constant 0 : index
    %c0_72 = arith.constant 0 : index
    %193 = vector.load %arg14[%c0_70, %c0_71, %c0_72] : memref<1x8x128xf32, #tpu.memory_space<vmem>>, vector<1x8x128xf32>
    %194 = vector.shape_cast %193 : vector<1x8x128xf32> to vector<8x128xf32>
    %195 = vector.shape_cast %192 : vector<8x128xf32> to vector<1x8x128xf32>
    tpu.vector_store %arg14[%c0_70, %c0_71, %c0_72], %195 {strides = array<i32>} : memref<1x8x128xf32, #tpu.memory_space<vmem>>, vector<1x8x128xf32>,
    return
  }
  func.func @transform_0(%arg0: i32) -> (i32, i32, i32) {
    %c0_i32 = arith.constant 0 : i32
    %c0_i32_0 = arith.constant 0 : i32
    %c0_i32_1 = arith.constant 0 : i32
    return %arg0, %c0_i32, %c0_i32_0 : i32, i32, i32
  }
  func.func @transform_1(%arg0: i32) -> (i32, i32) {
    %c0_i32 = arith.constant 0 : i32
    %c0_i32_0 = arith.constant 0 : i32
    %c0_i32_1 = arith.constant 0 : i32
    return %c0_i32, %c0_i32_0 : i32, i32
  }
  func.func @transform_2(%arg0: i32) -> (i32, i32) {
    %c0_i32 = arith.constant 0 : i32
    %c0_i32_0 = arith.constant 0 : i32
    %c0_i32_1 = arith.constant 0 : i32
    return %c0_i32, %c0_i32_0 : i32, i32
  }
  func.func @transform_3(%arg0: i32) -> (i32, i32) {
    %c0_i32 = arith.constant 0 : i32
    %c0_i32_0 = arith.constant 0 : i32
    %c0_i32_1 = arith.constant 0 : i32
    return %c0_i32, %c0_i32_0 : i32, i32
  }
  func.func @transform_4(%arg0: i32) -> (i32, i32) {
    %c0_i32 = arith.constant 0 : i32
    %c0_i32_0 = arith.constant 0 : i32
    %c0_i32_1 = arith.constant 0 : i32
    return %c0_i32, %c0_i32_0 : i32, i32
  }
  func.func @transform_5(%arg0: i32) -> (i32, i32) {
    %c0_i32 = arith.constant 0 : i32
    %c0_i32_0 = arith.constant 0 : i32
    %c0_i32_1 = arith.constant 0 : i32
    return %c0_i32, %c0_i32_0 : i32, i32
  }
  func.func @transform_6(%arg0: i32) -> (i32, i32) {
    %c0_i32 = arith.constant 0 : i32
    %c0_i32_0 = arith.constant 0 : i32
    %c0_i32_1 = arith.constant 0 : i32
    return %c0_i32, %c0_i32_0 : i32, i32
  }
  func.func @transform_7(%arg0: i32) -> (i32, i32) {
    %c0_i32 = arith.constant 0 : i32
    %c0_i32_0 = arith.constant 0 : i32
    %c0_i32_1 = arith.constant 0 : i32
    return %c0_i32, %c0_i32_0 : i32, i32
  }
  func.func @transform_8(%arg0: i32) -> (i32, i32) {
    %c0_i32 = arith.constant 0 : i32
    %c0_i32_0 = arith.constant 0 : i32
    %c0_i32_1 = arith.constant 0 : i32
    return %c0_i32, %c0_i32_0 : i32, i32
  }
  func.func @transform_9(%arg0: i32) -> (i32, i32) {
    %c0_i32 = arith.constant 0 : i32
    %c0_i32_0 = arith.constant 0 : i32
    %c0_i32_1 = arith.constant 0 : i32
    return %c0_i32, %c0_i32_0 : i32, i32
  }
  func.func @transform_10(%arg0: i32) -> (i32, i32) {
    %c0_i32 = arith.constant 0 : i32
    %c0_i32_0 = arith.constant 0 : i32
    %c0_i32_1 = arith.constant 0 : i32
    return %c0_i32, %c0_i32_0 : i32, i32
  }
  func.func @transform_11(%arg0: i32) -> (i32, i32) {
    %c0_i32 = arith.constant 0 : i32
    %c0_i32_0 = arith.constant 0 : i32
    %c0_i32_1 = arith.constant 0 : i32
    return %c0_i32, %c0_i32_0 : i32, i32
  }
  func.func @transform_12(%arg0: i32) -> (i32, i32) {
    %c0_i32 = arith.constant 0 : i32
    %c0_i32_0 = arith.constant 0 : i32
    %c0_i32_1 = arith.constant 0 : i32
    return %c0_i32, %c0_i32_0 : i32, i32
  }
  func.func @transform_13(%arg0: i32) -> (i32, i32, i32) {
    %c0_i32 = arith.constant 0 : i32
    %c0_i32_0 = arith.constant 0 : i32
    %c0_i32_1 = arith.constant 0 : i32
    return %arg0, %c0_i32, %c0_i32_0 : i32, i32, i32
  }
}

module attributes {stable_mosaic.version = 11 : i64} {
  func.func @_head_kernel(%arg0: i32, %arg1: memref<8x128xf32, #tpu.memory_space<vmem>>, %arg2: memref<1x128xf32, #tpu.memory_space<vmem>>, %arg3: memref<1x128xf32, #tpu.memory_space<vmem>>, %arg4: memref<128x1024xbf16, #tpu.memory_space<vmem>>, %arg5: memref<1x1024xf32, #tpu.memory_space<vmem>>, %arg6: memref<1024x512xbf16, #tpu.memory_space<vmem>>, %arg7: memref<1x512xf32, #tpu.memory_space<vmem>>, %arg8: memref<8x512xf32, #tpu.memory_space<vmem>>) attributes {dimension_semantics = [#tpu.dimension_semantics<arbitrary>], iteration_bounds = array<i64: 1>, scalar_prefetch = 0 : i64, scratch_operands = 0 : i64, tpu.core_type = #tpu.core_type<tc>, window_params = [{pipeline_mode = #tpu.pipeline_mode<synchronous>, transform_indices = @transform_0, window_bounds = array<i64: 8, 128>}, {pipeline_mode = #tpu.pipeline_mode<synchronous>, transform_indices = @transform_1, window_bounds = array<i64: 1, 128>}, {pipeline_mode = #tpu.pipeline_mode<synchronous>, transform_indices = @transform_2, window_bounds = array<i64: 1, 128>}, {pipeline_mode = #tpu.pipeline_mode<synchronous>, transform_indices = @transform_3, window_bounds = array<i64: 128, 1024>}, {pipeline_mode = #tpu.pipeline_mode<synchronous>, transform_indices = @transform_4, window_bounds = array<i64: 1, 1024>}, {pipeline_mode = #tpu.pipeline_mode<synchronous>, transform_indices = @transform_5, window_bounds = array<i64: 1024, 512>}, {pipeline_mode = #tpu.pipeline_mode<synchronous>, transform_indices = @transform_6, window_bounds = array<i64: 1, 512>}, {pipeline_mode = #tpu.pipeline_mode<synchronous>, transform_indices = @transform_7, window_bounds = array<i64: 8, 512>}]} {
    %c0 = arith.constant 0 : index
    %c0_0 = arith.constant 0 : index
    %0 = vector.load %arg1[%c0, %c0_0] : memref<8x128xf32, #tpu.memory_space<vmem>>, vector<8x128xf32>
    %c0_1 = arith.constant 0 : index
    %c0_2 = arith.constant 0 : index
    %1 = vector.load %arg2[%c0_1, %c0_2] : memref<1x128xf32, #tpu.memory_space<vmem>>, vector<1x128xf32>
    %c0_3 = arith.constant 0 : index
    %c0_4 = arith.constant 0 : index
    %2 = vector.load %arg3[%c0_3, %c0_4] : memref<1x128xf32, #tpu.memory_space<vmem>>, vector<1x128xf32>
    %cst = arith.constant dense<0.000000e+00> : vector<8xf32>
    %3 = vector.multi_reduction <add>, %0, %cst [1] : vector<8x128xf32> to vector<8xf32>
    %4 = vector.shape_cast %3 : vector<8xf32> to vector<8x1xf32>
    %cst_5 = arith.constant 1.280000e+02 : f32
    %5 = vector.broadcast %cst_5 : f32 to vector<8x1xf32>
    %6 = arith.divf %4, %5 : vector<8x1xf32>
    %7 = vector.broadcast %6 : vector<8x1xf32> to vector<8x128xf32>
    %8 = arith.subf %0, %7 : vector<8x128xf32>
    %9 = arith.mulf %8, %8 : vector<8x128xf32>
    %cst_6 = arith.constant dense<0.000000e+00> : vector<8xf32>
    %10 = vector.multi_reduction <add>, %9, %cst_6 [1] : vector<8x128xf32> to vector<8xf32>
    %11 = vector.shape_cast %10 : vector<8xf32> to vector<8x1xf32>
    %cst_7 = arith.constant 1.280000e+02 : f32
    %12 = vector.broadcast %cst_7 : f32 to vector<8x1xf32>
    %13 = arith.divf %11, %12 : vector<8x1xf32>
    %14 = vector.broadcast %6 : vector<8x1xf32> to vector<8x128xf32>
    %15 = arith.subf %0, %14 : vector<8x128xf32>
    %cst_8 = arith.constant 9.99999997E-7 : f32
    %16 = vector.broadcast %cst_8 : f32 to vector<8x1xf32>
    %17 = arith.addf %13, %16 : vector<8x1xf32>
    %18 = math.rsqrt %17 : vector<8x1xf32>
    %19 = vector.broadcast %18 : vector<8x1xf32> to vector<8x128xf32>
    %20 = arith.mulf %15, %19 : vector<8x128xf32>
    %21 = vector.broadcast %1 : vector<1x128xf32> to vector<8x128xf32>
    %22 = arith.mulf %20, %21 : vector<8x128xf32>
    %23 = vector.broadcast %2 : vector<1x128xf32> to vector<8x128xf32>
    %24 = arith.addf %22, %23 : vector<8x128xf32>
    %25 = arith.truncf %24 : vector<8x128xf32> to vector<8x128xbf16>
    %c0_9 = arith.constant 0 : index
    %c0_10 = arith.constant 0 : index
    %26 = vector.load %arg4[%c0_9, %c0_10] : memref<128x1024xbf16, #tpu.memory_space<vmem>>, vector<128x1024xbf16>
    %cst_11 = arith.constant dense<0.000000e+00> : vector<8x1024xf32>
    %27 = tpu.matmul %25, %26, %cst_11 {dimension_numbers = #tpu.dot_dimension_numbers<[1], [0], [0], [1], [0, 0, 1, 1], [], []>} : vector<8x128xbf16>, vector<128x1024xbf16>, vector<8x1024xf32> -> vector<8x1024xf32>
    %c0_12 = arith.constant 0 : index
    %c0_13 = arith.constant 0 : index
    %28 = vector.load %arg5[%c0_12, %c0_13] : memref<1x1024xf32, #tpu.memory_space<vmem>>, vector<1x1024xf32>
    %29 = vector.broadcast %28 : vector<1x1024xf32> to vector<8x1024xf32>
    %30 = arith.addf %27, %29 : vector<8x1024xf32>
    %31 = arith.truncf %30 : vector<8x1024xf32> to vector<8x1024xbf16>
    %c0_14 = arith.constant 0 : index
    %c0_15 = arith.constant 0 : index
    %32 = vector.load %arg6[%c0_14, %c0_15] : memref<1024x512xbf16, #tpu.memory_space<vmem>>, vector<1024x512xbf16>
    %cst_16 = arith.constant dense<0.000000e+00> : vector<8x512xf32>
    %33 = tpu.matmul %31, %32, %cst_16 {dimension_numbers = #tpu.dot_dimension_numbers<[1], [0], [0], [1], [0, 0, 1, 1], [], []>} : vector<8x1024xbf16>, vector<1024x512xbf16>, vector<8x512xf32> -> vector<8x512xf32>
    %c0_17 = arith.constant 0 : index
    %c0_18 = arith.constant 0 : index
    %34 = vector.load %arg7[%c0_17, %c0_18] : memref<1x512xf32, #tpu.memory_space<vmem>>, vector<1x512xf32>
    %35 = vector.broadcast %34 : vector<1x512xf32> to vector<8x512xf32>
    %36 = arith.addf %33, %35 : vector<8x512xf32>
    %c0_19 = arith.constant 0 : index
    %c0_20 = arith.constant 0 : index
    %37 = vector.load %arg8[%c0_19, %c0_20] : memref<8x512xf32, #tpu.memory_space<vmem>>, vector<8x512xf32>
    tpu.vector_store %arg8[%c0_19, %c0_20], %36 {strides = array<i32>} : memref<8x512xf32, #tpu.memory_space<vmem>>, vector<8x512xf32>,
    return
  }
  func.func @transform_0(%arg0: i32) -> (i32, i32) {
    %c0_i32 = arith.constant 0 : i32
    %c0_i32_0 = arith.constant 0 : i32
    %c0_i32_1 = arith.constant 0 : i32
    return %c0_i32, %c0_i32_0 : i32, i32
  }
  func.func @transform_1(%arg0: i32) -> (i32, i32) {
    %c0_i32 = arith.constant 0 : i32
    %c0_i32_0 = arith.constant 0 : i32
    %c0_i32_1 = arith.constant 0 : i32
    return %c0_i32, %c0_i32_0 : i32, i32
  }
  func.func @transform_2(%arg0: i32) -> (i32, i32) {
    %c0_i32 = arith.constant 0 : i32
    %c0_i32_0 = arith.constant 0 : i32
    %c0_i32_1 = arith.constant 0 : i32
    return %c0_i32, %c0_i32_0 : i32, i32
  }
  func.func @transform_3(%arg0: i32) -> (i32, i32) {
    %c0_i32 = arith.constant 0 : i32
    %c0_i32_0 = arith.constant 0 : i32
    %c0_i32_1 = arith.constant 0 : i32
    return %c0_i32, %c0_i32_0 : i32, i32
  }
  func.func @transform_4(%arg0: i32) -> (i32, i32) {
    %c0_i32 = arith.constant 0 : i32
    %c0_i32_0 = arith.constant 0 : i32
    %c0_i32_1 = arith.constant 0 : i32
    return %c0_i32, %c0_i32_0 : i32, i32
  }
  func.func @transform_5(%arg0: i32) -> (i32, i32) {
    %c0_i32 = arith.constant 0 : i32
    %c0_i32_0 = arith.constant 0 : i32
    %c0_i32_1 = arith.constant 0 : i32
    return %c0_i32, %c0_i32_0 : i32, i32
  }
  func.func @transform_6(%arg0: i32) -> (i32, i32) {
    %c0_i32 = arith.constant 0 : i32
    %c0_i32_0 = arith.constant 0 : i32
    %c0_i32_1 = arith.constant 0 : i32
    return %c0_i32, %c0_i32_0 : i32, i32
  }
  func.func @transform_7(%arg0: i32) -> (i32, i32) {
    %c0_i32 = arith.constant 0 : i32
    %c0_i32_0 = arith.constant 0 : i32
    %c0_i32_1 = arith.constant 0 : i32
    return %c0_i32, %c0_i32_0 : i32, i32
  }
}

</mosaic_0001>

<llo_original>
// kernel: deit_forward.4
$region0: #{deit_forward.4}
  #allocation0 [shape = 'u32[]', space=smem, size = 0x4, offset = 0x4, fixed_abs, tag = 'smem constant byte address 0x4 - core index']
  #allocation1 [shape = 'u32[144,128]{1,0:T(1,128)}', space=vmem, size = 0x12000, scoped, tag = 'internal scratch']
  %s0 = inlined_call_operand.vmem [shape: f32[8,768], index: 0, kind: input, shape index: {}]
  %s1 = inlined_call_operand.vmem [shape: bf16[768,128], index: 1, kind: input, shape index: {}]
  %s2 = inlined_call_operand.vmem [shape: f32[1,128], index: 2, kind: input, shape index: {}]
  %s3 = inlined_call_operand.vmem [shape: f32[8,128], index: 3, kind: output, shape index: {}]
  %s4 = sld [smem:[#allocation0]]
  $region22: #{deit_forward.4} parent=0
    _
  %s6 = ssub.s32 1, %s4
  %s7 = scalar_select 0, %s6, %s4
  // Predicated region
  $region2: #{deit_forward.4} parent=0 // pred_check
    _
  $region3: #{deit_forward.4} parent=0 // pred_check_branch
    %9 = sbr.rel (0) target = $region5
  $region4: #{deit_forward.4} parent=0 // pred_region
    _
  $region5: #{deit_forward.4} parent=0 // pred_fallthru
    _
  // Predicated region
  $region6: #{deit_forward.4} parent=0 // pred_check
    _
  $region7: #{deit_forward.4} parent=0 // pred_check_branch
    %11 = sbr.rel (0) target = $region9
  $region8: #{deit_forward.4} parent=0 // pred_region
    _
  $region9: #{deit_forward.4} parent=0 // pred_fallthru
    _
  // Predicated region
  $region10: #{deit_forward.4} parent=0 // pred_check
    _
  $region11: #{deit_forward.4} parent=0 // pred_check_branch
    %13 = sbr.rel (0) target = $region13
  $region12: #{deit_forward.4} parent=0 // pred_region
    _
  $region13: #{deit_forward.4} parent=0 // pred_fallthru
    _
  %v15 = vld [vmem:[%s0] sm:$0xff]
  %v16 = vld [vmem:[%s0 + $0x8] sm:$0xff]
  %v17 = vld [vmem:[%s0 + $0x10] sm:$0xff]
  %v18 = vld [vmem:[%s0 + $0x18] sm:$0xff]
  %v19 = vld [vmem:[%s0 + $0x20] sm:$0xff]
  %v20 = vld [vmem:[%s0 + $0x28] sm:$0xff]
  %v21 = vpack.c.bf16 %v15, %v15
  %v22 = vpack.c.bf16 %v16, %v16
  %v23 = vpack.c.bf16 %v17, %v17
  %v24 = vpack.c.bf16 %v18, %v18
  %v25 = vpack.c.bf16 %v19, %v19
  %v26 = vpack.c.bf16 %v20, %v20
  %v27 = vld [vmem:[%s1] sm:$0xf]
  %v28 = vld [vmem:[%s1 + $0x4] sm:$0xf]
  %v29 = vld [vmem:[%s1 + $0x8] sm:$0xf]
  %v30 = vld [vmem:[%s1 + $0xc] sm:$0xf]
  %v31 = vld [vmem:[%s1 + $0x10] sm:$0xf]
  %v32 = vld [vmem:[%s1 + $0x14] sm:$0xf]
  %v33 = vld [vmem:[%s1 + $0x18] sm:$0xf]
  %v34 = vld [vmem:[%s1 + $0x1c] sm:$0xf]
  %v35 = vld [vmem:[%s1 + $0x20] sm:$0xf]
  %v36 = vld [vmem:[%s1 + $0x24] sm:$0xf]
  %v37 = vld [vmem:[%s1 + $0x28] sm:$0xf]
  %v38 = vld [vmem:[%s1 + $0x2c] sm:$0xf]
  %v39 = vld [vmem:[%s1 + $0x30] sm:$0xf]
  %v40 = vld [vmem:[%s1 + $0x34] sm:$0xf]
  %v41 = vld [vmem:[%s1 + $0x38] sm:$0xf]
  %v42 = vld [vmem:[%s1 + $0x3c] sm:$0xf]
  %v43 = vld [vmem:[%s1 + $0x40] sm:$0xf]
  %v44 = vld [vmem:[%s1 + $0x44] sm:$0xf]
  %v45 = vld [vmem:[%s1 + $0x48] sm:$0xf]
  %v46 = vld [vmem:[%s1 + $0x4c] sm:$0xf]
  %v47 = vld [vmem:[%s1 + $0x50] sm:$0xf]
  %v48 = vld [vmem:[%s1 + $0x54] sm:$0xf]
  %v49 = vld [vmem:[%s1 + $0x58] sm:$0xf]
  %v50 = vld [vmem:[%s1 + $0x5c] sm:$0xf]
  %v51 = vld [vmem:[%s1 + $0x60] sm:$0xf]
  %v52 = vld [vmem:[%s1 + $0x64] sm:$0xf]
  %v53 = vld [vmem:[%s1 + $0x68] sm:$0xf]
  %v54 = vld [vmem:[%s1 + $0x6c] sm:$0xf]
  %v55 = vld [vmem:[%s1 + $0x70] sm:$0xf]
  %v56 = vld [vmem:[%s1 + $0x74] sm:$0xf]
  %v57 = vld [vmem:[%s1 + $0x78] sm:$0xf]
  %v58 = vld [vmem:[%s1 + $0x7c] sm:$0xf]
  %v59 = vld [vmem:[%s1 + $0x80] sm:$0xf]
  %v60 = vld [vmem:[%s1 + $0x84] sm:$0xf]
  %v61 = vld [vmem:[%s1 + $0x88] sm:$0xf]
  %v62 = vld [vmem:[%s1 + $0x8c] sm:$0xf]
  %v63 = vld [vmem:[%s1 + $0x90] sm:$0xf]
  %v64 = vld [vmem:[%s1 + $0x94] sm:$0xf]
  %v65 = vld [vmem:[%s1 + $0x98] sm:$0xf]
  %v66 = vld [vmem:[%s1 + $0x9c] sm:$0xf]
  %v67 = vld [vmem:[%s1 + $0xa0] sm:$0xf]
  %v68 = vld [vmem:[%s1 + $0xa4] sm:$0xf]
  %v69 = vld [vmem:[%s1 + $0xa8] sm:$0xf]
  %v70 = vld [vmem:[%s1 + $0xac] sm:$0xf]
  %v71 = vld [vmem:[%s1 + $0xb0] sm:$0xf]
  %v72 = vld [vmem:[%s1 + $0xb4] sm:$0xf]
  %v73 = vld [vmem:[%s1 + $0xb8] sm:$0xf]
  %v74 = vld [vmem:[%s1 + $0xbc] sm:$0xf]
  %v75 = vld [vmem:[%s1 + $0xc0] sm:$0xf]
  %v76 = vld [vmem:[%s1 + $0xc4] sm:$0xf]
  %v77 = vld [vmem:[%s1 + $0xc8] sm:$0xf]
  %v78 = vld [vmem:[%s1 + $0xcc] sm:$0xf]
  %v79 = vld [vmem:[%s1 + $0xd0] sm:$0xf]
  %v80 = vld [vmem:[%s1 + $0xd4] sm:$0xf]
  %v81 = vld [vmem:[%s1 + $0xd8] sm:$0xf]
  %v82 = vld [vmem:[%s1 + $0xdc] sm:$0xf]
  %v83 = vld [vmem:[%s1 + $0xe0] sm:$0xf]
  %v84 = vld [vmem:[%s1 + $0xe4] sm:$0xf]
  %v85 = vld [vmem:[%s1 + $0xe8] sm:$0xf]
  %v86 = vld [vmem:[%s1 + $0xec] sm:$0xf]
  %v87 = vld [vmem:[%s1 + $0xf0] sm:$0xf]
  %v88 = vld [vmem:[%s1 + $0xf4] sm:$0xf]
  %v89 = vld [vmem:[%s1 + $0xf8] sm:$0xf]
  %v90 = vld [vmem:[%s1 + $0xfc] sm:$0xf]
  %v91 = vld [vmem:[%s1 + $0x100] sm:$0xf]
  %v92 = vld [vmem:[%s1 + $0x104] sm:$0xf]
  %v93 = vld [vmem:[%s1 + $0x108] sm:$0xf]
  %v94 = vld [vmem:[%s1 + $0x10c] sm:$0xf]
  %v95 = vld [vmem:[%s1 + $0x110] sm:$0xf]
  %v96 = vld [vmem:[%s1 + $0x114] sm:$0xf]
  %v97 = vld [vmem:[%s1 + $0x118] sm:$0xf]
  %v98 = vld [vmem:[%s1 + $0x11c] sm:$0xf]
  %v99 = vld [vmem:[%s1 + $0x120] sm:$0xf]
  %v100 = vld [vmem:[%s1 + $0x124] sm:$0xf]
  %v101 = vld [vmem:[%s1 + $0x128] sm:$0xf]
  %v102 = vld [vmem:[%s1 + $0x12c] sm:$0xf]
  %v103 = vld [vmem:[%s1 + $0x130] sm:$0xf]
  %v104 = vld [vmem:[%s1 + $0x134] sm:$0xf]
  %v105 = vld [vmem:[%s1 + $0x138] sm:$0xf]
  %v106 = vld [vmem:[%s1 + $0x13c] sm:$0xf]
  %v107 = vld [vmem:[%s1 + $0x140] sm:$0xf]
  %v108 = vld [vmem:[%s1 + $0x144] sm:$0xf]
  %v109 = vld [vmem:[%s1 + $0x148] sm:$0xf]
  %v110 = vld [vmem:[%s1 + $0x14c] sm:$0xf]
  %v111 = vld [vmem:[%s1 + $0x150] sm:$0xf]
  %v112 = vld [vmem:[%s1 + $0x154] sm:$0xf]
  %v113 = vld [vmem:[%s1 + $0x158] sm:$0xf]
  %v114 = vld [vmem:[%s1 + $0x15c] sm:$0xf]
  %v115 = vld [vmem:[%s1 + $0x160] sm:$0xf]
  %v116 = vld [vmem:[%s1 + $0x164] sm:$0xf]
  %v117 = vld [vmem:[%s1 + $0x168] sm:$0xf]
  %v118 = vld [vmem:[%s1 + $0x16c] sm:$0xf]
  %v119 = vld [vmem:[%s1 + $0x170] sm:$0xf]
  %v120 = vld [vmem:[%s1 + $0x174] sm:$0xf]
  %v121 = vld [vmem:[%s1 + $0x178] sm:$0xf]
  %v122 = vld [vmem:[%s1 + $0x17c] sm:$0xf]
  %v123 = vld [vmem:[%s2] sm:$0x1]
  %v125 = vlaneseq
  %v126 = vshrl.u32 %v125, 7
  %v127 = vsub.s32 0, %v126
  %v128 = vrot.slane %v123, %v127
  %v226 = vunpack.c.l.b16 %v27
  %v227 = vunpack.c.l.b16 %v28
  %v228 = vunpack.c.l.b16 %v29
  %v229 = vunpack.c.l.b16 %v30
  %v230 = vunpack.c.l.b16 %v31
  %v231 = vunpack.c.l.b16 %v32
  %v232 = vunpack.c.l.b16 %v33
  %v233 = vunpack.c.l.b16 %v34
  %v234 = vunpack.c.l.b16 %v35
  %v235 = vunpack.c.l.b16 %v36
  %v236 = vunpack.c.l.b16 %v37
  %v237 = vunpack.c.l.b16 %v38
  %v238 = vunpack.c.l.b16 %v39
  %v239 = vunpack.c.l.b16 %v40
  %v240 = vunpack.c.l.b16 %v41
  %v241 = vunpack.c.l.b16 %v42
  %v242 = vunpack.c.l.b16 %v43
  %v243 = vunpack.c.l.b16 %v44
  %v244 = vunpack.c.l.b16 %v45
  %v245 = vunpack.c.l.b16 %v46
  %v246 = vunpack.c.l.b16 %v47
  %v247 = vunpack.c.l.b16 %v48
  %v248 = vunpack.c.l.b16 %v49
  %v249 = vunpack.c.l.b16 %v50
  %v250 = vunpack.c.l.b16 %v51
  %v251 = vunpack.c.l.b16 %v52
  %v252 = vunpack.c.l.b16 %v53
  %v253 = vunpack.c.l.b16 %v54
  %v254 = vunpack.c.l.b16 %v55
  %v255 = vunpack.c.l.b16 %v56
  %v256 = vunpack.c.l.b16 %v57
  %v257 = vunpack.c.l.b16 %v58
  %v258 = vunpack.c.l.b16 %v59
  %v259 = vunpack.c.l.b16 %v60
  %v260 = vunpack.c.l.b16 %v61
  %v261 = vunpack.c.l.b16 %v62
  %v262 = vunpack.c.l.b16 %v63
  %v263 = vunpack.c.l.b16 %v64
  %v264 = vunpack.c.l.b16 %v65
  %v265 = vunpack.c.l.b16 %v66
  %v266 = vunpack.c.l.b16 %v67
  %v267 = vunpack.c.l.b16 %v68
  %v268 = vunpack.c.l.b16 %v69
  %v269 = vunpack.c.l.b16 %v70
  %v270 = vunpack.c.l.b16 %v71
  %v271 = vunpack.c.l.b16 %v72
  %v272 = vunpack.c.l.b16 %v73
  %v273 = vunpack.c.l.b16 %v74
  %v274 = vunpack.c.l.b16 %v75
  %v275 = vunpack.c.l.b16 %v76
  %v276 = vunpack.c.l.b16 %v77
  %v277 = vunpack.c.l.b16 %v78
  %v278 = vunpack.c.l.b16 %v79
  %v279 = vunpack.c.l.b16 %v80
  %v280 = vunpack.c.l.b16 %v81
  %v281 = vunpack.c.l.b16 %v82
  %v282 = vunpack.c.l.b16 %v83
  %v283 = vunpack.c.l.b16 %v84
  %v284 = vunpack.c.l.b16 %v85
  %v285 = vunpack.c.l.b16 %v86
  %v286 = vunpack.c.l.b16 %v87
  %v287 = vunpack.c.l.b16 %v88
  %v288 = vunpack.c.l.b16 %v89
  %v289 = vunpack.c.l.b16 %v90
  %v290 = vunpack.c.l.b16 %v91
  %v291 = vunpack.c.l.b16 %v92
  %v292 = vunpack.c.l.b16 %v93
  %v293 = vunpack.c.l.b16 %v94
  %v294 = vunpack.c.l.b16 %v95
  %v295 = vunpack.c.l.b16 %v96
  %v296 = vunpack.c.l.b16 %v97
  %v297 = vunpack.c.l.b16 %v98
  %v298 = vunpack.c.l.b16 %v99
  %v299 = vunpack.c.l.b16 %v100
  %v300 = vunpack.c.l.b16 %v101
  %v301 = vunpack.c.l.b16 %v102
  %v302 = vunpack.c.l.b16 %v103
  %v303 = vunpack.c.l.b16 %v104
  %v304 = vunpack.c.l.b16 %v105
  %v305 = vunpack.c.l.b16 %v106
  %v306 = vunpack.c.l.b16 %v107
  %v307 = vunpack.c.l.b16 %v108
  %v308 = vunpack.c.l.b16 %v109
  %v309 = vunpack.c.l.b16 %v110
  %v310 = vunpack.c.l.b16 %v111
  %v311 = vunpack.c.l.b16 %v112
  %v312 = vunpack.c.l.b16 %v113
  %v313 = vunpack.c.l.b16 %v114
  %v314 = vunpack.c.l.b16 %v115
  %v315 = vunpack.c.l.b16 %v116
  %v316 = vunpack.c.l.b16 %v117
  %v317 = vunpack.c.l.b16 %v118
  %v318 = vunpack.c.l.b16 %v119
  %v319 = vunpack.c.l.b16 %v120
  %v320 = vunpack.c.l.b16 %v121
  %v321 = vunpack.c.l.b16 %v122
  %v322 = vpack.c.b16 %v227, %v226
  %v323 = vpack.c.b16 %v229, %v228
  %v324 = vpack.c.b16 %v231, %v230
  %v325 = vpack.c.b16 %v233, %v232
  %v326 = vpack.c.b16 %v235, %v234
  %v327 = vpack.c.b16 %v237, %v236
  %v328 = vpack.c.b16 %v239, %v238
  %v329 = vpack.c.b16 %v241, %v240
  %v330 = vpack.c.b16 %v243, %v242
  %v331 = vpack.c.b16 %v245, %v244
  %v332 = vpack.c.b16 %v247, %v246
  %v333 = vpack.c.b16 %v249, %v248
  %v334 = vpack.c.b16 %v251, %v250
  %v335 = vpack.c.b16 %v253, %v252
  %v336 = vpack.c.b16 %v255, %v254
  %v337 = vpack.c.b16 %v257, %v256
  %v338 = vpack.c.b16 %v259, %v258
  %v339 = vpack.c.b16 %v261, %v260
  %v340 = vpack.c.b16 %v263, %v262
  %v341 = vpack.c.b16 %v265, %v264
  %v342 = vpack.c.b16 %v267, %v266
  %v343 = vpack.c.b16 %v269, %v268
  %v344 = vpack.c.b16 %v271, %v270
  %v345 = vpack.c.b16 %v273, %v272
  %v346 = vpack.c.b16 %v275, %v274
  %v347 = vpack.c.b16 %v277, %v276
  %v348 = vpack.c.b16 %v279, %v278
  %v349 = vpack.c.b16 %v281, %v280
  %v350 = vpack.c.b16 %v283, %v282
  %v351 = vpack.c.b16 %v285, %v284
  %v352 = vpack.c.b16 %v287, %v286
  %v353 = vpack.c.b16 %v289, %v288
  %v354 = vpack.c.b16 %v291, %v290
  %v355 = vpack.c.b16 %v293, %v292
  %v356 = vpack.c.b16 %v295, %v294
  %v357 = vpack.c.b16 %v297, %v296
  %v358 = vpack.c.b16 %v299, %v298
  %v359 = vpack.c.b16 %v301, %v300
  %v360 = vpack.c.b16 %v303, %v302
  %v361 = vpack.c.b16 %v305, %v304
  %v362 = vpack.c.b16 %v307, %v306
  %v363 = vpack.c.b16 %v309, %v308
  %v364 = vpack.c.b16 %v311, %v310
  %v365 = vpack.c.b16 %v313, %v312
  %v366 = vpack.c.b16 %v315, %v314
  %v367 = vpack.c.b16 %v317, %v316
  %v368 = vpack.c.b16 %v319, %v318
  %v369 = vpack.c.b16 %v321, %v320
  %418 = vmatprep.subr.bf16.mxu0 0
  %419 = vmatpush1.bf16.msra.mxu0 %v329
  %420 = vmatprep.subr.bf16.mxu0 0
  %421 = vmatpush1.bf16.msra.mxu0 %v328
  %422 = vmatprep.subr.bf16.mxu0 0
  %423 = vmatpush1.bf16.msra.mxu0 %v327
  %424 = vmatprep.subr.bf16.mxu0 0
  %425 = vmatpush1.bf16.msra.mxu0 %v326
  %426 = vmatprep.subr.bf16.mxu0 0
  %427 = vmatpush1.bf16.msra.mxu0 %v325
  %428 = vmatprep.subr.bf16.mxu0 0
  %429 = vmatpush1.bf16.msra.mxu0 %v324
  %430 = vmatprep.subr.bf16.mxu0 0
  %431 = vmatpush1.bf16.msra.mxu0 %v323
  %432 = vmatprep.subr.bf16.mxu0 0
  %433 = vmatpush1.bf16.msra.mxu0 %v322
  %434 = vmatprep.subr.bf16.mxu0 0
  %435 = vmatpush2.bf16.msra.mxu0 %v337
  %436 = vmatprep.subr.bf16.mxu0 0
  %437 = vmatpush2.bf16.msra.mxu0 %v336
  %438 = vmatprep.subr.bf16.mxu0 0
  %439 = vmatpush2.bf16.msra.mxu0 %v335
  %440 = vmatprep.subr.bf16.mxu0 0
  %441 = vmatpush2.bf16.msra.mxu0 %v334
  %442 = vmatprep.subr.bf16.mxu0 0
  %443 = vmatpush2.bf16.msra.mxu0 %v333
  %444 = vmatprep.subr.bf16.mxu0 0
  %445 = vmatpush2.bf16.msra.mxu0 %v332
  %446 = vmatprep.subr.bf16.mxu0 0
  %447 = vmatpush2.bf16.msra.mxu0 %v331
  %448 = vmatprep.subr.bf16.mxu0 0
  %449 = vmatpush2.bf16.msra.mxu0 %v330
  %450 = vmatprep.mubr.bf16.mxu0 %v22
  %451 = vmatmul.mubr.bf16.gmra.mxu0 %v21
  %v452 = vpop.f32.mrf.mxu0
  %v453 = vadd.f32 %v128, %v452
  %v454 = vpop.f32.mrf.mxu0
  %v455 = vpop.f32.mrf.mxu0
  %v456 = vpop.f32.mrf.mxu0
  %457 = vdwg.mxu0
  %458 = vmatprep.subr.bf16.mxu0 0
  %459 = vmatpush1.bf16.msra.mxu0 %v345
  %460 = vmatprep.subr.bf16.mxu0 0
  %461 = vmatpush1.bf16.msra.mxu0 %v344
  %462 = vmatprep.subr.bf16.mxu0 0
  %463 = vmatpush1.bf16.msra.mxu0 %v343
  %464 = vmatprep.subr.bf16.mxu0 0
  %465 = vmatpush1.bf16.msra.mxu0 %v342
  %466 = vmatprep.subr.bf16.mxu0 0
  %467 = vmatpush1.bf16.msra.mxu0 %v341
  %468 = vmatprep.subr.bf16.mxu0 0
  %469 = vmatpush1.bf16.msra.mxu0 %v340
  %470 = vmatprep.subr.bf16.mxu0 0
  %471 = vmatpush1.bf16.msra.mxu0 %v339
  %472 = vmatprep.subr.bf16.mxu0 0
  %473 = vmatpush1.bf16.msra.mxu0 %v338
  %474 = vmatprep.subr.bf16.mxu0 0
  %475 = vmatpush2.bf16.msra.mxu0 %v353
  %476 = vmatprep.subr.bf16.mxu0 0
  %477 = vmatpush2.bf16.msra.mxu0 %v352
  %478 = vmatprep.subr.bf16.mxu0 0
  %479 = vmatpush2.bf16.msra.mxu0 %v351
  %480 = vmatprep.subr.bf16.mxu0 0
  %481 = vmatpush2.bf16.msra.mxu0 %v350
  %482 = vmatprep.subr.bf16.mxu0 0
  %483 = vmatpush2.bf16.msra.mxu0 %v349
  %484 = vmatprep.subr.bf16.mxu0 0
  %485 = vmatpush2.bf16.msra.mxu0 %v348
  %486 = vmatprep.subr.bf16.mxu0 0
  %487 = vmatpush2.bf16.msra.mxu0 %v347
  %488 = vmatprep.subr.bf16.mxu0 0
  %489 = vmatpush2.bf16.msra.mxu0 %v346
  %490 = vmatprep.mubr.bf16.mxu0 %v24
  %491 = vmatmul.mubr.bf16.gmra.mxu0 %v23
  %v492 = vpop.f32.mrf.mxu0
  %v493 = vadd.f32 %v453, %v492
  %v494 = vpop.f32.mrf.mxu0
  %v495 = vpop.f32.mrf.mxu0
  %v496 = vpop.f32.mrf.mxu0
  %497 = vdwg.mxu0
  %498 = vmatprep.subr.bf16.mxu0 0
  %499 = vmatpush1.bf16.msra.mxu0 %v361
  %500 = vmatprep.subr.bf16.mxu0 0
  %501 = vmatpush1.bf16.msra.mxu0 %v360
  %502 = vmatprep.subr.bf16.mxu0 0
  %503 = vmatpush1.bf16.msra.mxu0 %v359
  %504 = vmatprep.subr.bf16.mxu0 0
  %505 = vmatpush1.bf16.msra.mxu0 %v358
  %506 = vmatprep.subr.bf16.mxu0 0
  %507 = vmatpush1.bf16.msra.mxu0 %v357
  %508 = vmatprep.subr.bf16.mxu0 0
  %509 = vmatpush1.bf16.msra.mxu0 %v356
  %510 = vmatprep.subr.bf16.mxu0 0
  %511 = vmatpush1.bf16.msra.mxu0 %v355
  %512 = vmatprep.subr.bf16.mxu0 0
  %513 = vmatpush1.bf16.msra.mxu0 %v354
  %514 = vmatprep.subr.bf16.mxu0 0
  %515 = vmatpush2.bf16.msra.mxu0 %v369
  %516 = vmatprep.subr.bf16.mxu0 0
  %517 = vmatpush2.bf16.msra.mxu0 %v368
  %518 = vmatprep.subr.bf16.mxu0 0
  %519 = vmatpush2.bf16.msra.mxu0 %v367
  %520 = vmatprep.subr.bf16.mxu0 0
  %521 = vmatpush2.bf16.msra.mxu0 %v366
  %522 = vmatprep.subr.bf16.mxu0 0
  %523 = vmatpush2.bf16.msra.mxu0 %v365
  %524 = vmatprep.subr.bf16.mxu0 0
  %525 = vmatpush2.bf16.msra.mxu0 %v364
  %526 = vmatprep.subr.bf16.mxu0 0
  %527 = vmatpush2.bf16.msra.mxu0 %v363
  %528 = vmatprep.subr.bf16.mxu0 0
  %529 = vmatpush2.bf16.msra.mxu0 %v362
  %530 = vmatprep.mubr.bf16.mxu0 %v26
  %531 = vmatmul.mubr.bf16.gmra.mxu0 %v25
  %v532 = vpop.f32.mrf.mxu0
  %v533 = vadd.f32 %v493, %v532
  %v534 = vpop.f32.mrf.mxu0
  %v535 = vpop.f32.mrf.mxu0
  %v536 = vpop.f32.mrf.mxu0
  %537 = vdwg.mxu0
  %538 = vst [vmem:[%s3] sm:$0xff] %v533
  // Predicated region
  $region14: #{deit_forward.4} parent=0 // pred_check
    _
  $region15: #{deit_forward.4} parent=0 // pred_check_branch
    %540 = sbr.rel (0) target = $region17
  $region16: #{deit_forward.4} parent=0 // pred_region
    _
  $region17: #{deit_forward.4} parent=0 // pred_fallthru
    _
  // Predicated region
  $region18: #{deit_forward.4} parent=0 // pred_check
    _
  $region19: #{deit_forward.4} parent=0 // pred_check_branch
    %542 = sbr.rel (0) target = $region21
  $region20: #{deit_forward.4} parent=0 // pred_region
    _
  $region21: #{deit_forward.4} parent=0 // pred_fallthru
    _

// kernel: deit_forward.6
$region0: #{deit_forward.6}
  #allocation0 [shape = 'u32[]', space=smem, size = 0x4, offset = 0x4, fixed_abs, tag = 'smem constant byte address 0x4 - core index']
  #allocation1 [shape = 'u32[144,128]{1,0:T(1,128)}', space=vmem, size = 0x12000, scoped, tag = 'internal scratch']
  %s0 = inlined_call_operand.vmem [shape: f32[2,8,128], index: 0, kind: input, shape index: {}]
  %s1 = inlined_call_operand.hbm [shape: f32[1,128], index: 1, kind: input, shape index: {}]
  %s2 = inlined_call_operand.hbm [shape: f32[1,128], index: 2, kind: input, shape index: {}]
  %s3 = inlined_call_operand.hbm [shape: bf16[128,384], index: 3, kind: input, shape index: {}]
  %s4 = inlined_call_operand.hbm [shape: f32[1,384], index: 4, kind: input, shape index: {}]
  %s5 = inlined_call_operand.hbm [shape: bf16[128,128], index: 5, kind: input, shape index: {}]
  %s6 = inlined_call_operand.hbm [shape: f32[1,128], index: 6, kind: input, shape index: {}]
  %s7 = inlined_call_operand.hbm [shape: f32[1,128], index: 7, kind: input, shape index: {}]
  %s8 = inlined_call_operand.hbm [shape: f32[1,128], index: 8, kind: input, shape index: {}]
  %s9 = inlined_call_operand.hbm [shape: bf16[128,512], index: 9, kind: input, shape index: {}]
  %s10 = inlined_call_operand.hbm [shape: f32[1,512], index: 10, kind: input, shape index: {}]
  %s11 = inlined_call_operand.hbm [shape: bf16[512,128], index: 11, kind: input, shape index: {}]
  %s12 = inlined_call_operand.hbm [shape: f32[1,128], index: 12, kind: input, shape index: {}]
  %s13 = inlined_call_operand.vmem [shape: f32[2,8,128], index: 13, kind: output, shape index: {}]
  %s14 = sld [smem:[#allocation0]]
  $region133: #{deit_forward.6} parent=0
    _
  %s16 = ssub.s32 1, %s14
  %s17 = scalar_select 0, %s16, %s14
  $region1: #{deit_forward.6} parent=0
    #allocation2 [shape = 'u8[512]{0}', space=vmem, size = 0x400, scoped, tag = 'input window, operand 1, single buffered']
    #allocation3 [shape = 's32[2]{0}', space=sflag, size = 0x8, scoped, tag = 'scoped memory for deit_forward.6']
    #allocation4 [shape = 'u8[512]{0}', space=vmem, size = 0x400, scoped, tag = 'input window, operand 2, single buffered']
    #allocation5 [shape = 's32[1]{0}', space=sflag, size = 0x4, scoped, tag = 'scoped memory for deit_forward.6']
    #allocation6 [shape = 'u8[98304]{0}', space=vmem, size = 0x18000, scoped, tag = 'input window, operand 3, single buffered']
    #allocation7 [shape = 'u8[1536]{0}', space=vmem, size = 0x800, scoped, tag = 'input window, operand 4, single buffered']
    #allocation8 [shape = 's32[1]{0}', space=sflag, size = 0x4, scoped, tag = 'scoped memory for deit_forward.6']
    #allocation9 [shape = 'u8[32768]{0}', space=vmem, size = 0x8000, scoped, tag = 'input window, operand 5, single buffered']
    #allocation10 [shape = 'u8[512]{0}', space=vmem, size = 0x400, scoped, tag = 'input window, operand 6, single buffered']
    #allocation11 [shape = 's32[1]{0}', space=sflag, size = 0x4, scoped, tag = 'scoped memory for deit_forward.6']
    #allocation12 [shape = 'u8[512]{0}', space=vmem, size = 0x400, scoped, tag = 'input window, operand 7, single buffered']
    #allocation13 [shape = 'u8[512]{0}', space=vmem, size = 0x400, scoped, tag = 'input window, operand 8, single buffered']
    #allocation14 [shape = 's32[1]{0}', space=sflag, size = 0x4, scoped, tag = 'scoped memory for deit_forward.6']
    #allocation15 [shape = 'u8[131072]{0}', space=vmem, size = 0x20000, scoped, tag = 'input window, operand 9, single buffered']
    #allocation16 [shape = 'u8[2048]{0}', space=vmem, size = 0x800, scoped, tag = 'input window, operand 10, single buffered']
    #allocation17 [shape = 's32[1]{0}', space=sflag, size = 0x4, scoped, tag = 'scoped memory for deit_forward.6']
    #allocation18 [shape = 'u8[131072]{0}', space=vmem, size = 0x20000, scoped, tag = 'input window, operand 11, single buffered']
    #allocation19 [shape = 'u8[512]{0}', space=vmem, size = 0x400, scoped, tag = 'input window, operand 12, single buffered']
    #allocation20 [shape = 's32[1]{0}', space=sflag, size = 0x4, scoped, tag = 'scoped memory for deit_forward.6']
    %18 = vsyncpa [#allocation3], 0
    %19 = vsyncpa [#allocation5], 0
    %20 = vsyncpa [#allocation8], 0
    %21 = vsyncpa [#allocation11], 0
    %22 = vsyncpa [#allocation14], 0
    %23 = vsyncpa [#allocation17], 0
    %24 = vsyncpa [#allocation20], 0
    loop: start=0, step=1, limit=4
    $region2: #{deit_forward.6} parent=1 // loop_pre_header
      _
    $region3: #{deit_forward.6} parent=1 // loop_header
      %s26 = sphi 0, %s30
      %p27 = scmp.ge.s32.totalorder %s26, 4
      %s36 = sphi 0, %s38
      %s39 = sphi 0, %s36
      %s40 = sphi 0, %s39
      %s56 = sphi 0, %s40
      %s60 = sphi 0, %s60
      %s62 = sphi 0, %s60
      %s63 = sphi 0, %s62
      %s77 = sphi 0, %s63
      %s81 = sphi 0, %s81
      %s83 = sphi 0, %s81
      %s84 = sphi 0, %s83
      %s98 = sphi 0, %s84
      %s102 = sphi 0, %s102
      %s104 = sphi 0, %s102
      %s105 = sphi 0, %s104
      %s119 = sphi 0, %s105
      %s123 = sphi 0, %s123
      %s125 = sphi 0, %s123
      %s126 = sphi 0, %s125
      %s140 = sphi 0, %s126
      %s144 = sphi 0, %s144
      %s146 = sphi 0, %s144
      %s147 = sphi 0, %s146
      %s161 = sphi 0, %s147
      %s165 = sphi 0, %s165
      %s167 = sphi 0, %s165
      %s168 = sphi 0, %s167
      %s182 = sphi 0, %s168
      %s186 = sphi 0, %s186
      %s188 = sphi 0, %s186
      %s189 = sphi 0, %s188
      %s203 = sphi 0, %s189
      %s207 = sphi 0, %s207
      %s209 = sphi 0, %s207
      %s210 = sphi 0, %s209
      %s224 = sphi 0, %s210
      %s228 = sphi 0, %s228
      %s230 = sphi 0, %s228
      %s231 = sphi 0, %s230
      %s245 = sphi 0, %s231
      %s249 = sphi 0, %s249
      %s251 = sphi 0, %s249
      %s252 = sphi 0, %s251
      %s266 = sphi 0, %s252
      %s270 = sphi 0, %s270
      %s272 = sphi 0, %s270
      %s273 = sphi 0, %s272
      %s287 = sphi 0, %s273
      %s291 = sphi 0, %s291
      %s293 = sphi 0, %s291
      %s294 = sphi 0, %s293
      %s308 = sphi 0, %s294
      %s314 = sphi 0, %s316
      %s317 = sphi 0, %s314
      %s318 = sphi 0, %s317
      %s334 = sphi 0, %s318
    $region4: #{deit_forward.6} parent=1 // loop_header_branch
      %29 = sbr.rel (%p27) target = $region8
    $region5: #{deit_forward.6} parent=1 // loop_body
      %s31 = ssub.s32 %s26, 1
      %s32 = ssub.s32 %s26, 2
      %s33 = sadd.s32 %s26, 1
      %s34 = ssub.s32 %s26, %s33
      %p35 = scmp.eq.s32.totalorder %s34, 0
      %s37 = sadd.s32 %s36, 1
      %s38 = scalar_select %p35, %s36, %s37
      %p41 = pneg %p35
      %p42 = scmp.eq.s32.totalorder %s26, 1
      %p43 = por %p41, %p42
      %p44 = scmp.ne.s32.totalorder %s36, %s39
      %p45 = scmp.eq.s32.totalorder %s26, 0
      %p46 = por %p44, %p45
      %p47 = scmp.ne.s32.totalorder %s36, %s39
      %p48 = scmp.eq.s32.totalorder %s31, 1
      %p49 = por %p47, %p48
      %p50 = scmp.ne.s32.totalorder %s39, %s40
      %p51 = scmp.eq.s32.totalorder %s31, 0
      %p52 = por %p50, %p51
      %p53 = scmp.ne.s32.totalorder %s39, %s40
      %p54 = scmp.eq.s32.totalorder %s32, 1
      %p55 = por %p53, %p54
      %p57 = scmp.ne.s32.totalorder %s40, %s56
      %p58 = scmp.eq.s32.totalorder %s32, 0
      %p59 = por %p57, %p58
      %s61 = sadd.s32 %s60, 1
      %p64 = scmp.eq.s32.totalorder %s26, 1
      %p65 = scmp.ne.s32.totalorder %s60, %s62
      %p66 = scmp.eq.s32.totalorder %s26, 0
      %p67 = por %p65, %p66
      %p68 = scmp.ne.s32.totalorder %s60, %s62
      %p69 = scmp.eq.s32.totalorder %s31, 1
      %p70 = por %p68, %p69
      %p71 = scmp.ne.s32.totalorder %s62, %s63
      %p72 = scmp.eq.s32.totalorder %s31, 0
      %p73 = por %p71, %p72
      %p74 = scmp.ne.s32.totalorder %s62, %s63
      %p75 = scmp.eq.s32.totalorder %s32, 1
      %p76 = por %p74, %p75
      %p78 = scmp.ne.s32.totalorder %s63, %s77
      %p79 = scmp.eq.s32.totalorder %s32, 0
      %p80 = por %p78, %p79
      %s82 = sadd.s32 %s81, 1
      %p85 = scmp.eq.s32.totalorder %s26, 1
      %p86 = scmp.ne.s32.totalorder %s81, %s83
      %p87 = scmp.eq.s32.totalorder %s26, 0
      %p88 = por %p86, %p87
      %p89 = scmp.ne.s32.totalorder %s81, %s83
      %p90 = scmp.eq.s32.totalorder %s31, 1
      %p91 = por %p89, %p90
      %p92 = scmp.ne.s32.totalorder %s83, %s84
      %p93 = scmp.eq.s32.totalorder %s31, 0
      %p94 = por %p92, %p93
      %p95 = scmp.ne.s32.totalorder %s83, %s84
      %p96 = scmp.eq.s32.totalorder %s32, 1
      %p97 = por %p95, %p96
      %p99 = scmp.ne.s32.totalorder %s84, %s98
      %p100 = scmp.eq.s32.totalorder %s32, 0
      %p101 = por %p99, %p100
      %s103 = sadd.s32 %s102, 1
      %p106 = scmp.eq.s32.totalorder %s26, 1
      %p107 = scmp.ne.s32.totalorder %s102, %s104
      %p108 = scmp.eq.s32.totalorder %s26, 0
      %p109 = por %p107, %p108
      %p110 = scmp.ne.s32.totalorder %s102, %s104
      %p111 = scmp.eq.s32.totalorder %s31, 1
      %p112 = por %p110, %p111
      %p113 = scmp.ne.s32.totalorder %s104, %s105
      %p114 = scmp.eq.s32.totalorder %s31, 0
      %p115 = por %p113, %p114
      %p116 = scmp.ne.s32.totalorder %s104, %s105
      %p117 = scmp.eq.s32.totalorder %s32, 1
      %p118 = por %p116, %p117
      %p120 = scmp.ne.s32.totalorder %s105, %s119
      %p121 = scmp.eq.s32.totalorder %s32, 0
      %p122 = por %p120, %p121
      %s124 = sadd.s32 %s123, 1
      %p127 = scmp.eq.s32.totalorder %s26, 1
      %p128 = scmp.ne.s32.totalorder %s123, %s125
      %p129 = scmp.eq.s32.totalorder %s26, 0
      %p130 = por %p128, %p129
      %p131 = scmp.ne.s32.totalorder %s123, %s125
      %p132 = scmp.eq.s32.totalorder %s31, 1
      %p133 = por %p131, %p132
      %p134 = scmp.ne.s32.totalorder %s125, %s126
      %p135 = scmp.eq.s32.totalorder %s31, 0
      %p136 = por %p134, %p135
      %p137 = scmp.ne.s32.totalorder %s125, %s126
      %p138 = scmp.eq.s32.totalorder %s32, 1
      %p139 = por %p137, %p138
      %p141 = scmp.ne.s32.totalorder %s126, %s140
      %p142 = scmp.eq.s32.totalorder %s32, 0
      %p143 = por %p141, %p142
      %s145 = sadd.s32 %s144, 1
      %p148 = scmp.eq.s32.totalorder %s26, 1
      %p149 = scmp.ne.s32.totalorder %s144, %s146
      %p150 = scmp.eq.s32.totalorder %s26, 0
      %p151 = por %p149, %p150
      %p152 = scmp.ne.s32.totalorder %s144, %s146
      %p153 = scmp.eq.s32.totalorder %s31, 1
      %p154 = por %p152, %p153
      %p155 = scmp.ne.s32.totalorder %s146, %s147
      %p156 = scmp.eq.s32.totalorder %s31, 0
      %p157 = por %p155, %p156
      %p158 = scmp.ne.s32.totalorder %s146, %s147
      %p159 = scmp.eq.s32.totalorder %s32, 1
      %p160 = por %p158, %p159
      %p162 = scmp.ne.s32.totalorder %s147, %s161
      %p163 = scmp.eq.s32.totalorder %s32, 0
      %p164 = por %p162, %p163
      %s166 = sadd.s32 %s165, 1
      %p169 = scmp.eq.s32.totalorder %s26, 1
      %p170 = scmp.ne.s32.totalorder %s165, %s167
      %p171 = scmp.eq.s32.totalorder %s26, 0
      %p172 = por %p170, %p171
      %p173 = scmp.ne.s32.totalorder %s165, %s167
      %p174 = scmp.eq.s32.totalorder %s31, 1
      %p175 = por %p173, %p174
      %p176 = scmp.ne.s32.totalorder %s167, %s168
      %p177 = scmp.eq.s32.totalorder %s31, 0
      %p178 = por %p176, %p177
      %p179 = scmp.ne.s32.totalorder %s167, %s168
      %p180 = scmp.eq.s32.totalorder %s32, 1
      %p181 = por %p179, %p180
      %p183 = scmp.ne.s32.totalorder %s168, %s182
      %p184 = scmp.eq.s32.totalorder %s32, 0
      %p185 = por %p183, %p184
      %s187 = sadd.s32 %s186, 1
      %p190 = scmp.eq.s32.totalorder %s26, 1
      %p191 = scmp.ne.s32.totalorder %s186, %s188
      %p192 = scmp.eq.s32.totalorder %s26, 0
      %p193 = por %p191, %p192
      %p194 = scmp.ne.s32.totalorder %s186, %s188
      %p195 = scmp.eq.s32.totalorder %s31, 1
      %p196 = por %p194, %p195
      %p197 = scmp.ne.s32.totalorder %s188, %s189
      %p198 = scmp.eq.s32.totalorder %s31, 0
      %p199 = por %p197, %p198
      %p200 = scmp.ne.s32.totalorder %s188, %s189
      %p201 = scmp.eq.s32.totalorder %s32, 1
      %p202 = por %p200, %p201
      %p204 = scmp.ne.s32.totalorder %s189, %s203
      %p205 = scmp.eq.s32.totalorder %s32, 0
      %p206 = por %p204, %p205
      %s208 = sadd.s32 %s207, 1
      %p211 = scmp.eq.s32.totalorder %s26, 1
      %p212 = scmp.ne.s32.totalorder %s207, %s209
      %p213 = scmp.eq.s32.totalorder %s26, 0
      %p214 = por %p212, %p213
      %p215 = scmp.ne.s32.totalorder %s207, %s209
      %p216 = scmp.eq.s32.totalorder %s31, 1
      %p217 = por %p215, %p216
      %p218 = scmp.ne.s32.totalorder %s209, %s210
      %p219 = scmp.eq.s32.totalorder %s31, 0
      %p220 = por %p218, %p219
      %p221 = scmp.ne.s32.totalorder %s209, %s210
      %p222 = scmp.eq.s32.totalorder %s32, 1
      %p223 = por %p221, %p222
      %p225 = scmp.ne.s32.totalorder %s210, %s224
      %p226 = scmp.eq.s32.totalorder %s32, 0
      %p227 = por %p225, %p226
      %s229 = sadd.s32 %s228, 1
      %p232 = scmp.eq.s32.totalorder %s26, 1
      %p233 = scmp.ne.s32.totalorder %s228, %s230
      %p234 = scmp.eq.s32.totalorder %s26, 0
      %p235 = por %p233, %p234
      %p236 = scmp.ne.s32.totalorder %s228, %s230
      %p237 = scmp.eq.s32.totalorder %s31, 1
      %p238 = por %p236, %p237
      %p239 = scmp.ne.s32.totalorder %s230, %s231
      %p240 = scmp.eq.s32.totalorder %s31, 0
      %p241 = por %p239, %p240
      %p242 = scmp.ne.s32.totalorder %s230, %s231
      %p243 = scmp.eq.s32.totalorder %s32, 1
      %p244 = por %p242, %p243
      %p246 = scmp.ne.s32.totalorder %s231, %s245
      %p247 = scmp.eq.s32.totalorder %s32, 0
      %p248 = por %p246, %p247
      %s250 = sadd.s32 %s249, 1
      %p253 = scmp.eq.s32.totalorder %s26, 1
      %p254 = scmp.ne.s32.totalorder %s249, %s251
      %p255 = scmp.eq.s32.totalorder %s26, 0
      %p256 = por %p254, %p255
      %p257 = scmp.ne.s32.totalorder %s249, %s251
      %p258 = scmp.eq.s32.totalorder %s31, 1
      %p259 = por %p257, %p258
      %p260 = scmp.ne.s32.totalorder %s251, %s252
      %p261 = scmp.eq.s32.totalorder %s31, 0
      %p262 = por %p260, %p261
      %p263 = scmp.ne.s32.totalorder %s251, %s252
      %p264 = scmp.eq.s32.totalorder %s32, 1
      %p265 = por %p263, %p264
      %p267 = scmp.ne.s32.totalorder %s252, %s266
      %p268 = scmp.eq.s32.totalorder %s32, 0
      %p269 = por %p267, %p268
      %s271 = sadd.s32 %s270, 1
      %p274 = scmp.eq.s32.totalorder %s26, 1
      %p275 = scmp.ne.s32.totalorder %s270, %s272
      %p276 = scmp.eq.s32.totalorder %s26, 0
      %p277 = por %p275, %p276
      %p278 = scmp.ne.s32.totalorder %s270, %s272
      %p279 = scmp.eq.s32.totalorder %s31, 1
      %p280 = por %p278, %p279
      %p281 = scmp.ne.s32.totalorder %s272, %s273
      %p282 = scmp.eq.s32.totalorder %s31, 0
      %p283 = por %p281, %p282
      %p284 = scmp.ne.s32.totalorder %s272, %s273
      %p285 = scmp.eq.s32.totalorder %s32, 1
      %p286 = por %p284, %p285
      %p288 = scmp.ne.s32.totalorder %s273, %s287
      %p289 = scmp.eq.s32.totalorder %s32, 0
      %p290 = por %p288, %p289
      %s292 = sadd.s32 %s291, 1
      %p295 = scmp.eq.s32.totalorder %s26, 1
      %p296 = scmp.ne.s32.totalorder %s291, %s293
      %p297 = scmp.eq.s32.totalorder %s26, 0
      %p298 = por %p296, %p297
      %p299 = scmp.ne.s32.totalorder %s291, %s293
      %p300 = scmp.eq.s32.totalorder %s31, 1
      %p301 = por %p299, %p300
      %p302 = scmp.ne.s32.totalorder %s293, %s294
      %p303 = scmp.eq.s32.totalorder %s31, 0
      %p304 = por %p302, %p303
      %p305 = scmp.ne.s32.totalorder %s293, %s294
      %p306 = scmp.eq.s32.totalorder %s32, 1
      %p307 = por %p305, %p306
      %p309 = scmp.ne.s32.totalorder %s294, %s308
      %p310 = scmp.eq.s32.totalorder %s32, 0
      %p311 = por %p309, %p310
      %s312 = ssub.s32 %s26, %s33
      %p313 = scmp.eq.s32.totalorder %s312, 0
      %s315 = sadd.s32 %s314, 1
      %s316 = scalar_select %p313, %s314, %s315
      %p319 = pneg %p313
      %p320 = scmp.eq.s32.totalorder %s26, 1
      %p321 = por %p319, %p320
      %p322 = scmp.ne.s32.totalorder %s314, %s317
      %p323 = scmp.eq.s32.totalorder %s26, 0
      %p324 = por %p322, %p323
      %p325 = scmp.ne.s32.totalorder %s314, %s317
      %p326 = scmp.eq.s32.totalorder %s31, 1
      %p327 = por %p325, %p326
      %p328 = scmp.ne.s32.totalorder %s317, %s318
      %p329 = scmp.eq.s32.totalorder %s31, 0
      %p330 = por %p328, %p329
      %p331 = scmp.ne.s32.totalorder %s317, %s318
      %p332 = scmp.eq.s32.totalorder %s32, 1
      %p333 = por %p331, %p332
      %p335 = scmp.ne.s32.totalorder %s318, %s334
      %p336 = scmp.eq.s32.totalorder %s32, 0
      %p337 = por %p335, %p336
      %p338 = scmp.le.s32.totalorder 1, %s26
      %p339 = scmp.lt.s32.totalorder %s26, 3
      %p340 = pnand %p338, %p339
      %p341 = pneg %p340
      // Predicated region
      $region9: #{deit_forward.6} parent=5 // pred_check
        _
      $region10: #{deit_forward.6} parent=5 // pred_check_branch
        %343 = sbr.rel (%p340) target = $region12
      $region11: #{deit_forward.6} parent=5 // pred_region
        %s344 = ssub.s32 %s26, 1
        // Predicated region
        $region13: #{deit_forward.6} parent=11 // pred_check
          %p345 = pneg %p73
        $region14: #{deit_forward.6} parent=11 // pred_check_branch
          %347 = sbr.rel (%p345) target = $region16
        $region15: #{deit_forward.6} parent=11 // pred_region
          %s349 = ssub.s32 16, 16
          %350 = vsyncadd [#allocation3], %s349
          %s352 = sshll.u32 [#allocation2], 4
          %s353 = int_to_ptr.vmem [resolvable:$true] %s352
          %355 = dma.hbm_to_vmem [thread:$0]  %s1, 16, %s353, [#allocation3]
        $region16: #{deit_forward.6} parent=11 // pred_fallthru
          _
        // Predicated region
        $region17: #{deit_forward.6} parent=11 // pred_check
          %p356 = pneg %p94
        $region18: #{deit_forward.6} parent=11 // pred_check_branch
          %358 = sbr.rel (%p356) target = $region20
        $region19: #{deit_forward.6} parent=11 // pred_region
          %s360 = ssub.s32 16, 16
          %361 = vsyncadd [#allocation5], %s360
          %s363 = sshll.u32 [#allocation4], 4
          %s364 = int_to_ptr.vmem [resolvable:$true] %s363
          %366 = dma.hbm_to_vmem [thread:$0]  %s2, 16, %s364, [#allocation5]
        $region20: #{deit_forward.6} parent=11 // pred_fallthru
          _
        // Predicated region
        $region21: #{deit_forward.6} parent=11 // pred_check
          %p367 = pneg %p115
        $region22: #{deit_forward.6} parent=11 // pred_check_branch
          %369 = sbr.rel (%p367) target = $region24
        $region23: #{deit_forward.6} parent=11 // pred_region
          %s371 = ssub.s32 3072, 3072
          %372 = vsyncadd [#allocation5], %s371
          %s373 = sshll.u32 [#allocation6], 4
          %s374 = int_to_ptr.vmem [resolvable:$true] %s373
          %379 = dma.hbm_to_vmem [thread:$0]  %s3, 3072, %s374, [#allocation5], 192, 192, 12
        $region24: #{deit_forward.6} parent=11 // pred_fallthru
          _
        // Predicated region
        $region25: #{deit_forward.6} parent=11 // pred_check
          %p380 = pneg %p136
        $region26: #{deit_forward.6} parent=11 // pred_check_branch
          %382 = sbr.rel (%p380) target = $region28
        $region27: #{deit_forward.6} parent=11 // pred_region
          %s384 = ssub.s32 48, 48
          %385 = vsyncadd [#allocation8], %s384
          %s387 = sshll.u32 [#allocation7], 4
          %s388 = int_to_ptr.vmem [resolvable:$true] %s387
          %390 = dma.hbm_to_vmem [thread:$0]  %s4, 48, %s388, [#allocation8]
        $region28: #{deit_forward.6} parent=11 // pred_fallthru
          _
        // Predicated region
        $region29: #{deit_forward.6} parent=11 // pred_check
          %p391 = pneg %p157
        $region30: #{deit_forward.6} parent=11 // pred_check_branch
          %393 = sbr.rel (%p391) target = $region32
        $region31: #{deit_forward.6} parent=11 // pred_region
          %s395 = ssub.s32 1024, 1024
          %396 = vsyncadd [#allocation8], %s395
          %s397 = sshll.u32 [#allocation9], 4
          %s398 = int_to_ptr.vmem [resolvable:$true] %s397
          %403 = dma.hbm_to_vmem [thread:$0]  %s5, 1024, %s398, [#allocation8], 64, 64, 4
        $region32: #{deit_forward.6} parent=11 // pred_fallthru
          _
        // Predicated region
        $region33: #{deit_forward.6} parent=11 // pred_check
          %p404 = pneg %p178
        $region34: #{deit_forward.6} parent=11 // pred_check_branch
          %406 = sbr.rel (%p404) target = $region36
        $region35: #{deit_forward.6} parent=11 // pred_region
          %s408 = ssub.s32 16, 16
          %409 = vsyncadd [#allocation11], %s408
          %s411 = sshll.u32 [#allocation10], 4
          %s412 = int_to_ptr.vmem [resolvable:$true] %s411
          %414 = dma.hbm_to_vmem [thread:$0]  %s6, 16, %s412, [#allocation11]
        $region36: #{deit_forward.6} parent=11 // pred_fallthru
          _
        // Predicated region
        $region37: #{deit_forward.6} parent=11 // pred_check
          %p415 = pneg %p199
        $region38: #{deit_forward.6} parent=11 // pred_check_branch
          %417 = sbr.rel (%p415) target = $region40
        $region39: #{deit_forward.6} parent=11 // pred_region
          %s419 = ssub.s32 16, 16
          %420 = vsyncadd [#allocation11], %s419
          %s422 = sshll.u32 [#allocation12], 4
          %s423 = int_to_ptr.vmem [resolvable:$true] %s422
          %425 = dma.hbm_to_vmem [thread:$0]  %s7, 16, %s423, [#allocation11]
        $region40: #{deit_forward.6} parent=11 // pred_fallthru
          _
        // Predicated region
        $region41: #{deit_forward.6} parent=11 // pred_check
          %p426 = pneg %p220
        $region42: #{deit_forward.6} parent=11 // pred_check_branch
          %428 = sbr.rel (%p426) target = $region44
        $region43: #{deit_forward.6} parent=11 // pred_region
          %s430 = ssub.s32 16, 16
          %431 = vsyncadd [#allocation14], %s430
          %s433 = sshll.u32 [#allocation13], 4
          %s434 = int_to_ptr.vmem [resolvable:$true] %s433
          %436 = dma.hbm_to_vmem [thread:$0]  %s8, 16, %s434, [#allocation14]
        $region44: #{deit_forward.6} parent=11 // pred_fallthru
          _
        // Predicated region
        $region45: #{deit_forward.6} parent=11 // pred_check
          %p437 = pneg %p241
        $region46: #{deit_forward.6} parent=11 // pred_check_branch
          %439 = sbr.rel (%p437) target = $region48
        $region47: #{deit_forward.6} parent=11 // pred_region
          %s441 = ssub.s32 4096, 4096
          %442 = vsyncadd [#allocation14], %s441
          %s443 = sshll.u32 [#allocation15], 4
          %s444 = int_to_ptr.vmem [resolvable:$true] %s443
          %449 = dma.hbm_to_vmem [thread:$0]  %s9, 4096, %s444, [#allocation14], 256, 256, 16
        $region48: #{deit_forward.6} parent=11 // pred_fallthru
          _
        // Predicated region
        $region49: #{deit_forward.6} parent=11 // pred_check
          %p450 = pneg %p262
        $region50: #{deit_forward.6} parent=11 // pred_check_branch
          %452 = sbr.rel (%p450) target = $region52
        $region51: #{deit_forward.6} parent=11 // pred_region
          %s454 = ssub.s32 64, 64
          %455 = vsyncadd [#allocation17], %s454
          %s457 = sshll.u32 [#allocation16], 4
          %s458 = int_to_ptr.vmem [resolvable:$true] %s457
          %460 = dma.hbm_to_vmem [thread:$0]  %s10, 64, %s458, [#allocation17]
        $region52: #{deit_forward.6} parent=11 // pred_fallthru
          _
        // Predicated region
        $region53: #{deit_forward.6} parent=11 // pred_check
          %p461 = pneg %p283
        $region54: #{deit_forward.6} parent=11 // pred_check_branch
          %463 = sbr.rel (%p461) target = $region56
        $region55: #{deit_forward.6} parent=11 // pred_region
          %s465 = ssub.s32 4096, 4096
          %466 = vsyncadd [#allocation17], %s465
          %s467 = sshll.u32 [#allocation18], 4
          %s468 = int_to_ptr.vmem [resolvable:$true] %s467
          %473 = dma.hbm_to_vmem [thread:$0]  %s11, 4096, %s468, [#allocation17], 64, 64, 4
        $region56: #{deit_forward.6} parent=11 // pred_fallthru
          _
        // Predicated region
        $region57: #{deit_forward.6} parent=11 // pred_check
          %p474 = pneg %p304
        $region58: #{deit_forward.6} parent=11 // pred_check_branch
          %476 = sbr.rel (%p474) target = $region60
        $region59: #{deit_forward.6} parent=11 // pred_region
          %s478 = ssub.s32 16, 16
          %479 = vsyncadd [#allocation20], %s478
          %s481 = sshll.u32 [#allocation19], 4
          %s482 = int_to_ptr.vmem [resolvable:$true] %s481
          %484 = dma.hbm_to_vmem [thread:$0]  %s12, 16, %s482, [#allocation20]
        $region60: #{deit_forward.6} parent=11 // pred_fallthru
          _
      $region12: #{deit_forward.6} parent=5 // pred_fallthru
        _
      %p485 = scmp.lt.s32.totalorder %s26, 2
      // Predicated region
      $region61: #{deit_forward.6} parent=5 // pred_check
        %p486 = pneg %p485
      $region62: #{deit_forward.6} parent=5 // pred_check_branch
        %488 = sbr.rel (%p486) target = $region64
      $region63: #{deit_forward.6} parent=5 // pred_region
        // Predicated region
        $region65: #{deit_forward.6} parent=63 // pred_check
          %p489 = pneg %p46
        $region66: #{deit_forward.6} parent=63 // pred_check_branch
          %491 = sbr.rel (%p489) target = $region68
        $region67: #{deit_forward.6} parent=63 // pred_region
          %p492 = scmp.lt.s32.totalorder %s26, 1
          %s493 = scalar_select %p492, %s26, 1
          %s494 = smul.addr %s493, 8
          %s495 = scalar_lea.vmem %s0, %s494
        $region68: #{deit_forward.6} parent=63 // pred_fallthru
          _
      $region64: #{deit_forward.6} parent=5 // pred_fallthru
        _
      %p496 = scmp.le.s32.totalorder 1, %s26
      %p497 = scmp.lt.s32.totalorder %s26, 3
      %p498 = pnand %p496, %p497
      %p499 = pneg %p498
      // Predicated region
      $region69: #{deit_forward.6} parent=5 // pred_check
        _
      $region70: #{deit_forward.6} parent=5 // pred_check_branch
        %501 = sbr.rel (%p498) target = $region72
      $region71: #{deit_forward.6} parent=5 // pred_region
        %s502 = ssub.s32 %s26, 1
        // Predicated region
        $region73: #{deit_forward.6} parent=71 // pred_check
          %p503 = pneg %p73
        $region74: #{deit_forward.6} parent=71 // pred_check_branch
          %505 = sbr.rel (%p503) target = $region76
        $region75: #{deit_forward.6} parent=71 // pred_region
          %506 = dma.done [#allocation3], 16
        $region76: #{deit_forward.6} parent=71 // pred_fallthru
          _
        // Predicated region
        $region77: #{deit_forward.6} parent=71 // pred_check
          %p507 = pneg %p94
        $region78: #{deit_forward.6} parent=71 // pred_check_branch
          %509 = sbr.rel (%p507) target = $region80
        $region79: #{deit_forward.6} parent=71 // pred_region
          %510 = dma.done [#allocation5], 16
        $region80: #{deit_forward.6} parent=71 // pred_fallthru
          _
        // Predicated region
        $region81: #{deit_forward.6} parent=71 // pred_check
          %p511 = pneg %p115
        $region82: #{deit_forward.6} parent=71 // pred_check_branch
          %513 = sbr.rel (%p511) target = $region84
        $region83: #{deit_forward.6} parent=71 // pred_region
          %514 = dma.done [#allocation5], 3072
        $region84: #{deit_forward.6} parent=71 // pred_fallthru
          _
        // Predicated region
        $region85: #{deit_forward.6} parent=71 // pred_check
          %p515 = pneg %p136
        $region86: #{deit_forward.6} parent=71 // pred_check_branch
          %517 = sbr.rel (%p515) target = $region88
        $region87: #{deit_forward.6} parent=71 // pred_region
          %518 = dma.done [#allocation8], 48
        $region88: #{deit_forward.6} parent=71 // pred_fallthru
          _
        // Predicated region
        $region89: #{deit_forward.6} parent=71 // pred_check
          %p519 = pneg %p157
        $region90: #{deit_forward.6} parent=71 // pred_check_branch
          %521 = sbr.rel (%p519) target = $region92
        $region91: #{deit_forward.6} parent=71 // pred_region
          %522 = dma.done [#allocation8], 1024
        $region92: #{deit_forward.6} parent=71 // pred_fallthru
          _
        // Predicated region
        $region93: #{deit_forward.6} parent=71 // pred_check
          %p523 = pneg %p178
        $region94: #{deit_forward.6} parent=71 // pred_check_branch
          %525 = sbr.rel (%p523) target = $region96
        $region95: #{deit_forward.6} parent=71 // pred_region
          %526 = dma.done [#allocation11], 16
        $region96: #{deit_forward.6} parent=71 // pred_fallthru
          _
        // Predicated region
        $region97: #{deit_forward.6} parent=71 // pred_check
          %p527 = pneg %p199
        $region98: #{deit_forward.6} parent=71 // pred_check_branch
          %529 = sbr.rel (%p527) target = $region100
        $region99: #{deit_forward.6} parent=71 // pred_region
          %530 = dma.done [#allocation11], 16
        $region100: #{deit_forward.6} parent=71 // pred_fallthru
          _
        // Predicated region
        $region101: #{deit_forward.6} parent=71 // pred_check
          %p531 = pneg %p220
        $region102: #{deit_forward.6} parent=71 // pred_check_branch
          %533 = sbr.rel (%p531) target = $region104
        $region103: #{deit_forward.6} parent=71 // pred_region
          %534 = dma.done [#allocation14], 16
        $region104: #{deit_forward.6} parent=71 // pred_fallthru
          _
        // Predicated region
        $region105: #{deit_forward.6} parent=71 // pred_check
          %p535 = pneg %p241
        $region106: #{deit_forward.6} parent=71 // pred_check_branch
          %537 = sbr.rel (%p535) target = $region108
        $region107: #{deit_forward.6} parent=71 // pred_region
          %538 = dma.done [#allocation14], 4096
        $region108: #{deit_forward.6} parent=71 // pred_fallthru
          _
        // Predicated region
        $region109: #{deit_forward.6} parent=71 // pred_check
          %p539 = pneg %p262
        $region110: #{deit_forward.6} parent=71 // pred_check_branch
          %541 = sbr.rel (%p539) target = $region112
        $region111: #{deit_forward.6} parent=71 // pred_region
          %542 = dma.done [#allocation17], 64
        $region112: #{deit_forward.6} parent=71 // pred_fallthru
          _
        // Predicated region
        $region113: #{deit_forward.6} parent=71 // pred_check
          %p543 = pneg %p283
        $region114: #{deit_forward.6} parent=71 // pred_check_branch
          %545 = sbr.rel (%p543) target = $region116
        $region115: #{deit_forward.6} parent=71 // pred_region
          %546 = dma.done [#allocation17], 4096
        $region116: #{deit_forward.6} parent=71 // pred_fallthru
          _
        // Predicated region
        $region117: #{deit_forward.6} parent=71 // pred_check
          %p547 = pneg %p304
        $region118: #{deit_forward.6} parent=71 // pred_check_branch
          %549 = sbr.rel (%p547) target = $region120
        $region119: #{deit_forward.6} parent=71 // pred_region
          %550 = dma.done [#allocation20], 16
        $region120: #{deit_forward.6} parent=71 // pred_fallthru
          _
        %p551 = scmp.lt.s32.totalorder %s31, 1
        %s552 = scalar_select %p551, %s31, 1
        %s553 = smul.addr %s552, 8
        %s554 = scalar_lea.vmem %s0, %s553
        %p555 = pneg %p52
        %p556 = pneg %p49
        %p557 = pneg %p73
        %p558 = pneg %p70
        %p559 = pneg %p94
        %p560 = pneg %p91
        %p561 = pneg %p115
        %p562 = pneg %p112
        %p563 = pneg %p136
        %p564 = pneg %p133
        %p565 = pneg %p157
        %p566 = pneg %p154
        %p567 = pneg %p178
        %p568 = pneg %p175
        %p569 = pneg %p199
        %p570 = pneg %p196
        %p571 = pneg %p220
        %p572 = pneg %p217
        %p573 = pneg %p241
        %p574 = pneg %p238
        %p575 = pneg %p262
        %p576 = pneg %p259
        %p577 = pneg %p283
        %p578 = pneg %p280
        %p579 = pneg %p304
        %p580 = pneg %p301
        %p581 = pneg %p330
        %p582 = pneg %p327
        %p583 = scmp.lt.s32.totalorder %s31, 1
        %s584 = scalar_select %p583, %s31, 1
        %s585 = smul.addr %s584, 8
        %s586 = scalar_lea.vmem %s13, %s585
        %p587 = scmp.lt.s32.totalorder %s31, 1
        %s588 = scalar_select %p587, %s31, 1
        %s589 = smul.addr %s588, 8
        %s590 = scalar_lea.vmem %s0, %s589
        %p591 = scmp.lt.s32.totalorder %s31, 1
        %s592 = scalar_select %p591, %s31, 1
        %s593 = smul.addr %s592, 8
        %s594 = scalar_lea.vmem %s13, %s593
        %v596 = vld [vmem:[%s590] sm:$0xff]
        %v597 = vld [vmem:[#allocation2] sm:$0x1]
        %v598 = vld [vmem:[#allocation4] sm:$0x1]
        %599 = vadd.xlane.f32.xlu0 %v596
        %v600 = vpop.xlane.xlu0 %599
        %v601 = vrcp.pop 128.0
        %v602 = vmul.f32 %v600, %v601
        %v603 = vsub.f32 %v596, %v602
        %v604 = vmul.f32 %v603, %v603
        %605 = vadd.xlane.f32.xlu0 %v604
        %v606 = vpop.xlane.xlu0 %605
        %v607 = vmul.f32 %v606, %v601
        %v608 = vadd.f32 %v607, 1e-06
        %v609 = vrsqrt.pop %v608
        %v610 = vmul.f32 %v603, %v609
        %v612 = vlaneseq
        %v613 = vshrl.u32 %v612, 7
        %v614 = vsub.s32 0, %v613
        %v615 = vrot.slane %v597, %v614
        %v617 = vmul.f32 %v610, %v615
        %v619 = vlaneseq
        %v620 = vshrl.u32 %v619, 7
        %v621 = vsub.s32 0, %v620
        %v622 = vrot.slane %v598, %v621
        %v624 = vadd.f32 %v617, %v622
        %v625 = vpack.c.bf16 %v624, %v624
        %v626 = vld [vmem:[#allocation6] sm:$0xff]
        %v627 = vld [vmem:[#allocation6 + $0x8] sm:$0xf]
        %v628 = vld [vmem:[#allocation6 + $0xc] sm:$0xff]
        %v629 = vld [vmem:[#allocation6 + $0x14] sm:$0xf]
        %v630 = vld [vmem:[#allocation6 + $0x18] sm:$0xff]
        %v631 = vld [vmem:[#allocation6 + $0x20] sm:$0xf]
        %v632 = vld [vmem:[#allocation6 + $0x24] sm:$0xff]
        %v633 = vld [vmem:[#allocation6 + $0x2c] sm:$0xf]
        %v634 = vld [vmem:[#allocation6 + $0x30] sm:$0xff]
        %v635 = vld [vmem:[#allocation6 + $0x38] sm:$0xf]
        %v636 = vld [vmem:[#allocation6 + $0x3c] sm:$0xff]
        %v637 = vld [vmem:[#allocation6 + $0x44] sm:$0xf]
        %v638 = vld [vmem:[#allocation6 + $0x48] sm:$0xff]
        %v639 = vld [vmem:[#allocation6 + $0x50] sm:$0xf]
        %v640 = vld [vmem:[#allocation6 + $0x54] sm:$0xff]
        %v641 = vld [vmem:[#allocation6 + $0x5c] sm:$0xf]
        %v642 = vld [vmem:[#allocation6 + $0x60] sm:$0xff]
        %v643 = vld [vmem:[#allocation6 + $0x68] sm:$0xf]
        %v644 = vld [vmem:[#allocation6 + $0x6c] sm:$0xff]
        %v645 = vld [vmem:[#allocation6 + $0x74] sm:$0xf]
        %v646 = vld [vmem:[#allocation6 + $0x78] sm:$0xff]
        %v647 = vld [vmem:[#allocation6 + $0x80] sm:$0xf]
        %v648 = vld [vmem:[#allocation6 + $0x84] sm:$0xff]
        %v649 = vld [vmem:[#allocation6 + $0x8c] sm:$0xf]
        %v650 = vld [vmem:[#allocation6 + $0x90] sm:$0xff]
        %v651 = vld [vmem:[#allocation6 + $0x98] sm:$0xf]
        %v652 = vld [vmem:[#allocation6 + $0x9c] sm:$0xff]
        %v653 = vld [vmem:[#allocation6 + $0xa4] sm:$0xf]
        %v654 = vld [vmem:[#allocation6 + $0xa8] sm:$0xff]
        %v655 = vld [vmem:[#allocation6 + $0xb0] sm:$0xf]
        %v656 = vld [vmem:[#allocation6 + $0xb4] sm:$0xff]
        %v657 = vld [vmem:[#allocation6 + $0xbc] sm:$0xf]
        %v658 = vld [vmem:[#allocation7] sm:$0x7]
        %v660 = vlaneseq
        %v661 = vshrl.u32 %v660, 7
        %v662 = vsub.s32 0, %v661
        %v663 = vrot.slane %v658, %v662
        %v664 = vlaneseq
        %v665 = vshrl.u32 %v664, 7
        %v666 = vsub.s32 1, %v665
        %v667 = vrot.slane %v658, %v666
        %v668 = vlaneseq
        %v669 = vshrl.u32 %v668, 7
        %v670 = vsub.s32 2, %v669
        %v671 = vrot.slane %v658, %v670
        %v707 = vunpack.c.l.b16 %v626
        %v708 = vunpack.c.h.b16 %v626
        %v709 = vunpack.c.l.b16 %v627
        %v710 = vunpack.c.l.b16 %v628
        %v711 = vunpack.c.h.b16 %v628
        %v712 = vunpack.c.l.b16 %v629
        %v713 = vunpack.c.l.b16 %v630
        %v714 = vunpack.c.h.b16 %v630
        %v715 = vunpack.c.l.b16 %v631
        %v716 = vunpack.c.l.b16 %v632
        %v717 = vunpack.c.h.b16 %v632
        %v718 = vunpack.c.l.b16 %v633
        %v719 = vunpack.c.l.b16 %v634
        %v720 = vunpack.c.h.b16 %v634
        %v721 = vunpack.c.l.b16 %v635
        %v722 = vunpack.c.l.b16 %v636
        %v723 = vunpack.c.h.b16 %v636
        %v724 = vunpack.c.l.b16 %v637
        %v725 = vunpack.c.l.b16 %v638
        %v726 = vunpack.c.h.b16 %v638
        %v727 = vunpack.c.l.b16 %v639
        %v728 = vunpack.c.l.b16 %v640
        %v729 = vunpack.c.h.b16 %v640
        %v730 = vunpack.c.l.b16 %v641
        %v731 = vunpack.c.l.b16 %v642
        %v732 = vunpack.c.h.b16 %v642
        %v733 = vunpack.c.l.b16 %v643
        %v734 = vunpack.c.l.b16 %v644
        %v735 = vunpack.c.h.b16 %v644
        %v736 = vunpack.c.l.b16 %v645
        %v737 = vunpack.c.l.b16 %v646
        %v738 = vunpack.c.h.b16 %v646
        %v739 = vunpack.c.l.b16 %v647
        %v740 = vunpack.c.l.b16 %v648
        %v741 = vunpack.c.h.b16 %v648
        %v742 = vunpack.c.l.b16 %v649
        %v743 = vunpack.c.l.b16 %v650
        %v744 = vunpack.c.h.b16 %v650
        %v745 = vunpack.c.l.b16 %v651
        %v746 = vunpack.c.l.b16 %v652
        %v747 = vunpack.c.h.b16 %v652
        %v748 = vunpack.c.l.b16 %v653
        %v749 = vunpack.c.l.b16 %v654
        %v750 = vunpack.c.h.b16 %v654
        %v751 = vunpack.c.l.b16 %v655
        %v752 = vunpack.c.l.b16 %v656
        %v753 = vunpack.c.h.b16 %v656
        %v754 = vunpack.c.l.b16 %v657
        %v755 = vpack.c.b16 %v710, %v707
        %v756 = vpack.c.b16 %v711, %v708
        %v757 = vpack.c.b16 %v712, %v709
        %v758 = vpack.c.b16 %v716, %v713
        %v759 = vpack.c.b16 %v717, %v714
        %v760 = vpack.c.b16 %v718, %v715
        %v761 = vpack.c.b16 %v722, %v719
        %v762 = vpack.c.b16 %v723, %v720
        %v763 = vpack.c.b16 %v724, %v721
        %v764 = vpack.c.b16 %v728, %v725
        %v765 = vpack.c.b16 %v729, %v726
        %v766 = vpack.c.b16 %v730, %v727
        %v767 = vpack.c.b16 %v734, %v731
        %v768 = vpack.c.b16 %v735, %v732
        %v769 = vpack.c.b16 %v736, %v733
        %v770 = vpack.c.b16 %v740, %v737
        %v771 = vpack.c.b16 %v741, %v738
        %v772 = vpack.c.b16 %v742, %v739
        %v773 = vpack.c.b16 %v746, %v743
        %v774 = vpack.c.b16 %v747, %v744
        %v775 = vpack.c.b16 %v748, %v745
        %v776 = vpack.c.b16 %v752, %v749
        %v777 = vpack.c.b16 %v753, %v750
        %v778 = vpack.c.b16 %v754, %v751
        %803 = vmatprep.subr.bf16.mxu0 %v777
        %804 = vmatpush1.bf16.msra.mxu0 %v776
        %805 = vmatprep.subr.bf16.mxu0 %v774
        %806 = vmatpush1.bf16.msra.mxu0 %v773
        %807 = vmatprep.subr.bf16.mxu0 %v771
        %808 = vmatpush1.bf16.msra.mxu0 %v770
        %809 = vmatprep.subr.bf16.mxu0 %v768
        %810 = vmatpush1.bf16.msra.mxu0 %v767
        %811 = vmatprep.subr.bf16.mxu0 %v765
        %812 = vmatpush1.bf16.msra.mxu0 %v764
        %813 = vmatprep.subr.bf16.mxu0 %v762
        %814 = vmatpush1.bf16.msra.mxu0 %v761
        %815 = vmatprep.subr.bf16.mxu0 %v759
        %816 = vmatpush1.bf16.msra.mxu0 %v758
        %817 = vmatprep.subr.bf16.mxu0 %v756
        %818 = vmatpush1.bf16.msra.mxu0 %v755
        %819 = vmatprep.subr.bf16.mxu0 0
        %820 = vmatpush2.bf16.msra.mxu0 0
        %821 = vmatprep.subr.bf16.mxu0 0
        %822 = vmatpush2.bf16.msra.mxu0 0
        %823 = vmatprep.subr.bf16.mxu0 0
        %824 = vmatpush2.bf16.msra.mxu0 0
        %825 = vmatprep.subr.bf16.mxu0 0
        %826 = vmatpush2.bf16.msra.mxu0 0
        %827 = vmatprep.subr.bf16.mxu0 0
        %828 = vmatpush2.bf16.msra.mxu0 0
        %829 = vmatprep.subr.bf16.mxu0 0
        %830 = vmatpush2.bf16.msra.mxu0 0
        %831 = vmatprep.subr.bf16.mxu0 0
        %832 = vmatpush2.bf16.msra.mxu0 0
        %833 = vmatprep.subr.bf16.mxu0 0
        %834 = vmatpush2.bf16.msra.mxu0 0
        %835 = vmatprep.mubr.bf16.mxu0 0
        %836 = vmatmul.mubr.bf16.gmra.mxu0 %v625
        %v837 = vpop.f32.mrf.mxu0
        %v838 = vadd.f32 %v663, %v837
        %v839 = vpop.f32.mrf.mxu0
        %v840 = vadd.f32 %v667, %v839
        %v841 = vpop.f32.mrf.mxu0
        %v842 = vpop.f32.mrf.mxu0
        %843 = vdwg.mxu0
        %844 = vmatprep.subr.bf16.mxu0 0
        %845 = vmatpush1.bf16.msra.mxu0 %v778
        %846 = vmatprep.subr.bf16.mxu0 0
        %847 = vmatpush1.bf16.msra.mxu0 %v775
        %848 = vmatprep.subr.bf16.mxu0 0
        %849 = vmatpush1.bf16.msra.mxu0 %v772
        %850 = vmatprep.subr.bf16.mxu0 0
        %851 = vmatpush1.bf16.msra.mxu0 %v769
        %852 = vmatprep.subr.bf16.mxu0 0
        %853 = vmatpush1.bf16.msra.mxu0 %v766
        %854 = vmatprep.subr.bf16.mxu0 0
        %855 = vmatpush1.bf16.msra.mxu0 %v763
        %856 = vmatprep.subr.bf16.mxu0 0
        %857 = vmatpush1.bf16.msra.mxu0 %v760
        %858 = vmatprep.subr.bf16.mxu0 0
        %859 = vmatpush1.bf16.msra.mxu0 %v757
        %860 = vmatprep.subr.bf16.mxu0 0
        %861 = vmatpush2.bf16.msra.mxu0 0
        %862 = vmatprep.subr.bf16.mxu0 0
        %863 = vmatpush2.bf16.msra.mxu0 0
        %864 = vmatprep.subr.bf16.mxu0 0
        %865 = vmatpush2.bf16.msra.mxu0 0
        %866 = vmatprep.subr.bf16.mxu0 0
        %867 = vmatpush2.bf16.msra.mxu0 0
        %868 = vmatprep.subr.bf16.mxu0 0
        %869 = vmatpush2.bf16.msra.mxu0 0
        %870 = vmatprep.subr.bf16.mxu0 0
        %871 = vmatpush2.bf16.msra.mxu0 0
        %872 = vmatprep.subr.bf16.mxu0 0
        %873 = vmatpush2.bf16.msra.mxu0 0
        %874 = vmatprep.subr.bf16.mxu0 0
        %875 = vmatpush2.bf16.msra.mxu0 0
        %876 = vmatprep.mubr.bf16.mxu0 0
        %877 = vmatmul.mubr.bf16.gmra.mxu0 %v625
        %v878 = vpop.f32.mrf.mxu0
        %v879 = vadd.f32 %v671, %v878
        %v880 = vpop.f32.mrf.mxu0
        %v881 = vpop.f32.mrf.mxu0
        %v882 = vpop.f32.mrf.mxu0
        %883 = vdwg.mxu0
        %v884 = vlaneseq
        %v885 = vand.u32 %v884, 127
        %vm886 = vcmp.lt.s32.totalorder %v885, 5
        %v887 = vld [vmem:[#allocation9] sm:$0xf]
        %v888 = vld [vmem:[#allocation9 + $0x4] sm:$0xf]
        %v889 = vld [vmem:[#allocation9 + $0x8] sm:$0xf]
        %v890 = vld [vmem:[#allocation9 + $0xc] sm:$0xf]
        %v891 = vld [vmem:[#allocation9 + $0x10] sm:$0xf]
        %v892 = vld [vmem:[#allocation9 + $0x14] sm:$0xf]
        %v893 = vld [vmem:[#allocation9 + $0x18] sm:$0xf]
        %v894 = vld [vmem:[#allocation9 + $0x1c] sm:$0xf]
        %v895 = vld [vmem:[#allocation9 + $0x20] sm:$0xf]
        %v896 = vld [vmem:[#allocation9 + $0x24] sm:$0xf]
        %v897 = vld [vmem:[#allocation9 + $0x28] sm:$0xf]
        %v898 = vld [vmem:[#allocation9 + $0x2c] sm:$0xf]
        %v899 = vld [vmem:[#allocation9 + $0x30] sm:$0xf]
        %v900 = vld [vmem:[#allocation9 + $0x34] sm:$0xf]
        %v901 = vld [vmem:[#allocation9 + $0x38] sm:$0xf]
        %v902 = vld [vmem:[#allocation9 + $0x3c] sm:$0xf]
        %v903 = vpack.c.bf16 %v838, %v838
        %v904 = vpack.c.bf16 %v840, %v840
        %v905 = vpack.c.bf16 %v879, %v879
        %vm906 = vcmask 261120
        %v908 = vsel %vm906, %v903, 0
        %v911 = vsel %vm906, %v904, 0
        %913 = vmatprep.subr.bf16.mxu0 0
        %914 = vmatpush1.bf16.xpose.msra.mxu0 0
        %915 = vmatprep.subr.bf16.mxu0 0
        %916 = vmatpush1.bf16.xpose.msra.mxu0 0
        %917 = vmatprep.subr.bf16.mxu0 0
        %918 = vmatpush1.bf16.xpose.msra.mxu0 0
        %919 = vmatprep.subr.bf16.mxu0 0
        %920 = vmatpush1.bf16.xpose.msra.mxu0 0
        %921 = vmatprep.subr.bf16.mxu0 0
        %922 = vmatpush1.bf16.xpose.msra.mxu0 0
        %923 = vmatprep.subr.bf16.mxu0 0
        %924 = vmatpush1.bf16.xpose.msra.mxu0 0
        %925 = vmatprep.subr.bf16.mxu0 0
        %926 = vmatpush1.bf16.xpose.msra.mxu0 0
        %927 = vmatprep.subr.bf16.mxu0 0
        %928 = vmatpush1.bf16.xpose.msra.mxu0 %v911
        %929 = vmatprep.subr.bf16.mxu0 0
        %930 = vmatpush2.bf16.xpose.msra.mxu0 0
        %931 = vmatprep.subr.bf16.mxu0 0
        %932 = vmatpush2.bf16.xpose.msra.mxu0 0
        %933 = vmatprep.subr.bf16.mxu0 0
        %934 = vmatpush2.bf16.xpose.msra.mxu0 0
        %935 = vmatprep.subr.bf16.mxu0 0
        %936 = vmatpush2.bf16.xpose.msra.mxu0 0
        %937 = vmatprep.subr.bf16.mxu0 0
        %938 = vmatpush2.bf16.xpose.msra.mxu0 0
        %939 = vmatprep.subr.bf16.mxu0 0
        %940 = vmatpush2.bf16.xpose.msra.mxu0 0
        %941 = vmatprep.subr.bf16.mxu0 0
        %942 = vmatpush2.bf16.xpose.msra.mxu0 0
        %943 = vmatprep.subr.bf16.mxu0 0
        %944 = vmatpush2.bf16.xpose.msra.mxu0 0
        %945 = vmatprep.mubr.bf16.mxu0 0
        %946 = vmatmul.mubr.bf16.gmra.mxu0 %v908
        %v947 = vpop.f32.mrf.mxu0
        %v948 = vadd.f32 0.0, %v947
        %v949 = vpop.f32.mrf.mxu0
        %v950 = vpop.f32.mrf.mxu0
        %v951 = vpop.f32.mrf.mxu0
        %952 = vdwg.mxu0
        %v953 = vmul.f32 %v948, 0.17677669
        %v954 = vsel %vm886, %v953, -1e+30
        %vm955 = vcmask 64512
        %v956 = vsel %vm955, %v954, -inf
        %957 = vmax.xlane.f32.xlu0 %v956
        %v958 = vpop.xlane.xlu0 %957
        %v959 = vsub.f32 %v954, %v958
        %v960 = vmul.f32 %v959, 1.442695
        %v961 = vpow.pop %v960
        %v962 = vsel %vm955, %v961, 0.0
        %963 = vadd.xlane.f32.xlu0 %v962
        %v964 = vpop.xlane.xlu0 %963
        %v965 = vrcp.pop %v964
        %v966 = vmul.f32 %v961, %v965
        %v967 = vpack.c.bf16 %v966, %v966
        %v969 = vsel %vm955, %v967, 0
        %vm971 = vcmask 1043456
        %v973 = vsel %vm971, %v905, 0
        %975 = vmatprep.subr.bf16.mxu0 0
        %976 = vmatpush1.bf16.msra.mxu0 0
        %977 = vmatprep.subr.bf16.mxu0 0
        %978 = vmatpush1.bf16.msra.mxu0 0
        %979 = vmatprep.subr.bf16.mxu0 0
        %980 = vmatpush1.bf16.msra.mxu0 0
        %981 = vmatprep.subr.bf16.mxu0 0
        %982 = vmatpush1.bf16.msra.mxu0 0
        %983 = vmatprep.subr.bf16.mxu0 0
        %984 = vmatpush1.bf16.msra.mxu0 0
        %985 = vmatprep.subr.bf16.mxu0 0
        %986 = vmatpush1.bf16.msra.mxu0 0
        %987 = vmatprep.subr.bf16.mxu0 0
        %988 = vmatpush1.bf16.msra.mxu0 0
        %989 = vmatprep.subr.bf16.mxu0 0
        %990 = vmatpush1.bf16.msra.mxu0 %v973
        %991 = vmatprep.subr.bf16.mxu0 0
        %992 = vmatpush2.bf16.msra.mxu0 0
        %993 = vmatprep.subr.bf16.mxu0 0
        %994 = vmatpush2.bf16.msra.mxu0 0
        %995 = vmatprep.subr.bf16.mxu0 0
        %996 = vmatpush2.bf16.msra.mxu0 0
        %997 = vmatprep.subr.bf16.mxu0 0
        %998 = vmatpush2.bf16.msra.mxu0 0
        %999 = vmatprep.subr.bf16.mxu0 0
        %1000 = vmatpush2.bf16.msra.mxu0 0
        %1001 = vmatprep.subr.bf16.mxu0 0
        %1002 = vmatpush2.bf16.msra.mxu0 0
        %1003 = vmatprep.subr.bf16.mxu0 0
        %1004 = vmatpush2.bf16.msra.mxu0 0
        %1005 = vmatprep.subr.bf16.mxu0 0
        %1006 = vmatpush2.bf16.msra.mxu0 0
        %1007 = vmatprep.mubr.bf16.mxu0 0
        %1008 = vmatmul.mubr.bf16.gmra.mxu0 %v969
        %v1009 = vpop.f32.mrf.mxu0
        %v1010 = vadd.f32 0.0, %v1009
        %v1011 = vpop.f32.mrf.mxu0
        %v1012 = vpop.f32.mrf.mxu0
        %v1013 = vpop.f32.mrf.mxu0
        %1014 = vdwg.mxu0
        %v1015 = vpack.c.bf16 %v1010, %v1010
        %1017 = vrot.lane.b32.xlu0 %v903, 96
        %v1018 = vpop.permute.xlu0 %1017
        %1020 = vrot.lane.b32.xlu0 %v904, 96
        %v1021 = vpop.permute.xlu0 %1020
        %v1023 = vsel %vm906, %v1018, 0
        %v1026 = vsel %vm906, %v1021, 0
        %1028 = vmatprep.subr.bf16.mxu0 0
        %1029 = vmatpush1.bf16.xpose.msra.mxu0 0
        %1030 = vmatprep.subr.bf16.mxu0 0
        %1031 = vmatpush1.bf16.xpose.msra.mxu0 0
        %1032 = vmatprep.subr.bf16.mxu0 0
        %1033 = vmatpush1.bf16.xpose.msra.mxu0 0
        %1034 = vmatprep.subr.bf16.mxu0 0
        %1035 = vmatpush1.bf16.xpose.msra.mxu0 0
        %1036 = vmatprep.subr.bf16.mxu0 0
        %1037 = vmatpush1.bf16.xpose.msra.mxu0 0
        %1038 = vmatprep.subr.bf16.mxu0 0
        %1039 = vmatpush1.bf16.xpose.msra.mxu0 0
        %1040 = vmatprep.subr.bf16.mxu0 0
        %1041 = vmatpush1.bf16.xpose.msra.mxu0 0
        %1042 = vmatprep.subr.bf16.mxu0 0
        %1043 = vmatpush1.bf16.xpose.msra.mxu0 %v1026
        %1044 = vmatprep.subr.bf16.mxu0 0
        %1045 = vmatpush2.bf16.xpose.msra.mxu0 0
        %1046 = vmatprep.subr.bf16.mxu0 0
        %1047 = vmatpush2.bf16.xpose.msra.mxu0 0
        %1048 = vmatprep.subr.bf16.mxu0 0
        %1049 = vmatpush2.bf16.xpose.msra.mxu0 0
        %1050 = vmatprep.subr.bf16.mxu0 0
        %1051 = vmatpush2.bf16.xpose.msra.mxu0 0
        %1052 = vmatprep.subr.bf16.mxu0 0
        %1053 = vmatpush2.bf16.xpose.msra.mxu0 0
        %1054 = vmatprep.subr.bf16.mxu0 0
        %1055 = vmatpush2.bf16.xpose.msra.mxu0 0
        %1056 = vmatprep.subr.bf16.mxu0 0
        %1057 = vmatpush2.bf16.xpose.msra.mxu0 0
        %1058 = vmatprep.subr.bf16.mxu0 0
        %1059 = vmatpush2.bf16.xpose.msra.mxu0 0
        %1060 = vmatprep.mubr.bf16.mxu0 0
        %1061 = vmatmul.mubr.bf16.gmra.mxu0 %v1023
        %v1062 = vpop.f32.mrf.mxu0
        %v1063 = vadd.f32 0.0, %v1062
        %v1064 = vpop.f32.mrf.mxu0
        %v1065 = vpop.f32.mrf.mxu0
        %v1066 = vpop.f32.mrf.mxu0
        %1067 = vdwg.mxu0
        %v1068 = vmul.f32 %v1063, 0.17677669
        %v1069 = vsel %vm886, %v1068, -1e+30
        %v1070 = vsel %vm955, %v1069, -inf
        %1071 = vmax.xlane.f32.xlu0 %v1070
        %v1072 = vpop.xlane.xlu0 %1071
        %v1073 = vsub.f32 %v1069, %v1072
        %v1074 = vmul.f32 %v1073, 1.442695
        %v1075 = vpow.pop %v1074
        %v1076 = vsel %vm955, %v1075, 0.0
        %1077 = vadd.xlane.f32.xlu0 %v1076
        %v1078 = vpop.xlane.xlu0 %1077
        %v1079 = vrcp.pop %v1078
        %v1080 = vmul.f32 %v1075, %v1079
        %v1081 = vpack.c.bf16 %v1080, %v1080
        %1083 = vrot.lane.b32.xlu0 %v905, 96
        %v1084 = vpop.permute.xlu0 %1083
        %v1086 = vsel %vm955, %v1081, 0
        %v1089 = vsel %vm971, %v1084, 0
        %1091 = vmatprep.subr.bf16.mxu0 0
        %1092 = vmatpush1.bf16.msra.mxu0 0
        %1093 = vmatprep.subr.bf16.mxu0 0
        %1094 = vmatpush1.bf16.msra.mxu0 0
        %1095 = vmatprep.subr.bf16.mxu0 0
        %1096 = vmatpush1.bf16.msra.mxu0 0
        %1097 = vmatprep.subr.bf16.mxu0 0
        %1098 = vmatpush1.bf16.msra.mxu0 0
        %1099 = vmatprep.subr.bf16.mxu0 0
        %1100 = vmatpush1.bf16.msra.mxu0 0
        %1101 = vmatprep.subr.bf16.mxu0 0
        %1102 = vmatpush1.bf16.msra.mxu0 0
        %1103 = vmatprep.subr.bf16.mxu0 0
        %1104 = vmatpush1.bf16.msra.mxu0 0
        %1105 = vmatprep.subr.bf16.mxu0 0
        %1106 = vmatpush1.bf16.msra.mxu0 %v1089
        %1107 = vmatprep.subr.bf16.mxu0 0
        %1108 = vmatpush2.bf16.msra.mxu0 0
        %1109 = vmatprep.subr.bf16.mxu0 0
        %1110 = vmatpush2.bf16.msra.mxu0 0
        %1111 = vmatprep.subr.bf16.mxu0 0
        %1112 = vmatpush2.bf16.msra.mxu0 0
        %1113 = vmatprep.subr.bf16.mxu0 0
        %1114 = vmatpush2.bf16.msra.mxu0 0
        %1115 = vmatprep.subr.bf16.mxu0 0
        %1116 = vmatpush2.bf16.msra.mxu0 0
        %1117 = vmatprep.subr.bf16.mxu0 0
        %1118 = vmatpush2.bf16.msra.mxu0 0
        %1119 = vmatprep.subr.bf16.mxu0 0
        %1120 = vmatpush2.bf16.msra.mxu0 0
        %1121 = vmatprep.subr.bf16.mxu0 0
        %1122 = vmatpush2.bf16.msra.mxu0 0
        %1123 = vmatprep.mubr.bf16.mxu0 0
        %1124 = vmatmul.mubr.bf16.gmra.mxu0 %v1086
        %v1125 = vpop.f32.mrf.mxu0
        %v1126 = vadd.f32 0.0, %v1125
        %v1127 = vpop.f32.mrf.mxu0
        %v1128 = vpop.f32.mrf.mxu0
        %v1129 = vpop.f32.mrf.mxu0
        %1130 = vdwg.mxu0
        %v1131 = vpack.c.bf16 %v1126, %v1126
        %v1136 = vunpack.c.l.b16 %v891
        %v1137 = vunpack.c.l.b16 %v892
        %v1138 = vunpack.c.l.b16 %v893
        %v1139 = vunpack.c.l.b16 %v894
        %v1140 = vpack.c.b16 %v1137, %v1136
        %v1141 = vpack.c.b16 %v1139, %v1138
        %v1145 = vsel %vm906, %v1131, 0
        %1147 = vmatprep.subr.bf16.mxu0 0
        %1148 = vmatpush1.bf16.msra.mxu0 0
        %1149 = vmatprep.subr.bf16.mxu0 0
        %1150 = vmatpush1.bf16.msra.mxu0 0
        %1151 = vmatprep.subr.bf16.mxu0 0
        %1152 = vmatpush1.bf16.msra.mxu0 0
        %1153 = vmatprep.subr.bf16.mxu0 0
        %1154 = vmatpush1.bf16.msra.mxu0 0
        %1155 = vmatprep.subr.bf16.mxu0 0
        %1156 = vmatpush1.bf16.msra.mxu0 0
        %1157 = vmatprep.subr.bf16.mxu0 0
        %1158 = vmatpush1.bf16.msra.mxu0 0
        %1159 = vmatprep.subr.bf16.mxu0 0
        %1160 = vmatpush1.bf16.msra.mxu0 %v1141
        %1161 = vmatprep.subr.bf16.mxu0 0
        %1162 = vmatpush1.bf16.msra.mxu0 %v1140
        %1163 = vmatprep.subr.bf16.mxu0 0
        %1164 = vmatpush2.bf16.msra.mxu0 0
        %1165 = vmatprep.subr.bf16.mxu0 0
        %1166 = vmatpush2.bf16.msra.mxu0 0
        %1167 = vmatprep.subr.bf16.mxu0 0
        %1168 = vmatpush2.bf16.msra.mxu0 0
        %1169 = vmatprep.subr.bf16.mxu0 0
        %1170 = vmatpush2.bf16.msra.mxu0 0
        %1171 = vmatprep.subr.bf16.mxu0 0
        %1172 = vmatpush2.bf16.msra.mxu0 0
        %1173 = vmatprep.subr.bf16.mxu0 0
        %1174 = vmatpush2.bf16.msra.mxu0 0
        %1175 = vmatprep.subr.bf16.mxu0 0
        %1176 = vmatpush2.bf16.msra.mxu0 0
        %1177 = vmatprep.subr.bf16.mxu0 0
        %1178 = vmatpush2.bf16.msra.mxu0 0
        %1179 = vmatprep.mubr.bf16.mxu0 0
        %1180 = vmatmul.mubr.bf16.gmra.mxu0 %v1145
        %v1181 = vpop.f32.mrf.mxu0
        %v1182 = vadd.f32 0.0, %v1181
        %v1183 = vpop.f32.mrf.mxu0
        %v1184 = vpop.f32.mrf.mxu0
        %v1185 = vpop.f32.mrf.mxu0
        %1186 = vdwg.mxu0
        %v1191 = vunpack.c.l.b16 %v887
        %v1192 = vunpack.c.l.b16 %v888
        %v1193 = vunpack.c.l.b16 %v889
        %v1194 = vunpack.c.l.b16 %v890
        %v1195 = vpack.c.b16 %v1192, %v1191
        %v1196 = vpack.c.b16 %v1194, %v1193
        %v1200 = vsel %vm906, %v1015, 0
        %1202 = vmatprep.subr.bf16.mxu0 0
        %1203 = vmatpush1.bf16.msra.mxu0 0
        %1204 = vmatprep.subr.bf16.mxu0 0
        %1205 = vmatpush1.bf16.msra.mxu0 0
        %1206 = vmatprep.subr.bf16.mxu0 0
        %1207 = vmatpush1.bf16.msra.mxu0 0
        %1208 = vmatprep.subr.bf16.mxu0 0
        %1209 = vmatpush1.bf16.msra.mxu0 0
        %1210 = vmatprep.subr.bf16.mxu0 0
        %1211 = vmatpush1.bf16.msra.mxu0 0
        %1212 = vmatprep.subr.bf16.mxu0 0
        %1213 = vmatpush1.bf16.msra.mxu0 0
        %1214 = vmatprep.subr.bf16.mxu0 0
        %1215 = vmatpush1.bf16.msra.mxu0 %v1196
        %1216 = vmatprep.subr.bf16.mxu0 0
        %1217 = vmatpush1.bf16.msra.mxu0 %v1195
        %1218 = vmatprep.subr.bf16.mxu0 0
        %1219 = vmatpush2.bf16.msra.mxu0 0
        %1220 = vmatprep.subr.bf16.mxu0 0
        %1221 = vmatpush2.bf16.msra.mxu0 0
        %1222 = vmatprep.subr.bf16.mxu0 0
        %1223 = vmatpush2.bf16.msra.mxu0 0
        %1224 = vmatprep.subr.bf16.mxu0 0
        %1225 = vmatpush2.bf16.msra.mxu0 0
        %1226 = vmatprep.subr.bf16.mxu0 0
        %1227 = vmatpush2.bf16.msra.mxu0 0
        %1228 = vmatprep.subr.bf16.mxu0 0
        %1229 = vmatpush2.bf16.msra.mxu0 0
        %1230 = vmatprep.subr.bf16.mxu0 0
        %1231 = vmatpush2.bf16.msra.mxu0 0
        %1232 = vmatprep.subr.bf16.mxu0 0
        %1233 = vmatpush2.bf16.msra.mxu0 0
        %1234 = vmatprep.mubr.bf16.mxu0 0
        %1235 = vmatmul.mubr.bf16.gmra.mxu0 %v1200
        %v1236 = vpop.f32.mrf.mxu0
        %v1237 = vadd.f32 %v1182, %v1236
        %v1238 = vpop.f32.mrf.mxu0
        %v1239 = vpop.f32.mrf.mxu0
        %v1240 = vpop.f32.mrf.mxu0
        %1241 = vdwg.mxu0
        %1242 = vrot.lane.b32.xlu0 %v903, 64
        %v1243 = vpop.permute.xlu0 %1242
        %1244 = vrot.lane.b32.xlu0 %v904, 64
        %v1245 = vpop.permute.xlu0 %1244
        %v1247 = vsel %vm906, %v1243, 0
        %v1250 = vsel %vm906, %v1245, 0
        %1252 = vmatprep.subr.bf16.mxu0 0
        %1253 = vmatpush1.bf16.xpose.msra.mxu0 0
        %1254 = vmatprep.subr.bf16.mxu0 0
        %1255 = vmatpush1.bf16.xpose.msra.mxu0 0
        %1256 = vmatprep.subr.bf16.mxu0 0
        %1257 = vmatpush1.bf16.xpose.msra.mxu0 0
        %1258 = vmatprep.subr.bf16.mxu0 0
        %1259 = vmatpush1.bf16.xpose.msra.mxu0 0
        %1260 = vmatprep.subr.bf16.mxu0 0
        %1261 = vmatpush1.bf16.xpose.msra.mxu0 0
        %1262 = vmatprep.subr.bf16.mxu0 0
        %1263 = vmatpush1.bf16.xpose.msra.mxu0 0
        %1264 = vmatprep.subr.bf16.mxu0 0
        %1265 = vmatpush1.bf16.xpose.msra.mxu0 0
        %1266 = vmatprep.subr.bf16.mxu0 0
        %1267 = vmatpush1.bf16.xpose.msra.mxu0 %v1250
        %1268 = vmatprep.subr.bf16.mxu0 0
        %1269 = vmatpush2.bf16.xpose.msra.mxu0 0
        %1270 = vmatprep.subr.bf16.mxu0 0
        %1271 = vmatpush2.bf16.xpose.msra.mxu0 0
        %1272 = vmatprep.subr.bf16.mxu0 0
        %1273 = vmatpush2.bf16.xpose.msra.mxu0 0
        %1274 = vmatprep.subr.bf16.mxu0 0
        %1275 = vmatpush2.bf16.xpose.msra.mxu0 0
        %1276 = vmatprep.subr.bf16.mxu0 0
        %1277 = vmatpush2.bf16.xpose.msra.mxu0 0
        %1278 = vmatprep.subr.bf16.mxu0 0
        %1279 = vmatpush2.bf16.xpose.msra.mxu0 0
        %1280 = vmatprep.subr.bf16.mxu0 0
        %1281 = vmatpush2.bf16.xpose.msra.mxu0 0
        %1282 = vmatprep.subr.bf16.mxu0 0
        %1283 = vmatpush2.bf16.xpose.msra.mxu0 0
        %1284 = vmatprep.mubr.bf16.mxu0 0
        %1285 = vmatmul.mubr.bf16.gmra.mxu0 %v1247
        %v1286 = vpop.f32.mrf.mxu0
        %v1287 = vadd.f32 0.0, %v1286
        %v1288 = vpop.f32.mrf.mxu0
        %v1289 = vpop.f32.mrf.mxu0
        %v1290 = vpop.f32.mrf.mxu0
        %1291 = vdwg.mxu0
        %v1292 = vmul.f32 %v1287, 0.17677669
        %v1293 = vsel %vm886, %v1292, -1e+30
        %v1294 = vsel %vm955, %v1293, -inf
        %1295 = vmax.xlane.f32.xlu0 %v1294
        %v1296 = vpop.xlane.xlu0 %1295
        %v1297 = vsub.f32 %v1293, %v1296
        %v1298 = vmul.f32 %v1297, 1.442695
        %v1299 = vpow.pop %v1298
        %v1300 = vsel %vm955, %v1299, 0.0
        %1301 = vadd.xlane.f32.xlu0 %v1300
        %v1302 = vpop.xlane.xlu0 %1301
        %v1303 = vrcp.pop %v1302
        %v1304 = vmul.f32 %v1299, %v1303
        %v1305 = vpack.c.bf16 %v1304, %v1304
        %1306 = vrot.lane.b32.xlu0 %v905, 64
        %v1307 = vpop.permute.xlu0 %1306
        %v1309 = vsel %vm955, %v1305, 0
        %v1312 = vsel %vm971, %v1307, 0
        %1314 = vmatprep.subr.bf16.mxu0 0
        %1315 = vmatpush1.bf16.msra.mxu0 0
        %1316 = vmatprep.subr.bf16.mxu0 0
        %1317 = vmatpush1.bf16.msra.mxu0 0
        %1318 = vmatprep.subr.bf16.mxu0 0
        %1319 = vmatpush1.bf16.msra.mxu0 0
        %1320 = vmatprep.subr.bf16.mxu0 0
        %1321 = vmatpush1.bf16.msra.mxu0 0
        %1322 = vmatprep.subr.bf16.mxu0 0
        %1323 = vmatpush1.bf16.msra.mxu0 0
        %1324 = vmatprep.subr.bf16.mxu0 0
        %1325 = vmatpush1.bf16.msra.mxu0 0
        %1326 = vmatprep.subr.bf16.mxu0 0
        %1327 = vmatpush1.bf16.msra.mxu0 0
        %1328 = vmatprep.subr.bf16.mxu0 0
        %1329 = vmatpush1.bf16.msra.mxu0 %v1312
        %1330 = vmatprep.subr.bf16.mxu0 0
        %1331 = vmatpush2.bf16.msra.mxu0 0
        %1332 = vmatprep.subr.bf16.mxu0 0
        %1333 = vmatpush2.bf16.msra.mxu0 0
        %1334 = vmatprep.subr.bf16.mxu0 0
        %1335 = vmatpush2.bf16.msra.mxu0 0
        %1336 = vmatprep.subr.bf16.mxu0 0
        %1337 = vmatpush2.bf16.msra.mxu0 0
        %1338 = vmatprep.subr.bf16.mxu0 0
        %1339 = vmatpush2.bf16.msra.mxu0 0
        %1340 = vmatprep.subr.bf16.mxu0 0
        %1341 = vmatpush2.bf16.msra.mxu0 0
        %1342 = vmatprep.subr.bf16.mxu0 0
        %1343 = vmatpush2.bf16.msra.mxu0 0
        %1344 = vmatprep.subr.bf16.mxu0 0
        %1345 = vmatpush2.bf16.msra.mxu0 0
        %1346 = vmatprep.mubr.bf16.mxu0 0
        %1347 = vmatmul.mubr.bf16.gmra.mxu0 %v1309
        %v1348 = vpop.f32.mrf.mxu0
        %v1349 = vadd.f32 0.0, %v1348
        %v1350 = vpop.f32.mrf.mxu0
        %v1351 = vpop.f32.mrf.mxu0
        %v1352 = vpop.f32.mrf.mxu0
        %1353 = vdwg.mxu0
        %v1354 = vpack.c.bf16 %v1349, %v1349
        %v1359 = vunpack.c.l.b16 %v895
        %v1360 = vunpack.c.l.b16 %v896
        %v1361 = vunpack.c.l.b16 %v897
        %v1362 = vunpack.c.l.b16 %v898
        %v1363 = vpack.c.b16 %v1360, %v1359
        %v1364 = vpack.c.b16 %v1362, %v1361
        %v1368 = vsel %vm906, %v1354, 0
        %1370 = vmatprep.subr.bf16.mxu0 0
        %1371 = vmatpush1.bf16.msra.mxu0 0
        %1372 = vmatprep.subr.bf16.mxu0 0
        %1373 = vmatpush1.bf16.msra.mxu0 0
        %1374 = vmatprep.subr.bf16.mxu0 0
        %1375 = vmatpush1.bf16.msra.mxu0 0
        %1376 = vmatprep.subr.bf16.mxu0 0
        %1377 = vmatpush1.bf16.msra.mxu0 0
        %1378 = vmatprep.subr.bf16.mxu0 0
        %1379 = vmatpush1.bf16.msra.mxu0 0
        %1380 = vmatprep.subr.bf16.mxu0 0
        %1381 = vmatpush1.bf16.msra.mxu0 0
        %1382 = vmatprep.subr.bf16.mxu0 0
        %1383 = vmatpush1.bf16.msra.mxu0 %v1364
        %1384 = vmatprep.subr.bf16.mxu0 0
        %1385 = vmatpush1.bf16.msra.mxu0 %v1363
        %1386 = vmatprep.subr.bf16.mxu0 0
        %1387 = vmatpush2.bf16.msra.mxu0 0
        %1388 = vmatprep.subr.bf16.mxu0 0
        %1389 = vmatpush2.bf16.msra.mxu0 0
        %1390 = vmatprep.subr.bf16.mxu0 0
        %1391 = vmatpush2.bf16.msra.mxu0 0
        %1392 = vmatprep.subr.bf16.mxu0 0
        %1393 = vmatpush2.bf16.msra.mxu0 0
        %1394 = vmatprep.subr.bf16.mxu0 0
        %1395 = vmatpush2.bf16.msra.mxu0 0
        %1396 = vmatprep.subr.bf16.mxu0 0
        %1397 = vmatpush2.bf16.msra.mxu0 0
        %1398 = vmatprep.subr.bf16.mxu0 0
        %1399 = vmatpush2.bf16.msra.mxu0 0
        %1400 = vmatprep.subr.bf16.mxu0 0
        %1401 = vmatpush2.bf16.msra.mxu0 0
        %1402 = vmatprep.mubr.bf16.mxu0 0
        %1403 = vmatmul.mubr.bf16.gmra.mxu0 %v1368
        %v1404 = vpop.f32.mrf.mxu0
        %v1405 = vadd.f32 0.0, %v1404
        %v1406 = vpop.f32.mrf.mxu0
        %v1407 = vpop.f32.mrf.mxu0
        %v1408 = vpop.f32.mrf.mxu0
        %1409 = vdwg.mxu0
        %v1410 = vadd.f32 %v1237, %v1405
        %1411 = vrot.lane.b32.xlu0 %v903, 32
        %v1412 = vpop.permute.xlu0 %1411
        %1413 = vrot.lane.b32.xlu0 %v904, 32
        %v1414 = vpop.permute.xlu0 %1413
        %v1416 = vsel %vm906, %v1412, 0
        %v1419 = vsel %vm906, %v1414, 0
        %1421 = vmatprep.subr.bf16.mxu0 0
        %1422 = vmatpush1.bf16.xpose.msra.mxu0 0
        %1423 = vmatprep.subr.bf16.mxu0 0
        %1424 = vmatpush1.bf16.xpose.msra.mxu0 0
        %1425 = vmatprep.subr.bf16.mxu0 0
        %1426 = vmatpush1.bf16.xpose.msra.mxu0 0
        %1427 = vmatprep.subr.bf16.mxu0 0
        %1428 = vmatpush1.bf16.xpose.msra.mxu0 0
        %1429 = vmatprep.subr.bf16.mxu0 0
        %1430 = vmatpush1.bf16.xpose.msra.mxu0 0
        %1431 = vmatprep.subr.bf16.mxu0 0
        %1432 = vmatpush1.bf16.xpose.msra.mxu0 0
        %1433 = vmatprep.subr.bf16.mxu0 0
        %1434 = vmatpush1.bf16.xpose.msra.mxu0 0
        %1435 = vmatprep.subr.bf16.mxu0 0
        %1436 = vmatpush1.bf16.xpose.msra.mxu0 %v1419
        %1437 = vmatprep.subr.bf16.mxu0 0
        %1438 = vmatpush2.bf16.xpose.msra.mxu0 0
        %1439 = vmatprep.subr.bf16.mxu0 0
        %1440 = vmatpush2.bf16.xpose.msra.mxu0 0
        %1441 = vmatprep.subr.bf16.mxu0 0
        %1442 = vmatpush2.bf16.xpose.msra.mxu0 0
        %1443 = vmatprep.subr.bf16.mxu0 0
        %1444 = vmatpush2.bf16.xpose.msra.mxu0 0
        %1445 = vmatprep.subr.bf16.mxu0 0
        %1446 = vmatpush2.bf16.xpose.msra.mxu0 0
        %1447 = vmatprep.subr.bf16.mxu0 0
        %1448 = vmatpush2.bf16.xpose.msra.mxu0 0
        %1449 = vmatprep.subr.bf16.mxu0 0
        %1450 = vmatpush2.bf16.xpose.msra.mxu0 0
        %1451 = vmatprep.subr.bf16.mxu0 0
        %1452 = vmatpush2.bf16.xpose.msra.mxu0 0
        %1453 = vmatprep.mubr.bf16.mxu0 0
        %1454 = vmatmul.mubr.bf16.gmra.mxu0 %v1416
        %v1455 = vpop.f32.mrf.mxu0
        %v1456 = vadd.f32 0.0, %v1455
        %v1457 = vpop.f32.mrf.mxu0
        %v1458 = vpop.f32.mrf.mxu0
        %v1459 = vpop.f32.mrf.mxu0
        %1460 = vdwg.mxu0
        %v1461 = vmul.f32 %v1456, 0.17677669
        %v1462 = vsel %vm886, %v1461, -1e+30
        %v1463 = vsel %vm955, %v1462, -inf
        %1464 = vmax.xlane.f32.xlu0 %v1463
        %v1465 = vpop.xlane.xlu0 %1464
        %v1466 = vsub.f32 %v1462, %v1465
        %v1467 = vmul.f32 %v1466, 1.442695
        %v1468 = vpow.pop %v1467
        %v1469 = vsel %vm955, %v1468, 0.0
        %1470 = vadd.xlane.f32.xlu0 %v1469
        %v1471 = vpop.xlane.xlu0 %1470
        %v1472 = vrcp.pop %v1471
        %v1473 = vmul.f32 %v1468, %v1472
        %v1474 = vpack.c.bf16 %v1473, %v1473
        %1475 = vrot.lane.b32.xlu0 %v905, 32
        %v1476 = vpop.permute.xlu0 %1475
        %v1478 = vsel %vm955, %v1474, 0
        %v1481 = vsel %vm971, %v1476, 0
        %1483 = vmatprep.subr.bf16.mxu0 0
        %1484 = vmatpush1.bf16.msra.mxu0 0
        %1485 = vmatprep.subr.bf16.mxu0 0
        %1486 = vmatpush1.bf16.msra.mxu0 0
        %1487 = vmatprep.subr.bf16.mxu0 0
        %1488 = vmatpush1.bf16.msra.mxu0 0
        %1489 = vmatprep.subr.bf16.mxu0 0
        %1490 = vmatpush1.bf16.msra.mxu0 0
        %1491 = vmatprep.subr.bf16.mxu0 0
        %1492 = vmatpush1.bf16.msra.mxu0 0
        %1493 = vmatprep.subr.bf16.mxu0 0
        %1494 = vmatpush1.bf16.msra.mxu0 0
        %1495 = vmatprep.subr.bf16.mxu0 0
        %1496 = vmatpush1.bf16.msra.mxu0 0
        %1497 = vmatprep.subr.bf16.mxu0 0
        %1498 = vmatpush1.bf16.msra.mxu0 %v1481
        %1499 = vmatprep.subr.bf16.mxu0 0
        %1500 = vmatpush2.bf16.msra.mxu0 0
        %1501 = vmatprep.subr.bf16.mxu0 0
        %1502 = vmatpush2.bf16.msra.mxu0 0
        %1503 = vmatprep.subr.bf16.mxu0 0
        %1504 = vmatpush2.bf16.msra.mxu0 0
        %1505 = vmatprep.subr.bf16.mxu0 0
        %1506 = vmatpush2.bf16.msra.mxu0 0
        %1507 = vmatprep.subr.bf16.mxu0 0
        %1508 = vmatpush2.bf16.msra.mxu0 0
        %1509 = vmatprep.subr.bf16.mxu0 0
        %1510 = vmatpush2.bf16.msra.mxu0 0
        %1511 = vmatprep.subr.bf16.mxu0 0
        %1512 = vmatpush2.bf16.msra.mxu0 0
        %1513 = vmatprep.subr.bf16.mxu0 0
        %1514 = vmatpush2.bf16.msra.mxu0 0
        %1515 = vmatprep.mubr.bf16.mxu0 0
        %1516 = vmatmul.mubr.bf16.gmra.mxu0 %v1478
        %v1517 = vpop.f32.mrf.mxu0
        %v1518 = vadd.f32 0.0, %v1517
        %v1519 = vpop.f32.mrf.mxu0
        %v1520 = vpop.f32.mrf.mxu0
        %v1521 = vpop.f32.mrf.mxu0
        %1522 = vdwg.mxu0
        %v1523 = vpack.c.bf16 %v1518, %v1518
        %v1528 = vunpack.c.l.b16 %v899
        %v1529 = vunpack.c.l.b16 %v900
        %v1530 = vunpack.c.l.b16 %v901
        %v1531 = vunpack.c.l.b16 %v902
        %v1532 = vpack.c.b16 %v1529, %v1528
        %v1533 = vpack.c.b16 %v1531, %v1530
        %v1537 = vsel %vm906, %v1523, 0
        %1539 = vmatprep.subr.bf16.mxu0 0
        %1540 = vmatpush1.bf16.msra.mxu0 0
        %1541 = vmatprep.subr.bf16.mxu0 0
        %1542 = vmatpush1.bf16.msra.mxu0 0
        %1543 = vmatprep.subr.bf16.mxu0 0
        %1544 = vmatpush1.bf16.msra.mxu0 0
        %1545 = vmatprep.subr.bf16.mxu0 0
        %1546 = vmatpush1.bf16.msra.mxu0 0
        %1547 = vmatprep.subr.bf16.mxu0 0
        %1548 = vmatpush1.bf16.msra.mxu0 0
        %1549 = vmatprep.subr.bf16.mxu0 0
        %1550 = vmatpush1.bf16.msra.mxu0 0
        %1551 = vmatprep.subr.bf16.mxu0 0
        %1552 = vmatpush1.bf16.msra.mxu0 %v1533
        %1553 = vmatprep.subr.bf16.mxu0 0
        %1554 = vmatpush1.bf16.msra.mxu0 %v1532
        %1555 = vmatprep.subr.bf16.mxu0 0
        %1556 = vmatpush2.bf16.msra.mxu0 0
        %1557 = vmatprep.subr.bf16.mxu0 0
        %1558 = vmatpush2.bf16.msra.mxu0 0
        %1559 = vmatprep.subr.bf16.mxu0 0
        %1560 = vmatpush2.bf16.msra.mxu0 0
        %1561 = vmatprep.subr.bf16.mxu0 0
        %1562 = vmatpush2.bf16.msra.mxu0 0
        %1563 = vmatprep.subr.bf16.mxu0 0
        %1564 = vmatpush2.bf16.msra.mxu0 0
        %1565 = vmatprep.subr.bf16.mxu0 0
        %1566 = vmatpush2.bf16.msra.mxu0 0
        %1567 = vmatprep.subr.bf16.mxu0 0
        %1568 = vmatpush2.bf16.msra.mxu0 0
        %1569 = vmatprep.subr.bf16.mxu0 0
        %1570 = vmatpush2.bf16.msra.mxu0 0
        %1571 = vmatprep.mubr.bf16.mxu0 0
        %1572 = vmatmul.mubr.bf16.gmra.mxu0 %v1537
        %v1573 = vpop.f32.mrf.mxu0
        %v1574 = vadd.f32 0.0, %v1573
        %v1575 = vpop.f32.mrf.mxu0
        %v1576 = vpop.f32.mrf.mxu0
        %v1577 = vpop.f32.mrf.mxu0
        %1578 = vdwg.mxu0
        %v1579 = vadd.f32 %v1410, %v1574
        %v1580 = vadd.f32 %v596, %v1579
        %v1581 = vld [vmem:[#allocation10] sm:$0x1]
        %v1583 = vlaneseq
        %v1584 = vshrl.u32 %v1583, 7
        %v1585 = vsub.s32 0, %v1584
        %v1586 = vrot.slane %v1581, %v1585
        %v1588 = vadd.f32 %v1580, %v1586
        %v1589 = vld [vmem:[#allocation12] sm:$0x1]
        %v1590 = vld [vmem:[#allocation13] sm:$0x1]
        %1591 = vadd.xlane.f32.xlu0 %v1588
        %v1592 = vpop.xlane.xlu0 %1591
        %v1593 = vmul.f32 %v1592, %v601
        %v1594 = vsub.f32 %v1588, %v1593
        %v1595 = vmul.f32 %v1594, %v1594
        %1596 = vadd.xlane.f32.xlu0 %v1595
        %v1597 = vpop.xlane.xlu0 %1596
        %v1598 = vmul.f32 %v1597, %v601
        %v1599 = vadd.f32 %v1598, 1e-06
        %v1600 = vrsqrt.pop %v1599
        %v1601 = vmul.f32 %v1594, %v1600
        %v1603 = vlaneseq
        %v1604 = vshrl.u32 %v1603, 7
        %v1605 = vsub.s32 0, %v1604
        %v1606 = vrot.slane %v1589, %v1605
        %v1608 = vmul.f32 %v1601, %v1606
        %v1610 = vlaneseq
        %v1611 = vshrl.u32 %v1610, 7
        %v1612 = vsub.s32 0, %v1611
        %v1613 = vrot.slane %v1590, %v1612
        %v1615 = vadd.f32 %v1608, %v1613
        %v1616 = vpack.c.bf16 %v1615, %v1615
        %v1617 = vld [vmem:[#allocation15] sm:$0xff]
        %v1618 = vld [vmem:[#allocation15 + $0x8] sm:$0xff]
        %v1619 = vld [vmem:[#allocation15 + $0x10] sm:$0xff]
        %v1620 = vld [vmem:[#allocation15 + $0x18] sm:$0xff]
        %v1621 = vld [vmem:[#allocation15 + $0x20] sm:$0xff]
        %v1622 = vld [vmem:[#allocation15 + $0x28] sm:$0xff]
        %v1623 = vld [vmem:[#allocation15 + $0x30] sm:$0xff]
        %v1624 = vld [vmem:[#allocation15 + $0x38] sm:$0xff]
        %v1625 = vld [vmem:[#allocation15 + $0x40] sm:$0xff]
        %v1626 = vld [vmem:[#allocation15 + $0x48] sm:$0xff]
        %v1627 = vld [vmem:[#allocation15 + $0x50] sm:$0xff]
        %v1628 = vld [vmem:[#allocation15 + $0x58] sm:$0xff]
        %v1629 = vld [vmem:[#allocation15 + $0x60] sm:$0xff]
        %v1630 = vld [vmem:[#allocation15 + $0x68] sm:$0xff]
        %v1631 = vld [vmem:[#allocation15 + $0x70] sm:$0xff]
        %v1632 = vld [vmem:[#allocation15 + $0x78] sm:$0xff]
        %v1633 = vld [vmem:[#allocation15 + $0x80] sm:$0xff]
        %v1634 = vld [vmem:[#allocation15 + $0x88] sm:$0xff]
        %v1635 = vld [vmem:[#allocation15 + $0x90] sm:$0xff]
        %v1636 = vld [vmem:[#allocation15 + $0x98] sm:$0xff]
        %v1637 = vld [vmem:[#allocation15 + $0xa0] sm:$0xff]
        %v1638 = vld [vmem:[#allocation15 + $0xa8] sm:$0xff]
        %v1639 = vld [vmem:[#allocation15 + $0xb0] sm:$0xff]
        %v1640 = vld [vmem:[#allocation15 + $0xb8] sm:$0xff]
        %v1641 = vld [vmem:[#allocation15 + $0xc0] sm:$0xff]
        %v1642 = vld [vmem:[#allocation15 + $0xc8] sm:$0xff]
        %v1643 = vld [vmem:[#allocation15 + $0xd0] sm:$0xff]
        %v1644 = vld [vmem:[#allocation15 + $0xd8] sm:$0xff]
        %v1645 = vld [vmem:[#allocation15 + $0xe0] sm:$0xff]
        %v1646 = vld [vmem:[#allocation15 + $0xe8] sm:$0xff]
        %v1647 = vld [vmem:[#allocation15 + $0xf0] sm:$0xff]
        %v1648 = vld [vmem:[#allocation15 + $0xf8] sm:$0xff]
        %v1649 = vld [vmem:[#allocation16] sm:$0xf]
        %v1651 = vlaneseq
        %v1652 = vshrl.u32 %v1651, 7
        %v1653 = vsub.s32 0, %v1652
        %v1654 = vrot.slane %v1649, %v1653
        %v1655 = vlaneseq
        %v1656 = vshrl.u32 %v1655, 7
        %v1657 = vsub.s32 1, %v1656
        %v1658 = vrot.slane %v1649, %v1657
        %v1659 = vlaneseq
        %v1660 = vshrl.u32 %v1659, 7
        %v1661 = vsub.s32 2, %v1660
        %v1662 = vrot.slane %v1649, %v1661
        %v1663 = vlaneseq
        %v1664 = vshrl.u32 %v1663, 7
        %v1665 = vsub.s32 3, %v1664
        %v1666 = vrot.slane %v1649, %v1665
        %v1703 = vunpack.c.l.b16 %v1617
        %v1704 = vunpack.c.h.b16 %v1617
        %v1705 = vunpack.c.l.b16 %v1618
        %v1706 = vunpack.c.h.b16 %v1618
        %v1707 = vunpack.c.l.b16 %v1619
        %v1708 = vunpack.c.h.b16 %v1619
        %v1709 = vunpack.c.l.b16 %v1620
        %v1710 = vunpack.c.h.b16 %v1620
        %v1711 = vunpack.c.l.b16 %v1621
        %v1712 = vunpack.c.h.b16 %v1621
        %v1713 = vunpack.c.l.b16 %v1622
        %v1714 = vunpack.c.h.b16 %v1622
        %v1715 = vunpack.c.l.b16 %v1623
        %v1716 = vunpack.c.h.b16 %v1623
        %v1717 = vunpack.c.l.b16 %v1624
        %v1718 = vunpack.c.h.b16 %v1624
        %v1719 = vunpack.c.l.b16 %v1625
        %v1720 = vunpack.c.h.b16 %v1625
        %v1721 = vunpack.c.l.b16 %v1626
        %v1722 = vunpack.c.h.b16 %v1626
        %v1723 = vunpack.c.l.b16 %v1627
        %v1724 = vunpack.c.h.b16 %v1627
        %v1725 = vunpack.c.l.b16 %v1628
        %v1726 = vunpack.c.h.b16 %v1628
        %v1727 = vunpack.c.l.b16 %v1629
        %v1728 = vunpack.c.h.b16 %v1629
        %v1729 = vunpack.c.l.b16 %v1630
        %v1730 = vunpack.c.h.b16 %v1630
        %v1731 = vunpack.c.l.b16 %v1631
        %v1732 = vunpack.c.h.b16 %v1631
        %v1733 = vunpack.c.l.b16 %v1632
        %v1734 = vunpack.c.h.b16 %v1632
        %v1735 = vunpack.c.l.b16 %v1633
        %v1736 = vunpack.c.h.b16 %v1633
        %v1737 = vunpack.c.l.b16 %v1634
        %v1738 = vunpack.c.h.b16 %v1634
        %v1739 = vunpack.c.l.b16 %v1635
        %v1740 = vunpack.c.h.b16 %v1635
        %v1741 = vunpack.c.l.b16 %v1636
        %v1742 = vunpack.c.h.b16 %v1636
        %v1743 = vunpack.c.l.b16 %v1637
        %v1744 = vunpack.c.h.b16 %v1637
        %v1745 = vunpack.c.l.b16 %v1638
        %v1746 = vunpack.c.h.b16 %v1638
        %v1747 = vunpack.c.l.b16 %v1639
        %v1748 = vunpack.c.h.b16 %v1639
        %v1749 = vunpack.c.l.b16 %v1640
        %v1750 = vunpack.c.h.b16 %v1640
        %v1751 = vunpack.c.l.b16 %v1641
        %v1752 = vunpack.c.h.b16 %v1641
        %v1753 = vunpack.c.l.b16 %v1642
        %v1754 = vunpack.c.h.b16 %v1642
        %v1755 = vunpack.c.l.b16 %v1643
        %v1756 = vunpack.c.h.b16 %v1643
        %v1757 = vunpack.c.l.b16 %v1644
        %v1758 = vunpack.c.h.b16 %v1644
        %v1759 = vunpack.c.l.b16 %v1645
        %v1760 = vunpack.c.h.b16 %v1645
        %v1761 = vunpack.c.l.b16 %v1646
        %v1762 = vunpack.c.h.b16 %v1646
        %v1763 = vunpack.c.l.b16 %v1647
        %v1764 = vunpack.c.h.b16 %v1647
        %v1765 = vunpack.c.l.b16 %v1648
        %v1766 = vunpack.c.h.b16 %v1648
        %v1767 = vpack.c.b16 %v1707, %v1703
        %v1768 = vpack.c.b16 %v1708, %v1704
        %v1769 = vpack.c.b16 %v1709, %v1705
        %v1770 = vpack.c.b16 %v1710, %v1706
        %v1771 = vpack.c.b16 %v1715, %v1711
        %v1772 = vpack.c.b16 %v1716, %v1712
        %v1773 = vpack.c.b16 %v1717, %v1713
        %v1774 = vpack.c.b16 %v1718, %v1714
        %v1775 = vpack.c.b16 %v1723, %v1719
        %v1776 = vpack.c.b16 %v1724, %v1720
        %v1777 = vpack.c.b16 %v1725, %v1721
        %v1778 = vpack.c.b16 %v1726, %v1722
        %v1779 = vpack.c.b16 %v1731, %v1727
        %v1780 = vpack.c.b16 %v1732, %v1728
        %v1781 = vpack.c.b16 %v1733, %v1729
        %v1782 = vpack.c.b16 %v1734, %v1730
        %v1783 = vpack.c.b16 %v1739, %v1735
        %v1784 = vpack.c.b16 %v1740, %v1736
        %v1785 = vpack.c.b16 %v1741, %v1737
        %v1786 = vpack.c.b16 %v1742, %v1738
        %v1787 = vpack.c.b16 %v1747, %v1743
        %v1788 = vpack.c.b16 %v1748, %v1744
        %v1789 = vpack.c.b16 %v1749, %v1745
        %v1790 = vpack.c.b16 %v1750, %v1746
        %v1791 = vpack.c.b16 %v1755, %v1751
        %v1792 = vpack.c.b16 %v1756, %v1752
        %v1793 = vpack.c.b16 %v1757, %v1753
        %v1794 = vpack.c.b16 %v1758, %v1754
        %v1795 = vpack.c.b16 %v1763, %v1759
        %v1796 = vpack.c.b16 %v1764, %v1760
        %v1797 = vpack.c.b16 %v1765, %v1761
        %v1798 = vpack.c.b16 %v1766, %v1762
        %1831 = vmatprep.subr.bf16.mxu0 %v1796
        %1832 = vmatpush1.bf16.msra.mxu0 %v1795
        %1833 = vmatprep.subr.bf16.mxu0 %v1792
        %1834 = vmatpush1.bf16.msra.mxu0 %v1791
        %1835 = vmatprep.subr.bf16.mxu0 %v1788
        %1836 = vmatpush1.bf16.msra.mxu0 %v1787
        %1837 = vmatprep.subr.bf16.mxu0 %v1784
        %1838 = vmatpush1.bf16.msra.mxu0 %v1783
        %1839 = vmatprep.subr.bf16.mxu0 %v1780
        %1840 = vmatpush1.bf16.msra.mxu0 %v1779
        %1841 = vmatprep.subr.bf16.mxu0 %v1776
        %1842 = vmatpush1.bf16.msra.mxu0 %v1775
        %1843 = vmatprep.subr.bf16.mxu0 %v1772
        %1844 = vmatpush1.bf16.msra.mxu0 %v1771
        %1845 = vmatprep.subr.bf16.mxu0 %v1768
        %1846 = vmatpush1.bf16.msra.mxu0 %v1767
        %1847 = vmatprep.subr.bf16.mxu0 0
        %1848 = vmatpush2.bf16.msra.mxu0 0
        %1849 = vmatprep.subr.bf16.mxu0 0
        %1850 = vmatpush2.bf16.msra.mxu0 0
        %1851 = vmatprep.subr.bf16.mxu0 0
        %1852 = vmatpush2.bf16.msra.mxu0 0
        %1853 = vmatprep.subr.bf16.mxu0 0
        %1854 = vmatpush2.bf16.msra.mxu0 0
        %1855 = vmatprep.subr.bf16.mxu0 0
        %1856 = vmatpush2.bf16.msra.mxu0 0
        %1857 = vmatprep.subr.bf16.mxu0 0
        %1858 = vmatpush2.bf16.msra.mxu0 0
        %1859 = vmatprep.subr.bf16.mxu0 0
        %1860 = vmatpush2.bf16.msra.mxu0 0
        %1861 = vmatprep.subr.bf16.mxu0 0
        %1862 = vmatpush2.bf16.msra.mxu0 0
        %1863 = vmatprep.mubr.bf16.mxu0 0
        %1864 = vmatmul.mubr.bf16.gmra.mxu0 %v1616
        %v1865 = vpop.f32.mrf.mxu0
        %v1866 = vadd.f32 %v1654, %v1865
        %v1867 = vpop.f32.mrf.mxu0
        %v1868 = vadd.f32 %v1658, %v1867
        %v1869 = vpop.f32.mrf.mxu0
        %v1870 = vpop.f32.mrf.mxu0
        %1871 = vdwg.mxu0
        %1872 = vmatprep.subr.bf16.mxu0 %v1798
        %1873 = vmatpush1.bf16.msra.mxu0 %v1797
        %1874 = vmatprep.subr.bf16.mxu0 %v1794
        %1875 = vmatpush1.bf16.msra.mxu0 %v1793
        %1876 = vmatprep.subr.bf16.mxu0 %v1790
        %1877 = vmatpush1.bf16.msra.mxu0 %v1789
        %1878 = vmatprep.subr.bf16.mxu0 %v1786
        %1879 = vmatpush1.bf16.msra.mxu0 %v1785
        %1880 = vmatprep.subr.bf16.mxu0 %v1782
        %1881 = vmatpush1.bf16.msra.mxu0 %v1781
        %1882 = vmatprep.subr.bf16.mxu0 %v1778
        %1883 = vmatpush1.bf16.msra.mxu0 %v1777
        %1884 = vmatprep.subr.bf16.mxu0 %v1774
        %1885 = vmatpush1.bf16.msra.mxu0 %v1773
        %1886 = vmatprep.subr.bf16.mxu0 %v1770
        %1887 = vmatpush1.bf16.msra.mxu0 %v1769
        %1888 = vmatprep.subr.bf16.mxu0 0
        %1889 = vmatpush2.bf16.msra.mxu0 0
        %1890 = vmatprep.subr.bf16.mxu0 0
        %1891 = vmatpush2.bf16.msra.mxu0 0
        %1892 = vmatprep.subr.bf16.mxu0 0
        %1893 = vmatpush2.bf16.msra.mxu0 0
        %1894 = vmatprep.subr.bf16.mxu0 0
        %1895 = vmatpush2.bf16.msra.mxu0 0
        %1896 = vmatprep.subr.bf16.mxu0 0
        %1897 = vmatpush2.bf16.msra.mxu0 0
        %1898 = vmatprep.subr.bf16.mxu0 0
        %1899 = vmatpush2.bf16.msra.mxu0 0
        %1900 = vmatprep.subr.bf16.mxu0 0
        %1901 = vmatpush2.bf16.msra.mxu0 0
        %1902 = vmatprep.subr.bf16.mxu0 0
        %1903 = vmatpush2.bf16.msra.mxu0 0
        %1904 = vmatprep.mubr.bf16.mxu0 0
        %1905 = vmatmul.mubr.bf16.gmra.mxu0 %v1616
        %v1906 = vpop.f32.mrf.mxu0
        %v1907 = vadd.f32 %v1662, %v1906
        %v1908 = vpop.f32.mrf.mxu0
        %v1909 = vadd.f32 %v1666, %v1908
        %v1910 = vpop.f32.mrf.mxu0
        %v1911 = vpop.f32.mrf.mxu0
        %1912 = vdwg.mxu0
        %v1913 = vmul.f32 %v1866, 0.5
        %v1914 = vmul.f32 %v1868, 0.5
        %v1915 = vmul.f32 %v1907, 0.5
        %v1916 = vmul.f32 %v1909, 0.5
        %v1917 = vmul.f32 %v1866, 0.70710677
        %v1918 = vmul.f32 %v1868, 0.70710677
        %v1919 = vmul.f32 %v1907, 0.70710677
        %v1920 = vmul.f32 %v1909, 0.70710677
        %v1921 = verf.f32.pop %v1917
        %v1922 = verf.f32.pop %v1918
        %v1923 = verf.f32.pop %v1919
        %v1924 = verf.f32.pop %v1920
        %v1925 = vadd.f32 %v1921, 1.0
        %v1926 = vadd.f32 %v1922, 1.0
        %v1927 = vadd.f32 %v1923, 1.0
        %v1928 = vadd.f32 %v1924, 1.0
        %v1929 = vmul.f32 %v1913, %v1925
        %v1930 = vmul.f32 %v1914, %v1926
        %v1931 = vmul.f32 %v1915, %v1927
        %v1932 = vmul.f32 %v1916, %v1928
        %v1933 = vpack.c.bf16 %v1929, %v1929
        %v1934 = vpack.c.bf16 %v1930, %v1930
        %v1935 = vpack.c.bf16 %v1931, %v1931
        %v1936 = vpack.c.bf16 %v1932, %v1932
        %v1937 = vld [vmem:[#allocation18] sm:$0xf]
        %v1938 = vld [vmem:[#allocation18 + $0x4] sm:$0xf]
        %v1939 = vld [vmem:[#allocation18 + $0x8] sm:$0xf]
        %v1940 = vld [vmem:[#allocation18 + $0xc] sm:$0xf]
        %v1941 = vld [vmem:[#allocation18 + $0x10] sm:$0xf]
        %v1942 = vld [vmem:[#allocation18 + $0x14] sm:$0xf]
        %v1943 = vld [vmem:[#allocation18 + $0x18] sm:$0xf]
        %v1944 = vld [vmem:[#allocation18 + $0x1c] sm:$0xf]
        %v1945 = vld [vmem:[#allocation18 + $0x20] sm:$0xf]
        %v1946 = vld [vmem:[#allocation18 + $0x24] sm:$0xf]
        %v1947 = vld [vmem:[#allocation18 + $0x28] sm:$0xf]
        %v1948 = vld [vmem:[#allocation18 + $0x2c] sm:$0xf]
        %v1949 = vld [vmem:[#allocation18 + $0x30] sm:$0xf]
        %v1950 = vld [vmem:[#allocation18 + $0x34] sm:$0xf]
        %v1951 = vld [vmem:[#allocation18 + $0x38] sm:$0xf]
        %v1952 = vld [vmem:[#allocation18 + $0x3c] sm:$0xf]
        %v1953 = vld [vmem:[#allocation18 + $0x40] sm:$0xf]
        %v1954 = vld [vmem:[#allocation18 + $0x44] sm:$0xf]
        %v1955 = vld [vmem:[#allocation18 + $0x48] sm:$0xf]
        %v1956 = vld [vmem:[#allocation18 + $0x4c] sm:$0xf]
        %v1957 = vld [vmem:[#allocation18 + $0x50] sm:$0xf]
        %v1958 = vld [vmem:[#allocation18 + $0x54] sm:$0xf]
        %v1959 = vld [vmem:[#allocation18 + $0x58] sm:$0xf]
        %v1960 = vld [vmem:[#allocation18 + $0x5c] sm:$0xf]
        %v1961 = vld [vmem:[#allocation18 + $0x60] sm:$0xf]
        %v1962 = vld [vmem:[#allocation18 + $0x64] sm:$0xf]
        %v1963 = vld [vmem:[#allocation18 + $0x68] sm:$0xf]
        %v1964 = vld [vmem:[#allocation18 + $0x6c] sm:$0xf]
        %v1965 = vld [vmem:[#allocation18 + $0x70] sm:$0xf]
        %v1966 = vld [vmem:[#allocation18 + $0x74] sm:$0xf]
        %v1967 = vld [vmem:[#allocation18 + $0x78] sm:$0xf]
        %v1968 = vld [vmem:[#allocation18 + $0x7c] sm:$0xf]
        %v1969 = vld [vmem:[#allocation18 + $0x80] sm:$0xf]
        %v1970 = vld [vmem:[#allocation18 + $0x84] sm:$0xf]
        %v1971 = vld [vmem:[#allocation18 + $0x88] sm:$0xf]
        %v1972 = vld [vmem:[#allocation18 + $0x8c] sm:$0xf]
        %v1973 = vld [vmem:[#allocation18 + $0x90] sm:$0xf]
        %v1974 = vld [vmem:[#allocation18 + $0x94] sm:$0xf]
        %v1975 = vld [vmem:[#allocation18 + $0x98] sm:$0xf]
        %v1976 = vld [vmem:[#allocation18 + $0x9c] sm:$0xf]
        %v1977 = vld [vmem:[#allocation18 + $0xa0] sm:$0xf]
        %v1978 = vld [vmem:[#allocation18 + $0xa4] sm:$0xf]
        %v1979 = vld [vmem:[#allocation18 + $0xa8] sm:$0xf]
        %v1980 = vld [vmem:[#allocation18 + $0xac] sm:$0xf]
        %v1981 = vld [vmem:[#allocation18 + $0xb0] sm:$0xf]
        %v1982 = vld [vmem:[#allocation18 + $0xb4] sm:$0xf]
        %v1983 = vld [vmem:[#allocation18 + $0xb8] sm:$0xf]
        %v1984 = vld [vmem:[#allocation18 + $0xbc] sm:$0xf]
        %v1985 = vld [vmem:[#allocation18 + $0xc0] sm:$0xf]
        %v1986 = vld [vmem:[#allocation18 + $0xc4] sm:$0xf]
        %v1987 = vld [vmem:[#allocation18 + $0xc8] sm:$0xf]
        %v1988 = vld [vmem:[#allocation18 + $0xcc] sm:$0xf]
        %v1989 = vld [vmem:[#allocation18 + $0xd0] sm:$0xf]
        %v1990 = vld [vmem:[#allocation18 + $0xd4] sm:$0xf]
        %v1991 = vld [vmem:[#allocation18 + $0xd8] sm:$0xf]
        %v1992 = vld [vmem:[#allocation18 + $0xdc] sm:$0xf]
        %v1993 = vld [vmem:[#allocation18 + $0xe0] sm:$0xf]
        %v1994 = vld [vmem:[#allocation18 + $0xe4] sm:$0xf]
        %v1995 = vld [vmem:[#allocation18 + $0xe8] sm:$0xf]
        %v1996 = vld [vmem:[#allocation18 + $0xec] sm:$0xf]
        %v1997 = vld [vmem:[#allocation18 + $0xf0] sm:$0xf]
        %v1998 = vld [vmem:[#allocation18 + $0xf4] sm:$0xf]
        %v1999 = vld [vmem:[#allocation18 + $0xf8] sm:$0xf]
        %v2000 = vld [vmem:[#allocation18 + $0xfc] sm:$0xf]
        %v2001 = vld [vmem:[#allocation19] sm:$0x1]
        %v2003 = vlaneseq
        %v2004 = vshrl.u32 %v2003, 7
        %v2005 = vsub.s32 0, %v2004
        %v2006 = vrot.slane %v2001, %v2005
        %v2072 = vunpack.c.l.b16 %v1937
        %v2073 = vunpack.c.l.b16 %v1938
        %v2074 = vunpack.c.l.b16 %v1939
        %v2075 = vunpack.c.l.b16 %v1940
        %v2076 = vunpack.c.l.b16 %v1941
        %v2077 = vunpack.c.l.b16 %v1942
        %v2078 = vunpack.c.l.b16 %v1943
        %v2079 = vunpack.c.l.b16 %v1944
        %v2080 = vunpack.c.l.b16 %v1945
        %v2081 = vunpack.c.l.b16 %v1946
        %v2082 = vunpack.c.l.b16 %v1947
        %v2083 = vunpack.c.l.b16 %v1948
        %v2084 = vunpack.c.l.b16 %v1949
        %v2085 = vunpack.c.l.b16 %v1950
        %v2086 = vunpack.c.l.b16 %v1951
        %v2087 = vunpack.c.l.b16 %v1952
        %v2088 = vunpack.c.l.b16 %v1953
        %v2089 = vunpack.c.l.b16 %v1954
        %v2090 = vunpack.c.l.b16 %v1955
        %v2091 = vunpack.c.l.b16 %v1956
        %v2092 = vunpack.c.l.b16 %v1957
        %v2093 = vunpack.c.l.b16 %v1958
        %v2094 = vunpack.c.l.b16 %v1959
        %v2095 = vunpack.c.l.b16 %v1960
        %v2096 = vunpack.c.l.b16 %v1961
        %v2097 = vunpack.c.l.b16 %v1962
        %v2098 = vunpack.c.l.b16 %v1963
        %v2099 = vunpack.c.l.b16 %v1964
        %v2100 = vunpack.c.l.b16 %v1965
        %v2101 = vunpack.c.l.b16 %v1966
        %v2102 = vunpack.c.l.b16 %v1967
        %v2103 = vunpack.c.l.b16 %v1968
        %v2104 = vunpack.c.l.b16 %v1969
        %v2105 = vunpack.c.l.b16 %v1970
        %v2106 = vunpack.c.l.b16 %v1971
        %v2107 = vunpack.c.l.b16 %v1972
        %v2108 = vunpack.c.l.b16 %v1973
        %v2109 = vunpack.c.l.b16 %v1974
        %v2110 = vunpack.c.l.b16 %v1975
        %v2111 = vunpack.c.l.b16 %v1976
        %v2112 = vunpack.c.l.b16 %v1977
        %v2113 = vunpack.c.l.b16 %v1978
        %v2114 = vunpack.c.l.b16 %v1979
        %v2115 = vunpack.c.l.b16 %v1980
        %v2116 = vunpack.c.l.b16 %v1981
        %v2117 = vunpack.c.l.b16 %v1982
        %v2118 = vunpack.c.l.b16 %v1983
        %v2119 = vunpack.c.l.b16 %v1984
        %v2120 = vunpack.c.l.b16 %v1985
        %v2121 = vunpack.c.l.b16 %v1986
        %v2122 = vunpack.c.l.b16 %v1987
        %v2123 = vunpack.c.l.b16 %v1988
        %v2124 = vunpack.c.l.b16 %v1989
        %v2125 = vunpack.c.l.b16 %v1990
        %v2126 = vunpack.c.l.b16 %v1991
        %v2127 = vunpack.c.l.b16 %v1992
        %v2128 = vunpack.c.l.b16 %v1993
        %v2129 = vunpack.c.l.b16 %v1994
        %v2130 = vunpack.c.l.b16 %v1995
        %v2131 = vunpack.c.l.b16 %v1996
        %v2132 = vunpack.c.l.b16 %v1997
        %v2133 = vunpack.c.l.b16 %v1998
        %v2134 = vunpack.c.l.b16 %v1999
        %v2135 = vunpack.c.l.b16 %v2000
        %v2136 = vpack.c.b16 %v2073, %v2072
        %v2137 = vpack.c.b16 %v2075, %v2074
        %v2138 = vpack.c.b16 %v2077, %v2076
        %v2139 = vpack.c.b16 %v2079, %v2078
        %v2140 = vpack.c.b16 %v2081, %v2080
        %v2141 = vpack.c.b16 %v2083, %v2082
        %v2142 = vpack.c.b16 %v2085, %v2084
        %v2143 = vpack.c.b16 %v2087, %v2086
        %v2144 = vpack.c.b16 %v2089, %v2088
        %v2145 = vpack.c.b16 %v2091, %v2090
        %v2146 = vpack.c.b16 %v2093, %v2092
        %v2147 = vpack.c.b16 %v2095, %v2094
        %v2148 = vpack.c.b16 %v2097, %v2096
        %v2149 = vpack.c.b16 %v2099, %v2098
        %v2150 = vpack.c.b16 %v2101, %v2100
        %v2151 = vpack.c.b16 %v2103, %v2102
        %v2152 = vpack.c.b16 %v2105, %v2104
        %v2153 = vpack.c.b16 %v2107, %v2106
        %v2154 = vpack.c.b16 %v2109, %v2108
        %v2155 = vpack.c.b16 %v2111, %v2110
        %v2156 = vpack.c.b16 %v2113, %v2112
        %v2157 = vpack.c.b16 %v2115, %v2114
        %v2158 = vpack.c.b16 %v2117, %v2116
        %v2159 = vpack.c.b16 %v2119, %v2118
        %v2160 = vpack.c.b16 %v2121, %v2120
        %v2161 = vpack.c.b16 %v2123, %v2122
        %v2162 = vpack.c.b16 %v2125, %v2124
        %v2163 = vpack.c.b16 %v2127, %v2126
        %v2164 = vpack.c.b16 %v2129, %v2128
        %v2165 = vpack.c.b16 %v2131, %v2130
        %v2166 = vpack.c.b16 %v2133, %v2132
        %v2167 = vpack.c.b16 %v2135, %v2134
        %2200 = vmatprep.subr.bf16.mxu0 0
        %2201 = vmatpush1.bf16.msra.mxu0 %v2143
        %2202 = vmatprep.subr.bf16.mxu0 0
        %2203 = vmatpush1.bf16.msra.mxu0 %v2142
        %2204 = vmatprep.subr.bf16.mxu0 0
        %2205 = vmatpush1.bf16.msra.mxu0 %v2141
        %2206 = vmatprep.subr.bf16.mxu0 0
        %2207 = vmatpush1.bf16.msra.mxu0 %v2140
        %2208 = vmatprep.subr.bf16.mxu0 0
        %2209 = vmatpush1.bf16.msra.mxu0 %v2139
        %2210 = vmatprep.subr.bf16.mxu0 0
        %2211 = vmatpush1.bf16.msra.mxu0 %v2138
        %2212 = vmatprep.subr.bf16.mxu0 0
        %2213 = vmatpush1.bf16.msra.mxu0 %v2137
        %2214 = vmatprep.subr.bf16.mxu0 0
        %2215 = vmatpush1.bf16.msra.mxu0 %v2136
        %2216 = vmatprep.subr.bf16.mxu0 0
        %2217 = vmatpush2.bf16.msra.mxu0 %v2151
        %2218 = vmatprep.subr.bf16.mxu0 0
        %2219 = vmatpush2.bf16.msra.mxu0 %v2150
        %2220 = vmatprep.subr.bf16.mxu0 0
        %2221 = vmatpush2.bf16.msra.mxu0 %v2149
        %2222 = vmatprep.subr.bf16.mxu0 0
        %2223 = vmatpush2.bf16.msra.mxu0 %v2148
        %2224 = vmatprep.subr.bf16.mxu0 0
        %2225 = vmatpush2.bf16.msra.mxu0 %v2147
        %2226 = vmatprep.subr.bf16.mxu0 0
        %2227 = vmatpush2.bf16.msra.mxu0 %v2146
        %2228 = vmatprep.subr.bf16.mxu0 0
        %2229 = vmatpush2.bf16.msra.mxu0 %v2145
        %2230 = vmatprep.subr.bf16.mxu0 0
        %2231 = vmatpush2.bf16.msra.mxu0 %v2144
        %2232 = vmatprep.mubr.bf16.mxu0 %v1934
        %2233 = vmatmul.mubr.bf16.gmra.mxu0 %v1933
        %v2234 = vpop.f32.mrf.mxu0
        %v2235 = vadd.f32 %v2006, %v2234
        %v2236 = vpop.f32.mrf.mxu0
        %v2237 = vpop.f32.mrf.mxu0
        %v2238 = vpop.f32.mrf.mxu0
        %2239 = vdwg.mxu0
        %2240 = vmatprep.subr.bf16.mxu0 0
        %2241 = vmatpush1.bf16.msra.mxu0 %v2159
        %2242 = vmatprep.subr.bf16.mxu0 0
        %2243 = vmatpush1.bf16.msra.mxu0 %v2158
        %2244 = vmatprep.subr.bf16.mxu0 0
        %2245 = vmatpush1.bf16.msra.mxu0 %v2157
        %2246 = vmatprep.subr.bf16.mxu0 0
        %2247 = vmatpush1.bf16.msra.mxu0 %v2156
        %2248 = vmatprep.subr.bf16.mxu0 0
        %2249 = vmatpush1.bf16.msra.mxu0 %v2155
        %2250 = vmatprep.subr.bf16.mxu0 0
        %2251 = vmatpush1.bf16.msra.mxu0 %v2154
        %2252 = vmatprep.subr.bf16.mxu0 0
        %2253 = vmatpush1.bf16.msra.mxu0 %v2153
        %2254 = vmatprep.subr.bf16.mxu0 0
        %2255 = vmatpush1.bf16.msra.mxu0 %v2152
        %2256 = vmatprep.subr.bf16.mxu0 0
        %2257 = vmatpush2.bf16.msra.mxu0 %v2167
        %2258 = vmatprep.subr.bf16.mxu0 0
        %2259 = vmatpush2.bf16.msra.mxu0 %v2166
        %2260 = vmatprep.subr.bf16.mxu0 0
        %2261 = vmatpush2.bf16.msra.mxu0 %v2165
        %2262 = vmatprep.subr.bf16.mxu0 0
        %2263 = vmatpush2.bf16.msra.mxu0 %v2164
        %2264 = vmatprep.subr.bf16.mxu0 0
        %2265 = vmatpush2.bf16.msra.mxu0 %v2163
        %2266 = vmatprep.subr.bf16.mxu0 0
        %2267 = vmatpush2.bf16.msra.mxu0 %v2162
        %2268 = vmatprep.subr.bf16.mxu0 0
        %2269 = vmatpush2.bf16.msra.mxu0 %v2161
        %2270 = vmatprep.subr.bf16.mxu0 0
        %2271 = vmatpush2.bf16.msra.mxu0 %v2160
        %2272 = vmatprep.mubr.bf16.mxu0 %v1936
        %2273 = vmatmul.mubr.bf16.gmra.mxu0 %v1935
        %v2274 = vpop.f32.mrf.mxu0
        %v2275 = vadd.f32 %v2235, %v2274
        %v2276 = vpop.f32.mrf.mxu0
        %v2277 = vpop.f32.mrf.mxu0
        %v2278 = vpop.f32.mrf.mxu0
        %2279 = vdwg.mxu0
        %v2280 = vadd.f32 %v1588, %v2275
        %2281 = vst [vmem:[%s594] sm:$0xff] %v2280
        %p2282 = scmp.lt.s32.totalorder %s31, 1
        %s2283 = scalar_select %p2282, %s31, 1
        %s2284 = smul.addr %s2283, 8
        %s2285 = scalar_lea.vmem %s13, %s2284
        // Predicated region
        $region121: #{deit_forward.6} parent=71 // pred_check
          %p2286 = pneg %p327
        $region122: #{deit_forward.6} parent=71 // pred_check_branch
          %2288 = sbr.rel (%p2286) target = $region124
        $region123: #{deit_forward.6} parent=71 // pred_region
          _
        $region124: #{deit_forward.6} parent=71 // pred_fallthru
          _
      $region72: #{deit_forward.6} parent=5 // pred_fallthru
        _
      %p2289 = scmp.le.s32.totalorder 2, %s26
      // Predicated region
      $region125: #{deit_forward.6} parent=5 // pred_check
        %p2290 = pneg %p2289
      $region126: #{deit_forward.6} parent=5 // pred_check_branch
        %2292 = sbr.rel (%p2290) target = $region128
      $region127: #{deit_forward.6} parent=5 // pred_region
        %s2293 = ssub.s32 %s26, 2
        // Predicated region
        $region129: #{deit_forward.6} parent=127 // pred_check
          %p2294 = pneg %p333
        $region130: #{deit_forward.6} parent=127 // pred_check_branch
          %2296 = sbr.rel (%p2294) target = $region132
        $region131: #{deit_forward.6} parent=127 // pred_region
          %p2297 = scmp.lt.s32.totalorder %s32, 1
          %s2298 = scalar_select %p2297, %s32, 1
          %s2299 = smul.addr %s2298, 8
          %s2300 = scalar_lea.vmem %s13, %s2299
        $region132: #{deit_forward.6} parent=127 // pred_fallthru
          _
      $region128: #{deit_forward.6} parent=5 // pred_fallthru
        _
    $region6: #{deit_forward.6} parent=1 // loop_footer
      %s30 = sadd.s32 1, %s26
    $region7: #{deit_forward.6} parent=1 // loop_footer_branch
      %25 = sbr.rel target = $region3
    $region8: #{deit_forward.6} parent=1 // loop_exit
      _
    %2301 = vsyncpa [#allocation3], 1
    %s2302 = scalar_lea.sflag [#allocation3], 1
    %2303 = vsyncpa %s2302, 1
    %2304 = vsyncpa [#allocation5], 1
    %2305 = vsyncpa [#allocation8], 1
    %2306 = vsyncpa [#allocation11], 1
    %2307 = vsyncpa [#allocation14], 1
    %2308 = vsyncpa [#allocation17], 1
    %2309 = vsyncpa [#allocation20], 1

// kernel: deit_forward.5
$region0: #{deit_forward.5}
  #allocation0 [shape = 'u32[]', space=smem, size = 0x4, offset = 0x4, fixed_abs, tag = 'smem constant byte address 0x4 - core index']
  #allocation1 [shape = 'u32[144,128]{1,0:T(1,128)}', space=vmem, size = 0x12000, scoped, tag = 'internal scratch']
  %s0 = inlined_call_operand.vmem [shape: f32[2,8,128], index: 0, kind: input, shape index: {}]
  %s1 = inlined_call_operand.vmem [shape: f32[1,128], index: 1, kind: input, shape index: {}]
  %s2 = inlined_call_operand.vmem [shape: f32[1,128], index: 2, kind: input, shape index: {}]
  %s3 = inlined_call_operand.vmem [shape: bf16[128,384], index: 3, kind: input, shape index: {}]
  %s4 = inlined_call_operand.vmem [shape: f32[1,384], index: 4, kind: input, shape index: {}]
  %s5 = inlined_call_operand.vmem [shape: bf16[128,128], index: 5, kind: input, shape index: {}]
  %s6 = inlined_call_operand.vmem [shape: f32[1,128], index: 6, kind: input, shape index: {}]
  %s7 = inlined_call_operand.vmem [shape: f32[1,128], index: 7, kind: input, shape index: {}]
  %s8 = inlined_call_operand.vmem [shape: f32[1,128], index: 8, kind: input, shape index: {}]
  %s9 = inlined_call_operand.vmem [shape: bf16[128,512], index: 9, kind: input, shape index: {}]
  %s10 = inlined_call_operand.vmem [shape: f32[1,512], index: 10, kind: input, shape index: {}]
  %s11 = inlined_call_operand.vmem [shape: bf16[512,128], index: 11, kind: input, shape index: {}]
  %s12 = inlined_call_operand.vmem [shape: f32[1,128], index: 12, kind: input, shape index: {}]
  %s13 = inlined_call_operand.vmem [shape: f32[2,8,128], index: 13, kind: output, shape index: {}]
  %s14 = sld [smem:[#allocation0]]
  $region85: #{deit_forward.5} parent=0
    _
  %s16 = ssub.s32 1, %s14
  %s17 = scalar_select 0, %s16, %s14
  loop: start=0, step=1, limit=4
  $region2: #{deit_forward.5} parent=0 // loop_pre_header
    _
  $region3: #{deit_forward.5} parent=0 // loop_header
    %s19 = sphi 0, %s23
    %p20 = scmp.ge.s32.totalorder %s19, 4
    %s29 = sphi 0, %s31
    %s32 = sphi 0, %s29
    %s33 = sphi 0, %s32
    %s49 = sphi 0, %s33
    %s53 = sphi 0, %s53
    %s55 = sphi 0, %s53
    %s56 = sphi 0, %s55
    %s70 = sphi 0, %s56
    %s74 = sphi 0, %s74
    %s76 = sphi 0, %s74
    %s77 = sphi 0, %s76
    %s91 = sphi 0, %s77
    %s95 = sphi 0, %s95
    %s97 = sphi 0, %s95
    %s98 = sphi 0, %s97
    %s112 = sphi 0, %s98
    %s116 = sphi 0, %s116
    %s118 = sphi 0, %s116
    %s119 = sphi 0, %s118
    %s133 = sphi 0, %s119
    %s137 = sphi 0, %s137
    %s139 = sphi 0, %s137
    %s140 = sphi 0, %s139
    %s154 = sphi 0, %s140
    %s158 = sphi 0, %s158
    %s160 = sphi 0, %s158
    %s161 = sphi 0, %s160
    %s175 = sphi 0, %s161
    %s179 = sphi 0, %s179
    %s181 = sphi 0, %s179
    %s182 = sphi 0, %s181
    %s196 = sphi 0, %s182
    %s200 = sphi 0, %s200
    %s202 = sphi 0, %s200
    %s203 = sphi 0, %s202
    %s217 = sphi 0, %s203
    %s221 = sphi 0, %s221
    %s223 = sphi 0, %s221
    %s224 = sphi 0, %s223
    %s238 = sphi 0, %s224
    %s242 = sphi 0, %s242
    %s244 = sphi 0, %s242
    %s245 = sphi 0, %s244
    %s259 = sphi 0, %s245
    %s263 = sphi 0, %s263
    %s265 = sphi 0, %s263
    %s266 = sphi 0, %s265
    %s280 = sphi 0, %s266
    %s284 = sphi 0, %s284
    %s286 = sphi 0, %s284
    %s287 = sphi 0, %s286
    %s301 = sphi 0, %s287
    %s307 = sphi 0, %s309
    %s310 = sphi 0, %s307
    %s311 = sphi 0, %s310
    %s327 = sphi 0, %s311
  $region4: #{deit_forward.5} parent=0 // loop_header_branch
    %22 = sbr.rel (%p20) target = $region8
  $region5: #{deit_forward.5} parent=0 // loop_body
    %s24 = ssub.s32 %s19, 1
    %s25 = ssub.s32 %s19, 2
    %s26 = sadd.s32 %s19, 1
    %s27 = ssub.s32 %s19, %s26
    %p28 = scmp.eq.s32.totalorder %s27, 0
    %s30 = sadd.s32 %s29, 1
    %s31 = scalar_select %p28, %s29, %s30
    %p34 = pneg %p28
    %p35 = scmp.eq.s32.totalorder %s19, 1
    %p36 = por %p34, %p35
    %p37 = scmp.ne.s32.totalorder %s29, %s32
    %p38 = scmp.eq.s32.totalorder %s19, 0
    %p39 = por %p37, %p38
    %p40 = scmp.ne.s32.totalorder %s29, %s32
    %p41 = scmp.eq.s32.totalorder %s24, 1
    %p42 = por %p40, %p41
    %p43 = scmp.ne.s32.totalorder %s32, %s33
    %p44 = scmp.eq.s32.totalorder %s24, 0
    %p45 = por %p43, %p44
    %p46 = scmp.ne.s32.totalorder %s32, %s33
    %p47 = scmp.eq.s32.totalorder %s25, 1
    %p48 = por %p46, %p47
    %p50 = scmp.ne.s32.totalorder %s33, %s49
    %p51 = scmp.eq.s32.totalorder %s25, 0
    %p52 = por %p50, %p51
    %s54 = sadd.s32 %s53, 1
    %p57 = scmp.eq.s32.totalorder %s19, 1
    %p58 = scmp.ne.s32.totalorder %s53, %s55
    %p59 = scmp.eq.s32.totalorder %s19, 0
    %p60 = por %p58, %p59
    %p61 = scmp.ne.s32.totalorder %s53, %s55
    %p62 = scmp.eq.s32.totalorder %s24, 1
    %p63 = por %p61, %p62
    %p64 = scmp.ne.s32.totalorder %s55, %s56
    %p65 = scmp.eq.s32.totalorder %s24, 0
    %p66 = por %p64, %p65
    %p67 = scmp.ne.s32.totalorder %s55, %s56
    %p68 = scmp.eq.s32.totalorder %s25, 1
    %p69 = por %p67, %p68
    %p71 = scmp.ne.s32.totalorder %s56, %s70
    %p72 = scmp.eq.s32.totalorder %s25, 0
    %p73 = por %p71, %p72
    %s75 = sadd.s32 %s74, 1
    %p78 = scmp.eq.s32.totalorder %s19, 1
    %p79 = scmp.ne.s32.totalorder %s74, %s76
    %p80 = scmp.eq.s32.totalorder %s19, 0
    %p81 = por %p79, %p80
    %p82 = scmp.ne.s32.totalorder %s74, %s76
    %p83 = scmp.eq.s32.totalorder %s24, 1
    %p84 = por %p82, %p83
    %p85 = scmp.ne.s32.totalorder %s76, %s77
    %p86 = scmp.eq.s32.totalorder %s24, 0
    %p87 = por %p85, %p86
    %p88 = scmp.ne.s32.totalorder %s76, %s77
    %p89 = scmp.eq.s32.totalorder %s25, 1
    %p90 = por %p88, %p89
    %p92 = scmp.ne.s32.totalorder %s77, %s91
    %p93 = scmp.eq.s32.totalorder %s25, 0
    %p94 = por %p92, %p93
    %s96 = sadd.s32 %s95, 1
    %p99 = scmp.eq.s32.totalorder %s19, 1
    %p100 = scmp.ne.s32.totalorder %s95, %s97
    %p101 = scmp.eq.s32.totalorder %s19, 0
    %p102 = por %p100, %p101
    %p103 = scmp.ne.s32.totalorder %s95, %s97
    %p104 = scmp.eq.s32.totalorder %s24, 1
    %p105 = por %p103, %p104
    %p106 = scmp.ne.s32.totalorder %s97, %s98
    %p107 = scmp.eq.s32.totalorder %s24, 0
    %p108 = por %p106, %p107
    %p109 = scmp.ne.s32.totalorder %s97, %s98
    %p110 = scmp.eq.s32.totalorder %s25, 1
    %p111 = por %p109, %p110
    %p113 = scmp.ne.s32.totalorder %s98, %s112
    %p114 = scmp.eq.s32.totalorder %s25, 0
    %p115 = por %p113, %p114
    %s117 = sadd.s32 %s116, 1
    %p120 = scmp.eq.s32.totalorder %s19, 1
    %p121 = scmp.ne.s32.totalorder %s116, %s118
    %p122 = scmp.eq.s32.totalorder %s19, 0
    %p123 = por %p121, %p122
    %p124 = scmp.ne.s32.totalorder %s116, %s118
    %p125 = scmp.eq.s32.totalorder %s24, 1
    %p126 = por %p124, %p125
    %p127 = scmp.ne.s32.totalorder %s118, %s119
    %p128 = scmp.eq.s32.totalorder %s24, 0
    %p129 = por %p127, %p128
    %p130 = scmp.ne.s32.totalorder %s118, %s119
    %p131 = scmp.eq.s32.totalorder %s25, 1
    %p132 = por %p130, %p131
    %p134 = scmp.ne.s32.totalorder %s119, %s133
    %p135 = scmp.eq.s32.totalorder %s25, 0
    %p136 = por %p134, %p135
    %s138 = sadd.s32 %s137, 1
    %p141 = scmp.eq.s32.totalorder %s19, 1
    %p142 = scmp.ne.s32.totalorder %s137, %s139
    %p143 = scmp.eq.s32.totalorder %s19, 0
    %p144 = por %p142, %p143
    %p145 = scmp.ne.s32.totalorder %s137, %s139
    %p146 = scmp.eq.s32.totalorder %s24, 1
    %p147 = por %p145, %p146
    %p148 = scmp.ne.s32.totalorder %s139, %s140
    %p149 = scmp.eq.s32.totalorder %s24, 0
    %p150 = por %p148, %p149
    %p151 = scmp.ne.s32.totalorder %s139, %s140
    %p152 = scmp.eq.s32.totalorder %s25, 1
    %p153 = por %p151, %p152
    %p155 = scmp.ne.s32.totalorder %s140, %s154
    %p156 = scmp.eq.s32.totalorder %s25, 0
    %p157 = por %p155, %p156
    %s159 = sadd.s32 %s158, 1
    %p162 = scmp.eq.s32.totalorder %s19, 1
    %p163 = scmp.ne.s32.totalorder %s158, %s160
    %p164 = scmp.eq.s32.totalorder %s19, 0
    %p165 = por %p163, %p164
    %p166 = scmp.ne.s32.totalorder %s158, %s160
    %p167 = scmp.eq.s32.totalorder %s24, 1
    %p168 = por %p166, %p167
    %p169 = scmp.ne.s32.totalorder %s160, %s161
    %p170 = scmp.eq.s32.totalorder %s24, 0
    %p171 = por %p169, %p170
    %p172 = scmp.ne.s32.totalorder %s160, %s161
    %p173 = scmp.eq.s32.totalorder %s25, 1
    %p174 = por %p172, %p173
    %p176 = scmp.ne.s32.totalorder %s161, %s175
    %p177 = scmp.eq.s32.totalorder %s25, 0
    %p178 = por %p176, %p177
    %s180 = sadd.s32 %s179, 1
    %p183 = scmp.eq.s32.totalorder %s19, 1
    %p184 = scmp.ne.s32.totalorder %s179, %s181
    %p185 = scmp.eq.s32.totalorder %s19, 0
    %p186 = por %p184, %p185
    %p187 = scmp.ne.s32.totalorder %s179, %s181
    %p188 = scmp.eq.s32.totalorder %s24, 1
    %p189 = por %p187, %p188
    %p190 = scmp.ne.s32.totalorder %s181, %s182
    %p191 = scmp.eq.s32.totalorder %s24, 0
    %p192 = por %p190, %p191
    %p193 = scmp.ne.s32.totalorder %s181, %s182
    %p194 = scmp.eq.s32.totalorder %s25, 1
    %p195 = por %p193, %p194
    %p197 = scmp.ne.s32.totalorder %s182, %s196
    %p198 = scmp.eq.s32.totalorder %s25, 0
    %p199 = por %p197, %p198
    %s201 = sadd.s32 %s200, 1
    %p204 = scmp.eq.s32.totalorder %s19, 1
    %p205 = scmp.ne.s32.totalorder %s200, %s202
    %p206 = scmp.eq.s32.totalorder %s19, 0
    %p207 = por %p205, %p206
    %p208 = scmp.ne.s32.totalorder %s200, %s202
    %p209 = scmp.eq.s32.totalorder %s24, 1
    %p210 = por %p208, %p209
    %p211 = scmp.ne.s32.totalorder %s202, %s203
    %p212 = scmp.eq.s32.totalorder %s24, 0
    %p213 = por %p211, %p212
    %p214 = scmp.ne.s32.totalorder %s202, %s203
    %p215 = scmp.eq.s32.totalorder %s25, 1
    %p216 = por %p214, %p215
    %p218 = scmp.ne.s32.totalorder %s203, %s217
    %p219 = scmp.eq.s32.totalorder %s25, 0
    %p220 = por %p218, %p219
    %s222 = sadd.s32 %s221, 1
    %p225 = scmp.eq.s32.totalorder %s19, 1
    %p226 = scmp.ne.s32.totalorder %s221, %s223
    %p227 = scmp.eq.s32.totalorder %s19, 0
    %p228 = por %p226, %p227
    %p229 = scmp.ne.s32.totalorder %s221, %s223
    %p230 = scmp.eq.s32.totalorder %s24, 1
    %p231 = por %p229, %p230
    %p232 = scmp.ne.s32.totalorder %s223, %s224
    %p233 = scmp.eq.s32.totalorder %s24, 0
    %p234 = por %p232, %p233
    %p235 = scmp.ne.s32.totalorder %s223, %s224
    %p236 = scmp.eq.s32.totalorder %s25, 1
    %p237 = por %p235, %p236
    %p239 = scmp.ne.s32.totalorder %s224, %s238
    %p240 = scmp.eq.s32.totalorder %s25, 0
    %p241 = por %p239, %p240
    %s243 = sadd.s32 %s242, 1
    %p246 = scmp.eq.s32.totalorder %s19, 1
    %p247 = scmp.ne.s32.totalorder %s242, %s244
    %p248 = scmp.eq.s32.totalorder %s19, 0
    %p249 = por %p247, %p248
    %p250 = scmp.ne.s32.totalorder %s242, %s244
    %p251 = scmp.eq.s32.totalorder %s24, 1
    %p252 = por %p250, %p251
    %p253 = scmp.ne.s32.totalorder %s244, %s245
    %p254 = scmp.eq.s32.totalorder %s24, 0
    %p255 = por %p253, %p254
    %p256 = scmp.ne.s32.totalorder %s244, %s245
    %p257 = scmp.eq.s32.totalorder %s25, 1
    %p258 = por %p256, %p257
    %p260 = scmp.ne.s32.totalorder %s245, %s259
    %p261 = scmp.eq.s32.totalorder %s25, 0
    %p262 = por %p260, %p261
    %s264 = sadd.s32 %s263, 1
    %p267 = scmp.eq.s32.totalorder %s19, 1
    %p268 = scmp.ne.s32.totalorder %s263, %s265
    %p269 = scmp.eq.s32.totalorder %s19, 0
    %p270 = por %p268, %p269
    %p271 = scmp.ne.s32.totalorder %s263, %s265
    %p272 = scmp.eq.s32.totalorder %s24, 1
    %p273 = por %p271, %p272
    %p274 = scmp.ne.s32.totalorder %s265, %s266
    %p275 = scmp.eq.s32.totalorder %s24, 0
    %p276 = por %p274, %p275
    %p277 = scmp.ne.s32.totalorder %s265, %s266
    %p278 = scmp.eq.s32.totalorder %s25, 1
    %p279 = por %p277, %p278
    %p281 = scmp.ne.s32.totalorder %s266, %s280
    %p282 = scmp.eq.s32.totalorder %s25, 0
    %p283 = por %p281, %p282
    %s285 = sadd.s32 %s284, 1
    %p288 = scmp.eq.s32.totalorder %s19, 1
    %p289 = scmp.ne.s32.totalorder %s284, %s286
    %p290 = scmp.eq.s32.totalorder %s19, 0
    %p291 = por %p289, %p290
    %p292 = scmp.ne.s32.totalorder %s284, %s286
    %p293 = scmp.eq.s32.totalorder %s24, 1
    %p294 = por %p292, %p293
    %p295 = scmp.ne.s32.totalorder %s286, %s287
    %p296 = scmp.eq.s32.totalorder %s24, 0
    %p297 = por %p295, %p296
    %p298 = scmp.ne.s32.totalorder %s286, %s287
    %p299 = scmp.eq.s32.totalorder %s25, 1
    %p300 = por %p298, %p299
    %p302 = scmp.ne.s32.totalorder %s287, %s301
    %p303 = scmp.eq.s32.totalorder %s25, 0
    %p304 = por %p302, %p303
    %s305 = ssub.s32 %s19, %s26
    %p306 = scmp.eq.s32.totalorder %s305, 0
    %s308 = sadd.s32 %s307, 1
    %s309 = scalar_select %p306, %s307, %s308
    %p312 = pneg %p306
    %p313 = scmp.eq.s32.totalorder %s19, 1
    %p314 = por %p312, %p313
    %p315 = scmp.ne.s32.totalorder %s307, %s310
    %p316 = scmp.eq.s32.totalorder %s19, 0
    %p317 = por %p315, %p316
    %p318 = scmp.ne.s32.totalorder %s307, %s310
    %p319 = scmp.eq.s32.totalorder %s24, 1
    %p320 = por %p318, %p319
    %p321 = scmp.ne.s32.totalorder %s310, %s311
    %p322 = scmp.eq.s32.totalorder %s24, 0
    %p323 = por %p321, %p322
    %p324 = scmp.ne.s32.totalorder %s310, %s311
    %p325 = scmp.eq.s32.totalorder %s25, 1
    %p326 = por %p324, %p325
    %p328 = scmp.ne.s32.totalorder %s311, %s327
    %p329 = scmp.eq.s32.totalorder %s25, 0
    %p330 = por %p328, %p329
    %p331 = scmp.le.s32.totalorder 1, %s19
    %p332 = scmp.lt.s32.totalorder %s19, 3
    %p333 = pnand %p331, %p332
    %p334 = pneg %p333
    // Predicated region
    $region9: #{deit_forward.5} parent=5 // pred_check
      _
    $region10: #{deit_forward.5} parent=5 // pred_check_branch
      %336 = sbr.rel (%p333) target = $region12
    $region11: #{deit_forward.5} parent=5 // pred_region
      %s337 = ssub.s32 %s19, 1
      // Predicated region
      $region13: #{deit_forward.5} parent=11 // pred_check
        %p338 = pneg %p66
      $region14: #{deit_forward.5} parent=11 // pred_check_branch
        %340 = sbr.rel (%p338) target = $region16
      $region15: #{deit_forward.5} parent=11 // pred_region
        _
      $region16: #{deit_forward.5} parent=11 // pred_fallthru
        _
      // Predicated region
      $region17: #{deit_forward.5} parent=11 // pred_check
        %p341 = pneg %p87
      $region18: #{deit_forward.5} parent=11 // pred_check_branch
        %343 = sbr.rel (%p341) target = $region20
      $region19: #{deit_forward.5} parent=11 // pred_region
        _
      $region20: #{deit_forward.5} parent=11 // pred_fallthru
        _
      // Predicated region
      $region21: #{deit_forward.5} parent=11 // pred_check
        %p344 = pneg %p108
      $region22: #{deit_forward.5} parent=11 // pred_check_branch
        %346 = sbr.rel (%p344) target = $region24
      $region23: #{deit_forward.5} parent=11 // pred_region
        _
      $region24: #{deit_forward.5} parent=11 // pred_fallthru
        _
      // Predicated region
      $region25: #{deit_forward.5} parent=11 // pred_check
        %p347 = pneg %p129
      $region26: #{deit_forward.5} parent=11 // pred_check_branch
        %349 = sbr.rel (%p347) target = $region28
      $region27: #{deit_forward.5} parent=11 // pred_region
        _
      $region28: #{deit_forward.5} parent=11 // pred_fallthru
        _
      // Predicated region
      $region29: #{deit_forward.5} parent=11 // pred_check
        %p350 = pneg %p150
      $region30: #{deit_forward.5} parent=11 // pred_check_branch
        %352 = sbr.rel (%p350) target = $region32
      $region31: #{deit_forward.5} parent=11 // pred_region
        _
      $region32: #{deit_forward.5} parent=11 // pred_fallthru
        _
      // Predicated region
      $region33: #{deit_forward.5} parent=11 // pred_check
        %p353 = pneg %p171
      $region34: #{deit_forward.5} parent=11 // pred_check_branch
        %355 = sbr.rel (%p353) target = $region36
      $region35: #{deit_forward.5} parent=11 // pred_region
        _
      $region36: #{deit_forward.5} parent=11 // pred_fallthru
        _
      // Predicated region
      $region37: #{deit_forward.5} parent=11 // pred_check
        %p356 = pneg %p192
      $region38: #{deit_forward.5} parent=11 // pred_check_branch
        %358 = sbr.rel (%p356) target = $region40
      $region39: #{deit_forward.5} parent=11 // pred_region
        _
      $region40: #{deit_forward.5} parent=11 // pred_fallthru
        _
      // Predicated region
      $region41: #{deit_forward.5} parent=11 // pred_check
        %p359 = pneg %p213
      $region42: #{deit_forward.5} parent=11 // pred_check_branch
        %361 = sbr.rel (%p359) target = $region44
      $region43: #{deit_forward.5} parent=11 // pred_region
        _
      $region44: #{deit_forward.5} parent=11 // pred_fallthru
        _
      // Predicated region
      $region45: #{deit_forward.5} parent=11 // pred_check
        %p362 = pneg %p234
      $region46: #{deit_forward.5} parent=11 // pred_check_branch
        %364 = sbr.rel (%p362) target = $region48
      $region47: #{deit_forward.5} parent=11 // pred_region
        _
      $region48: #{deit_forward.5} parent=11 // pred_fallthru
        _
      // Predicated region
      $region49: #{deit_forward.5} parent=11 // pred_check
        %p365 = pneg %p255
      $region50: #{deit_forward.5} parent=11 // pred_check_branch
        %367 = sbr.rel (%p365) target = $region52
      $region51: #{deit_forward.5} parent=11 // pred_region
        _
      $region52: #{deit_forward.5} parent=11 // pred_fallthru
        _
      // Predicated region
      $region53: #{deit_forward.5} parent=11 // pred_check
        %p368 = pneg %p276
      $region54: #{deit_forward.5} parent=11 // pred_check_branch
        %370 = sbr.rel (%p368) target = $region56
      $region55: #{deit_forward.5} parent=11 // pred_region
        _
      $region56: #{deit_forward.5} parent=11 // pred_fallthru
        _
      // Predicated region
      $region57: #{deit_forward.5} parent=11 // pred_check
        %p371 = pneg %p297
      $region58: #{deit_forward.5} parent=11 // pred_check_branch
        %373 = sbr.rel (%p371) target = $region60
      $region59: #{deit_forward.5} parent=11 // pred_region
        _
      $region60: #{deit_forward.5} parent=11 // pred_fallthru
        _
    $region12: #{deit_forward.5} parent=5 // pred_fallthru
      _
    %p374 = scmp.lt.s32.totalorder %s19, 2
    // Predicated region
    $region61: #{deit_forward.5} parent=5 // pred_check
      %p375 = pneg %p374
    $region62: #{deit_forward.5} parent=5 // pred_check_branch
      %377 = sbr.rel (%p375) target = $region64
    $region63: #{deit_forward.5} parent=5 // pred_region
      // Predicated region
      $region65: #{deit_forward.5} parent=63 // pred_check
        %p378 = pneg %p39
      $region66: #{deit_forward.5} parent=63 // pred_check_branch
        %380 = sbr.rel (%p378) target = $region68
      $region67: #{deit_forward.5} parent=63 // pred_region
        %p381 = scmp.lt.s32.totalorder %s19, 1
        %s382 = scalar_select %p381, %s19, 1
        %s383 = smul.addr %s382, 8
        %s384 = scalar_lea.vmem %s0, %s383
      $region68: #{deit_forward.5} parent=63 // pred_fallthru
        _
    $region64: #{deit_forward.5} parent=5 // pred_fallthru
      _
    %p385 = scmp.le.s32.totalorder 1, %s19
    %p386 = scmp.lt.s32.totalorder %s19, 3
    %p387 = pnand %p385, %p386
    %p388 = pneg %p387
    // Predicated region
    $region69: #{deit_forward.5} parent=5 // pred_check
      _
    $region70: #{deit_forward.5} parent=5 // pred_check_branch
      %390 = sbr.rel (%p387) target = $region72
    $region71: #{deit_forward.5} parent=5 // pred_region
      %s391 = ssub.s32 %s19, 1
      %p392 = scmp.lt.s32.totalorder %s24, 1
      %s393 = scalar_select %p392, %s24, 1
      %s394 = smul.addr %s393, 8
      %s395 = scalar_lea.vmem %s0, %s394
      %p396 = pneg %p45
      %p397 = pneg %p42
      %p398 = pneg %p66
      %p399 = pneg %p63
      %p400 = pneg %p87
      %p401 = pneg %p84
      %p402 = pneg %p108
      %p403 = pneg %p105
      %p404 = pneg %p129
      %p405 = pneg %p126
      %p406 = pneg %p150
      %p407 = pneg %p147
      %p408 = pneg %p171
      %p409 = pneg %p168
      %p410 = pneg %p192
      %p411 = pneg %p189
      %p412 = pneg %p213
      %p413 = pneg %p210
      %p414 = pneg %p234
      %p415 = pneg %p231
      %p416 = pneg %p255
      %p417 = pneg %p252
      %p418 = pneg %p276
      %p419 = pneg %p273
      %p420 = pneg %p297
      %p421 = pneg %p294
      %p422 = pneg %p323
      %p423 = pneg %p320
      %p424 = scmp.lt.s32.totalorder %s24, 1
      %s425 = scalar_select %p424, %s24, 1
      %s426 = smul.addr %s425, 8
      %s427 = scalar_lea.vmem %s13, %s426
      %p428 = scmp.lt.s32.totalorder %s24, 1
      %s429 = scalar_select %p428, %s24, 1
      %s430 = smul.addr %s429, 8
      %s431 = scalar_lea.vmem %s0, %s430
      %p432 = scmp.lt.s32.totalorder %s24, 1
      %s433 = scalar_select %p432, %s24, 1
      %s434 = smul.addr %s433, 8
      %s435 = scalar_lea.vmem %s13, %s434
      %v437 = vld [vmem:[%s431] sm:$0xff]
      %v438 = vld [vmem:[%s1] sm:$0x1]
      %v439 = vld [vmem:[%s2] sm:$0x1]
      %440 = vadd.xlane.f32.xlu0 %v437
      %v441 = vpop.xlane.xlu0 %440
      %v442 = vrcp.pop 128.0
      %v443 = vmul.f32 %v441, %v442
      %v444 = vsub.f32 %v437, %v443
      %v445 = vmul.f32 %v444, %v444
      %446 = vadd.xlane.f32.xlu0 %v445
      %v447 = vpop.xlane.xlu0 %446
      %v448 = vmul.f32 %v447, %v442
      %v449 = vadd.f32 %v448, 1e-06
      %v450 = vrsqrt.pop %v449
      %v451 = vmul.f32 %v444, %v450
      %v453 = vlaneseq
      %v454 = vshrl.u32 %v453, 7
      %v455 = vsub.s32 0, %v454
      %v456 = vrot.slane %v438, %v455
      %v458 = vmul.f32 %v451, %v456
      %v460 = vlaneseq
      %v461 = vshrl.u32 %v460, 7
      %v462 = vsub.s32 0, %v461
      %v463 = vrot.slane %v439, %v462
      %v465 = vadd.f32 %v458, %v463
      %v466 = vpack.c.bf16 %v465, %v465
      %v467 = vld [vmem:[%s3] sm:$0xff]
      %v468 = vld [vmem:[%s3 + $0x8] sm:$0xf]
      %v469 = vld [vmem:[%s3 + $0xc] sm:$0xff]
      %v470 = vld [vmem:[%s3 + $0x14] sm:$0xf]
      %v471 = vld [vmem:[%s3 + $0x18] sm:$0xff]
      %v472 = vld [vmem:[%s3 + $0x20] sm:$0xf]
      %v473 = vld [vmem:[%s3 + $0x24] sm:$0xff]
      %v474 = vld [vmem:[%s3 + $0x2c] sm:$0xf]
      %v475 = vld [vmem:[%s3 + $0x30] sm:$0xff]
      %v476 = vld [vmem:[%s3 + $0x38] sm:$0xf]
      %v477 = vld [vmem:[%s3 + $0x3c] sm:$0xff]
      %v478 = vld [vmem:[%s3 + $0x44] sm:$0xf]
      %v479 = vld [vmem:[%s3 + $0x48] sm:$0xff]
      %v480 = vld [vmem:[%s3 + $0x50] sm:$0xf]
      %v481 = vld [vmem:[%s3 + $0x54] sm:$0xff]
      %v482 = vld [vmem:[%s3 + $0x5c] sm:$0xf]
      %v483 = vld [vmem:[%s3 + $0x60] sm:$0xff]
      %v484 = vld [vmem:[%s3 + $0x68] sm:$0xf]
      %v485 = vld [vmem:[%s3 + $0x6c] sm:$0xff]
      %v486 = vld [vmem:[%s3 + $0x74] sm:$0xf]
      %v487 = vld [vmem:[%s3 + $0x78] sm:$0xff]
      %v488 = vld [vmem:[%s3 + $0x80] sm:$0xf]
      %v489 = vld [vmem:[%s3 + $0x84] sm:$0xff]
      %v490 = vld [vmem:[%s3 + $0x8c] sm:$0xf]
      %v491 = vld [vmem:[%s3 + $0x90] sm:$0xff]
      %v492 = vld [vmem:[%s3 + $0x98] sm:$0xf]
      %v493 = vld [vmem:[%s3 + $0x9c] sm:$0xff]
      %v494 = vld [vmem:[%s3 + $0xa4] sm:$0xf]
      %v495 = vld [vmem:[%s3 + $0xa8] sm:$0xff]
      %v496 = vld [vmem:[%s3 + $0xb0] sm:$0xf]
      %v497 = vld [vmem:[%s3 + $0xb4] sm:$0xff]
      %v498 = vld [vmem:[%s3 + $0xbc] sm:$0xf]
      %v499 = vld [vmem:[%s4] sm:$0x7]
      %v501 = vlaneseq
      %v502 = vshrl.u32 %v501, 7
      %v503 = vsub.s32 0, %v502
      %v504 = vrot.slane %v499, %v503
      %v505 = vlaneseq
      %v506 = vshrl.u32 %v505, 7
      %v507 = vsub.s32 1, %v506
      %v508 = vrot.slane %v499, %v507
      %v509 = vlaneseq
      %v510 = vshrl.u32 %v509, 7
      %v511 = vsub.s32 2, %v510
      %v512 = vrot.slane %v499, %v511
      %v548 = vunpack.c.l.b16 %v467
      %v549 = vunpack.c.h.b16 %v467
      %v550 = vunpack.c.l.b16 %v468
      %v551 = vunpack.c.l.b16 %v469
      %v552 = vunpack.c.h.b16 %v469
      %v553 = vunpack.c.l.b16 %v470
      %v554 = vunpack.c.l.b16 %v471
      %v555 = vunpack.c.h.b16 %v471
      %v556 = vunpack.c.l.b16 %v472
      %v557 = vunpack.c.l.b16 %v473
      %v558 = vunpack.c.h.b16 %v473
      %v559 = vunpack.c.l.b16 %v474
      %v560 = vunpack.c.l.b16 %v475
      %v561 = vunpack.c.h.b16 %v475
      %v562 = vunpack.c.l.b16 %v476
      %v563 = vunpack.c.l.b16 %v477
      %v564 = vunpack.c.h.b16 %v477
      %v565 = vunpack.c.l.b16 %v478
      %v566 = vunpack.c.l.b16 %v479
      %v567 = vunpack.c.h.b16 %v479
      %v568 = vunpack.c.l.b16 %v480
      %v569 = vunpack.c.l.b16 %v481
      %v570 = vunpack.c.h.b16 %v481
      %v571 = vunpack.c.l.b16 %v482
      %v572 = vunpack.c.l.b16 %v483
      %v573 = vunpack.c.h.b16 %v483
      %v574 = vunpack.c.l.b16 %v484
      %v575 = vunpack.c.l.b16 %v485
      %v576 = vunpack.c.h.b16 %v485
      %v577 = vunpack.c.l.b16 %v486
      %v578 = vunpack.c.l.b16 %v487
      %v579 = vunpack.c.h.b16 %v487
      %v580 = vunpack.c.l.b16 %v488
      %v581 = vunpack.c.l.b16 %v489
      %v582 = vunpack.c.h.b16 %v489
      %v583 = vunpack.c.l.b16 %v490
      %v584 = vunpack.c.l.b16 %v491
      %v585 = vunpack.c.h.b16 %v491
      %v586 = vunpack.c.l.b16 %v492
      %v587 = vunpack.c.l.b16 %v493
      %v588 = vunpack.c.h.b16 %v493
      %v589 = vunpack.c.l.b16 %v494
      %v590 = vunpack.c.l.b16 %v495
      %v591 = vunpack.c.h.b16 %v495
      %v592 = vunpack.c.l.b16 %v496
      %v593 = vunpack.c.l.b16 %v497
      %v594 = vunpack.c.h.b16 %v497
      %v595 = vunpack.c.l.b16 %v498
      %v596 = vpack.c.b16 %v551, %v548
      %v597 = vpack.c.b16 %v552, %v549
      %v598 = vpack.c.b16 %v553, %v550
      %v599 = vpack.c.b16 %v557, %v554
      %v600 = vpack.c.b16 %v558, %v555
      %v601 = vpack.c.b16 %v559, %v556
      %v602 = vpack.c.b16 %v563, %v560
      %v603 = vpack.c.b16 %v564, %v561
      %v604 = vpack.c.b16 %v565, %v562
      %v605 = vpack.c.b16 %v569, %v566
      %v606 = vpack.c.b16 %v570, %v567
      %v607 = vpack.c.b16 %v571, %v568
      %v608 = vpack.c.b16 %v575, %v572
      %v609 = vpack.c.b16 %v576, %v573
      %v610 = vpack.c.b16 %v577, %v574
      %v611 = vpack.c.b16 %v581, %v578
      %v612 = vpack.c.b16 %v582, %v579
      %v613 = vpack.c.b16 %v583, %v580
      %v614 = vpack.c.b16 %v587, %v584
      %v615 = vpack.c.b16 %v588, %v585
      %v616 = vpack.c.b16 %v589, %v586
      %v617 = vpack.c.b16 %v593, %v590
      %v618 = vpack.c.b16 %v594, %v591
      %v619 = vpack.c.b16 %v595, %v592
      %644 = vmatprep.subr.bf16.mxu0 %v618
      %645 = vmatpush1.bf16.msra.mxu0 %v617
      %646 = vmatprep.subr.bf16.mxu0 %v615
      %647 = vmatpush1.bf16.msra.mxu0 %v614
      %648 = vmatprep.subr.bf16.mxu0 %v612
      %649 = vmatpush1.bf16.msra.mxu0 %v611
      %650 = vmatprep.subr.bf16.mxu0 %v609
      %651 = vmatpush1.bf16.msra.mxu0 %v608
      %652 = vmatprep.subr.bf16.mxu0 %v606
      %653 = vmatpush1.bf16.msra.mxu0 %v605
      %654 = vmatprep.subr.bf16.mxu0 %v603
      %655 = vmatpush1.bf16.msra.mxu0 %v602
      %656 = vmatprep.subr.bf16.mxu0 %v600
      %657 = vmatpush1.bf16.msra.mxu0 %v599
      %658 = vmatprep.subr.bf16.mxu0 %v597
      %659 = vmatpush1.bf16.msra.mxu0 %v596
      %660 = vmatprep.subr.bf16.mxu0 0
      %661 = vmatpush2.bf16.msra.mxu0 0
      %662 = vmatprep.subr.bf16.mxu0 0
      %663 = vmatpush2.bf16.msra.mxu0 0
      %664 = vmatprep.subr.bf16.mxu0 0
      %665 = vmatpush2.bf16.msra.mxu0 0
      %666 = vmatprep.subr.bf16.mxu0 0
      %667 = vmatpush2.bf16.msra.mxu0 0
      %668 = vmatprep.subr.bf16.mxu0 0
      %669 = vmatpush2.bf16.msra.mxu0 0
      %670 = vmatprep.subr.bf16.mxu0 0
      %671 = vmatpush2.bf16.msra.mxu0 0
      %672 = vmatprep.subr.bf16.mxu0 0
      %673 = vmatpush2.bf16.msra.mxu0 0
      %674 = vmatprep.subr.bf16.mxu0 0
      %675 = vmatpush2.bf16.msra.mxu0 0
      %676 = vmatprep.mubr.bf16.mxu0 0
      %677 = vmatmul.mubr.bf16.gmra.mxu0 %v466
      %v678 = vpop.f32.mrf.mxu0
      %v679 = vadd.f32 %v504, %v678
      %v680 = vpop.f32.mrf.mxu0
      %v681 = vadd.f32 %v508, %v680
      %v682 = vpop.f32.mrf.mxu0
      %v683 = vpop.f32.mrf.mxu0
      %684 = vdwg.mxu0
      %685 = vmatprep.subr.bf16.mxu0 0
      %686 = vmatpush1.bf16.msra.mxu0 %v619
      %687 = vmatprep.subr.bf16.mxu0 0
      %688 = vmatpush1.bf16.msra.mxu0 %v616
      %689 = vmatprep.subr.bf16.mxu0 0
      %690 = vmatpush1.bf16.msra.mxu0 %v613
      %691 = vmatprep.subr.bf16.mxu0 0
      %692 = vmatpush1.bf16.msra.mxu0 %v610
      %693 = vmatprep.subr.bf16.mxu0 0
      %694 = vmatpush1.bf16.msra.mxu0 %v607
      %695 = vmatprep.subr.bf16.mxu0 0
      %696 = vmatpush1.bf16.msra.mxu0 %v604
      %697 = vmatprep.subr.bf16.mxu0 0
      %698 = vmatpush1.bf16.msra.mxu0 %v601
      %699 = vmatprep.subr.bf16.mxu0 0
      %700 = vmatpush1.bf16.msra.mxu0 %v598
      %701 = vmatprep.subr.bf16.mxu0 0
      %702 = vmatpush2.bf16.msra.mxu0 0
      %703 = vmatprep.subr.bf16.mxu0 0
      %704 = vmatpush2.bf16.msra.mxu0 0
      %705 = vmatprep.subr.bf16.mxu0 0
      %706 = vmatpush2.bf16.msra.mxu0 0
      %707 = vmatprep.subr.bf16.mxu0 0
      %708 = vmatpush2.bf16.msra.mxu0 0
      %709 = vmatprep.subr.bf16.mxu0 0
      %710 = vmatpush2.bf16.msra.mxu0 0
      %711 = vmatprep.subr.bf16.mxu0 0
      %712 = vmatpush2.bf16.msra.mxu0 0
      %713 = vmatprep.subr.bf16.mxu0 0
      %714 = vmatpush2.bf16.msra.mxu0 0
      %715 = vmatprep.subr.bf16.mxu0 0
      %716 = vmatpush2.bf16.msra.mxu0 0
      %717 = vmatprep.mubr.bf16.mxu0 0
      %718 = vmatmul.mubr.bf16.gmra.mxu0 %v466
      %v719 = vpop.f32.mrf.mxu0
      %v720 = vadd.f32 %v512, %v719
      %v721 = vpop.f32.mrf.mxu0
      %v722 = vpop.f32.mrf.mxu0
      %v723 = vpop.f32.mrf.mxu0
      %724 = vdwg.mxu0
      %v725 = vlaneseq
      %v726 = vand.u32 %v725, 127
      %vm727 = vcmp.lt.s32.totalorder %v726, 5
      %v728 = vld [vmem:[%s5] sm:$0xf]
      %v729 = vld [vmem:[%s5 + $0x4] sm:$0xf]
      %v730 = vld [vmem:[%s5 + $0x8] sm:$0xf]
      %v731 = vld [vmem:[%s5 + $0xc] sm:$0xf]
      %v732 = vld [vmem:[%s5 + $0x10] sm:$0xf]
      %v733 = vld [vmem:[%s5 + $0x14] sm:$0xf]
      %v734 = vld [vmem:[%s5 + $0x18] sm:$0xf]
      %v735 = vld [vmem:[%s5 + $0x1c] sm:$0xf]
      %v736 = vld [vmem:[%s5 + $0x20] sm:$0xf]
      %v737 = vld [vmem:[%s5 + $0x24] sm:$0xf]
      %v738 = vld [vmem:[%s5 + $0x28] sm:$0xf]
      %v739 = vld [vmem:[%s5 + $0x2c] sm:$0xf]
      %v740 = vld [vmem:[%s5 + $0x30] sm:$0xf]
      %v741 = vld [vmem:[%s5 + $0x34] sm:$0xf]
      %v742 = vld [vmem:[%s5 + $0x38] sm:$0xf]
      %v743 = vld [vmem:[%s5 + $0x3c] sm:$0xf]
      %v744 = vpack.c.bf16 %v679, %v679
      %v745 = vpack.c.bf16 %v681, %v681
      %v746 = vpack.c.bf16 %v720, %v720
      %vm747 = vcmask 261120
      %v749 = vsel %vm747, %v744, 0
      %v752 = vsel %vm747, %v745, 0
      %754 = vmatprep.subr.bf16.mxu0 0
      %755 = vmatpush1.bf16.xpose.msra.mxu0 0
      %756 = vmatprep.subr.bf16.mxu0 0
      %757 = vmatpush1.bf16.xpose.msra.mxu0 0
      %758 = vmatprep.subr.bf16.mxu0 0
      %759 = vmatpush1.bf16.xpose.msra.mxu0 0
      %760 = vmatprep.subr.bf16.mxu0 0
      %761 = vmatpush1.bf16.xpose.msra.mxu0 0
      %762 = vmatprep.subr.bf16.mxu0 0
      %763 = vmatpush1.bf16.xpose.msra.mxu0 0
      %764 = vmatprep.subr.bf16.mxu0 0
      %765 = vmatpush1.bf16.xpose.msra.mxu0 0
      %766 = vmatprep.subr.bf16.mxu0 0
      %767 = vmatpush1.bf16.xpose.msra.mxu0 0
      %768 = vmatprep.subr.bf16.mxu0 0
      %769 = vmatpush1.bf16.xpose.msra.mxu0 %v752
      %770 = vmatprep.subr.bf16.mxu0 0
      %771 = vmatpush2.bf16.xpose.msra.mxu0 0
      %772 = vmatprep.subr.bf16.mxu0 0
      %773 = vmatpush2.bf16.xpose.msra.mxu0 0
      %774 = vmatprep.subr.bf16.mxu0 0
      %775 = vmatpush2.bf16.xpose.msra.mxu0 0
      %776 = vmatprep.subr.bf16.mxu0 0
      %777 = vmatpush2.bf16.xpose.msra.mxu0 0
      %778 = vmatprep.subr.bf16.mxu0 0
      %779 = vmatpush2.bf16.xpose.msra.mxu0 0
      %780 = vmatprep.subr.bf16.mxu0 0
      %781 = vmatpush2.bf16.xpose.msra.mxu0 0
      %782 = vmatprep.subr.bf16.mxu0 0
      %783 = vmatpush2.bf16.xpose.msra.mxu0 0
      %784 = vmatprep.subr.bf16.mxu0 0
      %785 = vmatpush2.bf16.xpose.msra.mxu0 0
      %786 = vmatprep.mubr.bf16.mxu0 0
      %787 = vmatmul.mubr.bf16.gmra.mxu0 %v749
      %v788 = vpop.f32.mrf.mxu0
      %v789 = vadd.f32 0.0, %v788
      %v790 = vpop.f32.mrf.mxu0
      %v791 = vpop.f32.mrf.mxu0
      %v792 = vpop.f32.mrf.mxu0
      %793 = vdwg.mxu0
      %v794 = vmul.f32 %v789, 0.17677669
      %v795 = vsel %vm727, %v794, -1e+30
      %vm796 = vcmask 64512
      %v797 = vsel %vm796, %v795, -inf
      %798 = vmax.xlane.f32.xlu0 %v797
      %v799 = vpop.xlane.xlu0 %798
      %v800 = vsub.f32 %v795, %v799
      %v801 = vmul.f32 %v800, 1.442695
      %v802 = vpow.pop %v801
      %v803 = vsel %vm796, %v802, 0.0
      %804 = vadd.xlane.f32.xlu0 %v803
      %v805 = vpop.xlane.xlu0 %804
      %v806 = vrcp.pop %v805
      %v807 = vmul.f32 %v802, %v806
      %v808 = vpack.c.bf16 %v807, %v807
      %v810 = vsel %vm796, %v808, 0
      %vm812 = vcmask 1043456
      %v814 = vsel %vm812, %v746, 0
      %816 = vmatprep.subr.bf16.mxu0 0
      %817 = vmatpush1.bf16.msra.mxu0 0
      %818 = vmatprep.subr.bf16.mxu0 0
      %819 = vmatpush1.bf16.msra.mxu0 0
      %820 = vmatprep.subr.bf16.mxu0 0
      %821 = vmatpush1.bf16.msra.mxu0 0
      %822 = vmatprep.subr.bf16.mxu0 0
      %823 = vmatpush1.bf16.msra.mxu0 0
      %824 = vmatprep.subr.bf16.mxu0 0
      %825 = vmatpush1.bf16.msra.mxu0 0
      %826 = vmatprep.subr.bf16.mxu0 0
      %827 = vmatpush1.bf16.msra.mxu0 0
      %828 = vmatprep.subr.bf16.mxu0 0
      %829 = vmatpush1.bf16.msra.mxu0 0
      %830 = vmatprep.subr.bf16.mxu0 0
      %831 = vmatpush1.bf16.msra.mxu0 %v814
      %832 = vmatprep.subr.bf16.mxu0 0
      %833 = vmatpush2.bf16.msra.mxu0 0
      %834 = vmatprep.subr.bf16.mxu0 0
      %835 = vmatpush2.bf16.msra.mxu0 0
      %836 = vmatprep.subr.bf16.mxu0 0
      %837 = vmatpush2.bf16.msra.mxu0 0
      %838 = vmatprep.subr.bf16.mxu0 0
      %839 = vmatpush2.bf16.msra.mxu0 0
      %840 = vmatprep.subr.bf16.mxu0 0
      %841 = vmatpush2.bf16.msra.mxu0 0
      %842 = vmatprep.subr.bf16.mxu0 0
      %843 = vmatpush2.bf16.msra.mxu0 0
      %844 = vmatprep.subr.bf16.mxu0 0
      %845 = vmatpush2.bf16.msra.mxu0 0
      %846 = vmatprep.subr.bf16.mxu0 0
      %847 = vmatpush2.bf16.msra.mxu0 0
      %848 = vmatprep.mubr.bf16.mxu0 0
      %849 = vmatmul.mubr.bf16.gmra.mxu0 %v810
      %v850 = vpop.f32.mrf.mxu0
      %v851 = vadd.f32 0.0, %v850
      %v852 = vpop.f32.mrf.mxu0
      %v853 = vpop.f32.mrf.mxu0
      %v854 = vpop.f32.mrf.mxu0
      %855 = vdwg.mxu0
      %v856 = vpack.c.bf16 %v851, %v851
      %858 = vrot.lane.b32.xlu0 %v744, 96
      %v859 = vpop.permute.xlu0 %858
      %861 = vrot.lane.b32.xlu0 %v745, 96
      %v862 = vpop.permute.xlu0 %861
      %v864 = vsel %vm747, %v859, 0
      %v867 = vsel %vm747, %v862, 0
      %869 = vmatprep.subr.bf16.mxu0 0
      %870 = vmatpush1.bf16.xpose.msra.mxu0 0
      %871 = vmatprep.subr.bf16.mxu0 0
      %872 = vmatpush1.bf16.xpose.msra.mxu0 0
      %873 = vmatprep.subr.bf16.mxu0 0
      %874 = vmatpush1.bf16.xpose.msra.mxu0 0
      %875 = vmatprep.subr.bf16.mxu0 0
      %876 = vmatpush1.bf16.xpose.msra.mxu0 0
      %877 = vmatprep.subr.bf16.mxu0 0
      %878 = vmatpush1.bf16.xpose.msra.mxu0 0
      %879 = vmatprep.subr.bf16.mxu0 0
      %880 = vmatpush1.bf16.xpose.msra.mxu0 0
      %881 = vmatprep.subr.bf16.mxu0 0
      %882 = vmatpush1.bf16.xpose.msra.mxu0 0
      %883 = vmatprep.subr.bf16.mxu0 0
      %884 = vmatpush1.bf16.xpose.msra.mxu0 %v867
      %885 = vmatprep.subr.bf16.mxu0 0
      %886 = vmatpush2.bf16.xpose.msra.mxu0 0
      %887 = vmatprep.subr.bf16.mxu0 0
      %888 = vmatpush2.bf16.xpose.msra.mxu0 0
      %889 = vmatprep.subr.bf16.mxu0 0
      %890 = vmatpush2.bf16.xpose.msra.mxu0 0
      %891 = vmatprep.subr.bf16.mxu0 0
      %892 = vmatpush2.bf16.xpose.msra.mxu0 0
      %893 = vmatprep.subr.bf16.mxu0 0
      %894 = vmatpush2.bf16.xpose.msra.mxu0 0
      %895 = vmatprep.subr.bf16.mxu0 0
      %896 = vmatpush2.bf16.xpose.msra.mxu0 0
      %897 = vmatprep.subr.bf16.mxu0 0
      %898 = vmatpush2.bf16.xpose.msra.mxu0 0
      %899 = vmatprep.subr.bf16.mxu0 0
      %900 = vmatpush2.bf16.xpose.msra.mxu0 0
      %901 = vmatprep.mubr.bf16.mxu0 0
      %902 = vmatmul.mubr.bf16.gmra.mxu0 %v864
      %v903 = vpop.f32.mrf.mxu0
      %v904 = vadd.f32 0.0, %v903
      %v905 = vpop.f32.mrf.mxu0
      %v906 = vpop.f32.mrf.mxu0
      %v907 = vpop.f32.mrf.mxu0
      %908 = vdwg.mxu0
      %v909 = vmul.f32 %v904, 0.17677669
      %v910 = vsel %vm727, %v909, -1e+30
      %v911 = vsel %vm796, %v910, -inf
      %912 = vmax.xlane.f32.xlu0 %v911
      %v913 = vpop.xlane.xlu0 %912
      %v914 = vsub.f32 %v910, %v913
      %v915 = vmul.f32 %v914, 1.442695
      %v916 = vpow.pop %v915
      %v917 = vsel %vm796, %v916, 0.0
      %918 = vadd.xlane.f32.xlu0 %v917
      %v919 = vpop.xlane.xlu0 %918
      %v920 = vrcp.pop %v919
      %v921 = vmul.f32 %v916, %v920
      %v922 = vpack.c.bf16 %v921, %v921
      %924 = vrot.lane.b32.xlu0 %v746, 96
      %v925 = vpop.permute.xlu0 %924
      %v927 = vsel %vm796, %v922, 0
      %v930 = vsel %vm812, %v925, 0
      %932 = vmatprep.subr.bf16.mxu0 0
      %933 = vmatpush1.bf16.msra.mxu0 0
      %934 = vmatprep.subr.bf16.mxu0 0
      %935 = vmatpush1.bf16.msra.mxu0 0
      %936 = vmatprep.subr.bf16.mxu0 0
      %937 = vmatpush1.bf16.msra.mxu0 0
      %938 = vmatprep.subr.bf16.mxu0 0
      %939 = vmatpush1.bf16.msra.mxu0 0
      %940 = vmatprep.subr.bf16.mxu0 0
      %941 = vmatpush1.bf16.msra.mxu0 0
      %942 = vmatprep.subr.bf16.mxu0 0
      %943 = vmatpush1.bf16.msra.mxu0 0
      %944 = vmatprep.subr.bf16.mxu0 0
      %945 = vmatpush1.bf16.msra.mxu0 0
      %946 = vmatprep.subr.bf16.mxu0 0
      %947 = vmatpush1.bf16.msra.mxu0 %v930
      %948 = vmatprep.subr.bf16.mxu0 0
      %949 = vmatpush2.bf16.msra.mxu0 0
      %950 = vmatprep.subr.bf16.mxu0 0
      %951 = vmatpush2.bf16.msra.mxu0 0
      %952 = vmatprep.subr.bf16.mxu0 0
      %953 = vmatpush2.bf16.msra.mxu0 0
      %954 = vmatprep.subr.bf16.mxu0 0
      %955 = vmatpush2.bf16.msra.mxu0 0
      %956 = vmatprep.subr.bf16.mxu0 0
      %957 = vmatpush2.bf16.msra.mxu0 0
      %958 = vmatprep.subr.bf16.mxu0 0
      %959 = vmatpush2.bf16.msra.mxu0 0
      %960 = vmatprep.subr.bf16.mxu0 0
      %961 = vmatpush2.bf16.msra.mxu0 0
      %962 = vmatprep.subr.bf16.mxu0 0
      %963 = vmatpush2.bf16.msra.mxu0 0
      %964 = vmatprep.mubr.bf16.mxu0 0
      %965 = vmatmul.mubr.bf16.gmra.mxu0 %v927
      %v966 = vpop.f32.mrf.mxu0
      %v967 = vadd.f32 0.0, %v966
      %v968 = vpop.f32.mrf.mxu0
      %v969 = vpop.f32.mrf.mxu0
      %v970 = vpop.f32.mrf.mxu0
      %971 = vdwg.mxu0
      %v972 = vpack.c.bf16 %v967, %v967
      %v977 = vunpack.c.l.b16 %v732
      %v978 = vunpack.c.l.b16 %v733
      %v979 = vunpack.c.l.b16 %v734
      %v980 = vunpack.c.l.b16 %v735
      %v981 = vpack.c.b16 %v978, %v977
      %v982 = vpack.c.b16 %v980, %v979
      %v986 = vsel %vm747, %v972, 0
      %988 = vmatprep.subr.bf16.mxu0 0
      %989 = vmatpush1.bf16.msra.mxu0 0
      %990 = vmatprep.subr.bf16.mxu0 0
      %991 = vmatpush1.bf16.msra.mxu0 0
      %992 = vmatprep.subr.bf16.mxu0 0
      %993 = vmatpush1.bf16.msra.mxu0 0
      %994 = vmatprep.subr.bf16.mxu0 0
      %995 = vmatpush1.bf16.msra.mxu0 0
      %996 = vmatprep.subr.bf16.mxu0 0
      %997 = vmatpush1.bf16.msra.mxu0 0
      %998 = vmatprep.subr.bf16.mxu0 0
      %999 = vmatpush1.bf16.msra.mxu0 0
      %1000 = vmatprep.subr.bf16.mxu0 0
      %1001 = vmatpush1.bf16.msra.mxu0 %v982
      %1002 = vmatprep.subr.bf16.mxu0 0
      %1003 = vmatpush1.bf16.msra.mxu0 %v981
      %1004 = vmatprep.subr.bf16.mxu0 0
      %1005 = vmatpush2.bf16.msra.mxu0 0
      %1006 = vmatprep.subr.bf16.mxu0 0
      %1007 = vmatpush2.bf16.msra.mxu0 0
      %1008 = vmatprep.subr.bf16.mxu0 0
      %1009 = vmatpush2.bf16.msra.mxu0 0
      %1010 = vmatprep.subr.bf16.mxu0 0
      %1011 = vmatpush2.bf16.msra.mxu0 0
      %1012 = vmatprep.subr.bf16.mxu0 0
      %1013 = vmatpush2.bf16.msra.mxu0 0
      %1014 = vmatprep.subr.bf16.mxu0 0
      %1015 = vmatpush2.bf16.msra.mxu0 0
      %1016 = vmatprep.subr.bf16.mxu0 0
      %1017 = vmatpush2.bf16.msra.mxu0 0
      %1018 = vmatprep.subr.bf16.mxu0 0
      %1019 = vmatpush2.bf16.msra.mxu0 0
      %1020 = vmatprep.mubr.bf16.mxu0 0
      %1021 = vmatmul.mubr.bf16.gmra.mxu0 %v986
      %v1022 = vpop.f32.mrf.mxu0
      %v1023 = vadd.f32 0.0, %v1022
      %v1024 = vpop.f32.mrf.mxu0
      %v1025 = vpop.f32.mrf.mxu0
      %v1026 = vpop.f32.mrf.mxu0
      %1027 = vdwg.mxu0
      %v1032 = vunpack.c.l.b16 %v728
      %v1033 = vunpack.c.l.b16 %v729
      %v1034 = vunpack.c.l.b16 %v730
      %v1035 = vunpack.c.l.b16 %v731
      %v1036 = vpack.c.b16 %v1033, %v1032
      %v1037 = vpack.c.b16 %v1035, %v1034
      %v1041 = vsel %vm747, %v856, 0
      %1043 = vmatprep.subr.bf16.mxu0 0
      %1044 = vmatpush1.bf16.msra.mxu0 0
      %1045 = vmatprep.subr.bf16.mxu0 0
      %1046 = vmatpush1.bf16.msra.mxu0 0
      %1047 = vmatprep.subr.bf16.mxu0 0
      %1048 = vmatpush1.bf16.msra.mxu0 0
      %1049 = vmatprep.subr.bf16.mxu0 0
      %1050 = vmatpush1.bf16.msra.mxu0 0
      %1051 = vmatprep.subr.bf16.mxu0 0
      %1052 = vmatpush1.bf16.msra.mxu0 0
      %1053 = vmatprep.subr.bf16.mxu0 0
      %1054 = vmatpush1.bf16.msra.mxu0 0
      %1055 = vmatprep.subr.bf16.mxu0 0
      %1056 = vmatpush1.bf16.msra.mxu0 %v1037
      %1057 = vmatprep.subr.bf16.mxu0 0
      %1058 = vmatpush1.bf16.msra.mxu0 %v1036
      %1059 = vmatprep.subr.bf16.mxu0 0
      %1060 = vmatpush2.bf16.msra.mxu0 0
      %1061 = vmatprep.subr.bf16.mxu0 0
      %1062 = vmatpush2.bf16.msra.mxu0 0
      %1063 = vmatprep.subr.bf16.mxu0 0
      %1064 = vmatpush2.bf16.msra.mxu0 0
      %1065 = vmatprep.subr.bf16.mxu0 0
      %1066 = vmatpush2.bf16.msra.mxu0 0
      %1067 = vmatprep.subr.bf16.mxu0 0
      %1068 = vmatpush2.bf16.msra.mxu0 0
      %1069 = vmatprep.subr.bf16.mxu0 0
      %1070 = vmatpush2.bf16.msra.mxu0 0
      %1071 = vmatprep.subr.bf16.mxu0 0
      %1072 = vmatpush2.bf16.msra.mxu0 0
      %1073 = vmatprep.subr.bf16.mxu0 0
      %1074 = vmatpush2.bf16.msra.mxu0 0
      %1075 = vmatprep.mubr.bf16.mxu0 0
      %1076 = vmatmul.mubr.bf16.gmra.mxu0 %v1041
      %v1077 = vpop.f32.mrf.mxu0
      %v1078 = vadd.f32 %v1023, %v1077
      %v1079 = vpop.f32.mrf.mxu0
      %v1080 = vpop.f32.mrf.mxu0
      %v1081 = vpop.f32.mrf.mxu0
      %1082 = vdwg.mxu0
      %1083 = vrot.lane.b32.xlu0 %v744, 64
      %v1084 = vpop.permute.xlu0 %1083
      %1085 = vrot.lane.b32.xlu0 %v745, 64
      %v1086 = vpop.permute.xlu0 %1085
      %v1088 = vsel %vm747, %v1084, 0
      %v1091 = vsel %vm747, %v1086, 0
      %1093 = vmatprep.subr.bf16.mxu0 0
      %1094 = vmatpush1.bf16.xpose.msra.mxu0 0
      %1095 = vmatprep.subr.bf16.mxu0 0
      %1096 = vmatpush1.bf16.xpose.msra.mxu0 0
      %1097 = vmatprep.subr.bf16.mxu0 0
      %1098 = vmatpush1.bf16.xpose.msra.mxu0 0
      %1099 = vmatprep.subr.bf16.mxu0 0
      %1100 = vmatpush1.bf16.xpose.msra.mxu0 0
      %1101 = vmatprep.subr.bf16.mxu0 0
      %1102 = vmatpush1.bf16.xpose.msra.mxu0 0
      %1103 = vmatprep.subr.bf16.mxu0 0
      %1104 = vmatpush1.bf16.xpose.msra.mxu0 0
      %1105 = vmatprep.subr.bf16.mxu0 0
      %1106 = vmatpush1.bf16.xpose.msra.mxu0 0
      %1107 = vmatprep.subr.bf16.mxu0 0
      %1108 = vmatpush1.bf16.xpose.msra.mxu0 %v1091
      %1109 = vmatprep.subr.bf16.mxu0 0
      %1110 = vmatpush2.bf16.xpose.msra.mxu0 0
      %1111 = vmatprep.subr.bf16.mxu0 0
      %1112 = vmatpush2.bf16.xpose.msra.mxu0 0
      %1113 = vmatprep.subr.bf16.mxu0 0
      %1114 = vmatpush2.bf16.xpose.msra.mxu0 0
      %1115 = vmatprep.subr.bf16.mxu0 0
      %1116 = vmatpush2.bf16.xpose.msra.mxu0 0
      %1117 = vmatprep.subr.bf16.mxu0 0
      %1118 = vmatpush2.bf16.xpose.msra.mxu0 0
      %1119 = vmatprep.subr.bf16.mxu0 0
      %1120 = vmatpush2.bf16.xpose.msra.mxu0 0
      %1121 = vmatprep.subr.bf16.mxu0 0
      %1122 = vmatpush2.bf16.xpose.msra.mxu0 0
      %1123 = vmatprep.subr.bf16.mxu0 0
      %1124 = vmatpush2.bf16.xpose.msra.mxu0 0
      %1125 = vmatprep.mubr.bf16.mxu0 0
      %1126 = vmatmul.mubr.bf16.gmra.mxu0 %v1088
      %v1127 = vpop.f32.mrf.mxu0
      %v1128 = vadd.f32 0.0, %v1127
      %v1129 = vpop.f32.mrf.mxu0
      %v1130 = vpop.f32.mrf.mxu0
      %v1131 = vpop.f32.mrf.mxu0
      %1132 = vdwg.mxu0
      %v1133 = vmul.f32 %v1128, 0.17677669
      %v1134 = vsel %vm727, %v1133, -1e+30
      %v1135 = vsel %vm796, %v1134, -inf
      %1136 = vmax.xlane.f32.xlu0 %v1135
      %v1137 = vpop.xlane.xlu0 %1136
      %v1138 = vsub.f32 %v1134, %v1137
      %v1139 = vmul.f32 %v1138, 1.442695
      %v1140 = vpow.pop %v1139
      %v1141 = vsel %vm796, %v1140, 0.0
      %1142 = vadd.xlane.f32.xlu0 %v1141
      %v1143 = vpop.xlane.xlu0 %1142
      %v1144 = vrcp.pop %v1143
      %v1145 = vmul.f32 %v1140, %v1144
      %v1146 = vpack.c.bf16 %v1145, %v1145
      %1147 = vrot.lane.b32.xlu0 %v746, 64
      %v1148 = vpop.permute.xlu0 %1147
      %v1150 = vsel %vm796, %v1146, 0
      %v1153 = vsel %vm812, %v1148, 0
      %1155 = vmatprep.subr.bf16.mxu0 0
      %1156 = vmatpush1.bf16.msra.mxu0 0
      %1157 = vmatprep.subr.bf16.mxu0 0
      %1158 = vmatpush1.bf16.msra.mxu0 0
      %1159 = vmatprep.subr.bf16.mxu0 0
      %1160 = vmatpush1.bf16.msra.mxu0 0
      %1161 = vmatprep.subr.bf16.mxu0 0
      %1162 = vmatpush1.bf16.msra.mxu0 0
      %1163 = vmatprep.subr.bf16.mxu0 0
      %1164 = vmatpush1.bf16.msra.mxu0 0
      %1165 = vmatprep.subr.bf16.mxu0 0
      %1166 = vmatpush1.bf16.msra.mxu0 0
      %1167 = vmatprep.subr.bf16.mxu0 0
      %1168 = vmatpush1.bf16.msra.mxu0 0
      %1169 = vmatprep.subr.bf16.mxu0 0
      %1170 = vmatpush1.bf16.msra.mxu0 %v1153
      %1171 = vmatprep.subr.bf16.mxu0 0
      %1172 = vmatpush2.bf16.msra.mxu0 0
      %1173 = vmatprep.subr.bf16.mxu0 0
      %1174 = vmatpush2.bf16.msra.mxu0 0
      %1175 = vmatprep.subr.bf16.mxu0 0
      %1176 = vmatpush2.bf16.msra.mxu0 0
      %1177 = vmatprep.subr.bf16.mxu0 0
      %1178 = vmatpush2.bf16.msra.mxu0 0
      %1179 = vmatprep.subr.bf16.mxu0 0
      %1180 = vmatpush2.bf16.msra.mxu0 0
      %1181 = vmatprep.subr.bf16.mxu0 0
      %1182 = vmatpush2.bf16.msra.mxu0 0
      %1183 = vmatprep.subr.bf16.mxu0 0
      %1184 = vmatpush2.bf16.msra.mxu0 0
      %1185 = vmatprep.subr.bf16.mxu0 0
      %1186 = vmatpush2.bf16.msra.mxu0 0
      %1187 = vmatprep.mubr.bf16.mxu0 0
      %1188 = vmatmul.mubr.bf16.gmra.mxu0 %v1150
      %v1189 = vpop.f32.mrf.mxu0
      %v1190 = vadd.f32 0.0, %v1189
      %v1191 = vpop.f32.mrf.mxu0
      %v1192 = vpop.f32.mrf.mxu0
      %v1193 = vpop.f32.mrf.mxu0
      %1194 = vdwg.mxu0
      %v1195 = vpack.c.bf16 %v1190, %v1190
      %v1200 = vunpack.c.l.b16 %v736
      %v1201 = vunpack.c.l.b16 %v737
      %v1202 = vunpack.c.l.b16 %v738
      %v1203 = vunpack.c.l.b16 %v739
      %v1204 = vpack.c.b16 %v1201, %v1200
      %v1205 = vpack.c.b16 %v1203, %v1202
      %v1209 = vsel %vm747, %v1195, 0
      %1211 = vmatprep.subr.bf16.mxu0 0
      %1212 = vmatpush1.bf16.msra.mxu0 0
      %1213 = vmatprep.subr.bf16.mxu0 0
      %1214 = vmatpush1.bf16.msra.mxu0 0
      %1215 = vmatprep.subr.bf16.mxu0 0
      %1216 = vmatpush1.bf16.msra.mxu0 0
      %1217 = vmatprep.subr.bf16.mxu0 0
      %1218 = vmatpush1.bf16.msra.mxu0 0
      %1219 = vmatprep.subr.bf16.mxu0 0
      %1220 = vmatpush1.bf16.msra.mxu0 0
      %1221 = vmatprep.subr.bf16.mxu0 0
      %1222 = vmatpush1.bf16.msra.mxu0 0
      %1223 = vmatprep.subr.bf16.mxu0 0
      %1224 = vmatpush1.bf16.msra.mxu0 %v1205
      %1225 = vmatprep.subr.bf16.mxu0 0
      %1226 = vmatpush1.bf16.msra.mxu0 %v1204
      %1227 = vmatprep.subr.bf16.mxu0 0
      %1228 = vmatpush2.bf16.msra.mxu0 0
      %1229 = vmatprep.subr.bf16.mxu0 0
      %1230 = vmatpush2.bf16.msra.mxu0 0
      %1231 = vmatprep.subr.bf16.mxu0 0
      %1232 = vmatpush2.bf16.msra.mxu0 0
      %1233 = vmatprep.subr.bf16.mxu0 0
      %1234 = vmatpush2.bf16.msra.mxu0 0
      %1235 = vmatprep.subr.bf16.mxu0 0
      %1236 = vmatpush2.bf16.msra.mxu0 0
      %1237 = vmatprep.subr.bf16.mxu0 0
      %1238 = vmatpush2.bf16.msra.mxu0 0
      %1239 = vmatprep.subr.bf16.mxu0 0
      %1240 = vmatpush2.bf16.msra.mxu0 0
      %1241 = vmatprep.subr.bf16.mxu0 0
      %1242 = vmatpush2.bf16.msra.mxu0 0
      %1243 = vmatprep.mubr.bf16.mxu0 0
      %1244 = vmatmul.mubr.bf16.gmra.mxu0 %v1209
      %v1245 = vpop.f32.mrf.mxu0
      %v1246 = vadd.f32 0.0, %v1245
      %v1247 = vpop.f32.mrf.mxu0
      %v1248 = vpop.f32.mrf.mxu0
      %v1249 = vpop.f32.mrf.mxu0
      %1250 = vdwg.mxu0
      %v1251 = vadd.f32 %v1078, %v1246
      %1252 = vrot.lane.b32.xlu0 %v744, 32
      %v1253 = vpop.permute.xlu0 %1252
      %1254 = vrot.lane.b32.xlu0 %v745, 32
      %v1255 = vpop.permute.xlu0 %1254
      %v1257 = vsel %vm747, %v1253, 0
      %v1260 = vsel %vm747, %v1255, 0
      %1262 = vmatprep.subr.bf16.mxu0 0
      %1263 = vmatpush1.bf16.xpose.msra.mxu0 0
      %1264 = vmatprep.subr.bf16.mxu0 0
      %1265 = vmatpush1.bf16.xpose.msra.mxu0 0
      %1266 = vmatprep.subr.bf16.mxu0 0
      %1267 = vmatpush1.bf16.xpose.msra.mxu0 0
      %1268 = vmatprep.subr.bf16.mxu0 0
      %1269 = vmatpush1.bf16.xpose.msra.mxu0 0
      %1270 = vmatprep.subr.bf16.mxu0 0
      %1271 = vmatpush1.bf16.xpose.msra.mxu0 0
      %1272 = vmatprep.subr.bf16.mxu0 0
      %1273 = vmatpush1.bf16.xpose.msra.mxu0 0
      %1274 = vmatprep.subr.bf16.mxu0 0
      %1275 = vmatpush1.bf16.xpose.msra.mxu0 0
      %1276 = vmatprep.subr.bf16.mxu0 0
      %1277 = vmatpush1.bf16.xpose.msra.mxu0 %v1260
      %1278 = vmatprep.subr.bf16.mxu0 0
      %1279 = vmatpush2.bf16.xpose.msra.mxu0 0
      %1280 = vmatprep.subr.bf16.mxu0 0
      %1281 = vmatpush2.bf16.xpose.msra.mxu0 0
      %1282 = vmatprep.subr.bf16.mxu0 0
      %1283 = vmatpush2.bf16.xpose.msra.mxu0 0
      %1284 = vmatprep.subr.bf16.mxu0 0
      %1285 = vmatpush2.bf16.xpose.msra.mxu0 0
      %1286 = vmatprep.subr.bf16.mxu0 0
      %1287 = vmatpush2.bf16.xpose.msra.mxu0 0
      %1288 = vmatprep.subr.bf16.mxu0 0
      %1289 = vmatpush2.bf16.xpose.msra.mxu0 0
      %1290 = vmatprep.subr.bf16.mxu0 0
      %1291 = vmatpush2.bf16.xpose.msra.mxu0 0
      %1292 = vmatprep.subr.bf16.mxu0 0
      %1293 = vmatpush2.bf16.xpose.msra.mxu0 0
      %1294 = vmatprep.mubr.bf16.mxu0 0
      %1295 = vmatmul.mubr.bf16.gmra.mxu0 %v1257
      %v1296 = vpop.f32.mrf.mxu0
      %v1297 = vadd.f32 0.0, %v1296
      %v1298 = vpop.f32.mrf.mxu0
      %v1299 = vpop.f32.mrf.mxu0
      %v1300 = vpop.f32.mrf.mxu0
      %1301 = vdwg.mxu0
      %v1302 = vmul.f32 %v1297, 0.17677669
      %v1303 = vsel %vm727, %v1302, -1e+30
      %v1304 = vsel %vm796, %v1303, -inf
      %1305 = vmax.xlane.f32.xlu0 %v1304
      %v1306 = vpop.xlane.xlu0 %1305
      %v1307 = vsub.f32 %v1303, %v1306
      %v1308 = vmul.f32 %v1307, 1.442695
      %v1309 = vpow.pop %v1308
      %v1310 = vsel %vm796, %v1309, 0.0
      %1311 = vadd.xlane.f32.xlu0 %v1310
      %v1312 = vpop.xlane.xlu0 %1311
      %v1313 = vrcp.pop %v1312
      %v1314 = vmul.f32 %v1309, %v1313
      %v1315 = vpack.c.bf16 %v1314, %v1314
      %1316 = vrot.lane.b32.xlu0 %v746, 32
      %v1317 = vpop.permute.xlu0 %1316
      %v1319 = vsel %vm796, %v1315, 0
      %v1322 = vsel %vm812, %v1317, 0
      %1324 = vmatprep.subr.bf16.mxu0 0
      %1325 = vmatpush1.bf16.msra.mxu0 0
      %1326 = vmatprep.subr.bf16.mxu0 0
      %1327 = vmatpush1.bf16.msra.mxu0 0
      %1328 = vmatprep.subr.bf16.mxu0 0
      %1329 = vmatpush1.bf16.msra.mxu0 0
      %1330 = vmatprep.subr.bf16.mxu0 0
      %1331 = vmatpush1.bf16.msra.mxu0 0
      %1332 = vmatprep.subr.bf16.mxu0 0
      %1333 = vmatpush1.bf16.msra.mxu0 0
      %1334 = vmatprep.subr.bf16.mxu0 0
      %1335 = vmatpush1.bf16.msra.mxu0 0
      %1336 = vmatprep.subr.bf16.mxu0 0
      %1337 = vmatpush1.bf16.msra.mxu0 0
      %1338 = vmatprep.subr.bf16.mxu0 0
      %1339 = vmatpush1.bf16.msra.mxu0 %v1322
      %1340 = vmatprep.subr.bf16.mxu0 0
      %1341 = vmatpush2.bf16.msra.mxu0 0
      %1342 = vmatprep.subr.bf16.mxu0 0
      %1343 = vmatpush2.bf16.msra.mxu0 0
      %1344 = vmatprep.subr.bf16.mxu0 0
      %1345 = vmatpush2.bf16.msra.mxu0 0
      %1346 = vmatprep.subr.bf16.mxu0 0
      %1347 = vmatpush2.bf16.msra.mxu0 0
      %1348 = vmatprep.subr.bf16.mxu0 0
      %1349 = vmatpush2.bf16.msra.mxu0 0
      %1350 = vmatprep.subr.bf16.mxu0 0
      %1351 = vmatpush2.bf16.msra.mxu0 0
      %1352 = vmatprep.subr.bf16.mxu0 0
      %1353 = vmatpush2.bf16.msra.mxu0 0
      %1354 = vmatprep.subr.bf16.mxu0 0
      %1355 = vmatpush2.bf16.msra.mxu0 0
      %1356 = vmatprep.mubr.bf16.mxu0 0
      %1357 = vmatmul.mubr.bf16.gmra.mxu0 %v1319
      %v1358 = vpop.f32.mrf.mxu0
      %v1359 = vadd.f32 0.0, %v1358
      %v1360 = vpop.f32.mrf.mxu0
      %v1361 = vpop.f32.mrf.mxu0
      %v1362 = vpop.f32.mrf.mxu0
      %1363 = vdwg.mxu0
      %v1364 = vpack.c.bf16 %v1359, %v1359
      %v1369 = vunpack.c.l.b16 %v740
      %v1370 = vunpack.c.l.b16 %v741
      %v1371 = vunpack.c.l.b16 %v742
      %v1372 = vunpack.c.l.b16 %v743
      %v1373 = vpack.c.b16 %v1370, %v1369
      %v1374 = vpack.c.b16 %v1372, %v1371
      %v1378 = vsel %vm747, %v1364, 0
      %1380 = vmatprep.subr.bf16.mxu0 0
      %1381 = vmatpush1.bf16.msra.mxu0 0
      %1382 = vmatprep.subr.bf16.mxu0 0
      %1383 = vmatpush1.bf16.msra.mxu0 0
      %1384 = vmatprep.subr.bf16.mxu0 0
      %1385 = vmatpush1.bf16.msra.mxu0 0
      %1386 = vmatprep.subr.bf16.mxu0 0
      %1387 = vmatpush1.bf16.msra.mxu0 0
      %1388 = vmatprep.subr.bf16.mxu0 0
      %1389 = vmatpush1.bf16.msra.mxu0 0
      %1390 = vmatprep.subr.bf16.mxu0 0
      %1391 = vmatpush1.bf16.msra.mxu0 0
      %1392 = vmatprep.subr.bf16.mxu0 0
      %1393 = vmatpush1.bf16.msra.mxu0 %v1374
      %1394 = vmatprep.subr.bf16.mxu0 0
      %1395 = vmatpush1.bf16.msra.mxu0 %v1373
      %1396 = vmatprep.subr.bf16.mxu0 0
      %1397 = vmatpush2.bf16.msra.mxu0 0
      %1398 = vmatprep.subr.bf16.mxu0 0
      %1399 = vmatpush2.bf16.msra.mxu0 0
      %1400 = vmatprep.subr.bf16.mxu0 0
      %1401 = vmatpush2.bf16.msra.mxu0 0
      %1402 = vmatprep.subr.bf16.mxu0 0
      %1403 = vmatpush2.bf16.msra.mxu0 0
      %1404 = vmatprep.subr.bf16.mxu0 0
      %1405 = vmatpush2.bf16.msra.mxu0 0
      %1406 = vmatprep.subr.bf16.mxu0 0
      %1407 = vmatpush2.bf16.msra.mxu0 0
      %1408 = vmatprep.subr.bf16.mxu0 0
      %1409 = vmatpush2.bf16.msra.mxu0 0
      %1410 = vmatprep.subr.bf16.mxu0 0
      %1411 = vmatpush2.bf16.msra.mxu0 0
      %1412 = vmatprep.mubr.bf16.mxu0 0
      %1413 = vmatmul.mubr.bf16.gmra.mxu0 %v1378
      %v1414 = vpop.f32.mrf.mxu0
      %v1415 = vadd.f32 0.0, %v1414
      %v1416 = vpop.f32.mrf.mxu0
      %v1417 = vpop.f32.mrf.mxu0
      %v1418 = vpop.f32.mrf.mxu0
      %1419 = vdwg.mxu0
      %v1420 = vadd.f32 %v1251, %v1415
      %v1421 = vadd.f32 %v437, %v1420
      %v1422 = vld [vmem:[%s6] sm:$0x1]
      %v1424 = vlaneseq
      %v1425 = vshrl.u32 %v1424, 7
      %v1426 = vsub.s32 0, %v1425
      %v1427 = vrot.slane %v1422, %v1426
      %v1429 = vadd.f32 %v1421, %v1427
      %v1430 = vld [vmem:[%s7] sm:$0x1]
      %v1431 = vld [vmem:[%s8] sm:$0x1]
      %1432 = vadd.xlane.f32.xlu0 %v1429
      %v1433 = vpop.xlane.xlu0 %1432
      %v1434 = vmul.f32 %v1433, %v442
      %v1435 = vsub.f32 %v1429, %v1434
      %v1436 = vmul.f32 %v1435, %v1435
      %1437 = vadd.xlane.f32.xlu0 %v1436
      %v1438 = vpop.xlane.xlu0 %1437
      %v1439 = vmul.f32 %v1438, %v442
      %v1440 = vadd.f32 %v1439, 1e-06
      %v1441 = vrsqrt.pop %v1440
      %v1442 = vmul.f32 %v1435, %v1441
      %v1444 = vlaneseq
      %v1445 = vshrl.u32 %v1444, 7
      %v1446 = vsub.s32 0, %v1445
      %v1447 = vrot.slane %v1430, %v1446
      %v1449 = vmul.f32 %v1442, %v1447
      %v1451 = vlaneseq
      %v1452 = vshrl.u32 %v1451, 7
      %v1453 = vsub.s32 0, %v1452
      %v1454 = vrot.slane %v1431, %v1453
      %v1456 = vadd.f32 %v1449, %v1454
      %v1457 = vpack.c.bf16 %v1456, %v1456
      %v1458 = vld [vmem:[%s9] sm:$0xff]
      %v1459 = vld [vmem:[%s9 + $0x8] sm:$0xff]
      %v1460 = vld [vmem:[%s9 + $0x10] sm:$0xff]
      %v1461 = vld [vmem:[%s9 + $0x18] sm:$0xff]
      %v1462 = vld [vmem:[%s9 + $0x20] sm:$0xff]
      %v1463 = vld [vmem:[%s9 + $0x28] sm:$0xff]
      %v1464 = vld [vmem:[%s9 + $0x30] sm:$0xff]
      %v1465 = vld [vmem:[%s9 + $0x38] sm:$0xff]
      %v1466 = vld [vmem:[%s9 + $0x40] sm:$0xff]
      %v1467 = vld [vmem:[%s9 + $0x48] sm:$0xff]
      %v1468 = vld [vmem:[%s9 + $0x50] sm:$0xff]
      %v1469 = vld [vmem:[%s9 + $0x58] sm:$0xff]
      %v1470 = vld [vmem:[%s9 + $0x60] sm:$0xff]
      %v1471 = vld [vmem:[%s9 + $0x68] sm:$0xff]
      %v1472 = vld [vmem:[%s9 + $0x70] sm:$0xff]
      %v1473 = vld [vmem:[%s9 + $0x78] sm:$0xff]
      %v1474 = vld [vmem:[%s9 + $0x80] sm:$0xff]
      %v1475 = vld [vmem:[%s9 + $0x88] sm:$0xff]
      %v1476 = vld [vmem:[%s9 + $0x90] sm:$0xff]
      %v1477 = vld [vmem:[%s9 + $0x98] sm:$0xff]
      %v1478 = vld [vmem:[%s9 + $0xa0] sm:$0xff]
      %v1479 = vld [vmem:[%s9 + $0xa8] sm:$0xff]
      %v1480 = vld [vmem:[%s9 + $0xb0] sm:$0xff]
      %v1481 = vld [vmem:[%s9 + $0xb8] sm:$0xff]
      %v1482 = vld [vmem:[%s9 + $0xc0] sm:$0xff]
      %v1483 = vld [vmem:[%s9 + $0xc8] sm:$0xff]
      %v1484 = vld [vmem:[%s9 + $0xd0] sm:$0xff]
      %v1485 = vld [vmem:[%s9 + $0xd8] sm:$0xff]
      %v1486 = vld [vmem:[%s9 + $0xe0] sm:$0xff]
      %v1487 = vld [vmem:[%s9 + $0xe8] sm:$0xff]
      %v1488 = vld [vmem:[%s9 + $0xf0] sm:$0xff]
      %v1489 = vld [vmem:[%s9 + $0xf8] sm:$0xff]
      %v1490 = vld [vmem:[%s10] sm:$0xf]
      %v1492 = vlaneseq
      %v1493 = vshrl.u32 %v1492, 7
      %v1494 = vsub.s32 0, %v1493
      %v1495 = vrot.slane %v1490, %v1494
      %v1496 = vlaneseq
      %v1497 = vshrl.u32 %v1496, 7
      %v1498 = vsub.s32 1, %v1497
      %v1499 = vrot.slane %v1490, %v1498
      %v1500 = vlaneseq
      %v1501 = vshrl.u32 %v1500, 7
      %v1502 = vsub.s32 2, %v1501
      %v1503 = vrot.slane %v1490, %v1502
      %v1504 = vlaneseq
      %v1505 = vshrl.u32 %v1504, 7
      %v1506 = vsub.s32 3, %v1505
      %v1507 = vrot.slane %v1490, %v1506
      %v1544 = vunpack.c.l.b16 %v1458
      %v1545 = vunpack.c.h.b16 %v1458
      %v1546 = vunpack.c.l.b16 %v1459
      %v1547 = vunpack.c.h.b16 %v1459
      %v1548 = vunpack.c.l.b16 %v1460
      %v1549 = vunpack.c.h.b16 %v1460
      %v1550 = vunpack.c.l.b16 %v1461
      %v1551 = vunpack.c.h.b16 %v1461
      %v1552 = vunpack.c.l.b16 %v1462
      %v1553 = vunpack.c.h.b16 %v1462
      %v1554 = vunpack.c.l.b16 %v1463
      %v1555 = vunpack.c.h.b16 %v1463
      %v1556 = vunpack.c.l.b16 %v1464
      %v1557 = vunpack.c.h.b16 %v1464
      %v1558 = vunpack.c.l.b16 %v1465
      %v1559 = vunpack.c.h.b16 %v1465
      %v1560 = vunpack.c.l.b16 %v1466
      %v1561 = vunpack.c.h.b16 %v1466
      %v1562 = vunpack.c.l.b16 %v1467
      %v1563 = vunpack.c.h.b16 %v1467
      %v1564 = vunpack.c.l.b16 %v1468
      %v1565 = vunpack.c.h.b16 %v1468
      %v1566 = vunpack.c.l.b16 %v1469
      %v1567 = vunpack.c.h.b16 %v1469
      %v1568 = vunpack.c.l.b16 %v1470
      %v1569 = vunpack.c.h.b16 %v1470
      %v1570 = vunpack.c.l.b16 %v1471
      %v1571 = vunpack.c.h.b16 %v1471
      %v1572 = vunpack.c.l.b16 %v1472
      %v1573 = vunpack.c.h.b16 %v1472
      %v1574 = vunpack.c.l.b16 %v1473
      %v1575 = vunpack.c.h.b16 %v1473
      %v1576 = vunpack.c.l.b16 %v1474
      %v1577 = vunpack.c.h.b16 %v1474
      %v1578 = vunpack.c.l.b16 %v1475
      %v1579 = vunpack.c.h.b16 %v1475
      %v1580 = vunpack.c.l.b16 %v1476
      %v1581 = vunpack.c.h.b16 %v1476
      %v1582 = vunpack.c.l.b16 %v1477
      %v1583 = vunpack.c.h.b16 %v1477
      %v1584 = vunpack.c.l.b16 %v1478
      %v1585 = vunpack.c.h.b16 %v1478
      %v1586 = vunpack.c.l.b16 %v1479
      %v1587 = vunpack.c.h.b16 %v1479
      %v1588 = vunpack.c.l.b16 %v1480
      %v1589 = vunpack.c.h.b16 %v1480
      %v1590 = vunpack.c.l.b16 %v1481
      %v1591 = vunpack.c.h.b16 %v1481
      %v1592 = vunpack.c.l.b16 %v1482
      %v1593 = vunpack.c.h.b16 %v1482
      %v1594 = vunpack.c.l.b16 %v1483
      %v1595 = vunpack.c.h.b16 %v1483
      %v1596 = vunpack.c.l.b16 %v1484
      %v1597 = vunpack.c.h.b16 %v1484
      %v1598 = vunpack.c.l.b16 %v1485
      %v1599 = vunpack.c.h.b16 %v1485
      %v1600 = vunpack.c.l.b16 %v1486
      %v1601 = vunpack.c.h.b16 %v1486
      %v1602 = vunpack.c.l.b16 %v1487
      %v1603 = vunpack.c.h.b16 %v1487
      %v1604 = vunpack.c.l.b16 %v1488
      %v1605 = vunpack.c.h.b16 %v1488
      %v1606 = vunpack.c.l.b16 %v1489
      %v1607 = vunpack.c.h.b16 %v1489
      %v1608 = vpack.c.b16 %v1548, %v1544
      %v1609 = vpack.c.b16 %v1549, %v1545
      %v1610 = vpack.c.b16 %v1550, %v1546
      %v1611 = vpack.c.b16 %v1551, %v1547
      %v1612 = vpack.c.b16 %v1556, %v1552
      %v1613 = vpack.c.b16 %v1557, %v1553
      %v1614 = vpack.c.b16 %v1558, %v1554
      %v1615 = vpack.c.b16 %v1559, %v1555
      %v1616 = vpack.c.b16 %v1564, %v1560
      %v1617 = vpack.c.b16 %v1565, %v1561
      %v1618 = vpack.c.b16 %v1566, %v1562
      %v1619 = vpack.c.b16 %v1567, %v1563
      %v1620 = vpack.c.b16 %v1572, %v1568
      %v1621 = vpack.c.b16 %v1573, %v1569
      %v1622 = vpack.c.b16 %v1574, %v1570
      %v1623 = vpack.c.b16 %v1575, %v1571
      %v1624 = vpack.c.b16 %v1580, %v1576
      %v1625 = vpack.c.b16 %v1581, %v1577
      %v1626 = vpack.c.b16 %v1582, %v1578
      %v1627 = vpack.c.b16 %v1583, %v1579
      %v1628 = vpack.c.b16 %v1588, %v1584
      %v1629 = vpack.c.b16 %v1589, %v1585
      %v1630 = vpack.c.b16 %v1590, %v1586
      %v1631 = vpack.c.b16 %v1591, %v1587
      %v1632 = vpack.c.b16 %v1596, %v1592
      %v1633 = vpack.c.b16 %v1597, %v1593
      %v1634 = vpack.c.b16 %v1598, %v1594
      %v1635 = vpack.c.b16 %v1599, %v1595
      %v1636 = vpack.c.b16 %v1604, %v1600
      %v1637 = vpack.c.b16 %v1605, %v1601
      %v1638 = vpack.c.b16 %v1606, %v1602
      %v1639 = vpack.c.b16 %v1607, %v1603
      %1672 = vmatprep.subr.bf16.mxu0 %v1637
      %1673 = vmatpush1.bf16.msra.mxu0 %v1636
      %1674 = vmatprep.subr.bf16.mxu0 %v1633
      %1675 = vmatpush1.bf16.msra.mxu0 %v1632
      %1676 = vmatprep.subr.bf16.mxu0 %v1629
      %1677 = vmatpush1.bf16.msra.mxu0 %v1628
      %1678 = vmatprep.subr.bf16.mxu0 %v1625
      %1679 = vmatpush1.bf16.msra.mxu0 %v1624
      %1680 = vmatprep.subr.bf16.mxu0 %v1621
      %1681 = vmatpush1.bf16.msra.mxu0 %v1620
      %1682 = vmatprep.subr.bf16.mxu0 %v1617
      %1683 = vmatpush1.bf16.msra.mxu0 %v1616
      %1684 = vmatprep.subr.bf16.mxu0 %v1613
      %1685 = vmatpush1.bf16.msra.mxu0 %v1612
      %1686 = vmatprep.subr.bf16.mxu0 %v1609
      %1687 = vmatpush1.bf16.msra.mxu0 %v1608
      %1688 = vmatprep.subr.bf16.mxu0 0
      %1689 = vmatpush2.bf16.msra.mxu0 0
      %1690 = vmatprep.subr.bf16.mxu0 0
      %1691 = vmatpush2.bf16.msra.mxu0 0
      %1692 = vmatprep.subr.bf16.mxu0 0
      %1693 = vmatpush2.bf16.msra.mxu0 0
      %1694 = vmatprep.subr.bf16.mxu0 0
      %1695 = vmatpush2.bf16.msra.mxu0 0
      %1696 = vmatprep.subr.bf16.mxu0 0
      %1697 = vmatpush2.bf16.msra.mxu0 0
      %1698 = vmatprep.subr.bf16.mxu0 0
      %1699 = vmatpush2.bf16.msra.mxu0 0
      %1700 = vmatprep.subr.bf16.mxu0 0
      %1701 = vmatpush2.bf16.msra.mxu0 0
      %1702 = vmatprep.subr.bf16.mxu0 0
      %1703 = vmatpush2.bf16.msra.mxu0 0
      %1704 = vmatprep.mubr.bf16.mxu0 0
      %1705 = vmatmul.mubr.bf16.gmra.mxu0 %v1457
      %v1706 = vpop.f32.mrf.mxu0
      %v1707 = vadd.f32 %v1495, %v1706
      %v1708 = vpop.f32.mrf.mxu0
      %v1709 = vadd.f32 %v1499, %v1708
      %v1710 = vpop.f32.mrf.mxu0
      %v1711 = vpop.f32.mrf.mxu0
      %1712 = vdwg.mxu0
      %1713 = vmatprep.subr.bf16.mxu0 %v1639
      %1714 = vmatpush1.bf16.msra.mxu0 %v1638
      %1715 = vmatprep.subr.bf16.mxu0 %v1635
      %1716 = vmatpush1.bf16.msra.mxu0 %v1634
      %1717 = vmatprep.subr.bf16.mxu0 %v1631
      %1718 = vmatpush1.bf16.msra.mxu0 %v1630
      %1719 = vmatprep.subr.bf16.mxu0 %v1627
      %1720 = vmatpush1.bf16.msra.mxu0 %v1626
      %1721 = vmatprep.subr.bf16.mxu0 %v1623
      %1722 = vmatpush1.bf16.msra.mxu0 %v1622
      %1723 = vmatprep.subr.bf16.mxu0 %v1619
      %1724 = vmatpush1.bf16.msra.mxu0 %v1618
      %1725 = vmatprep.subr.bf16.mxu0 %v1615
      %1726 = vmatpush1.bf16.msra.mxu0 %v1614
      %1727 = vmatprep.subr.bf16.mxu0 %v1611
      %1728 = vmatpush1.bf16.msra.mxu0 %v1610
      %1729 = vmatprep.subr.bf16.mxu0 0
      %1730 = vmatpush2.bf16.msra.mxu0 0
      %1731 = vmatprep.subr.bf16.mxu0 0
      %1732 = vmatpush2.bf16.msra.mxu0 0
      %1733 = vmatprep.subr.bf16.mxu0 0
      %1734 = vmatpush2.bf16.msra.mxu0 0
      %1735 = vmatprep.subr.bf16.mxu0 0
      %1736 = vmatpush2.bf16.msra.mxu0 0
      %1737 = vmatprep.subr.bf16.mxu0 0
      %1738 = vmatpush2.bf16.msra.mxu0 0
      %1739 = vmatprep.subr.bf16.mxu0 0
      %1740 = vmatpush2.bf16.msra.mxu0 0
      %1741 = vmatprep.subr.bf16.mxu0 0
      %1742 = vmatpush2.bf16.msra.mxu0 0
      %1743 = vmatprep.subr.bf16.mxu0 0
      %1744 = vmatpush2.bf16.msra.mxu0 0
      %1745 = vmatprep.mubr.bf16.mxu0 0
      %1746 = vmatmul.mubr.bf16.gmra.mxu0 %v1457
      %v1747 = vpop.f32.mrf.mxu0
      %v1748 = vadd.f32 %v1503, %v1747
      %v1749 = vpop.f32.mrf.mxu0
      %v1750 = vadd.f32 %v1507, %v1749
      %v1751 = vpop.f32.mrf.mxu0
      %v1752 = vpop.f32.mrf.mxu0
      %1753 = vdwg.mxu0
      %v1754 = vmul.f32 %v1707, 0.5
      %v1755 = vmul.f32 %v1709, 0.5
      %v1756 = vmul.f32 %v1748, 0.5
      %v1757 = vmul.f32 %v1750, 0.5
      %v1758 = vmul.f32 %v1707, 0.70710677
      %v1759 = vmul.f32 %v1709, 0.70710677
      %v1760 = vmul.f32 %v1748, 0.70710677
      %v1761 = vmul.f32 %v1750, 0.70710677
      %v1762 = verf.f32.pop %v1758
      %v1763 = verf.f32.pop %v1759
      %v1764 = verf.f32.pop %v1760
      %v1765 = verf.f32.pop %v1761
      %v1766 = vadd.f32 %v1762, 1.0
      %v1767 = vadd.f32 %v1763, 1.0
      %v1768 = vadd.f32 %v1764, 1.0
      %v1769 = vadd.f32 %v1765, 1.0
      %v1770 = vmul.f32 %v1754, %v1766
      %v1771 = vmul.f32 %v1755, %v1767
      %v1772 = vmul.f32 %v1756, %v1768
      %v1773 = vmul.f32 %v1757, %v1769
      %v1774 = vpack.c.bf16 %v1770, %v1770
      %v1775 = vpack.c.bf16 %v1771, %v1771
      %v1776 = vpack.c.bf16 %v1772, %v1772
      %v1777 = vpack.c.bf16 %v1773, %v1773
      %v1778 = vld [vmem:[%s11] sm:$0xf]
      %v1779 = vld [vmem:[%s11 + $0x4] sm:$0xf]
      %v1780 = vld [vmem:[%s11 + $0x8] sm:$0xf]
      %v1781 = vld [vmem:[%s11 + $0xc] sm:$0xf]
      %v1782 = vld [vmem:[%s11 + $0x10] sm:$0xf]
      %v1783 = vld [vmem:[%s11 + $0x14] sm:$0xf]
      %v1784 = vld [vmem:[%s11 + $0x18] sm:$0xf]
      %v1785 = vld [vmem:[%s11 + $0x1c] sm:$0xf]
      %v1786 = vld [vmem:[%s11 + $0x20] sm:$0xf]
      %v1787 = vld [vmem:[%s11 + $0x24] sm:$0xf]
      %v1788 = vld [vmem:[%s11 + $0x28] sm:$0xf]
      %v1789 = vld [vmem:[%s11 + $0x2c] sm:$0xf]
      %v1790 = vld [vmem:[%s11 + $0x30] sm:$0xf]
      %v1791 = vld [vmem:[%s11 + $0x34] sm:$0xf]
      %v1792 = vld [vmem:[%s11 + $0x38] sm:$0xf]
      %v1793 = vld [vmem:[%s11 + $0x3c] sm:$0xf]
      %v1794 = vld [vmem:[%s11 + $0x40] sm:$0xf]
      %v1795 = vld [vmem:[%s11 + $0x44] sm:$0xf]
      %v1796 = vld [vmem:[%s11 + $0x48] sm:$0xf]
      %v1797 = vld [vmem:[%s11 + $0x4c] sm:$0xf]
      %v1798 = vld [vmem:[%s11 + $0x50] sm:$0xf]
      %v1799 = vld [vmem:[%s11 + $0x54] sm:$0xf]
      %v1800 = vld [vmem:[%s11 + $0x58] sm:$0xf]
      %v1801 = vld [vmem:[%s11 + $0x5c] sm:$0xf]
      %v1802 = vld [vmem:[%s11 + $0x60] sm:$0xf]
      %v1803 = vld [vmem:[%s11 + $0x64] sm:$0xf]
      %v1804 = vld [vmem:[%s11 + $0x68] sm:$0xf]
      %v1805 = vld [vmem:[%s11 + $0x6c] sm:$0xf]
      %v1806 = vld [vmem:[%s11 + $0x70] sm:$0xf]
      %v1807 = vld [vmem:[%s11 + $0x74] sm:$0xf]
      %v1808 = vld [vmem:[%s11 + $0x78] sm:$0xf]
      %v1809 = vld [vmem:[%s11 + $0x7c] sm:$0xf]
      %v1810 = vld [vmem:[%s11 + $0x80] sm:$0xf]
      %v1811 = vld [vmem:[%s11 + $0x84] sm:$0xf]
      %v1812 = vld [vmem:[%s11 + $0x88] sm:$0xf]
      %v1813 = vld [vmem:[%s11 + $0x8c] sm:$0xf]
      %v1814 = vld [vmem:[%s11 + $0x90] sm:$0xf]
      %v1815 = vld [vmem:[%s11 + $0x94] sm:$0xf]
      %v1816 = vld [vmem:[%s11 + $0x98] sm:$0xf]
      %v1817 = vld [vmem:[%s11 + $0x9c] sm:$0xf]
      %v1818 = vld [vmem:[%s11 + $0xa0] sm:$0xf]
      %v1819 = vld [vmem:[%s11 + $0xa4] sm:$0xf]
      %v1820 = vld [vmem:[%s11 + $0xa8] sm:$0xf]
      %v1821 = vld [vmem:[%s11 + $0xac] sm:$0xf]
      %v1822 = vld [vmem:[%s11 + $0xb0] sm:$0xf]
      %v1823 = vld [vmem:[%s11 + $0xb4] sm:$0xf]
      %v1824 = vld [vmem:[%s11 + $0xb8] sm:$0xf]
      %v1825 = vld [vmem:[%s11 + $0xbc] sm:$0xf]
      %v1826 = vld [vmem:[%s11 + $0xc0] sm:$0xf]
      %v1827 = vld [vmem:[%s11 + $0xc4] sm:$0xf]
      %v1828 = vld [vmem:[%s11 + $0xc8] sm:$0xf]
      %v1829 = vld [vmem:[%s11 + $0xcc] sm:$0xf]
      %v1830 = vld [vmem:[%s11 + $0xd0] sm:$0xf]
      %v1831 = vld [vmem:[%s11 + $0xd4] sm:$0xf]
      %v1832 = vld [vmem:[%s11 + $0xd8] sm:$0xf]
      %v1833 = vld [vmem:[%s11 + $0xdc] sm:$0xf]
      %v1834 = vld [vmem:[%s11 + $0xe0] sm:$0xf]
      %v1835 = vld [vmem:[%s11 + $0xe4] sm:$0xf]
      %v1836 = vld [vmem:[%s11 + $0xe8] sm:$0xf]
      %v1837 = vld [vmem:[%s11 + $0xec] sm:$0xf]
      %v1838 = vld [vmem:[%s11 + $0xf0] sm:$0xf]
      %v1839 = vld [vmem:[%s11 + $0xf4] sm:$0xf]
      %v1840 = vld [vmem:[%s11 + $0xf8] sm:$0xf]
      %v1841 = vld [vmem:[%s11 + $0xfc] sm:$0xf]
      %v1842 = vld [vmem:[%s12] sm:$0x1]
      %v1844 = vlaneseq
      %v1845 = vshrl.u32 %v1844, 7
      %v1846 = vsub.s32 0, %v1845
      %v1847 = vrot.slane %v1842, %v1846
      %v1913 = vunpack.c.l.b16 %v1778
      %v1914 = vunpack.c.l.b16 %v1779
      %v1915 = vunpack.c.l.b16 %v1780
      %v1916 = vunpack.c.l.b16 %v1781
      %v1917 = vunpack.c.l.b16 %v1782
      %v1918 = vunpack.c.l.b16 %v1783
      %v1919 = vunpack.c.l.b16 %v1784
      %v1920 = vunpack.c.l.b16 %v1785
      %v1921 = vunpack.c.l.b16 %v1786
      %v1922 = vunpack.c.l.b16 %v1787
      %v1923 = vunpack.c.l.b16 %v1788
      %v1924 = vunpack.c.l.b16 %v1789
      %v1925 = vunpack.c.l.b16 %v1790
      %v1926 = vunpack.c.l.b16 %v1791
      %v1927 = vunpack.c.l.b16 %v1792
      %v1928 = vunpack.c.l.b16 %v1793
      %v1929 = vunpack.c.l.b16 %v1794
      %v1930 = vunpack.c.l.b16 %v1795
      %v1931 = vunpack.c.l.b16 %v1796
      %v1932 = vunpack.c.l.b16 %v1797
      %v1933 = vunpack.c.l.b16 %v1798
      %v1934 = vunpack.c.l.b16 %v1799
      %v1935 = vunpack.c.l.b16 %v1800
      %v1936 = vunpack.c.l.b16 %v1801
      %v1937 = vunpack.c.l.b16 %v1802
      %v1938 = vunpack.c.l.b16 %v1803
      %v1939 = vunpack.c.l.b16 %v1804
      %v1940 = vunpack.c.l.b16 %v1805
      %v1941 = vunpack.c.l.b16 %v1806
      %v1942 = vunpack.c.l.b16 %v1807
      %v1943 = vunpack.c.l.b16 %v1808
      %v1944 = vunpack.c.l.b16 %v1809
      %v1945 = vunpack.c.l.b16 %v1810
      %v1946 = vunpack.c.l.b16 %v1811
      %v1947 = vunpack.c.l.b16 %v1812
      %v1948 = vunpack.c.l.b16 %v1813
      %v1949 = vunpack.c.l.b16 %v1814
      %v1950 = vunpack.c.l.b16 %v1815
      %v1951 = vunpack.c.l.b16 %v1816
      %v1952 = vunpack.c.l.b16 %v1817
      %v1953 = vunpack.c.l.b16 %v1818
      %v1954 = vunpack.c.l.b16 %v1819
      %v1955 = vunpack.c.l.b16 %v1820
      %v1956 = vunpack.c.l.b16 %v1821
      %v1957 = vunpack.c.l.b16 %v1822
      %v1958 = vunpack.c.l.b16 %v1823
      %v1959 = vunpack.c.l.b16 %v1824
      %v1960 = vunpack.c.l.b16 %v1825
      %v1961 = vunpack.c.l.b16 %v1826
      %v1962 = vunpack.c.l.b16 %v1827
      %v1963 = vunpack.c.l.b16 %v1828
      %v1964 = vunpack.c.l.b16 %v1829
      %v1965 = vunpack.c.l.b16 %v1830
      %v1966 = vunpack.c.l.b16 %v1831
      %v1967 = vunpack.c.l.b16 %v1832
      %v1968 = vunpack.c.l.b16 %v1833
      %v1969 = vunpack.c.l.b16 %v1834
      %v1970 = vunpack.c.l.b16 %v1835
      %v1971 = vunpack.c.l.b16 %v1836
      %v1972 = vunpack.c.l.b16 %v1837
      %v1973 = vunpack.c.l.b16 %v1838
      %v1974 = vunpack.c.l.b16 %v1839
      %v1975 = vunpack.c.l.b16 %v1840
      %v1976 = vunpack.c.l.b16 %v1841
      %v1977 = vpack.c.b16 %v1914, %v1913
      %v1978 = vpack.c.b16 %v1916, %v1915
      %v1979 = vpack.c.b16 %v1918, %v1917
      %v1980 = vpack.c.b16 %v1920, %v1919
      %v1981 = vpack.c.b16 %v1922, %v1921
      %v1982 = vpack.c.b16 %v1924, %v1923
      %v1983 = vpack.c.b16 %v1926, %v1925
      %v1984 = vpack.c.b16 %v1928, %v1927
      %v1985 = vpack.c.b16 %v1930, %v1929
      %v1986 = vpack.c.b16 %v1932, %v1931
      %v1987 = vpack.c.b16 %v1934, %v1933
      %v1988 = vpack.c.b16 %v1936, %v1935
      %v1989 = vpack.c.b16 %v1938, %v1937
      %v1990 = vpack.c.b16 %v1940, %v1939
      %v1991 = vpack.c.b16 %v1942, %v1941
      %v1992 = vpack.c.b16 %v1944, %v1943
      %v1993 = vpack.c.b16 %v1946, %v1945
      %v1994 = vpack.c.b16 %v1948, %v1947
      %v1995 = vpack.c.b16 %v1950, %v1949
      %v1996 = vpack.c.b16 %v1952, %v1951
      %v1997 = vpack.c.b16 %v1954, %v1953
      %v1998 = vpack.c.b16 %v1956, %v1955
      %v1999 = vpack.c.b16 %v1958, %v1957
      %v2000 = vpack.c.b16 %v1960, %v1959
      %v2001 = vpack.c.b16 %v1962, %v1961
      %v2002 = vpack.c.b16 %v1964, %v1963
      %v2003 = vpack.c.b16 %v1966, %v1965
      %v2004 = vpack.c.b16 %v1968, %v1967
      %v2005 = vpack.c.b16 %v1970, %v1969
      %v2006 = vpack.c.b16 %v1972, %v1971
      %v2007 = vpack.c.b16 %v1974, %v1973
      %v2008 = vpack.c.b16 %v1976, %v1975
      %2041 = vmatprep.subr.bf16.mxu0 0
      %2042 = vmatpush1.bf16.msra.mxu0 %v1984
      %2043 = vmatprep.subr.bf16.mxu0 0
      %2044 = vmatpush1.bf16.msra.mxu0 %v1983
      %2045 = vmatprep.subr.bf16.mxu0 0
      %2046 = vmatpush1.bf16.msra.mxu0 %v1982
      %2047 = vmatprep.subr.bf16.mxu0 0
      %2048 = vmatpush1.bf16.msra.mxu0 %v1981
      %2049 = vmatprep.subr.bf16.mxu0 0
      %2050 = vmatpush1.bf16.msra.mxu0 %v1980
      %2051 = vmatprep.subr.bf16.mxu0 0
      %2052 = vmatpush1.bf16.msra.mxu0 %v1979
      %2053 = vmatprep.subr.bf16.mxu0 0
      %2054 = vmatpush1.bf16.msra.mxu0 %v1978
      %2055 = vmatprep.subr.bf16.mxu0 0
      %2056 = vmatpush1.bf16.msra.mxu0 %v1977
      %2057 = vmatprep.subr.bf16.mxu0 0
      %2058 = vmatpush2.bf16.msra.mxu0 %v1992
      %2059 = vmatprep.subr.bf16.mxu0 0
      %2060 = vmatpush2.bf16.msra.mxu0 %v1991
      %2061 = vmatprep.subr.bf16.mxu0 0
      %2062 = vmatpush2.bf16.msra.mxu0 %v1990
      %2063 = vmatprep.subr.bf16.mxu0 0
      %2064 = vmatpush2.bf16.msra.mxu0 %v1989
      %2065 = vmatprep.subr.bf16.mxu0 0
      %2066 = vmatpush2.bf16.msra.mxu0 %v1988
      %2067 = vmatprep.subr.bf16.mxu0 0
      %2068 = vmatpush2.bf16.msra.mxu0 %v1987
      %2069 = vmatprep.subr.bf16.mxu0 0
      %2070 = vmatpush2.bf16.msra.mxu0 %v1986
      %2071 = vmatprep.subr.bf16.mxu0 0
      %2072 = vmatpush2.bf16.msra.mxu0 %v1985
      %2073 = vmatprep.mubr.bf16.mxu0 %v1775
      %2074 = vmatmul.mubr.bf16.gmra.mxu0 %v1774
      %v2075 = vpop.f32.mrf.mxu0
      %v2076 = vadd.f32 %v1847, %v2075
      %v2077 = vpop.f32.mrf.mxu0
      %v2078 = vpop.f32.mrf.mxu0
      %v2079 = vpop.f32.mrf.mxu0
      %2080 = vdwg.mxu0
      %2081 = vmatprep.subr.bf16.mxu0 0
      %2082 = vmatpush1.bf16.msra.mxu0 %v2000
      %2083 = vmatprep.subr.bf16.mxu0 0
      %2084 = vmatpush1.bf16.msra.mxu0 %v1999
      %2085 = vmatprep.subr.bf16.mxu0 0
      %2086 = vmatpush1.bf16.msra.mxu0 %v1998
      %2087 = vmatprep.subr.bf16.mxu0 0
      %2088 = vmatpush1.bf16.msra.mxu0 %v1997
      %2089 = vmatprep.subr.bf16.mxu0 0
      %2090 = vmatpush1.bf16.msra.mxu0 %v1996
      %2091 = vmatprep.subr.bf16.mxu0 0
      %2092 = vmatpush1.bf16.msra.mxu0 %v1995
      %2093 = vmatprep.subr.bf16.mxu0 0
      %2094 = vmatpush1.bf16.msra.mxu0 %v1994
      %2095 = vmatprep.subr.bf16.mxu0 0
      %2096 = vmatpush1.bf16.msra.mxu0 %v1993
      %2097 = vmatprep.subr.bf16.mxu0 0
      %2098 = vmatpush2.bf16.msra.mxu0 %v2008
      %2099 = vmatprep.subr.bf16.mxu0 0
      %2100 = vmatpush2.bf16.msra.mxu0 %v2007
      %2101 = vmatprep.subr.bf16.mxu0 0
      %2102 = vmatpush2.bf16.msra.mxu0 %v2006
      %2103 = vmatprep.subr.bf16.mxu0 0
      %2104 = vmatpush2.bf16.msra.mxu0 %v2005
      %2105 = vmatprep.subr.bf16.mxu0 0
      %2106 = vmatpush2.bf16.msra.mxu0 %v2004
      %2107 = vmatprep.subr.bf16.mxu0 0
      %2108 = vmatpush2.bf16.msra.mxu0 %v2003
      %2109 = vmatprep.subr.bf16.mxu0 0
      %2110 = vmatpush2.bf16.msra.mxu0 %v2002
      %2111 = vmatprep.subr.bf16.mxu0 0
      %2112 = vmatpush2.bf16.msra.mxu0 %v2001
      %2113 = vmatprep.mubr.bf16.mxu0 %v1777
      %2114 = vmatmul.mubr.bf16.gmra.mxu0 %v1776
      %v2115 = vpop.f32.mrf.mxu0
      %v2116 = vadd.f32 %v2076, %v2115
      %v2117 = vpop.f32.mrf.mxu0
      %v2118 = vpop.f32.mrf.mxu0
      %v2119 = vpop.f32.mrf.mxu0
      %2120 = vdwg.mxu0
      %v2121 = vadd.f32 %v1429, %v2116
      %2122 = vst [vmem:[%s435] sm:$0xff] %v2121
      %p2123 = scmp.lt.s32.totalorder %s24, 1
      %s2124 = scalar_select %p2123, %s24, 1
      %s2125 = smul.addr %s2124, 8
      %s2126 = scalar_lea.vmem %s13, %s2125
      // Predicated region
      $region73: #{deit_forward.5} parent=71 // pred_check
        %p2127 = pneg %p320
      $region74: #{deit_forward.5} parent=71 // pred_check_branch
        %2129 = sbr.rel (%p2127) target = $region76
      $region75: #{deit_forward.5} parent=71 // pred_region
        _
      $region76: #{deit_forward.5} parent=71 // pred_fallthru
        _
    $region72: #{deit_forward.5} parent=5 // pred_fallthru
      _
    %p2130 = scmp.le.s32.totalorder 2, %s19
    // Predicated region
    $region77: #{deit_forward.5} parent=5 // pred_check
      %p2131 = pneg %p2130
    $region78: #{deit_forward.5} parent=5 // pred_check_branch
      %2133 = sbr.rel (%p2131) target = $region80
    $region79: #{deit_forward.5} parent=5 // pred_region
      %s2134 = ssub.s32 %s19, 2
      // Predicated region
      $region81: #{deit_forward.5} parent=79 // pred_check
        %p2135 = pneg %p326
      $region82: #{deit_forward.5} parent=79 // pred_check_branch
        %2137 = sbr.rel (%p2135) target = $region84
      $region83: #{deit_forward.5} parent=79 // pred_region
        %p2138 = scmp.lt.s32.totalorder %s25, 1
        %s2139 = scalar_select %p2138, %s25, 1
        %s2140 = smul.addr %s2139, 8
        %s2141 = scalar_lea.vmem %s13, %s2140
      $region84: #{deit_forward.5} parent=79 // pred_fallthru
        _
    $region80: #{deit_forward.5} parent=5 // pred_fallthru
      _
  $region6: #{deit_forward.5} parent=0 // loop_footer
    %s23 = sadd.s32 1, %s19
  $region7: #{deit_forward.5} parent=0 // loop_footer_branch
    %18 = sbr.rel target = $region3
  $region8: #{deit_forward.5} parent=0 // loop_exit
    _

// kernel: deit_forward.7
$region0: #{deit_forward.7}
  #allocation0 [shape = 'u32[]', space=smem, size = 0x4, offset = 0x4, fixed_abs, tag = 'smem constant byte address 0x4 - core index']
  #allocation1 [shape = 'u32[144,128]{1,0:T(1,128)}', space=vmem, size = 0x12000, scoped, tag = 'internal scratch']
  %s0 = inlined_call_operand.vmem [shape: f32[8,128], index: 0, kind: input, shape index: {}]
  %s1 = inlined_call_operand.vmem [shape: f32[1,128], index: 1, kind: input, shape index: {}]
  %s2 = inlined_call_operand.vmem [shape: f32[1,128], index: 2, kind: input, shape index: {}]
  %s3 = inlined_call_operand.vmem [shape: bf16[128,1024], index: 3, kind: input, shape index: {}]
  %s4 = inlined_call_operand.vmem [shape: f32[1,1024], index: 4, kind: input, shape index: {}]
  %s5 = inlined_call_operand.vmem [shape: bf16[1024,512], index: 5, kind: input, shape index: {}]
  %s6 = inlined_call_operand.vmem [shape: f32[1,512], index: 6, kind: input, shape index: {}]
  %s7 = inlined_call_operand.vmem [shape: f32[8,512], index: 7, kind: output, shape index: {}]
  %s8 = sld [smem:[#allocation0]]
  $region38: #{deit_forward.7} parent=0
    _
  %s10 = ssub.s32 1, %s8
  %s11 = scalar_select 0, %s10, %s8
  // Predicated region
  $region2: #{deit_forward.7} parent=0 // pred_check
    _
  $region3: #{deit_forward.7} parent=0 // pred_check_branch
    %13 = sbr.rel (0) target = $region5
  $region4: #{deit_forward.7} parent=0 // pred_region
    _
  $region5: #{deit_forward.7} parent=0 // pred_fallthru
    _
  // Predicated region
  $region6: #{deit_forward.7} parent=0 // pred_check
    _
  $region7: #{deit_forward.7} parent=0 // pred_check_branch
    %15 = sbr.rel (0) target = $region9
  $region8: #{deit_forward.7} parent=0 // pred_region
    _
  $region9: #{deit_forward.7} parent=0 // pred_fallthru
    _
  // Predicated region
  $region10: #{deit_forward.7} parent=0 // pred_check
    _
  $region11: #{deit_forward.7} parent=0 // pred_check_branch
    %17 = sbr.rel (0) target = $region13
  $region12: #{deit_forward.7} parent=0 // pred_region
    _
  $region13: #{deit_forward.7} parent=0 // pred_fallthru
    _
  // Predicated region
  $region14: #{deit_forward.7} parent=0 // pred_check
    _
  $region15: #{deit_forward.7} parent=0 // pred_check_branch
    %19 = sbr.rel (0) target = $region17
  $region16: #{deit_forward.7} parent=0 // pred_region
    _
  $region17: #{deit_forward.7} parent=0 // pred_fallthru
    _
  // Predicated region
  $region18: #{deit_forward.7} parent=0 // pred_check
    _
  $region19: #{deit_forward.7} parent=0 // pred_check_branch
    %21 = sbr.rel (0) target = $region21
  $region20: #{deit_forward.7} parent=0 // pred_region
    _
  $region21: #{deit_forward.7} parent=0 // pred_fallthru
    _
  // Predicated region
  $region22: #{deit_forward.7} parent=0 // pred_check
    _
  $region23: #{deit_forward.7} parent=0 // pred_check_branch
    %23 = sbr.rel (0) target = $region25
  $region24: #{deit_forward.7} parent=0 // pred_region
    _
  $region25: #{deit_forward.7} parent=0 // pred_fallthru
    _
  // Predicated region
  $region26: #{deit_forward.7} parent=0 // pred_check
    _
  $region27: #{deit_forward.7} parent=0 // pred_check_branch
    %25 = sbr.rel (0) target = $region29
  $region28: #{deit_forward.7} parent=0 // pred_region
    _
  $region29: #{deit_forward.7} parent=0 // pred_fallthru
    _
  %v27 = vld [vmem:[%s0] sm:$0xff]
  %v28 = vld [vmem:[%s1] sm:$0x1]
  %v29 = vld [vmem:[%s2] sm:$0x1]
  %30 = vadd.xlane.f32.xlu0 %v27
  %v31 = vpop.xlane.xlu0 %30
  %v32 = vrcp.pop 128.0
  %v33 = vmul.f32 %v31, %v32
  %v34 = vsub.f32 %v27, %v33
  %v35 = vmul.f32 %v34, %v34
  %36 = vadd.xlane.f32.xlu0 %v35
  %v37 = vpop.xlane.xlu0 %36
  %v38 = vmul.f32 %v37, %v32
  %v39 = vadd.f32 %v38, 1e-06
  %v40 = vrsqrt.pop %v39
  %v41 = vmul.f32 %v34, %v40
  %v43 = vlaneseq
  %v44 = vshrl.u32 %v43, 7
  %v45 = vsub.s32 0, %v44
  %v46 = vrot.slane %v28, %v45
  %v48 = vmul.f32 %v41, %v46
  %v50 = vlaneseq
  %v51 = vshrl.u32 %v50, 7
  %v52 = vsub.s32 0, %v51
  %v53 = vrot.slane %v29, %v52
  %v55 = vadd.f32 %v48, %v53
  %v56 = vpack.c.bf16 %v55, %v55
  %v57 = vld [vmem:[%s3] sm:$0xff]
  %v58 = vld [vmem:[%s3 + $0x8] sm:$0xff]
  %v59 = vld [vmem:[%s3 + $0x10] sm:$0xff]
  %v60 = vld [vmem:[%s3 + $0x18] sm:$0xff]
  %v61 = vld [vmem:[%s3 + $0x20] sm:$0xff]
  %v62 = vld [vmem:[%s3 + $0x28] sm:$0xff]
  %v63 = vld [vmem:[%s3 + $0x30] sm:$0xff]
  %v64 = vld [vmem:[%s3 + $0x38] sm:$0xff]
  %v65 = vld [vmem:[%s3 + $0x40] sm:$0xff]
  %v66 = vld [vmem:[%s3 + $0x48] sm:$0xff]
  %v67 = vld [vmem:[%s3 + $0x50] sm:$0xff]
  %v68 = vld [vmem:[%s3 + $0x58] sm:$0xff]
  %v69 = vld [vmem:[%s3 + $0x60] sm:$0xff]
  %v70 = vld [vmem:[%s3 + $0x68] sm:$0xff]
  %v71 = vld [vmem:[%s3 + $0x70] sm:$0xff]
  %v72 = vld [vmem:[%s3 + $0x78] sm:$0xff]
  %v73 = vld [vmem:[%s3 + $0x80] sm:$0xff]
  %v74 = vld [vmem:[%s3 + $0x88] sm:$0xff]
  %v75 = vld [vmem:[%s3 + $0x90] sm:$0xff]
  %v76 = vld [vmem:[%s3 + $0x98] sm:$0xff]
  %v77 = vld [vmem:[%s3 + $0xa0] sm:$0xff]
  %v78 = vld [vmem:[%s3 + $0xa8] sm:$0xff]
  %v79 = vld [vmem:[%s3 + $0xb0] sm:$0xff]
  %v80 = vld [vmem:[%s3 + $0xb8] sm:$0xff]
  %v81 = vld [vmem:[%s3 + $0xc0] sm:$0xff]
  %v82 = vld [vmem:[%s3 + $0xc8] sm:$0xff]
  %v83 = vld [vmem:[%s3 + $0xd0] sm:$0xff]
  %v84 = vld [vmem:[%s3 + $0xd8] sm:$0xff]
  %v85 = vld [vmem:[%s3 + $0xe0] sm:$0xff]
  %v86 = vld [vmem:[%s3 + $0xe8] sm:$0xff]
  %v87 = vld [vmem:[%s3 + $0xf0] sm:$0xff]
  %v88 = vld [vmem:[%s3 + $0xf8] sm:$0xff]
  %v89 = vld [vmem:[%s3 + $0x100] sm:$0xff]
  %v90 = vld [vmem:[%s3 + $0x108] sm:$0xff]
  %v91 = vld [vmem:[%s3 + $0x110] sm:$0xff]
  %v92 = vld [vmem:[%s3 + $0x118] sm:$0xff]
  %v93 = vld [vmem:[%s3 + $0x120] sm:$0xff]
  %v94 = vld [vmem:[%s3 + $0x128] sm:$0xff]
  %v95 = vld [vmem:[%s3 + $0x130] sm:$0xff]
  %v96 = vld [vmem:[%s3 + $0x138] sm:$0xff]
  %v97 = vld [vmem:[%s3 + $0x140] sm:$0xff]
  %v98 = vld [vmem:[%s3 + $0x148] sm:$0xff]
  %v99 = vld [vmem:[%s3 + $0x150] sm:$0xff]
  %v100 = vld [vmem:[%s3 + $0x158] sm:$0xff]
  %v101 = vld [vmem:[%s3 + $0x160] sm:$0xff]
  %v102 = vld [vmem:[%s3 + $0x168] sm:$0xff]
  %v103 = vld [vmem:[%s3 + $0x170] sm:$0xff]
  %v104 = vld [vmem:[%s3 + $0x178] sm:$0xff]
  %v105 = vld [vmem:[%s3 + $0x180] sm:$0xff]
  %v106 = vld [vmem:[%s3 + $0x188] sm:$0xff]
  %v107 = vld [vmem:[%s3 + $0x190] sm:$0xff]
  %v108 = vld [vmem:[%s3 + $0x198] sm:$0xff]
  %v109 = vld [vmem:[%s3 + $0x1a0] sm:$0xff]
  %v110 = vld [vmem:[%s3 + $0x1a8] sm:$0xff]
  %v111 = vld [vmem:[%s3 + $0x1b0] sm:$0xff]
  %v112 = vld [vmem:[%s3 + $0x1b8] sm:$0xff]
  %v113 = vld [vmem:[%s3 + $0x1c0] sm:$0xff]
  %v114 = vld [vmem:[%s3 + $0x1c8] sm:$0xff]
  %v115 = vld [vmem:[%s3 + $0x1d0] sm:$0xff]
  %v116 = vld [vmem:[%s3 + $0x1d8] sm:$0xff]
  %v117 = vld [vmem:[%s3 + $0x1e0] sm:$0xff]
  %v118 = vld [vmem:[%s3 + $0x1e8] sm:$0xff]
  %v119 = vld [vmem:[%s3 + $0x1f0] sm:$0xff]
  %v120 = vld [vmem:[%s3 + $0x1f8] sm:$0xff]
  %v121 = vld [vmem:[%s4] sm:$0xff]
  %v123 = vlaneseq
  %v124 = vshrl.u32 %v123, 7
  %v125 = vsub.s32 0, %v124
  %v126 = vrot.slane %v121, %v125
  %v127 = vlaneseq
  %v128 = vshrl.u32 %v127, 7
  %v129 = vsub.s32 1, %v128
  %v130 = vrot.slane %v121, %v129
  %v131 = vlaneseq
  %v132 = vshrl.u32 %v131, 7
  %v133 = vsub.s32 2, %v132
  %v134 = vrot.slane %v121, %v133
  %v135 = vlaneseq
  %v136 = vshrl.u32 %v135, 7
  %v137 = vsub.s32 3, %v136
  %v138 = vrot.slane %v121, %v137
  %v139 = vlaneseq
  %v140 = vshrl.u32 %v139, 7
  %v141 = vsub.s32 4, %v140
  %v142 = vrot.slane %v121, %v141
  %v143 = vlaneseq
  %v144 = vshrl.u32 %v143, 7
  %v145 = vsub.s32 5, %v144
  %v146 = vrot.slane %v121, %v145
  %v147 = vlaneseq
  %v148 = vshrl.u32 %v147, 7
  %v149 = vsub.s32 6, %v148
  %v150 = vrot.slane %v121, %v149
  %v151 = vlaneseq
  %v152 = vshrl.u32 %v151, 7
  %v153 = vsub.s32 7, %v152
  %v154 = vrot.slane %v121, %v153
  %v227 = vunpack.c.l.b16 %v57
  %v228 = vunpack.c.h.b16 %v57
  %v229 = vunpack.c.l.b16 %v58
  %v230 = vunpack.c.h.b16 %v58
  %v231 = vunpack.c.l.b16 %v59
  %v232 = vunpack.c.h.b16 %v59
  %v233 = vunpack.c.l.b16 %v60
  %v234 = vunpack.c.h.b16 %v60
  %v235 = vunpack.c.l.b16 %v61
  %v236 = vunpack.c.h.b16 %v61
  %v237 = vunpack.c.l.b16 %v62
  %v238 = vunpack.c.h.b16 %v62
  %v239 = vunpack.c.l.b16 %v63
  %v240 = vunpack.c.h.b16 %v63
  %v241 = vunpack.c.l.b16 %v64
  %v242 = vunpack.c.h.b16 %v64
  %v243 = vunpack.c.l.b16 %v65
  %v244 = vunpack.c.h.b16 %v65
  %v245 = vunpack.c.l.b16 %v66
  %v246 = vunpack.c.h.b16 %v66
  %v247 = vunpack.c.l.b16 %v67
  %v248 = vunpack.c.h.b16 %v67
  %v249 = vunpack.c.l.b16 %v68
  %v250 = vunpack.c.h.b16 %v68
  %v251 = vunpack.c.l.b16 %v69
  %v252 = vunpack.c.h.b16 %v69
  %v253 = vunpack.c.l.b16 %v70
  %v254 = vunpack.c.h.b16 %v70
  %v255 = vunpack.c.l.b16 %v71
  %v256 = vunpack.c.h.b16 %v71
  %v257 = vunpack.c.l.b16 %v72
  %v258 = vunpack.c.h.b16 %v72
  %v259 = vunpack.c.l.b16 %v73
  %v260 = vunpack.c.h.b16 %v73
  %v261 = vunpack.c.l.b16 %v74
  %v262 = vunpack.c.h.b16 %v74
  %v263 = vunpack.c.l.b16 %v75
  %v264 = vunpack.c.h.b16 %v75
  %v265 = vunpack.c.l.b16 %v76
  %v266 = vunpack.c.h.b16 %v76
  %v267 = vunpack.c.l.b16 %v77
  %v268 = vunpack.c.h.b16 %v77
  %v269 = vunpack.c.l.b16 %v78
  %v270 = vunpack.c.h.b16 %v78
  %v271 = vunpack.c.l.b16 %v79
  %v272 = vunpack.c.h.b16 %v79
  %v273 = vunpack.c.l.b16 %v80
  %v274 = vunpack.c.h.b16 %v80
  %v275 = vunpack.c.l.b16 %v81
  %v276 = vunpack.c.h.b16 %v81
  %v277 = vunpack.c.l.b16 %v82
  %v278 = vunpack.c.h.b16 %v82
  %v279 = vunpack.c.l.b16 %v83
  %v280 = vunpack.c.h.b16 %v83
  %v281 = vunpack.c.l.b16 %v84
  %v282 = vunpack.c.h.b16 %v84
  %v283 = vunpack.c.l.b16 %v85
  %v284 = vunpack.c.h.b16 %v85
  %v285 = vunpack.c.l.b16 %v86
  %v286 = vunpack.c.h.b16 %v86
  %v287 = vunpack.c.l.b16 %v87
  %v288 = vunpack.c.h.b16 %v87
  %v289 = vunpack.c.l.b16 %v88
  %v290 = vunpack.c.h.b16 %v88
  %v291 = vunpack.c.l.b16 %v89
  %v292 = vunpack.c.h.b16 %v89
  %v293 = vunpack.c.l.b16 %v90
  %v294 = vunpack.c.h.b16 %v90
  %v295 = vunpack.c.l.b16 %v91
  %v296 = vunpack.c.h.b16 %v91
  %v297 = vunpack.c.l.b16 %v92
  %v298 = vunpack.c.h.b16 %v92
  %v299 = vunpack.c.l.b16 %v93
  %v300 = vunpack.c.h.b16 %v93
  %v301 = vunpack.c.l.b16 %v94
  %v302 = vunpack.c.h.b16 %v94
  %v303 = vunpack.c.l.b16 %v95
  %v304 = vunpack.c.h.b16 %v95
  %v305 = vunpack.c.l.b16 %v96
  %v306 = vunpack.c.h.b16 %v96
  %v307 = vunpack.c.l.b16 %v97
  %v308 = vunpack.c.h.b16 %v97
  %v309 = vunpack.c.l.b16 %v98
  %v310 = vunpack.c.h.b16 %v98
  %v311 = vunpack.c.l.b16 %v99
  %v312 = vunpack.c.h.b16 %v99
  %v313 = vunpack.c.l.b16 %v100
  %v314 = vunpack.c.h.b16 %v100
  %v315 = vunpack.c.l.b16 %v101
  %v316 = vunpack.c.h.b16 %v101
  %v317 = vunpack.c.l.b16 %v102
  %v318 = vunpack.c.h.b16 %v102
  %v319 = vunpack.c.l.b16 %v103
  %v320 = vunpack.c.h.b16 %v103
  %v321 = vunpack.c.l.b16 %v104
  %v322 = vunpack.c.h.b16 %v104
  %v323 = vunpack.c.l.b16 %v105
  %v324 = vunpack.c.h.b16 %v105
  %v325 = vunpack.c.l.b16 %v106
  %v326 = vunpack.c.h.b16 %v106
  %v327 = vunpack.c.l.b16 %v107
  %v328 = vunpack.c.h.b16 %v107
  %v329 = vunpack.c.l.b16 %v108
  %v330 = vunpack.c.h.b16 %v108
  %v331 = vunpack.c.l.b16 %v109
  %v332 = vunpack.c.h.b16 %v109
  %v333 = vunpack.c.l.b16 %v110
  %v334 = vunpack.c.h.b16 %v110
  %v335 = vunpack.c.l.b16 %v111
  %v336 = vunpack.c.h.b16 %v111
  %v337 = vunpack.c.l.b16 %v112
  %v338 = vunpack.c.h.b16 %v112
  %v339 = vunpack.c.l.b16 %v113
  %v340 = vunpack.c.h.b16 %v113
  %v341 = vunpack.c.l.b16 %v114
  %v342 = vunpack.c.h.b16 %v114
  %v343 = vunpack.c.l.b16 %v115
  %v344 = vunpack.c.h.b16 %v115
  %v345 = vunpack.c.l.b16 %v116
  %v346 = vunpack.c.h.b16 %v116
  %v347 = vunpack.c.l.b16 %v117
  %v348 = vunpack.c.h.b16 %v117
  %v349 = vunpack.c.l.b16 %v118
  %v350 = vunpack.c.h.b16 %v118
  %v351 = vunpack.c.l.b16 %v119
  %v352 = vunpack.c.h.b16 %v119
  %v353 = vunpack.c.l.b16 %v120
  %v354 = vunpack.c.h.b16 %v120
  %v355 = vpack.c.b16 %v235, %v227
  %v356 = vpack.c.b16 %v236, %v228
  %v357 = vpack.c.b16 %v237, %v229
  %v358 = vpack.c.b16 %v238, %v230
  %v359 = vpack.c.b16 %v239, %v231
  %v360 = vpack.c.b16 %v240, %v232
  %v361 = vpack.c.b16 %v241, %v233
  %v362 = vpack.c.b16 %v242, %v234
  %v363 = vpack.c.b16 %v251, %v243
  %v364 = vpack.c.b16 %v252, %v244
  %v365 = vpack.c.b16 %v253, %v245
  %v366 = vpack.c.b16 %v254, %v246
  %v367 = vpack.c.b16 %v255, %v247
  %v368 = vpack.c.b16 %v256, %v248
  %v369 = vpack.c.b16 %v257, %v249
  %v370 = vpack.c.b16 %v258, %v250
  %v371 = vpack.c.b16 %v267, %v259
  %v372 = vpack.c.b16 %v268, %v260
  %v373 = vpack.c.b16 %v269, %v261
  %v374 = vpack.c.b16 %v270, %v262
  %v375 = vpack.c.b16 %v271, %v263
  %v376 = vpack.c.b16 %v272, %v264
  %v377 = vpack.c.b16 %v273, %v265
  %v378 = vpack.c.b16 %v274, %v266
  %v379 = vpack.c.b16 %v283, %v275
  %v380 = vpack.c.b16 %v284, %v276
  %v381 = vpack.c.b16 %v285, %v277
  %v382 = vpack.c.b16 %v286, %v278
  %v383 = vpack.c.b16 %v287, %v279
  %v384 = vpack.c.b16 %v288, %v280
  %v385 = vpack.c.b16 %v289, %v281
  %v386 = vpack.c.b16 %v290, %v282
  %v387 = vpack.c.b16 %v299, %v291
  %v388 = vpack.c.b16 %v300, %v292
  %v389 = vpack.c.b16 %v301, %v293
  %v390 = vpack.c.b16 %v302, %v294
  %v391 = vpack.c.b16 %v303, %v295
  %v392 = vpack.c.b16 %v304, %v296
  %v393 = vpack.c.b16 %v305, %v297
  %v394 = vpack.c.b16 %v306, %v298
  %v395 = vpack.c.b16 %v315, %v307
  %v396 = vpack.c.b16 %v316, %v308
  %v397 = vpack.c.b16 %v317, %v309
  %v398 = vpack.c.b16 %v318, %v310
  %v399 = vpack.c.b16 %v319, %v311
  %v400 = vpack.c.b16 %v320, %v312
  %v401 = vpack.c.b16 %v321, %v313
  %v402 = vpack.c.b16 %v322, %v314
  %v403 = vpack.c.b16 %v331, %v323
  %v404 = vpack.c.b16 %v332, %v324
  %v405 = vpack.c.b16 %v333, %v325
  %v406 = vpack.c.b16 %v334, %v326
  %v407 = vpack.c.b16 %v335, %v327
  %v408 = vpack.c.b16 %v336, %v328
  %v409 = vpack.c.b16 %v337, %v329
  %v410 = vpack.c.b16 %v338, %v330
  %v411 = vpack.c.b16 %v347, %v339
  %v412 = vpack.c.b16 %v348, %v340
  %v413 = vpack.c.b16 %v349, %v341
  %v414 = vpack.c.b16 %v350, %v342
  %v415 = vpack.c.b16 %v351, %v343
  %v416 = vpack.c.b16 %v352, %v344
  %v417 = vpack.c.b16 %v353, %v345
  %v418 = vpack.c.b16 %v354, %v346
  %483 = vmatprep.subr.bf16.mxu0 %v412
  %484 = vmatpush1.bf16.msra.mxu0 %v411
  %485 = vmatprep.subr.bf16.mxu0 %v404
  %486 = vmatpush1.bf16.msra.mxu0 %v403
  %487 = vmatprep.subr.bf16.mxu0 %v396
  %488 = vmatpush1.bf16.msra.mxu0 %v395
  %489 = vmatprep.subr.bf16.mxu0 %v388
  %490 = vmatpush1.bf16.msra.mxu0 %v387
  %491 = vmatprep.subr.bf16.mxu0 %v380
  %492 = vmatpush1.bf16.msra.mxu0 %v379
  %493 = vmatprep.subr.bf16.mxu0 %v372
  %494 = vmatpush1.bf16.msra.mxu0 %v371
  %495 = vmatprep.subr.bf16.mxu0 %v364
  %496 = vmatpush1.bf16.msra.mxu0 %v363
  %497 = vmatprep.subr.bf16.mxu0 %v356
  %498 = vmatpush1.bf16.msra.mxu0 %v355
  %499 = vmatprep.subr.bf16.mxu0 0
  %500 = vmatpush2.bf16.msra.mxu0 0
  %501 = vmatprep.subr.bf16.mxu0 0
  %502 = vmatpush2.bf16.msra.mxu0 0
  %503 = vmatprep.subr.bf16.mxu0 0
  %504 = vmatpush2.bf16.msra.mxu0 0
  %505 = vmatprep.subr.bf16.mxu0 0
  %506 = vmatpush2.bf16.msra.mxu0 0
  %507 = vmatprep.subr.bf16.mxu0 0
  %508 = vmatpush2.bf16.msra.mxu0 0
  %509 = vmatprep.subr.bf16.mxu0 0
  %510 = vmatpush2.bf16.msra.mxu0 0
  %511 = vmatprep.subr.bf16.mxu0 0
  %512 = vmatpush2.bf16.msra.mxu0 0
  %513 = vmatprep.subr.bf16.mxu0 0
  %514 = vmatpush2.bf16.msra.mxu0 0
  %515 = vmatprep.mubr.bf16.mxu0 0
  %516 = vmatmul.mubr.bf16.gmra.mxu0 %v56
  %v517 = vpop.f32.mrf.mxu0
  %v518 = vadd.f32 %v126, %v517
  %v519 = vpop.f32.mrf.mxu0
  %v520 = vadd.f32 %v130, %v519
  %v521 = vpop.f32.mrf.mxu0
  %v522 = vpop.f32.mrf.mxu0
  %523 = vdwg.mxu0
  %524 = vmatprep.subr.bf16.mxu0 %v414
  %525 = vmatpush1.bf16.msra.mxu0 %v413
  %526 = vmatprep.subr.bf16.mxu0 %v406
  %527 = vmatpush1.bf16.msra.mxu0 %v405
  %528 = vmatprep.subr.bf16.mxu0 %v398
  %529 = vmatpush1.bf16.msra.mxu0 %v397
  %530 = vmatprep.subr.bf16.mxu0 %v390
  %531 = vmatpush1.bf16.msra.mxu0 %v389
  %532 = vmatprep.subr.bf16.mxu0 %v382
  %533 = vmatpush1.bf16.msra.mxu0 %v381
  %534 = vmatprep.subr.bf16.mxu0 %v374
  %535 = vmatpush1.bf16.msra.mxu0 %v373
  %536 = vmatprep.subr.bf16.mxu0 %v366
  %537 = vmatpush1.bf16.msra.mxu0 %v365
  %538 = vmatprep.subr.bf16.mxu0 %v358
  %539 = vmatpush1.bf16.msra.mxu0 %v357
  %540 = vmatprep.subr.bf16.mxu0 0
  %541 = vmatpush2.bf16.msra.mxu0 0
  %542 = vmatprep.subr.bf16.mxu0 0
  %543 = vmatpush2.bf16.msra.mxu0 0
  %544 = vmatprep.subr.bf16.mxu0 0
  %545 = vmatpush2.bf16.msra.mxu0 0
  %546 = vmatprep.subr.bf16.mxu0 0
  %547 = vmatpush2.bf16.msra.mxu0 0
  %548 = vmatprep.subr.bf16.mxu0 0
  %549 = vmatpush2.bf16.msra.mxu0 0
  %550 = vmatprep.subr.bf16.mxu0 0
  %551 = vmatpush2.bf16.msra.mxu0 0
  %552 = vmatprep.subr.bf16.mxu0 0
  %553 = vmatpush2.bf16.msra.mxu0 0
  %554 = vmatprep.subr.bf16.mxu0 0
  %555 = vmatpush2.bf16.msra.mxu0 0
  %556 = vmatprep.mubr.bf16.mxu0 0
  %557 = vmatmul.mubr.bf16.gmra.mxu0 %v56
  %v558 = vpop.f32.mrf.mxu0
  %v559 = vadd.f32 %v134, %v558
  %v560 = vpop.f32.mrf.mxu0
  %v561 = vadd.f32 %v138, %v560
  %v562 = vpop.f32.mrf.mxu0
  %v563 = vpop.f32.mrf.mxu0
  %564 = vdwg.mxu0
  %565 = vmatprep.subr.bf16.mxu0 %v416
  %566 = vmatpush1.bf16.msra.mxu0 %v415
  %567 = vmatprep.subr.bf16.mxu0 %v408
  %568 = vmatpush1.bf16.msra.mxu0 %v407
  %569 = vmatprep.subr.bf16.mxu0 %v400
  %570 = vmatpush1.bf16.msra.mxu0 %v399
  %571 = vmatprep.subr.bf16.mxu0 %v392
  %572 = vmatpush1.bf16.msra.mxu0 %v391
  %573 = vmatprep.subr.bf16.mxu0 %v384
  %574 = vmatpush1.bf16.msra.mxu0 %v383
  %575 = vmatprep.subr.bf16.mxu0 %v376
  %576 = vmatpush1.bf16.msra.mxu0 %v375
  %577 = vmatprep.subr.bf16.mxu0 %v368
  %578 = vmatpush1.bf16.msra.mxu0 %v367
  %579 = vmatprep.subr.bf16.mxu0 %v360
  %580 = vmatpush1.bf16.msra.mxu0 %v359
  %581 = vmatprep.subr.bf16.mxu0 0
  %582 = vmatpush2.bf16.msra.mxu0 0
  %583 = vmatprep.subr.bf16.mxu0 0
  %584 = vmatpush2.bf16.msra.mxu0 0
  %585 = vmatprep.subr.bf16.mxu0 0
  %586 = vmatpush2.bf16.msra.mxu0 0
  %587 = vmatprep.subr.bf16.mxu0 0
  %588 = vmatpush2.bf16.msra.mxu0 0
  %589 = vmatprep.subr.bf16.mxu0 0
  %590 = vmatpush2.bf16.msra.mxu0 0
  %591 = vmatprep.subr.bf16.mxu0 0
  %592 = vmatpush2.bf16.msra.mxu0 0
  %593 = vmatprep.subr.bf16.mxu0 0
  %594 = vmatpush2.bf16.msra.mxu0 0
  %595 = vmatprep.subr.bf16.mxu0 0
  %596 = vmatpush2.bf16.msra.mxu0 0
  %597 = vmatprep.mubr.bf16.mxu0 0
  %598 = vmatmul.mubr.bf16.gmra.mxu0 %v56
  %v599 = vpop.f32.mrf.mxu0
  %v600 = vadd.f32 %v142, %v599
  %v601 = vpop.f32.mrf.mxu0
  %v602 = vadd.f32 %v146, %v601
  %v603 = vpop.f32.mrf.mxu0
  %v604 = vpop.f32.mrf.mxu0
  %605 = vdwg.mxu0
  %606 = vmatprep.subr.bf16.mxu0 %v418
  %607 = vmatpush1.bf16.msra.mxu0 %v417
  %608 = vmatprep.subr.bf16.mxu0 %v410
  %609 = vmatpush1.bf16.msra.mxu0 %v409
  %610 = vmatprep.subr.bf16.mxu0 %v402
  %611 = vmatpush1.bf16.msra.mxu0 %v401
  %612 = vmatprep.subr.bf16.mxu0 %v394
  %613 = vmatpush1.bf16.msra.mxu0 %v393
  %614 = vmatprep.subr.bf16.mxu0 %v386
  %615 = vmatpush1.bf16.msra.mxu0 %v385
  %616 = vmatprep.subr.bf16.mxu0 %v378
  %617 = vmatpush1.bf16.msra.mxu0 %v377
  %618 = vmatprep.subr.bf16.mxu0 %v370
  %619 = vmatpush1.bf16.msra.mxu0 %v369
  %620 = vmatprep.subr.bf16.mxu0 %v362
  %621 = vmatpush1.bf16.msra.mxu0 %v361
  %622 = vmatprep.subr.bf16.mxu0 0
  %623 = vmatpush2.bf16.msra.mxu0 0
  %624 = vmatprep.subr.bf16.mxu0 0
  %625 = vmatpush2.bf16.msra.mxu0 0
  %626 = vmatprep.subr.bf16.mxu0 0
  %627 = vmatpush2.bf16.msra.mxu0 0
  %628 = vmatprep.subr.bf16.mxu0 0
  %629 = vmatpush2.bf16.msra.mxu0 0
  %630 = vmatprep.subr.bf16.mxu0 0
  %631 = vmatpush2.bf16.msra.mxu0 0
  %632 = vmatprep.subr.bf16.mxu0 0
  %633 = vmatpush2.bf16.msra.mxu0 0
  %634 = vmatprep.subr.bf16.mxu0 0
  %635 = vmatpush2.bf16.msra.mxu0 0
  %636 = vmatprep.subr.bf16.mxu0 0
  %637 = vmatpush2.bf16.msra.mxu0 0
  %638 = vmatprep.mubr.bf16.mxu0 0
  %639 = vmatmul.mubr.bf16.gmra.mxu0 %v56
  %v640 = vpop.f32.mrf.mxu0
  %v641 = vadd.f32 %v150, %v640
  %v642 = vpop.f32.mrf.mxu0
  %v643 = vadd.f32 %v154, %v642
  %v644 = vpop.f32.mrf.mxu0
  %v645 = vpop.f32.mrf.mxu0
  %646 = vdwg.mxu0
  %v647 = vpack.c.bf16 %v518, %v518
  %v648 = vpack.c.bf16 %v520, %v520
  %v649 = vpack.c.bf16 %v559, %v559
  %v650 = vpack.c.bf16 %v561, %v561
  %v651 = vpack.c.bf16 %v600, %v600
  %v652 = vpack.c.bf16 %v602, %v602
  %v653 = vpack.c.bf16 %v641, %v641
  %v654 = vpack.c.bf16 %v643, %v643
  %v655 = vld [vmem:[%s5] sm:$0xff]
  %v656 = vld [vmem:[%s5 + $0x8] sm:$0xff]
  %v657 = vld [vmem:[%s5 + $0x10] sm:$0xff]
  %v658 = vld [vmem:[%s5 + $0x18] sm:$0xff]
  %v659 = vld [vmem:[%s5 + $0x20] sm:$0xff]
  %v660 = vld [vmem:[%s5 + $0x28] sm:$0xff]
  %v661 = vld [vmem:[%s5 + $0x30] sm:$0xff]
  %v662 = vld [vmem:[%s5 + $0x38] sm:$0xff]
  %v663 = vld [vmem:[%s5 + $0x40] sm:$0xff]
  %v664 = vld [vmem:[%s5 + $0x48] sm:$0xff]
  %v665 = vld [vmem:[%s5 + $0x50] sm:$0xff]
  %v666 = vld [vmem:[%s5 + $0x58] sm:$0xff]
  %v667 = vld [vmem:[%s5 + $0x60] sm:$0xff]
  %v668 = vld [vmem:[%s5 + $0x68] sm:$0xff]
  %v669 = vld [vmem:[%s5 + $0x70] sm:$0xff]
  %v670 = vld [vmem:[%s5 + $0x78] sm:$0xff]
  %v671 = vld [vmem:[%s5 + $0x80] sm:$0xff]
  %v672 = vld [vmem:[%s5 + $0x88] sm:$0xff]
  %v673 = vld [vmem:[%s5 + $0x90] sm:$0xff]
  %v674 = vld [vmem:[%s5 + $0x98] sm:$0xff]
  %v675 = vld [vmem:[%s5 + $0xa0] sm:$0xff]
  %v676 = vld [vmem:[%s5 + $0xa8] sm:$0xff]
  %v677 = vld [vmem:[%s5 + $0xb0] sm:$0xff]
  %v678 = vld [vmem:[%s5 + $0xb8] sm:$0xff]
  %v679 = vld [vmem:[%s5 + $0xc0] sm:$0xff]
  %v680 = vld [vmem:[%s5 + $0xc8] sm:$0xff]
  %v681 = vld [vmem:[%s5 + $0xd0] sm:$0xff]
  %v682 = vld [vmem:[%s5 + $0xd8] sm:$0xff]
  %v683 = vld [vmem:[%s5 + $0xe0] sm:$0xff]
  %v684 = vld [vmem:[%s5 + $0xe8] sm:$0xff]
  %v685 = vld [vmem:[%s5 + $0xf0] sm:$0xff]
  %v686 = vld [vmem:[%s5 + $0xf8] sm:$0xff]
  %v687 = vld [vmem:[%s5 + $0x100] sm:$0xff]
  %v688 = vld [vmem:[%s5 + $0x108] sm:$0xff]
  %v689 = vld [vmem:[%s5 + $0x110] sm:$0xff]
  %v690 = vld [vmem:[%s5 + $0x118] sm:$0xff]
  %v691 = vld [vmem:[%s5 + $0x120] sm:$0xff]
  %v692 = vld [vmem:[%s5 + $0x128] sm:$0xff]
  %v693 = vld [vmem:[%s5 + $0x130] sm:$0xff]
  %v694 = vld [vmem:[%s5 + $0x138] sm:$0xff]
  %v695 = vld [vmem:[%s5 + $0x140] sm:$0xff]
  %v696 = vld [vmem:[%s5 + $0x148] sm:$0xff]
  %v697 = vld [vmem:[%s5 + $0x150] sm:$0xff]
  %v698 = vld [vmem:[%s5 + $0x158] sm:$0xff]
  %v699 = vld [vmem:[%s5 + $0x160] sm:$0xff]
  %v700 = vld [vmem:[%s5 + $0x168] sm:$0xff]
  %v701 = vld [vmem:[%s5 + $0x170] sm:$0xff]
  %v702 = vld [vmem:[%s5 + $0x178] sm:$0xff]
  %v703 = vld [vmem:[%s5 + $0x180] sm:$0xff]
  %v704 = vld [vmem:[%s5 + $0x188] sm:$0xff]
  %v705 = vld [vmem:[%s5 + $0x190] sm:$0xff]
  %v706 = vld [vmem:[%s5 + $0x198] sm:$0xff]
  %v707 = vld [vmem:[%s5 + $0x1a0] sm:$0xff]
  %v708 = vld [vmem:[%s5 + $0x1a8] sm:$0xff]
  %v709 = vld [vmem:[%s5 + $0x1b0] sm:$0xff]
  %v710 = vld [vmem:[%s5 + $0x1b8] sm:$0xff]
  %v711 = vld [vmem:[%s5 + $0x1c0] sm:$0xff]
  %v712 = vld [vmem:[%s5 + $0x1c8] sm:$0xff]
  %v713 = vld [vmem:[%s5 + $0x1d0] sm:$0xff]
  %v714 = vld [vmem:[%s5 + $0x1d8] sm:$0xff]
  %v715 = vld [vmem:[%s5 + $0x1e0] sm:$0xff]
  %v716 = vld [vmem:[%s5 + $0x1e8] sm:$0xff]
  %v717 = vld [vmem:[%s5 + $0x1f0] sm:$0xff]
  %v718 = vld [vmem:[%s5 + $0x1f8] sm:$0xff]
  %v719 = vld [vmem:[%s5 + $0x200] sm:$0xff]
  %v720 = vld [vmem:[%s5 + $0x208] sm:$0xff]
  %v721 = vld [vmem:[%s5 + $0x210] sm:$0xff]
  %v722 = vld [vmem:[%s5 + $0x218] sm:$0xff]
  %v723 = vld [vmem:[%s5 + $0x220] sm:$0xff]
  %v724 = vld [vmem:[%s5 + $0x228] sm:$0xff]
  %v725 = vld [vmem:[%s5 + $0x230] sm:$0xff]
  %v726 = vld [vmem:[%s5 + $0x238] sm:$0xff]
  %v727 = vld [vmem:[%s5 + $0x240] sm:$0xff]
  %v728 = vld [vmem:[%s5 + $0x248] sm:$0xff]
  %v729 = vld [vmem:[%s5 + $0x250] sm:$0xff]
  %v730 = vld [vmem:[%s5 + $0x258] sm:$0xff]
  %v731 = vld [vmem:[%s5 + $0x260] sm:$0xff]
  %v732 = vld [vmem:[%s5 + $0x268] sm:$0xff]
  %v733 = vld [vmem:[%s5 + $0x270] sm:$0xff]
  %v734 = vld [vmem:[%s5 + $0x278] sm:$0xff]
  %v735 = vld [vmem:[%s5 + $0x280] sm:$0xff]
  %v736 = vld [vmem:[%s5 + $0x288] sm:$0xff]
  %v737 = vld [vmem:[%s5 + $0x290] sm:$0xff]
  %v738 = vld [vmem:[%s5 + $0x298] sm:$0xff]
  %v739 = vld [vmem:[%s5 + $0x2a0] sm:$0xff]
  %v740 = vld [vmem:[%s5 + $0x2a8] sm:$0xff]
  %v741 = vld [vmem:[%s5 + $0x2b0] sm:$0xff]
  %v742 = vld [vmem:[%s5 + $0x2b8] sm:$0xff]
  %v743 = vld [vmem:[%s5 + $0x2c0] sm:$0xff]
  %v744 = vld [vmem:[%s5 + $0x2c8] sm:$0xff]
  %v745 = vld [vmem:[%s5 + $0x2d0] sm:$0xff]
  %v746 = vld [vmem:[%s5 + $0x2d8] sm:$0xff]
  %v747 = vld [vmem:[%s5 + $0x2e0] sm:$0xff]
  %v748 = vld [vmem:[%s5 + $0x2e8] sm:$0xff]
  %v749 = vld [vmem:[%s5 + $0x2f0] sm:$0xff]
  %v750 = vld [vmem:[%s5 + $0x2f8] sm:$0xff]
  %v751 = vld [vmem:[%s5 + $0x300] sm:$0xff]
  %v752 = vld [vmem:[%s5 + $0x308] sm:$0xff]
  %v753 = vld [vmem:[%s5 + $0x310] sm:$0xff]
  %v754 = vld [vmem:[%s5 + $0x318] sm:$0xff]
  %v755 = vld [vmem:[%s5 + $0x320] sm:$0xff]
  %v756 = vld [vmem:[%s5 + $0x328] sm:$0xff]
  %v757 = vld [vmem:[%s5 + $0x330] sm:$0xff]
  %v758 = vld [vmem:[%s5 + $0x338] sm:$0xff]
  %v759 = vld [vmem:[%s5 + $0x340] sm:$0xff]
  %v760 = vld [vmem:[%s5 + $0x348] sm:$0xff]
  %v761 = vld [vmem:[%s5 + $0x350] sm:$0xff]
  %v762 = vld [vmem:[%s5 + $0x358] sm:$0xff]
  %v763 = vld [vmem:[%s5 + $0x360] sm:$0xff]
  %v764 = vld [vmem:[%s5 + $0x368] sm:$0xff]
  %v765 = vld [vmem:[%s5 + $0x370] sm:$0xff]
  %v766 = vld [vmem:[%s5 + $0x378] sm:$0xff]
  %v767 = vld [vmem:[%s5 + $0x380] sm:$0xff]
  %v768 = vld [vmem:[%s5 + $0x388] sm:$0xff]
  %v769 = vld [vmem:[%s5 + $0x390] sm:$0xff]
  %v770 = vld [vmem:[%s5 + $0x398] sm:$0xff]
  %v771 = vld [vmem:[%s5 + $0x3a0] sm:$0xff]
  %v772 = vld [vmem:[%s5 + $0x3a8] sm:$0xff]
  %v773 = vld [vmem:[%s5 + $0x3b0] sm:$0xff]
  %v774 = vld [vmem:[%s5 + $0x3b8] sm:$0xff]
  %v775 = vld [vmem:[%s5 + $0x3c0] sm:$0xff]
  %v776 = vld [vmem:[%s5 + $0x3c8] sm:$0xff]
  %v777 = vld [vmem:[%s5 + $0x3d0] sm:$0xff]
  %v778 = vld [vmem:[%s5 + $0x3d8] sm:$0xff]
  %v779 = vld [vmem:[%s5 + $0x3e0] sm:$0xff]
  %v780 = vld [vmem:[%s5 + $0x3e8] sm:$0xff]
  %v781 = vld [vmem:[%s5 + $0x3f0] sm:$0xff]
  %v782 = vld [vmem:[%s5 + $0x3f8] sm:$0xff]
  %v783 = vld [vmem:[%s5 + $0x400] sm:$0xff]
  %v784 = vld [vmem:[%s5 + $0x408] sm:$0xff]
  %v785 = vld [vmem:[%s5 + $0x410] sm:$0xff]
  %v786 = vld [vmem:[%s5 + $0x418] sm:$0xff]
  %v787 = vld [vmem:[%s5 + $0x420] sm:$0xff]
  %v788 = vld [vmem:[%s5 + $0x428] sm:$0xff]
  %v789 = vld [vmem:[%s5 + $0x430] sm:$0xff]
  %v790 = vld [vmem:[%s5 + $0x438] sm:$0xff]
  %v791 = vld [vmem:[%s5 + $0x440] sm:$0xff]
  %v792 = vld [vmem:[%s5 + $0x448] sm:$0xff]
  %v793 = vld [vmem:[%s5 + $0x450] sm:$0xff]
  %v794 = vld [vmem:[%s5 + $0x458] sm:$0xff]
  %v795 = vld [vmem:[%s5 + $0x460] sm:$0xff]
  %v796 = vld [vmem:[%s5 + $0x468] sm:$0xff]
  %v797 = vld [vmem:[%s5 + $0x470] sm:$0xff]
  %v798 = vld [vmem:[%s5 + $0x478] sm:$0xff]
  %v799 = vld [vmem:[%s5 + $0x480] sm:$0xff]
  %v800 = vld [vmem:[%s5 + $0x488] sm:$0xff]
  %v801 = vld [vmem:[%s5 + $0x490] sm:$0xff]
  %v802 = vld [vmem:[%s5 + $0x498] sm:$0xff]
  %v803 = vld [vmem:[%s5 + $0x4a0] sm:$0xff]
  %v804 = vld [vmem:[%s5 + $0x4a8] sm:$0xff]
  %v805 = vld [vmem:[%s5 + $0x4b0] sm:$0xff]
  %v806 = vld [vmem:[%s5 + $0x4b8] sm:$0xff]
  %v807 = vld [vmem:[%s5 + $0x4c0] sm:$0xff]
  %v808 = vld [vmem:[%s5 + $0x4c8] sm:$0xff]
  %v809 = vld [vmem:[%s5 + $0x4d0] sm:$0xff]
  %v810 = vld [vmem:[%s5 + $0x4d8] sm:$0xff]
  %v811 = vld [vmem:[%s5 + $0x4e0] sm:$0xff]
  %v812 = vld [vmem:[%s5 + $0x4e8] sm:$0xff]
  %v813 = vld [vmem:[%s5 + $0x4f0] sm:$0xff]
  %v814 = vld [vmem:[%s5 + $0x4f8] sm:$0xff]
  %v815 = vld [vmem:[%s5 + $0x500] sm:$0xff]
  %v816 = vld [vmem:[%s5 + $0x508] sm:$0xff]
  %v817 = vld [vmem:[%s5 + $0x510] sm:$0xff]
  %v818 = vld [vmem:[%s5 + $0x518] sm:$0xff]
  %v819 = vld [vmem:[%s5 + $0x520] sm:$0xff]
  %v820 = vld [vmem:[%s5 + $0x528] sm:$0xff]
  %v821 = vld [vmem:[%s5 + $0x530] sm:$0xff]
  %v822 = vld [vmem:[%s5 + $0x538] sm:$0xff]
  %v823 = vld [vmem:[%s5 + $0x540] sm:$0xff]
  %v824 = vld [vmem:[%s5 + $0x548] sm:$0xff]
  %v825 = vld [vmem:[%s5 + $0x550] sm:$0xff]
  %v826 = vld [vmem:[%s5 + $0x558] sm:$0xff]
  %v827 = vld [vmem:[%s5 + $0x560] sm:$0xff]
  %v828 = vld [vmem:[%s5 + $0x568] sm:$0xff]
  %v829 = vld [vmem:[%s5 + $0x570] sm:$0xff]
  %v830 = vld [vmem:[%s5 + $0x578] sm:$0xff]
  %v831 = vld [vmem:[%s5 + $0x580] sm:$0xff]
  %v832 = vld [vmem:[%s5 + $0x588] sm:$0xff]
  %v833 = vld [vmem:[%s5 + $0x590] sm:$0xff]
  %v834 = vld [vmem:[%s5 + $0x598] sm:$0xff]
  %v835 = vld [vmem:[%s5 + $0x5a0] sm:$0xff]
  %v836 = vld [vmem:[%s5 + $0x5a8] sm:$0xff]
  %v837 = vld [vmem:[%s5 + $0x5b0] sm:$0xff]
  %v838 = vld [vmem:[%s5 + $0x5b8] sm:$0xff]
  %v839 = vld [vmem:[%s5 + $0x5c0] sm:$0xff]
  %v840 = vld [vmem:[%s5 + $0x5c8] sm:$0xff]
  %v841 = vld [vmem:[%s5 + $0x5d0] sm:$0xff]
  %v842 = vld [vmem:[%s5 + $0x5d8] sm:$0xff]
  %v843 = vld [vmem:[%s5 + $0x5e0] sm:$0xff]
  %v844 = vld [vmem:[%s5 + $0x5e8] sm:$0xff]
  %v845 = vld [vmem:[%s5 + $0x5f0] sm:$0xff]
  %v846 = vld [vmem:[%s5 + $0x5f8] sm:$0xff]
  %v847 = vld [vmem:[%s5 + $0x600] sm:$0xff]
  %v848 = vld [vmem:[%s5 + $0x608] sm:$0xff]
  %v849 = vld [vmem:[%s5 + $0x610] sm:$0xff]
  %v850 = vld [vmem:[%s5 + $0x618] sm:$0xff]
  %v851 = vld [vmem:[%s5 + $0x620] sm:$0xff]
  %v852 = vld [vmem:[%s5 + $0x628] sm:$0xff]
  %v853 = vld [vmem:[%s5 + $0x630] sm:$0xff]
  %v854 = vld [vmem:[%s5 + $0x638] sm:$0xff]
  %v855 = vld [vmem:[%s5 + $0x640] sm:$0xff]
  %v856 = vld [vmem:[%s5 + $0x648] sm:$0xff]
  %v857 = vld [vmem:[%s5 + $0x650] sm:$0xff]
  %v858 = vld [vmem:[%s5 + $0x658] sm:$0xff]
  %v859 = vld [vmem:[%s5 + $0x660] sm:$0xff]
  %v860 = vld [vmem:[%s5 + $0x668] sm:$0xff]
  %v861 = vld [vmem:[%s5 + $0x670] sm:$0xff]
  %v862 = vld [vmem:[%s5 + $0x678] sm:$0xff]
  %v863 = vld [vmem:[%s5 + $0x680] sm:$0xff]
  %v864 = vld [vmem:[%s5 + $0x688] sm:$0xff]
  %v865 = vld [vmem:[%s5 + $0x690] sm:$0xff]
  %v866 = vld [vmem:[%s5 + $0x698] sm:$0xff]
  %v867 = vld [vmem:[%s5 + $0x6a0] sm:$0xff]
  %v868 = vld [vmem:[%s5 + $0x6a8] sm:$0xff]
  %v869 = vld [vmem:[%s5 + $0x6b0] sm:$0xff]
  %v870 = vld [vmem:[%s5 + $0x6b8] sm:$0xff]
  %v871 = vld [vmem:[%s5 + $0x6c0] sm:$0xff]
  %v872 = vld [vmem:[%s5 + $0x6c8] sm:$0xff]
  %v873 = vld [vmem:[%s5 + $0x6d0] sm:$0xff]
  %v874 = vld [vmem:[%s5 + $0x6d8] sm:$0xff]
  %v875 = vld [vmem:[%s5 + $0x6e0] sm:$0xff]
  %v876 = vld [vmem:[%s5 + $0x6e8] sm:$0xff]
  %v877 = vld [vmem:[%s5 + $0x6f0] sm:$0xff]
  %v878 = vld [vmem:[%s5 + $0x6f8] sm:$0xff]
  %v879 = vld [vmem:[%s5 + $0x700] sm:$0xff]
  %v880 = vld [vmem:[%s5 + $0x708] sm:$0xff]
  %v881 = vld [vmem:[%s5 + $0x710] sm:$0xff]
  %v882 = vld [vmem:[%s5 + $0x718] sm:$0xff]
  %v883 = vld [vmem:[%s5 + $0x720] sm:$0xff]
  %v884 = vld [vmem:[%s5 + $0x728] sm:$0xff]
  %v885 = vld [vmem:[%s5 + $0x730] sm:$0xff]
  %v886 = vld [vmem:[%s5 + $0x738] sm:$0xff]
  %v887 = vld [vmem:[%s5 + $0x740] sm:$0xff]
  %v888 = vld [vmem:[%s5 + $0x748] sm:$0xff]
  %v889 = vld [vmem:[%s5 + $0x750] sm:$0xff]
  %v890 = vld [vmem:[%s5 + $0x758] sm:$0xff]
  %v891 = vld [vmem:[%s5 + $0x760] sm:$0xff]
  %v892 = vld [vmem:[%s5 + $0x768] sm:$0xff]
  %v893 = vld [vmem:[%s5 + $0x770] sm:$0xff]
  %v894 = vld [vmem:[%s5 + $0x778] sm:$0xff]
  %v895 = vld [vmem:[%s5 + $0x780] sm:$0xff]
  %v896 = vld [vmem:[%s5 + $0x788] sm:$0xff]
  %v897 = vld [vmem:[%s5 + $0x790] sm:$0xff]
  %v898 = vld [vmem:[%s5 + $0x798] sm:$0xff]
  %v899 = vld [vmem:[%s5 + $0x7a0] sm:$0xff]
  %v900 = vld [vmem:[%s5 + $0x7a8] sm:$0xff]
  %v901 = vld [vmem:[%s5 + $0x7b0] sm:$0xff]
  %v902 = vld [vmem:[%s5 + $0x7b8] sm:$0xff]
  %v903 = vld [vmem:[%s5 + $0x7c0] sm:$0xff]
  %v904 = vld [vmem:[%s5 + $0x7c8] sm:$0xff]
  %v905 = vld [vmem:[%s5 + $0x7d0] sm:$0xff]
  %v906 = vld [vmem:[%s5 + $0x7d8] sm:$0xff]
  %v907 = vld [vmem:[%s5 + $0x7e0] sm:$0xff]
  %v908 = vld [vmem:[%s5 + $0x7e8] sm:$0xff]
  %v909 = vld [vmem:[%s5 + $0x7f0] sm:$0xff]
  %v910 = vld [vmem:[%s5 + $0x7f8] sm:$0xff]
  %v911 = vld [vmem:[%s6] sm:$0xf]
  %v913 = vlaneseq
  %v914 = vshrl.u32 %v913, 7
  %v915 = vsub.s32 0, %v914
  %v916 = vrot.slane %v911, %v915
  %v917 = vlaneseq
  %v918 = vshrl.u32 %v917, 7
  %v919 = vsub.s32 1, %v918
  %v920 = vrot.slane %v911, %v919
  %v921 = vlaneseq
  %v922 = vshrl.u32 %v921, 7
  %v923 = vsub.s32 2, %v922
  %v924 = vrot.slane %v911, %v923
  %v925 = vlaneseq
  %v926 = vshrl.u32 %v925, 7
  %v927 = vsub.s32 3, %v926
  %v928 = vrot.slane %v911, %v927
  %v1189 = vunpack.c.l.b16 %v655
  %v1190 = vunpack.c.h.b16 %v655
  %v1191 = vunpack.c.l.b16 %v656
  %v1192 = vunpack.c.h.b16 %v656
  %v1193 = vunpack.c.l.b16 %v657
  %v1194 = vunpack.c.h.b16 %v657
  %v1195 = vunpack.c.l.b16 %v658
  %v1196 = vunpack.c.h.b16 %v658
  %v1197 = vunpack.c.l.b16 %v659
  %v1198 = vunpack.c.h.b16 %v659
  %v1199 = vunpack.c.l.b16 %v660
  %v1200 = vunpack.c.h.b16 %v660
  %v1201 = vunpack.c.l.b16 %v661
  %v1202 = vunpack.c.h.b16 %v661
  %v1203 = vunpack.c.l.b16 %v662
  %v1204 = vunpack.c.h.b16 %v662
  %v1205 = vunpack.c.l.b16 %v663
  %v1206 = vunpack.c.h.b16 %v663
  %v1207 = vunpack.c.l.b16 %v664
  %v1208 = vunpack.c.h.b16 %v664
  %v1209 = vunpack.c.l.b16 %v665
  %v1210 = vunpack.c.h.b16 %v665
  %v1211 = vunpack.c.l.b16 %v666
  %v1212 = vunpack.c.h.b16 %v666
  %v1213 = vunpack.c.l.b16 %v667
  %v1214 = vunpack.c.h.b16 %v667
  %v1215 = vunpack.c.l.b16 %v668
  %v1216 = vunpack.c.h.b16 %v668
  %v1217 = vunpack.c.l.b16 %v669
  %v1218 = vunpack.c.h.b16 %v669
  %v1219 = vunpack.c.l.b16 %v670
  %v1220 = vunpack.c.h.b16 %v670
  %v1221 = vunpack.c.l.b16 %v671
  %v1222 = vunpack.c.h.b16 %v671
  %v1223 = vunpack.c.l.b16 %v672
  %v1224 = vunpack.c.h.b16 %v672
  %v1225 = vunpack.c.l.b16 %v673
  %v1226 = vunpack.c.h.b16 %v673
  %v1227 = vunpack.c.l.b16 %v674
  %v1228 = vunpack.c.h.b16 %v674
  %v1229 = vunpack.c.l.b16 %v675
  %v1230 = vunpack.c.h.b16 %v675
  %v1231 = vunpack.c.l.b16 %v676
  %v1232 = vunpack.c.h.b16 %v676
  %v1233 = vunpack.c.l.b16 %v677
  %v1234 = vunpack.c.h.b16 %v677
  %v1235 = vunpack.c.l.b16 %v678
  %v1236 = vunpack.c.h.b16 %v678
  %v1237 = vunpack.c.l.b16 %v679
  %v1238 = vunpack.c.h.b16 %v679
  %v1239 = vunpack.c.l.b16 %v680
  %v1240 = vunpack.c.h.b16 %v680
  %v1241 = vunpack.c.l.b16 %v681
  %v1242 = vunpack.c.h.b16 %v681
  %v1243 = vunpack.c.l.b16 %v682
  %v1244 = vunpack.c.h.b16 %v682
  %v1245 = vunpack.c.l.b16 %v683
  %v1246 = vunpack.c.h.b16 %v683
  %v1247 = vunpack.c.l.b16 %v684
  %v1248 = vunpack.c.h.b16 %v684
  %v1249 = vunpack.c.l.b16 %v685
  %v1250 = vunpack.c.h.b16 %v685
  %v1251 = vunpack.c.l.b16 %v686
  %v1252 = vunpack.c.h.b16 %v686
  %v1253 = vunpack.c.l.b16 %v687
  %v1254 = vunpack.c.h.b16 %v687
  %v1255 = vunpack.c.l.b16 %v688
  %v1256 = vunpack.c.h.b16 %v688
  %v1257 = vunpack.c.l.b16 %v689
  %v1258 = vunpack.c.h.b16 %v689
  %v1259 = vunpack.c.l.b16 %v690
  %v1260 = vunpack.c.h.b16 %v690
  %v1261 = vunpack.c.l.b16 %v691
  %v1262 = vunpack.c.h.b16 %v691
  %v1263 = vunpack.c.l.b16 %v692
  %v1264 = vunpack.c.h.b16 %v692
  %v1265 = vunpack.c.l.b16 %v693
  %v1266 = vunpack.c.h.b16 %v693
  %v1267 = vunpack.c.l.b16 %v694
  %v1268 = vunpack.c.h.b16 %v694
  %v1269 = vunpack.c.l.b16 %v695
  %v1270 = vunpack.c.h.b16 %v695
  %v1271 = vunpack.c.l.b16 %v696
  %v1272 = vunpack.c.h.b16 %v696
  %v1273 = vunpack.c.l.b16 %v697
  %v1274 = vunpack.c.h.b16 %v697
  %v1275 = vunpack.c.l.b16 %v698
  %v1276 = vunpack.c.h.b16 %v698
  %v1277 = vunpack.c.l.b16 %v699
  %v1278 = vunpack.c.h.b16 %v699
  %v1279 = vunpack.c.l.b16 %v700
  %v1280 = vunpack.c.h.b16 %v700
  %v1281 = vunpack.c.l.b16 %v701
  %v1282 = vunpack.c.h.b16 %v701
  %v1283 = vunpack.c.l.b16 %v702
  %v1284 = vunpack.c.h.b16 %v702
  %v1285 = vunpack.c.l.b16 %v703
  %v1286 = vunpack.c.h.b16 %v703
  %v1287 = vunpack.c.l.b16 %v704
  %v1288 = vunpack.c.h.b16 %v704
  %v1289 = vunpack.c.l.b16 %v705
  %v1290 = vunpack.c.h.b16 %v705
  %v1291 = vunpack.c.l.b16 %v706
  %v1292 = vunpack.c.h.b16 %v706
  %v1293 = vunpack.c.l.b16 %v707
  %v1294 = vunpack.c.h.b16 %v707
  %v1295 = vunpack.c.l.b16 %v708
  %v1296 = vunpack.c.h.b16 %v708
  %v1297 = vunpack.c.l.b16 %v709
  %v1298 = vunpack.c.h.b16 %v709
  %v1299 = vunpack.c.l.b16 %v710
  %v1300 = vunpack.c.h.b16 %v710
  %v1301 = vunpack.c.l.b16 %v711
  %v1302 = vunpack.c.h.b16 %v711
  %v1303 = vunpack.c.l.b16 %v712
  %v1304 = vunpack.c.h.b16 %v712
  %v1305 = vunpack.c.l.b16 %v713
  %v1306 = vunpack.c.h.b16 %v713
  %v1307 = vunpack.c.l.b16 %v714
  %v1308 = vunpack.c.h.b16 %v714
  %v1309 = vunpack.c.l.b16 %v715
  %v1310 = vunpack.c.h.b16 %v715
  %v1311 = vunpack.c.l.b16 %v716
  %v1312 = vunpack.c.h.b16 %v716
  %v1313 = vunpack.c.l.b16 %v717
  %v1314 = vunpack.c.h.b16 %v717
  %v1315 = vunpack.c.l.b16 %v718
  %v1316 = vunpack.c.h.b16 %v718
  %v1317 = vunpack.c.l.b16 %v719
  %v1318 = vunpack.c.h.b16 %v719
  %v1319 = vunpack.c.l.b16 %v720
  %v1320 = vunpack.c.h.b16 %v720
  %v1321 = vunpack.c.l.b16 %v721
  %v1322 = vunpack.c.h.b16 %v721
  %v1323 = vunpack.c.l.b16 %v722
  %v1324 = vunpack.c.h.b16 %v722
  %v1325 = vunpack.c.l.b16 %v723
  %v1326 = vunpack.c.h.b16 %v723
  %v1327 = vunpack.c.l.b16 %v724
  %v1328 = vunpack.c.h.b16 %v724
  %v1329 = vunpack.c.l.b16 %v725
  %v1330 = vunpack.c.h.b16 %v725
  %v1331 = vunpack.c.l.b16 %v726
  %v1332 = vunpack.c.h.b16 %v726
  %v1333 = vunpack.c.l.b16 %v727
  %v1334 = vunpack.c.h.b16 %v727
  %v1335 = vunpack.c.l.b16 %v728
  %v1336 = vunpack.c.h.b16 %v728
  %v1337 = vunpack.c.l.b16 %v729
  %v1338 = vunpack.c.h.b16 %v729
  %v1339 = vunpack.c.l.b16 %v730
  %v1340 = vunpack.c.h.b16 %v730
  %v1341 = vunpack.c.l.b16 %v731
  %v1342 = vunpack.c.h.b16 %v731
  %v1343 = vunpack.c.l.b16 %v732
  %v1344 = vunpack.c.h.b16 %v732
  %v1345 = vunpack.c.l.b16 %v733
  %v1346 = vunpack.c.h.b16 %v733
  %v1347 = vunpack.c.l.b16 %v734
  %v1348 = vunpack.c.h.b16 %v734
  %v1349 = vunpack.c.l.b16 %v735
  %v1350 = vunpack.c.h.b16 %v735
  %v1351 = vunpack.c.l.b16 %v736
  %v1352 = vunpack.c.h.b16 %v736
  %v1353 = vunpack.c.l.b16 %v737
  %v1354 = vunpack.c.h.b16 %v737
  %v1355 = vunpack.c.l.b16 %v738
  %v1356 = vunpack.c.h.b16 %v738
  %v1357 = vunpack.c.l.b16 %v739
  %v1358 = vunpack.c.h.b16 %v739
  %v1359 = vunpack.c.l.b16 %v740
  %v1360 = vunpack.c.h.b16 %v740
  %v1361 = vunpack.c.l.b16 %v741
  %v1362 = vunpack.c.h.b16 %v741
  %v1363 = vunpack.c.l.b16 %v742
  %v1364 = vunpack.c.h.b16 %v742
  %v1365 = vunpack.c.l.b16 %v743
  %v1366 = vunpack.c.h.b16 %v743
  %v1367 = vunpack.c.l.b16 %v744
  %v1368 = vunpack.c.h.b16 %v744
  %v1369 = vunpack.c.l.b16 %v745
  %v1370 = vunpack.c.h.b16 %v745
  %v1371 = vunpack.c.l.b16 %v746
  %v1372 = vunpack.c.h.b16 %v746
  %v1373 = vunpack.c.l.b16 %v747
  %v1374 = vunpack.c.h.b16 %v747
  %v1375 = vunpack.c.l.b16 %v748
  %v1376 = vunpack.c.h.b16 %v748
  %v1377 = vunpack.c.l.b16 %v749
  %v1378 = vunpack.c.h.b16 %v749
  %v1379 = vunpack.c.l.b16 %v750
  %v1380 = vunpack.c.h.b16 %v750
  %v1381 = vunpack.c.l.b16 %v751
  %v1382 = vunpack.c.h.b16 %v751
  %v1383 = vunpack.c.l.b16 %v752
  %v1384 = vunpack.c.h.b16 %v752
  %v1385 = vunpack.c.l.b16 %v753
  %v1386 = vunpack.c.h.b16 %v753
  %v1387 = vunpack.c.l.b16 %v754
  %v1388 = vunpack.c.h.b16 %v754
  %v1389 = vunpack.c.l.b16 %v755
  %v1390 = vunpack.c.h.b16 %v755
  %v1391 = vunpack.c.l.b16 %v756
  %v1392 = vunpack.c.h.b16 %v756
  %v1393 = vunpack.c.l.b16 %v757
  %v1394 = vunpack.c.h.b16 %v757
  %v1395 = vunpack.c.l.b16 %v758
  %v1396 = vunpack.c.h.b16 %v758
  %v1397 = vunpack.c.l.b16 %v759
  %v1398 = vunpack.c.h.b16 %v759
  %v1399 = vunpack.c.l.b16 %v760
  %v1400 = vunpack.c.h.b16 %v760
  %v1401 = vunpack.c.l.b16 %v761
  %v1402 = vunpack.c.h.b16 %v761
  %v1403 = vunpack.c.l.b16 %v762
  %v1404 = vunpack.c.h.b16 %v762
  %v1405 = vunpack.c.l.b16 %v763
  %v1406 = vunpack.c.h.b16 %v763
  %v1407 = vunpack.c.l.b16 %v764
  %v1408 = vunpack.c.h.b16 %v764
  %v1409 = vunpack.c.l.b16 %v765
  %v1410 = vunpack.c.h.b16 %v765
  %v1411 = vunpack.c.l.b16 %v766
  %v1412 = vunpack.c.h.b16 %v766
  %v1413 = vunpack.c.l.b16 %v767
  %v1414 = vunpack.c.h.b16 %v767
  %v1415 = vunpack.c.l.b16 %v768
  %v1416 = vunpack.c.h.b16 %v768
  %v1417 = vunpack.c.l.b16 %v769
  %v1418 = vunpack.c.h.b16 %v769
  %v1419 = vunpack.c.l.b16 %v770
  %v1420 = vunpack.c.h.b16 %v770
  %v1421 = vunpack.c.l.b16 %v771
  %v1422 = vunpack.c.h.b16 %v771
  %v1423 = vunpack.c.l.b16 %v772
  %v1424 = vunpack.c.h.b16 %v772
  %v1425 = vunpack.c.l.b16 %v773
  %v1426 = vunpack.c.h.b16 %v773
  %v1427 = vunpack.c.l.b16 %v774
  %v1428 = vunpack.c.h.b16 %v774
  %v1429 = vunpack.c.l.b16 %v775
  %v1430 = vunpack.c.h.b16 %v775
  %v1431 = vunpack.c.l.b16 %v776
  %v1432 = vunpack.c.h.b16 %v776
  %v1433 = vunpack.c.l.b16 %v777
  %v1434 = vunpack.c.h.b16 %v777
  %v1435 = vunpack.c.l.b16 %v778
  %v1436 = vunpack.c.h.b16 %v778
  %v1437 = vunpack.c.l.b16 %v779
  %v1438 = vunpack.c.h.b16 %v779
  %v1439 = vunpack.c.l.b16 %v780
  %v1440 = vunpack.c.h.b16 %v780
  %v1441 = vunpack.c.l.b16 %v781
  %v1442 = vunpack.c.h.b16 %v781
  %v1443 = vunpack.c.l.b16 %v782
  %v1444 = vunpack.c.h.b16 %v782
  %v1445 = vunpack.c.l.b16 %v783
  %v1446 = vunpack.c.h.b16 %v783
  %v1447 = vunpack.c.l.b16 %v784
  %v1448 = vunpack.c.h.b16 %v784
  %v1449 = vunpack.c.l.b16 %v785
  %v1450 = vunpack.c.h.b16 %v785
  %v1451 = vunpack.c.l.b16 %v786
  %v1452 = vunpack.c.h.b16 %v786
  %v1453 = vunpack.c.l.b16 %v787
  %v1454 = vunpack.c.h.b16 %v787
  %v1455 = vunpack.c.l.b16 %v788
  %v1456 = vunpack.c.h.b16 %v788
  %v1457 = vunpack.c.l.b16 %v789
  %v1458 = vunpack.c.h.b16 %v789
  %v1459 = vunpack.c.l.b16 %v790
  %v1460 = vunpack.c.h.b16 %v790
  %v1461 = vunpack.c.l.b16 %v791
  %v1462 = vunpack.c.h.b16 %v791
  %v1463 = vunpack.c.l.b16 %v792
  %v1464 = vunpack.c.h.b16 %v792
  %v1465 = vunpack.c.l.b16 %v793
  %v1466 = vunpack.c.h.b16 %v793
  %v1467 = vunpack.c.l.b16 %v794
  %v1468 = vunpack.c.h.b16 %v794
  %v1469 = vunpack.c.l.b16 %v795
  %v1470 = vunpack.c.h.b16 %v795
  %v1471 = vunpack.c.l.b16 %v796
  %v1472 = vunpack.c.h.b16 %v796
  %v1473 = vunpack.c.l.b16 %v797
  %v1474 = vunpack.c.h.b16 %v797
  %v1475 = vunpack.c.l.b16 %v798
  %v1476 = vunpack.c.h.b16 %v798
  %v1477 = vunpack.c.l.b16 %v799
  %v1478 = vunpack.c.h.b16 %v799
  %v1479 = vunpack.c.l.b16 %v800
  %v1480 = vunpack.c.h.b16 %v800
  %v1481 = vunpack.c.l.b16 %v801
  %v1482 = vunpack.c.h.b16 %v801
  %v1483 = vunpack.c.l.b16 %v802
  %v1484 = vunpack.c.h.b16 %v802
  %v1485 = vunpack.c.l.b16 %v803
  %v1486 = vunpack.c.h.b16 %v803
  %v1487 = vunpack.c.l.b16 %v804
  %v1488 = vunpack.c.h.b16 %v804
  %v1489 = vunpack.c.l.b16 %v805
  %v1490 = vunpack.c.h.b16 %v805
  %v1491 = vunpack.c.l.b16 %v806
  %v1492 = vunpack.c.h.b16 %v806
  %v1493 = vunpack.c.l.b16 %v807
  %v1494 = vunpack.c.h.b16 %v807
  %v1495 = vunpack.c.l.b16 %v808
  %v1496 = vunpack.c.h.b16 %v808
  %v1497 = vunpack.c.l.b16 %v809
  %v1498 = vunpack.c.h.b16 %v809
  %v1499 = vunpack.c.l.b16 %v810
  %v1500 = vunpack.c.h.b16 %v810
  %v1501 = vunpack.c.l.b16 %v811
  %v1502 = vunpack.c.h.b16 %v811
  %v1503 = vunpack.c.l.b16 %v812
  %v1504 = vunpack.c.h.b16 %v812
  %v1505 = vunpack.c.l.b16 %v813
  %v1506 = vunpack.c.h.b16 %v813
  %v1507 = vunpack.c.l.b16 %v814
  %v1508 = vunpack.c.h.b16 %v814
  %v1509 = vunpack.c.l.b16 %v815
  %v1510 = vunpack.c.h.b16 %v815
  %v1511 = vunpack.c.l.b16 %v816
  %v1512 = vunpack.c.h.b16 %v816
  %v1513 = vunpack.c.l.b16 %v817
  %v1514 = vunpack.c.h.b16 %v817
  %v1515 = vunpack.c.l.b16 %v818
  %v1516 = vunpack.c.h.b16 %v818
  %v1517 = vunpack.c.l.b16 %v819
  %v1518 = vunpack.c.h.b16 %v819
  %v1519 = vunpack.c.l.b16 %v820
  %v1520 = vunpack.c.h.b16 %v820
  %v1521 = vunpack.c.l.b16 %v821
  %v1522 = vunpack.c.h.b16 %v821
  %v1523 = vunpack.c.l.b16 %v822
  %v1524 = vunpack.c.h.b16 %v822
  %v1525 = vunpack.c.l.b16 %v823
  %v1526 = vunpack.c.h.b16 %v823
  %v1527 = vunpack.c.l.b16 %v824
  %v1528 = vunpack.c.h.b16 %v824
  %v1529 = vunpack.c.l.b16 %v825
  %v1530 = vunpack.c.h.b16 %v825
  %v1531 = vunpack.c.l.b16 %v826
  %v1532 = vunpack.c.h.b16 %v826
  %v1533 = vunpack.c.l.b16 %v827
  %v1534 = vunpack.c.h.b16 %v827
  %v1535 = vunpack.c.l.b16 %v828
  %v1536 = vunpack.c.h.b16 %v828
  %v1537 = vunpack.c.l.b16 %v829
  %v1538 = vunpack.c.h.b16 %v829
  %v1539 = vunpack.c.l.b16 %v830
  %v1540 = vunpack.c.h.b16 %v830
  %v1541 = vunpack.c.l.b16 %v831
  %v1542 = vunpack.c.h.b16 %v831
  %v1543 = vunpack.c.l.b16 %v832
  %v1544 = vunpack.c.h.b16 %v832
  %v1545 = vunpack.c.l.b16 %v833
  %v1546 = vunpack.c.h.b16 %v833
  %v1547 = vunpack.c.l.b16 %v834
  %v1548 = vunpack.c.h.b16 %v834
  %v1549 = vunpack.c.l.b16 %v835
  %v1550 = vunpack.c.h.b16 %v835
  %v1551 = vunpack.c.l.b16 %v836
  %v1552 = vunpack.c.h.b16 %v836
  %v1553 = vunpack.c.l.b16 %v837
  %v1554 = vunpack.c.h.b16 %v837
  %v1555 = vunpack.c.l.b16 %v838
  %v1556 = vunpack.c.h.b16 %v838
  %v1557 = vunpack.c.l.b16 %v839
  %v1558 = vunpack.c.h.b16 %v839
  %v1559 = vunpack.c.l.b16 %v840
  %v1560 = vunpack.c.h.b16 %v840
  %v1561 = vunpack.c.l.b16 %v841
  %v1562 = vunpack.c.h.b16 %v841
  %v1563 = vunpack.c.l.b16 %v842
  %v1564 = vunpack.c.h.b16 %v842
  %v1565 = vunpack.c.l.b16 %v843
  %v1566 = vunpack.c.h.b16 %v843
  %v1567 = vunpack.c.l.b16 %v844
  %v1568 = vunpack.c.h.b16 %v844
  %v1569 = vunpack.c.l.b16 %v845
  %v1570 = vunpack.c.h.b16 %v845
  %v1571 = vunpack.c.l.b16 %v846
  %v1572 = vunpack.c.h.b16 %v846
  %v1573 = vunpack.c.l.b16 %v847
  %v1574 = vunpack.c.h.b16 %v847
  %v1575 = vunpack.c.l.b16 %v848
  %v1576 = vunpack.c.h.b16 %v848
  %v1577 = vunpack.c.l.b16 %v849
  %v1578 = vunpack.c.h.b16 %v849
  %v1579 = vunpack.c.l.b16 %v850
  %v1580 = vunpack.c.h.b16 %v850
  %v1581 = vunpack.c.l.b16 %v851
  %v1582 = vunpack.c.h.b16 %v851
  %v1583 = vunpack.c.l.b16 %v852
  %v1584 = vunpack.c.h.b16 %v852
  %v1585 = vunpack.c.l.b16 %v853
  %v1586 = vunpack.c.h.b16 %v853
  %v1587 = vunpack.c.l.b16 %v854
  %v1588 = vunpack.c.h.b16 %v854
  %v1589 = vunpack.c.l.b16 %v855
  %v1590 = vunpack.c.h.b16 %v855
  %v1591 = vunpack.c.l.b16 %v856
  %v1592 = vunpack.c.h.b16 %v856
  %v1593 = vunpack.c.l.b16 %v857
  %v1594 = vunpack.c.h.b16 %v857
  %v1595 = vunpack.c.l.b16 %v858
  %v1596 = vunpack.c.h.b16 %v858
  %v1597 = vunpack.c.l.b16 %v859
  %v1598 = vunpack.c.h.b16 %v859
  %v1599 = vunpack.c.l.b16 %v860
  %v1600 = vunpack.c.h.b16 %v860
  %v1601 = vunpack.c.l.b16 %v861
  %v1602 = vunpack.c.h.b16 %v861
  %v1603 = vunpack.c.l.b16 %v862
  %v1604 = vunpack.c.h.b16 %v862
  %v1605 = vunpack.c.l.b16 %v863
  %v1606 = vunpack.c.h.b16 %v863
  %v1607 = vunpack.c.l.b16 %v864
  %v1608 = vunpack.c.h.b16 %v864
  %v1609 = vunpack.c.l.b16 %v865
  %v1610 = vunpack.c.h.b16 %v865
  %v1611 = vunpack.c.l.b16 %v866
  %v1612 = vunpack.c.h.b16 %v866
  %v1613 = vunpack.c.l.b16 %v867
  %v1614 = vunpack.c.h.b16 %v867
  %v1615 = vunpack.c.l.b16 %v868
  %v1616 = vunpack.c.h.b16 %v868
  %v1617 = vunpack.c.l.b16 %v869
  %v1618 = vunpack.c.h.b16 %v869
  %v1619 = vunpack.c.l.b16 %v870
  %v1620 = vunpack.c.h.b16 %v870
  %v1621 = vunpack.c.l.b16 %v871
  %v1622 = vunpack.c.h.b16 %v871
  %v1623 = vunpack.c.l.b16 %v872
  %v1624 = vunpack.c.h.b16 %v872
  %v1625 = vunpack.c.l.b16 %v873
  %v1626 = vunpack.c.h.b16 %v873
  %v1627 = vunpack.c.l.b16 %v874
  %v1628 = vunpack.c.h.b16 %v874
  %v1629 = vunpack.c.l.b16 %v875
  %v1630 = vunpack.c.h.b16 %v875
  %v1631 = vunpack.c.l.b16 %v876
  %v1632 = vunpack.c.h.b16 %v876
  %v1633 = vunpack.c.l.b16 %v877
  %v1634 = vunpack.c.h.b16 %v877
  %v1635 = vunpack.c.l.b16 %v878
  %v1636 = vunpack.c.h.b16 %v878
  %v1637 = vunpack.c.l.b16 %v879
  %v1638 = vunpack.c.h.b16 %v879
  %v1639 = vunpack.c.l.b16 %v880
  %v1640 = vunpack.c.h.b16 %v880
  %v1641 = vunpack.c.l.b16 %v881
  %v1642 = vunpack.c.h.b16 %v881
  %v1643 = vunpack.c.l.b16 %v882
  %v1644 = vunpack.c.h.b16 %v882
  %v1645 = vunpack.c.l.b16 %v883
  %v1646 = vunpack.c.h.b16 %v883
  %v1647 = vunpack.c.l.b16 %v884
  %v1648 = vunpack.c.h.b16 %v884
  %v1649 = vunpack.c.l.b16 %v885
  %v1650 = vunpack.c.h.b16 %v885
  %v1651 = vunpack.c.l.b16 %v886
  %v1652 = vunpack.c.h.b16 %v886
  %v1653 = vunpack.c.l.b16 %v887
  %v1654 = vunpack.c.h.b16 %v887
  %v1655 = vunpack.c.l.b16 %v888
  %v1656 = vunpack.c.h.b16 %v888
  %v1657 = vunpack.c.l.b16 %v889
  %v1658 = vunpack.c.h.b16 %v889
  %v1659 = vunpack.c.l.b16 %v890
  %v1660 = vunpack.c.h.b16 %v890
  %v1661 = vunpack.c.l.b16 %v891
  %v1662 = vunpack.c.h.b16 %v891
  %v1663 = vunpack.c.l.b16 %v892
  %v1664 = vunpack.c.h.b16 %v892
  %v1665 = vunpack.c.l.b16 %v893
  %v1666 = vunpack.c.h.b16 %v893
  %v1667 = vunpack.c.l.b16 %v894
  %v1668 = vunpack.c.h.b16 %v894
  %v1669 = vunpack.c.l.b16 %v895
  %v1670 = vunpack.c.h.b16 %v895
  %v1671 = vunpack.c.l.b16 %v896
  %v1672 = vunpack.c.h.b16 %v896
  %v1673 = vunpack.c.l.b16 %v897
  %v1674 = vunpack.c.h.b16 %v897
  %v1675 = vunpack.c.l.b16 %v898
  %v1676 = vunpack.c.h.b16 %v898
  %v1677 = vunpack.c.l.b16 %v899
  %v1678 = vunpack.c.h.b16 %v899
  %v1679 = vunpack.c.l.b16 %v900
  %v1680 = vunpack.c.h.b16 %v900
  %v1681 = vunpack.c.l.b16 %v901
  %v1682 = vunpack.c.h.b16 %v901
  %v1683 = vunpack.c.l.b16 %v902
  %v1684 = vunpack.c.h.b16 %v902
  %v1685 = vunpack.c.l.b16 %v903
  %v1686 = vunpack.c.h.b16 %v903
  %v1687 = vunpack.c.l.b16 %v904
  %v1688 = vunpack.c.h.b16 %v904
  %v1689 = vunpack.c.l.b16 %v905
  %v1690 = vunpack.c.h.b16 %v905
  %v1691 = vunpack.c.l.b16 %v906
  %v1692 = vunpack.c.h.b16 %v906
  %v1693 = vunpack.c.l.b16 %v907
  %v1694 = vunpack.c.h.b16 %v907
  %v1695 = vunpack.c.l.b16 %v908
  %v1696 = vunpack.c.h.b16 %v908
  %v1697 = vunpack.c.l.b16 %v909
  %v1698 = vunpack.c.h.b16 %v909
  %v1699 = vunpack.c.l.b16 %v910
  %v1700 = vunpack.c.h.b16 %v910
  %v1701 = vpack.c.b16 %v1193, %v1189
  %v1702 = vpack.c.b16 %v1194, %v1190
  %v1703 = vpack.c.b16 %v1195, %v1191
  %v1704 = vpack.c.b16 %v1196, %v1192
  %v1705 = vpack.c.b16 %v1201, %v1197
  %v1706 = vpack.c.b16 %v1202, %v1198
  %v1707 = vpack.c.b16 %v1203, %v1199
  %v1708 = vpack.c.b16 %v1204, %v1200
  %v1709 = vpack.c.b16 %v1209, %v1205
  %v1710 = vpack.c.b16 %v1210, %v1206
  %v1711 = vpack.c.b16 %v1211, %v1207
  %v1712 = vpack.c.b16 %v1212, %v1208
  %v1713 = vpack.c.b16 %v1217, %v1213
  %v1714 = vpack.c.b16 %v1218, %v1214
  %v1715 = vpack.c.b16 %v1219, %v1215
  %v1716 = vpack.c.b16 %v1220, %v1216
  %v1717 = vpack.c.b16 %v1225, %v1221
  %v1718 = vpack.c.b16 %v1226, %v1222
  %v1719 = vpack.c.b16 %v1227, %v1223
  %v1720 = vpack.c.b16 %v1228, %v1224
  %v1721 = vpack.c.b16 %v1233, %v1229
  %v1722 = vpack.c.b16 %v1234, %v1230
  %v1723 = vpack.c.b16 %v1235, %v1231
  %v1724 = vpack.c.b16 %v1236, %v1232
  %v1725 = vpack.c.b16 %v1241, %v1237
  %v1726 = vpack.c.b16 %v1242, %v1238
  %v1727 = vpack.c.b16 %v1243, %v1239
  %v1728 = vpack.c.b16 %v1244, %v1240
  %v1729 = vpack.c.b16 %v1249, %v1245
  %v1730 = vpack.c.b16 %v1250, %v1246
  %v1731 = vpack.c.b16 %v1251, %v1247
  %v1732 = vpack.c.b16 %v1252, %v1248
  %v1733 = vpack.c.b16 %v1257, %v1253
  %v1734 = vpack.c.b16 %v1258, %v1254
  %v1735 = vpack.c.b16 %v1259, %v1255
  %v1736 = vpack.c.b16 %v1260, %v1256
  %v1737 = vpack.c.b16 %v1265, %v1261
  %v1738 = vpack.c.b16 %v1266, %v1262
  %v1739 = vpack.c.b16 %v1267, %v1263
  %v1740 = vpack.c.b16 %v1268, %v1264
  %v1741 = vpack.c.b16 %v1273, %v1269
  %v1742 = vpack.c.b16 %v1274, %v1270
  %v1743 = vpack.c.b16 %v1275, %v1271
  %v1744 = vpack.c.b16 %v1276, %v1272
  %v1745 = vpack.c.b16 %v1281, %v1277
  %v1746 = vpack.c.b16 %v1282, %v1278
  %v1747 = vpack.c.b16 %v1283, %v1279
  %v1748 = vpack.c.b16 %v1284, %v1280
  %v1749 = vpack.c.b16 %v1289, %v1285
  %v1750 = vpack.c.b16 %v1290, %v1286
  %v1751 = vpack.c.b16 %v1291, %v1287
  %v1752 = vpack.c.b16 %v1292, %v1288
  %v1753 = vpack.c.b16 %v1297, %v1293
  %v1754 = vpack.c.b16 %v1298, %v1294
  %v1755 = vpack.c.b16 %v1299, %v1295
  %v1756 = vpack.c.b16 %v1300, %v1296
  %v1757 = vpack.c.b16 %v1305, %v1301
  %v1758 = vpack.c.b16 %v1306, %v1302
  %v1759 = vpack.c.b16 %v1307, %v1303
  %v1760 = vpack.c.b16 %v1308, %v1304
  %v1761 = vpack.c.b16 %v1313, %v1309
  %v1762 = vpack.c.b16 %v1314, %v1310
  %v1763 = vpack.c.b16 %v1315, %v1311
  %v1764 = vpack.c.b16 %v1316, %v1312
  %v1765 = vpack.c.b16 %v1321, %v1317
  %v1766 = vpack.c.b16 %v1322, %v1318
  %v1767 = vpack.c.b16 %v1323, %v1319
  %v1768 = vpack.c.b16 %v1324, %v1320
  %v1769 = vpack.c.b16 %v1329, %v1325
  %v1770 = vpack.c.b16 %v1330, %v1326
  %v1771 = vpack.c.b16 %v1331, %v1327
  %v1772 = vpack.c.b16 %v1332, %v1328
  %v1773 = vpack.c.b16 %v1337, %v1333
  %v1774 = vpack.c.b16 %v1338, %v1334
  %v1775 = vpack.c.b16 %v1339, %v1335
  %v1776 = vpack.c.b16 %v1340, %v1336
  %v1777 = vpack.c.b16 %v1345, %v1341
  %v1778 = vpack.c.b16 %v1346, %v1342
  %v1779 = vpack.c.b16 %v1347, %v1343
  %v1780 = vpack.c.b16 %v1348, %v1344
  %v1781 = vpack.c.b16 %v1353, %v1349
  %v1782 = vpack.c.b16 %v1354, %v1350
  %v1783 = vpack.c.b16 %v1355, %v1351
  %v1784 = vpack.c.b16 %v1356, %v1352
  %v1785 = vpack.c.b16 %v1361, %v1357
  %v1786 = vpack.c.b16 %v1362, %v1358
  %v1787 = vpack.c.b16 %v1363, %v1359
  %v1788 = vpack.c.b16 %v1364, %v1360
  %v1789 = vpack.c.b16 %v1369, %v1365
  %v1790 = vpack.c.b16 %v1370, %v1366
  %v1791 = vpack.c.b16 %v1371, %v1367
  %v1792 = vpack.c.b16 %v1372, %v1368
  %v1793 = vpack.c.b16 %v1377, %v1373
  %v1794 = vpack.c.b16 %v1378, %v1374
  %v1795 = vpack.c.b16 %v1379, %v1375
  %v1796 = vpack.c.b16 %v1380, %v1376
  %v1797 = vpack.c.b16 %v1385, %v1381
  %v1798 = vpack.c.b16 %v1386, %v1382
  %v1799 = vpack.c.b16 %v1387, %v1383
  %v1800 = vpack.c.b16 %v1388, %v1384
  %v1801 = vpack.c.b16 %v1393, %v1389
  %v1802 = vpack.c.b16 %v1394, %v1390
  %v1803 = vpack.c.b16 %v1395, %v1391
  %v1804 = vpack.c.b16 %v1396, %v1392
  %v1805 = vpack.c.b16 %v1401, %v1397
  %v1806 = vpack.c.b16 %v1402, %v1398
  %v1807 = vpack.c.b16 %v1403, %v1399
  %v1808 = vpack.c.b16 %v1404, %v1400
  %v1809 = vpack.c.b16 %v1409, %v1405
  %v1810 = vpack.c.b16 %v1410, %v1406
  %v1811 = vpack.c.b16 %v1411, %v1407
  %v1812 = vpack.c.b16 %v1412, %v1408
  %v1813 = vpack.c.b16 %v1417, %v1413
  %v1814 = vpack.c.b16 %v1418, %v1414
  %v1815 = vpack.c.b16 %v1419, %v1415
  %v1816 = vpack.c.b16 %v1420, %v1416
  %v1817 = vpack.c.b16 %v1425, %v1421
  %v1818 = vpack.c.b16 %v1426, %v1422
  %v1819 = vpack.c.b16 %v1427, %v1423
  %v1820 = vpack.c.b16 %v1428, %v1424
  %v1821 = vpack.c.b16 %v1433, %v1429
  %v1822 = vpack.c.b16 %v1434, %v1430
  %v1823 = vpack.c.b16 %v1435, %v1431
  %v1824 = vpack.c.b16 %v1436, %v1432
  %v1825 = vpack.c.b16 %v1441, %v1437
  %v1826 = vpack.c.b16 %v1442, %v1438
  %v1827 = vpack.c.b16 %v1443, %v1439
  %v1828 = vpack.c.b16 %v1444, %v1440
  %v1829 = vpack.c.b16 %v1449, %v1445
  %v1830 = vpack.c.b16 %v1450, %v1446
  %v1831 = vpack.c.b16 %v1451, %v1447
  %v1832 = vpack.c.b16 %v1452, %v1448
  %v1833 = vpack.c.b16 %v1457, %v1453
  %v1834 = vpack.c.b16 %v1458, %v1454
  %v1835 = vpack.c.b16 %v1459, %v1455
  %v1836 = vpack.c.b16 %v1460, %v1456
  %v1837 = vpack.c.b16 %v1465, %v1461
  %v1838 = vpack.c.b16 %v1466, %v1462
  %v1839 = vpack.c.b16 %v1467, %v1463
  %v1840 = vpack.c.b16 %v1468, %v1464
  %v1841 = vpack.c.b16 %v1473, %v1469
  %v1842 = vpack.c.b16 %v1474, %v1470
  %v1843 = vpack.c.b16 %v1475, %v1471
  %v1844 = vpack.c.b16 %v1476, %v1472
  %v1845 = vpack.c.b16 %v1481, %v1477
  %v1846 = vpack.c.b16 %v1482, %v1478
  %v1847 = vpack.c.b16 %v1483, %v1479
  %v1848 = vpack.c.b16 %v1484, %v1480
  %v1849 = vpack.c.b16 %v1489, %v1485
  %v1850 = vpack.c.b16 %v1490, %v1486
  %v1851 = vpack.c.b16 %v1491, %v1487
  %v1852 = vpack.c.b16 %v1492, %v1488
  %v1853 = vpack.c.b16 %v1497, %v1493
  %v1854 = vpack.c.b16 %v1498, %v1494
  %v1855 = vpack.c.b16 %v1499, %v1495
  %v1856 = vpack.c.b16 %v1500, %v1496
  %v1857 = vpack.c.b16 %v1505, %v1501
  %v1858 = vpack.c.b16 %v1506, %v1502
  %v1859 = vpack.c.b16 %v1507, %v1503
  %v1860 = vpack.c.b16 %v1508, %v1504
  %v1861 = vpack.c.b16 %v1513, %v1509
  %v1862 = vpack.c.b16 %v1514, %v1510
  %v1863 = vpack.c.b16 %v1515, %v1511
  %v1864 = vpack.c.b16 %v1516, %v1512
  %v1865 = vpack.c.b16 %v1521, %v1517
  %v1866 = vpack.c.b16 %v1522, %v1518
  %v1867 = vpack.c.b16 %v1523, %v1519
  %v1868 = vpack.c.b16 %v1524, %v1520
  %v1869 = vpack.c.b16 %v1529, %v1525
  %v1870 = vpack.c.b16 %v1530, %v1526
  %v1871 = vpack.c.b16 %v1531, %v1527
  %v1872 = vpack.c.b16 %v1532, %v1528
  %v1873 = vpack.c.b16 %v1537, %v1533
  %v1874 = vpack.c.b16 %v1538, %v1534
  %v1875 = vpack.c.b16 %v1539, %v1535
  %v1876 = vpack.c.b16 %v1540, %v1536
  %v1877 = vpack.c.b16 %v1545, %v1541
  %v1878 = vpack.c.b16 %v1546, %v1542
  %v1879 = vpack.c.b16 %v1547, %v1543
  %v1880 = vpack.c.b16 %v1548, %v1544
  %v1881 = vpack.c.b16 %v1553, %v1549
  %v1882 = vpack.c.b16 %v1554, %v1550
  %v1883 = vpack.c.b16 %v1555, %v1551
  %v1884 = vpack.c.b16 %v1556, %v1552
  %v1885 = vpack.c.b16 %v1561, %v1557
  %v1886 = vpack.c.b16 %v1562, %v1558
  %v1887 = vpack.c.b16 %v1563, %v1559
  %v1888 = vpack.c.b16 %v1564, %v1560
  %v1889 = vpack.c.b16 %v1569, %v1565
  %v1890 = vpack.c.b16 %v1570, %v1566
  %v1891 = vpack.c.b16 %v1571, %v1567
  %v1892 = vpack.c.b16 %v1572, %v1568
  %v1893 = vpack.c.b16 %v1577, %v1573
  %v1894 = vpack.c.b16 %v1578, %v1574
  %v1895 = vpack.c.b16 %v1579, %v1575
  %v1896 = vpack.c.b16 %v1580, %v1576
  %v1897 = vpack.c.b16 %v1585, %v1581
  %v1898 = vpack.c.b16 %v1586, %v1582
  %v1899 = vpack.c.b16 %v1587, %v1583
  %v1900 = vpack.c.b16 %v1588, %v1584
  %v1901 = vpack.c.b16 %v1593, %v1589
  %v1902 = vpack.c.b16 %v1594, %v1590
  %v1903 = vpack.c.b16 %v1595, %v1591
  %v1904 = vpack.c.b16 %v1596, %v1592
  %v1905 = vpack.c.b16 %v1601, %v1597
  %v1906 = vpack.c.b16 %v1602, %v1598
  %v1907 = vpack.c.b16 %v1603, %v1599
  %v1908 = vpack.c.b16 %v1604, %v1600
  %v1909 = vpack.c.b16 %v1609, %v1605
  %v1910 = vpack.c.b16 %v1610, %v1606
  %v1911 = vpack.c.b16 %v1611, %v1607
  %v1912 = vpack.c.b16 %v1612, %v1608
  %v1913 = vpack.c.b16 %v1617, %v1613
  %v1914 = vpack.c.b16 %v1618, %v1614
  %v1915 = vpack.c.b16 %v1619, %v1615
  %v1916 = vpack.c.b16 %v1620, %v1616
  %v1917 = vpack.c.b16 %v1625, %v1621
  %v1918 = vpack.c.b16 %v1626, %v1622
  %v1919 = vpack.c.b16 %v1627, %v1623
  %v1920 = vpack.c.b16 %v1628, %v1624
  %v1921 = vpack.c.b16 %v1633, %v1629
  %v1922 = vpack.c.b16 %v1634, %v1630
  %v1923 = vpack.c.b16 %v1635, %v1631
  %v1924 = vpack.c.b16 %v1636, %v1632
  %v1925 = vpack.c.b16 %v1641, %v1637
  %v1926 = vpack.c.b16 %v1642, %v1638
  %v1927 = vpack.c.b16 %v1643, %v1639
  %v1928 = vpack.c.b16 %v1644, %v1640
  %v1929 = vpack.c.b16 %v1649, %v1645
  %v1930 = vpack.c.b16 %v1650, %v1646
  %v1931 = vpack.c.b16 %v1651, %v1647
  %v1932 = vpack.c.b16 %v1652, %v1648
  %v1933 = vpack.c.b16 %v1657, %v1653
  %v1934 = vpack.c.b16 %v1658, %v1654
  %v1935 = vpack.c.b16 %v1659, %v1655
  %v1936 = vpack.c.b16 %v1660, %v1656
  %v1937 = vpack.c.b16 %v1665, %v1661
  %v1938 = vpack.c.b16 %v1666, %v1662
  %v1939 = vpack.c.b16 %v1667, %v1663
  %v1940 = vpack.c.b16 %v1668, %v1664
  %v1941 = vpack.c.b16 %v1673, %v1669
  %v1942 = vpack.c.b16 %v1674, %v1670
  %v1943 = vpack.c.b16 %v1675, %v1671
  %v1944 = vpack.c.b16 %v1676, %v1672
  %v1945 = vpack.c.b16 %v1681, %v1677
  %v1946 = vpack.c.b16 %v1682, %v1678
  %v1947 = vpack.c.b16 %v1683, %v1679
  %v1948 = vpack.c.b16 %v1684, %v1680
  %v1949 = vpack.c.b16 %v1689, %v1685
  %v1950 = vpack.c.b16 %v1690, %v1686
  %v1951 = vpack.c.b16 %v1691, %v1687
  %v1952 = vpack.c.b16 %v1692, %v1688
  %v1953 = vpack.c.b16 %v1697, %v1693
  %v1954 = vpack.c.b16 %v1698, %v1694
  %v1955 = vpack.c.b16 %v1699, %v1695
  %v1956 = vpack.c.b16 %v1700, %v1696
  %2213 = vmatprep.subr.bf16.mxu0 %v1730
  %2214 = vmatpush1.bf16.msra.mxu0 %v1729
  %2215 = vmatprep.subr.bf16.mxu0 %v1726
  %2216 = vmatpush1.bf16.msra.mxu0 %v1725
  %2217 = vmatprep.subr.bf16.mxu0 %v1722
  %2218 = vmatpush1.bf16.msra.mxu0 %v1721
  %2219 = vmatprep.subr.bf16.mxu0 %v1718
  %2220 = vmatpush1.bf16.msra.mxu0 %v1717
  %2221 = vmatprep.subr.bf16.mxu0 %v1714
  %2222 = vmatpush1.bf16.msra.mxu0 %v1713
  %2223 = vmatprep.subr.bf16.mxu0 %v1710
  %2224 = vmatpush1.bf16.msra.mxu0 %v1709
  %2225 = vmatprep.subr.bf16.mxu0 %v1706
  %2226 = vmatpush1.bf16.msra.mxu0 %v1705
  %2227 = vmatprep.subr.bf16.mxu0 %v1702
  %2228 = vmatpush1.bf16.msra.mxu0 %v1701
  %2229 = vmatprep.subr.bf16.mxu0 %v1762
  %2230 = vmatpush2.bf16.msra.mxu0 %v1761
  %2231 = vmatprep.subr.bf16.mxu0 %v1758
  %2232 = vmatpush2.bf16.msra.mxu0 %v1757
  %2233 = vmatprep.subr.bf16.mxu0 %v1754
  %2234 = vmatpush2.bf16.msra.mxu0 %v1753
  %2235 = vmatprep.subr.bf16.mxu0 %v1750
  %2236 = vmatpush2.bf16.msra.mxu0 %v1749
  %2237 = vmatprep.subr.bf16.mxu0 %v1746
  %2238 = vmatpush2.bf16.msra.mxu0 %v1745
  %2239 = vmatprep.subr.bf16.mxu0 %v1742
  %2240 = vmatpush2.bf16.msra.mxu0 %v1741
  %2241 = vmatprep.subr.bf16.mxu0 %v1738
  %2242 = vmatpush2.bf16.msra.mxu0 %v1737
  %2243 = vmatprep.subr.bf16.mxu0 %v1734
  %2244 = vmatpush2.bf16.msra.mxu0 %v1733
  %2245 = vmatprep.mubr.bf16.mxu0 %v648
  %2246 = vmatmul.mubr.bf16.gmra.mxu0 %v647
  %v2247 = vpop.f32.mrf.mxu0
  %v2248 = vadd.f32 %v916, %v2247
  %v2249 = vpop.f32.mrf.mxu0
  %v2250 = vadd.f32 %v920, %v2249
  %v2251 = vpop.f32.mrf.mxu0
  %v2252 = vpop.f32.mrf.mxu0
  %2253 = vdwg.mxu0
  %2254 = vmatprep.subr.bf16.mxu0 %v1794
  %2255 = vmatpush1.bf16.msra.mxu0 %v1793
  %2256 = vmatprep.subr.bf16.mxu0 %v1790
  %2257 = vmatpush1.bf16.msra.mxu0 %v1789
  %2258 = vmatprep.subr.bf16.mxu0 %v1786
  %2259 = vmatpush1.bf16.msra.mxu0 %v1785
  %2260 = vmatprep.subr.bf16.mxu0 %v1782
  %2261 = vmatpush1.bf16.msra.mxu0 %v1781
  %2262 = vmatprep.subr.bf16.mxu0 %v1778
  %2263 = vmatpush1.bf16.msra.mxu0 %v1777
  %2264 = vmatprep.subr.bf16.mxu0 %v1774
  %2265 = vmatpush1.bf16.msra.mxu0 %v1773
  %2266 = vmatprep.subr.bf16.mxu0 %v1770
  %2267 = vmatpush1.bf16.msra.mxu0 %v1769
  %2268 = vmatprep.subr.bf16.mxu0 %v1766
  %2269 = vmatpush1.bf16.msra.mxu0 %v1765
  %2270 = vmatprep.subr.bf16.mxu0 %v1826
  %2271 = vmatpush2.bf16.msra.mxu0 %v1825
  %2272 = vmatprep.subr.bf16.mxu0 %v1822
  %2273 = vmatpush2.bf16.msra.mxu0 %v1821
  %2274 = vmatprep.subr.bf16.mxu0 %v1818
  %2275 = vmatpush2.bf16.msra.mxu0 %v1817
  %2276 = vmatprep.subr.bf16.mxu0 %v1814
  %2277 = vmatpush2.bf16.msra.mxu0 %v1813
  %2278 = vmatprep.subr.bf16.mxu0 %v1810
  %2279 = vmatpush2.bf16.msra.mxu0 %v1809
  %2280 = vmatprep.subr.bf16.mxu0 %v1806
  %2281 = vmatpush2.bf16.msra.mxu0 %v1805
  %2282 = vmatprep.subr.bf16.mxu0 %v1802
  %2283 = vmatpush2.bf16.msra.mxu0 %v1801
  %2284 = vmatprep.subr.bf16.mxu0 %v1798
  %2285 = vmatpush2.bf16.msra.mxu0 %v1797
  %2286 = vmatprep.mubr.bf16.mxu0 %v650
  %2287 = vmatmul.mubr.bf16.gmra.mxu0 %v649
  %v2288 = vpop.f32.mrf.mxu0
  %v2289 = vadd.f32 %v2248, %v2288
  %v2290 = vpop.f32.mrf.mxu0
  %v2291 = vadd.f32 %v2250, %v2290
  %v2292 = vpop.f32.mrf.mxu0
  %v2293 = vpop.f32.mrf.mxu0
  %2294 = vdwg.mxu0
  %2295 = vmatprep.subr.bf16.mxu0 %v1858
  %2296 = vmatpush1.bf16.msra.mxu0 %v1857
  %2297 = vmatprep.subr.bf16.mxu0 %v1854
  %2298 = vmatpush1.bf16.msra.mxu0 %v1853
  %2299 = vmatprep.subr.bf16.mxu0 %v1850
  %2300 = vmatpush1.bf16.msra.mxu0 %v1849
  %2301 = vmatprep.subr.bf16.mxu0 %v1846
  %2302 = vmatpush1.bf16.msra.mxu0 %v1845
  %2303 = vmatprep.subr.bf16.mxu0 %v1842
  %2304 = vmatpush1.bf16.msra.mxu0 %v1841
  %2305 = vmatprep.subr.bf16.mxu0 %v1838
  %2306 = vmatpush1.bf16.msra.mxu0 %v1837
  %2307 = vmatprep.subr.bf16.mxu0 %v1834
  %2308 = vmatpush1.bf16.msra.mxu0 %v1833
  %2309 = vmatprep.subr.bf16.mxu0 %v1830
  %2310 = vmatpush1.bf16.msra.mxu0 %v1829
  %2311 = vmatprep.subr.bf16.mxu0 %v1890
  %2312 = vmatpush2.bf16.msra.mxu0 %v1889
  %2313 = vmatprep.subr.bf16.mxu0 %v1886
  %2314 = vmatpush2.bf16.msra.mxu0 %v1885
  %2315 = vmatprep.subr.bf16.mxu0 %v1882
  %2316 = vmatpush2.bf16.msra.mxu0 %v1881
  %2317 = vmatprep.subr.bf16.mxu0 %v1878
  %2318 = vmatpush2.bf16.msra.mxu0 %v1877
  %2319 = vmatprep.subr.bf16.mxu0 %v1874
  %2320 = vmatpush2.bf16.msra.mxu0 %v1873
  %2321 = vmatprep.subr.bf16.mxu0 %v1870
  %2322 = vmatpush2.bf16.msra.mxu0 %v1869
  %2323 = vmatprep.subr.bf16.mxu0 %v1866
  %2324 = vmatpush2.bf16.msra.mxu0 %v1865
  %2325 = vmatprep.subr.bf16.mxu0 %v1862
  %2326 = vmatpush2.bf16.msra.mxu0 %v1861
  %2327 = vmatprep.mubr.bf16.mxu0 %v652
  %2328 = vmatmul.mubr.bf16.gmra.mxu0 %v651
  %v2329 = vpop.f32.mrf.mxu0
  %v2330 = vadd.f32 %v2289, %v2329
  %v2331 = vpop.f32.mrf.mxu0
  %v2332 = vadd.f32 %v2291, %v2331
  %v2333 = vpop.f32.mrf.mxu0
  %v2334 = vpop.f32.mrf.mxu0
  %2335 = vdwg.mxu0
  %2336 = vmatprep.subr.bf16.mxu0 %v1922
  %2337 = vmatpush1.bf16.msra.mxu0 %v1921
  %2338 = vmatprep.subr.bf16.mxu0 %v1918
  %2339 = vmatpush1.bf16.msra.mxu0 %v1917
  %2340 = vmatprep.subr.bf16.mxu0 %v1914
  %2341 = vmatpush1.bf16.msra.mxu0 %v1913
  %2342 = vmatprep.subr.bf16.mxu0 %v1910
  %2343 = vmatpush1.bf16.msra.mxu0 %v1909
  %2344 = vmatprep.subr.bf16.mxu0 %v1906
  %2345 = vmatpush1.bf16.msra.mxu0 %v1905
  %2346 = vmatprep.subr.bf16.mxu0 %v1902
  %2347 = vmatpush1.bf16.msra.mxu0 %v1901
  %2348 = vmatprep.subr.bf16.mxu0 %v1898
  %2349 = vmatpush1.bf16.msra.mxu0 %v1897
  %2350 = vmatprep.subr.bf16.mxu0 %v1894
  %2351 = vmatpush1.bf16.msra.mxu0 %v1893
  %2352 = vmatprep.subr.bf16.mxu0 %v1954
  %2353 = vmatpush2.bf16.msra.mxu0 %v1953
  %2354 = vmatprep.subr.bf16.mxu0 %v1950
  %2355 = vmatpush2.bf16.msra.mxu0 %v1949
  %2356 = vmatprep.subr.bf16.mxu0 %v1946
  %2357 = vmatpush2.bf16.msra.mxu0 %v1945
  %2358 = vmatprep.subr.bf16.mxu0 %v1942
  %2359 = vmatpush2.bf16.msra.mxu0 %v1941
  %2360 = vmatprep.subr.bf16.mxu0 %v1938
  %2361 = vmatpush2.bf16.msra.mxu0 %v1937
  %2362 = vmatprep.subr.bf16.mxu0 %v1934
  %2363 = vmatpush2.bf16.msra.mxu0 %v1933
  %2364 = vmatprep.subr.bf16.mxu0 %v1930
  %2365 = vmatpush2.bf16.msra.mxu0 %v1929
  %2366 = vmatprep.subr.bf16.mxu0 %v1926
  %2367 = vmatpush2.bf16.msra.mxu0 %v1925
  %2368 = vmatprep.mubr.bf16.mxu0 %v654
  %2369 = vmatmul.mubr.bf16.gmra.mxu0 %v653
  %v2370 = vpop.f32.mrf.mxu0
  %v2371 = vadd.f32 %v2330, %v2370
  %v2372 = vpop.f32.mrf.mxu0
  %v2373 = vadd.f32 %v2332, %v2372
  %v2374 = vpop.f32.mrf.mxu0
  %v2375 = vpop.f32.mrf.mxu0
  %2376 = vdwg.mxu0
  %2377 = vmatprep.subr.bf16.mxu0 %v1732
  %2378 = vmatpush1.bf16.msra.mxu0 %v1731
  %2379 = vmatprep.subr.bf16.mxu0 %v1728
  %2380 = vmatpush1.bf16.msra.mxu0 %v1727
  %2381 = vmatprep.subr.bf16.mxu0 %v1724
  %2382 = vmatpush1.bf16.msra.mxu0 %v1723
  %2383 = vmatprep.subr.bf16.mxu0 %v1720
  %2384 = vmatpush1.bf16.msra.mxu0 %v1719
  %2385 = vmatprep.subr.bf16.mxu0 %v1716
  %2386 = vmatpush1.bf16.msra.mxu0 %v1715
  %2387 = vmatprep.subr.bf16.mxu0 %v1712
  %2388 = vmatpush1.bf16.msra.mxu0 %v1711
  %2389 = vmatprep.subr.bf16.mxu0 %v1708
  %2390 = vmatpush1.bf16.msra.mxu0 %v1707
  %2391 = vmatprep.subr.bf16.mxu0 %v1704
  %2392 = vmatpush1.bf16.msra.mxu0 %v1703
  %2393 = vmatprep.subr.bf16.mxu0 %v1764
  %2394 = vmatpush2.bf16.msra.mxu0 %v1763
  %2395 = vmatprep.subr.bf16.mxu0 %v1760
  %2396 = vmatpush2.bf16.msra.mxu0 %v1759
  %2397 = vmatprep.subr.bf16.mxu0 %v1756
  %2398 = vmatpush2.bf16.msra.mxu0 %v1755
  %2399 = vmatprep.subr.bf16.mxu0 %v1752
  %2400 = vmatpush2.bf16.msra.mxu0 %v1751
  %2401 = vmatprep.subr.bf16.mxu0 %v1748
  %2402 = vmatpush2.bf16.msra.mxu0 %v1747
  %2403 = vmatprep.subr.bf16.mxu0 %v1744
  %2404 = vmatpush2.bf16.msra.mxu0 %v1743
  %2405 = vmatprep.subr.bf16.mxu0 %v1740
  %2406 = vmatpush2.bf16.msra.mxu0 %v1739
  %2407 = vmatprep.subr.bf16.mxu0 %v1736
  %2408 = vmatpush2.bf16.msra.mxu0 %v1735
  %2409 = vmatprep.mubr.bf16.mxu0 %v648
  %2410 = vmatmul.mubr.bf16.gmra.mxu0 %v647
  %v2411 = vpop.f32.mrf.mxu0
  %v2412 = vadd.f32 %v924, %v2411
  %v2413 = vpop.f32.mrf.mxu0
  %v2414 = vadd.f32 %v928, %v2413
  %v2415 = vpop.f32.mrf.mxu0
  %v2416 = vpop.f32.mrf.mxu0
  %2417 = vdwg.mxu0
  %2418 = vmatprep.subr.bf16.mxu0 %v1796
  %2419 = vmatpush1.bf16.msra.mxu0 %v1795
  %2420 = vmatprep.subr.bf16.mxu0 %v1792
  %2421 = vmatpush1.bf16.msra.mxu0 %v1791
  %2422 = vmatprep.subr.bf16.mxu0 %v1788
  %2423 = vmatpush1.bf16.msra.mxu0 %v1787
  %2424 = vmatprep.subr.bf16.mxu0 %v1784
  %2425 = vmatpush1.bf16.msra.mxu0 %v1783
  %2426 = vmatprep.subr.bf16.mxu0 %v1780
  %2427 = vmatpush1.bf16.msra.mxu0 %v1779
  %2428 = vmatprep.subr.bf16.mxu0 %v1776
  %2429 = vmatpush1.bf16.msra.mxu0 %v1775
  %2430 = vmatprep.subr.bf16.mxu0 %v1772
  %2431 = vmatpush1.bf16.msra.mxu0 %v1771
  %2432 = vmatprep.subr.bf16.mxu0 %v1768
  %2433 = vmatpush1.bf16.msra.mxu0 %v1767
  %2434 = vmatprep.subr.bf16.mxu0 %v1828
  %2435 = vmatpush2.bf16.msra.mxu0 %v1827
  %2436 = vmatprep.subr.bf16.mxu0 %v1824
  %2437 = vmatpush2.bf16.msra.mxu0 %v1823
  %2438 = vmatprep.subr.bf16.mxu0 %v1820
  %2439 = vmatpush2.bf16.msra.mxu0 %v1819
  %2440 = vmatprep.subr.bf16.mxu0 %v1816
  %2441 = vmatpush2.bf16.msra.mxu0 %v1815
  %2442 = vmatprep.subr.bf16.mxu0 %v1812
  %2443 = vmatpush2.bf16.msra.mxu0 %v1811
  %2444 = vmatprep.subr.bf16.mxu0 %v1808
  %2445 = vmatpush2.bf16.msra.mxu0 %v1807
  %2446 = vmatprep.subr.bf16.mxu0 %v1804
  %2447 = vmatpush2.bf16.msra.mxu0 %v1803
  %2448 = vmatprep.subr.bf16.mxu0 %v1800
  %2449 = vmatpush2.bf16.msra.mxu0 %v1799
  %2450 = vmatprep.mubr.bf16.mxu0 %v650
  %2451 = vmatmul.mubr.bf16.gmra.mxu0 %v649
  %v2452 = vpop.f32.mrf.mxu0
  %v2453 = vadd.f32 %v2412, %v2452
  %v2454 = vpop.f32.mrf.mxu0
  %v2455 = vadd.f32 %v2414, %v2454
  %v2456 = vpop.f32.mrf.mxu0
  %v2457 = vpop.f32.mrf.mxu0
  %2458 = vdwg.mxu0
  %2459 = vmatprep.subr.bf16.mxu0 %v1860
  %2460 = vmatpush1.bf16.msra.mxu0 %v1859
  %2461 = vmatprep.subr.bf16.mxu0 %v1856
  %2462 = vmatpush1.bf16.msra.mxu0 %v1855
  %2463 = vmatprep.subr.bf16.mxu0 %v1852
  %2464 = vmatpush1.bf16.msra.mxu0 %v1851
  %2465 = vmatprep.subr.bf16.mxu0 %v1848
  %2466 = vmatpush1.bf16.msra.mxu0 %v1847
  %2467 = vmatprep.subr.bf16.mxu0 %v1844
  %2468 = vmatpush1.bf16.msra.mxu0 %v1843
  %2469 = vmatprep.subr.bf16.mxu0 %v1840
  %2470 = vmatpush1.bf16.msra.mxu0 %v1839
  %2471 = vmatprep.subr.bf16.mxu0 %v1836
  %2472 = vmatpush1.bf16.msra.mxu0 %v1835
  %2473 = vmatprep.subr.bf16.mxu0 %v1832
  %2474 = vmatpush1.bf16.msra.mxu0 %v1831
  %2475 = vmatprep.subr.bf16.mxu0 %v1892
  %2476 = vmatpush2.bf16.msra.mxu0 %v1891
  %2477 = vmatprep.subr.bf16.mxu0 %v1888
  %2478 = vmatpush2.bf16.msra.mxu0 %v1887
  %2479 = vmatprep.subr.bf16.mxu0 %v1884
  %2480 = vmatpush2.bf16.msra.mxu0 %v1883
  %2481 = vmatprep.subr.bf16.mxu0 %v1880
  %2482 = vmatpush2.bf16.msra.mxu0 %v1879
  %2483 = vmatprep.subr.bf16.mxu0 %v1876
  %2484 = vmatpush2.bf16.msra.mxu0 %v1875
  %2485 = vmatprep.subr.bf16.mxu0 %v1872
  %2486 = vmatpush2.bf16.msra.mxu0 %v1871
  %2487 = vmatprep.subr.bf16.mxu0 %v1868
  %2488 = vmatpush2.bf16.msra.mxu0 %v1867
  %2489 = vmatprep.subr.bf16.mxu0 %v1864
  %2490 = vmatpush2.bf16.msra.mxu0 %v1863
  %2491 = vmatprep.mubr.bf16.mxu0 %v652
  %2492 = vmatmul.mubr.bf16.gmra.mxu0 %v651
  %v2493 = vpop.f32.mrf.mxu0
  %v2494 = vadd.f32 %v2453, %v2493
  %v2495 = vpop.f32.mrf.mxu0
  %v2496 = vadd.f32 %v2455, %v2495
  %v2497 = vpop.f32.mrf.mxu0
  %v2498 = vpop.f32.mrf.mxu0
  %2499 = vdwg.mxu0
  %2500 = vmatprep.subr.bf16.mxu0 %v1924
  %2501 = vmatpush1.bf16.msra.mxu0 %v1923
  %2502 = vmatprep.subr.bf16.mxu0 %v1920
  %2503 = vmatpush1.bf16.msra.mxu0 %v1919
  %2504 = vmatprep.subr.bf16.mxu0 %v1916
  %2505 = vmatpush1.bf16.msra.mxu0 %v1915
  %2506 = vmatprep.subr.bf16.mxu0 %v1912
  %2507 = vmatpush1.bf16.msra.mxu0 %v1911
  %2508 = vmatprep.subr.bf16.mxu0 %v1908
  %2509 = vmatpush1.bf16.msra.mxu0 %v1907
  %2510 = vmatprep.subr.bf16.mxu0 %v1904
  %2511 = vmatpush1.bf16.msra.mxu0 %v1903
  %2512 = vmatprep.subr.bf16.mxu0 %v1900
  %2513 = vmatpush1.bf16.msra.mxu0 %v1899
  %2514 = vmatprep.subr.bf16.mxu0 %v1896
  %2515 = vmatpush1.bf16.msra.mxu0 %v1895
  %2516 = vmatprep.subr.bf16.mxu0 %v1956
  %2517 = vmatpush2.bf16.msra.mxu0 %v1955
  %2518 = vmatprep.subr.bf16.mxu0 %v1952
  %2519 = vmatpush2.bf16.msra.mxu0 %v1951
  %2520 = vmatprep.subr.bf16.mxu0 %v1948
  %2521 = vmatpush2.bf16.msra.mxu0 %v1947
  %2522 = vmatprep.subr.bf16.mxu0 %v1944
  %2523 = vmatpush2.bf16.msra.mxu0 %v1943
  %2524 = vmatprep.subr.bf16.mxu0 %v1940
  %2525 = vmatpush2.bf16.msra.mxu0 %v1939
  %2526 = vmatprep.subr.bf16.mxu0 %v1936
  %2527 = vmatpush2.bf16.msra.mxu0 %v1935
  %2528 = vmatprep.subr.bf16.mxu0 %v1932
  %2529 = vmatpush2.bf16.msra.mxu0 %v1931
  %2530 = vmatprep.subr.bf16.mxu0 %v1928
  %2531 = vmatpush2.bf16.msra.mxu0 %v1927
  %2532 = vmatprep.mubr.bf16.mxu0 %v654
  %2533 = vmatmul.mubr.bf16.gmra.mxu0 %v653
  %v2534 = vpop.f32.mrf.mxu0
  %v2535 = vadd.f32 %v2494, %v2534
  %v2536 = vpop.f32.mrf.mxu0
  %v2537 = vadd.f32 %v2496, %v2536
  %v2538 = vpop.f32.mrf.mxu0
  %v2539 = vpop.f32.mrf.mxu0
  %2540 = vdwg.mxu0
  %2541 = vst [vmem:[%s7] sm:$0xff] %v2371
  %2542 = vst [vmem:[%s7 + $0x8] sm:$0xff] %v2373
  %2543 = vst [vmem:[%s7 + $0x10] sm:$0xff] %v2535
  %2544 = vst [vmem:[%s7 + $0x18] sm:$0xff] %v2537
  // Predicated region
  $region30: #{deit_forward.7} parent=0 // pred_check
    _
  $region31: #{deit_forward.7} parent=0 // pred_check_branch
    %2546 = sbr.rel (0) target = $region33
  $region32: #{deit_forward.7} parent=0 // pred_region
    _
  $region33: #{deit_forward.7} parent=0 // pred_fallthru
    _
  // Predicated region
  $region34: #{deit_forward.7} parent=0 // pred_check
    _
  $region35: #{deit_forward.7} parent=0 // pred_check_branch
    %2548 = sbr.rel (0) target = $region37
  $region36: #{deit_forward.7} parent=0 // pred_region
    _
  $region37: #{deit_forward.7} parent=0 // pred_fallthru
    _

</llo_original>
